<compile_context>
chip_gen: v6e
topology: v6e:2x2x1
jax: 0.10.0
libtpu: 0.0.40
codegen_flags: <defaults>
</compile_context>

<pallas_src>
import jax
import jax.numpy as jnp
from jax.experimental import pallas as pl
from jax.experimental.pallas import tpu as pltpu

LAYER_DIMS = [784, 600, 400, 200, 50, 10]      # logical feature dims
PADDED_DIMS = [896, 640, 512, 256, 128, 128]   # lane-padded (multiples of 128)


def _round_up(n, m):
    return (n + m - 1) // m * m


def _default_activation_dtype():
    """bf16 hidden activations on chips with a bf16 VPU path, else f32."""
    try:
        kind = jax.devices()[0].device_kind.lower()
    except Exception:
        kind = ""
    for old in ("v2", "v3", "v4", "v5"):
        if old in kind:
            return jnp.float32
    return jnp.bfloat16


def make_ffn_kernel(act_dtype):
    """Kernel factory; act_dtype is the dtype the hidden activations carry."""

    def ffn_kernel(x_ref,
                   w1_ref, b1_ref,
                   w2_ref, b2_ref,
                   w3_ref, b3_ref,
                   w4_ref, b4_ref,
                   w5_ref, b5_ref,
                   o_ref):
        def dense(h, w_ref, b_ref, relu, out_dtype):
            lhs = h if h.dtype == jnp.bfloat16 else h.astype(jnp.bfloat16)
            y = jnp.dot(lhs, w_ref[...], preferred_element_type=jnp.float32)
            y = y.astype(out_dtype) + b_ref[...].astype(out_dtype)
            if relu:
                y = jnp.maximum(y, 0.0)
            return y

        h = x_ref[...]                                   # (TILE_B, 896) bf16
        h = dense(h, w1_ref, b1_ref, True, act_dtype)    # (TILE_B, 640)
        h = dense(h, w2_ref, b2_ref, True, act_dtype)    # (TILE_B, 512)
        h = dense(h, w3_ref, b3_ref, True, act_dtype)    # (TILE_B, 256)
        h = dense(h, w4_ref, b4_ref, True, act_dtype)    # (TILE_B, 128)
        # Final logits layer keeps an f32 epilogue.
        o_ref[...] = dense(h, w5_ref, b5_ref, False,
                           jnp.float32).astype(o_ref.dtype)

    return ffn_kernel


def init_params(key):
    """f32 master params mimicking PyTorch nn.Linear default init.

    Weights are kept pre-transposed as (in_features, out_features)."""
    params = []
    for i in range(5):
        fan_in, fan_out = LAYER_DIMS[i], LAYER_DIMS[i + 1]
        key, kw, kb = jax.random.split(key, 3)
        bound = 1.0 / (fan_in ** 0.5)
        w = jax.random.uniform(kw, (fan_in, fan_out), jnp.float32, -bound, bound)
        b = jax.random.uniform(kb, (1, fan_out), jnp.float32, -bound, bound)
        params.append((w, b))
    return params


def prepare_params(params):
    """Zero-pad every layer to lane-dense shapes; weights bf16, biases f32."""
    padded = []
    for i, (w, b) in enumerate(params):
        din, dout = LAYER_DIMS[i], LAYER_DIMS[i + 1]
        pin, pout = PADDED_DIMS[i], PADDED_DIMS[i + 1]
        wp = jnp.zeros((pin, pout), jnp.bfloat16).at[:din, :dout].set(
            w.astype(jnp.bfloat16))
        bp = jnp.zeros((1, pout), jnp.float32).at[:, :dout].set(b)
        padded.append((wp, bp))
    return padded


def _build_in_specs(tile_b, single_buffer_weights):
    in_specs = [pl.BlockSpec((tile_b, PADDED_DIMS[0]), lambda i: (i, 0))]
    for li in range(5):
        pin, pout = PADDED_DIMS[li], PADDED_DIMS[li + 1]
        kwargs = {}
        if single_buffer_weights:
            # Constant block index -> a second buffer is pure VMEM waste.
            kwargs = dict(pipeline_mode=pl.Buffered(1))
        in_specs.append(pl.BlockSpec((pin, pout), lambda i: (0, 0), **kwargs))
        in_specs.append(pl.BlockSpec((1, pout), lambda i: (0, 0), **kwargs))
    return in_specs


def ff_net_forward(x, padded_params, tile_b=512, act_dtype=None):
    """x: (B, 784) f32.  padded_params: output of prepare_params."""
    B = x.shape[0]
    if act_dtype is None:
        act_dtype = _default_activation_dtype()

    # Batch-tile granularity of 16 (bf16 sublane packing).  Don't over-pad
    # tiny batches, and make sure mid/large batches split into >=2 grid steps
    # so the "parallel" batch axis shards across both v7x TensorCores and the
    # x-tile DMA stays pipelined.
    tile_b = min(tile_b, _round_up(B, 16))
    if B > 16:
        tile_b = min(tile_b, _round_up(pl.cdiv(B, 2), 16))
    tile_b = _round_up(tile_b, 16)
    Bp = _round_up(B, tile_b)

    # Ship the padded input as bf16; padded rows/cols are exact zeros.
    xp = jnp.zeros((Bp, PADDED_DIMS[0]), jnp.bfloat16)
    xp = xp.at[:B, :LAYER_DIMS[0]].set(x.astype(jnp.bfloat16))

    flat = []
    for w, b in padded_params:
        flat.extend([w, b])

    kernel = make_ffn_kernel(act_dtype)

    def run(single_buffer_weights):
        return pl.pallas_call(
            kernel,
            out_shape=jax.ShapeDtypeStruct((Bp, PADDED_DIMS[-1]), jnp.float32),
            grid=(Bp // tile_b,),
            in_specs=_build_in_specs(tile_b, single_buffer_weights),
            out_specs=pl.BlockSpec((tile_b, PADDED_DIMS[-1]), lambda i: (i, 0)),
            compiler_params=pltpu.CompilerParams(
                dimension_semantics=("parallel",),
                vmem_limit_bytes=48 * 1024 * 1024),
        )(xp, *flat)

    single_buffer = hasattr(pl, "Buffered")
    try:
        out_padded = run(single_buffer)
    except Exception:
        if not single_buffer:
            raise
        # pl.Buffered(1) unsupported on this jax/backend: fall back to the
        # default (double-buffered) resident-weight specs.
        out_padded = run(False)

    return out_padded[:B, :LAYER_DIMS[-1]]


def ff_net_reference(x, params, act_dtype=None):
    """Pure-JAX reference matching the kernel's bf16-weight / f32-acc math."""
    if act_dtype is None:
        act_dtype = _default_activation_dtype()
    h = x.astype(jnp.bfloat16)
    y = None
    for i, (w, b) in enumerate(params):
        y = jnp.dot(h, w.astype(jnp.bfloat16),
                    preferred_element_type=jnp.float32)
        if i < 4:
            y = y.astype(act_dtype) + b.astype(act_dtype)
            y = jnp.maximum(y, 0.0)
            h = y if y.dtype == jnp.bfloat16 else y.astype(jnp.bfloat16)
        else:
            y = y + b  # final layer: f32 epilogue
    return y.astype(jnp.float32)


if __name__ == "__main__":
    key = jax.random.PRNGKey(0)
    key, kx = jax.random.split(key)

    B = 8
    x = jax.random.normal(kx, (B, 784), jnp.float32)
    params = init_params(key)
    padded_params = prepare_params(params)

    out = ff_net_forward(x, padded_params)
    out = jax.block_until_ready(out)

    ref = ff_net_reference(x, params)
    assert out.shape == (B, 10), out.shape
    max_err = jnp.max(jnp.abs(out - ref))
    assert jnp.allclose(out, ref, atol=2e-2, rtol=2e-2), \
        f"max abs err {max_err}"

    print("KERNEL_OK")
</pallas_src>

<mosaic_0001>
module attributes {stable_mosaic.version = 11 : i64} {
  func.func @ffn_kernel(%arg0: i32, %arg1: memref<16x896xbf16, #tpu.memory_space<vmem>>, %arg2: memref<896x640xbf16, #tpu.memory_space<vmem>>, %arg3: memref<1x640xf32, #tpu.memory_space<vmem>>, %arg4: memref<640x512xbf16, #tpu.memory_space<vmem>>, %arg5: memref<1x512xf32, #tpu.memory_space<vmem>>, %arg6: memref<512x256xbf16, #tpu.memory_space<vmem>>, %arg7: memref<1x256xf32, #tpu.memory_space<vmem>>, %arg8: memref<256x128xbf16, #tpu.memory_space<vmem>>, %arg9: memref<1x128xf32, #tpu.memory_space<vmem>>, %arg10: memref<128x128xbf16, #tpu.memory_space<vmem>>, %arg11: memref<1x128xf32, #tpu.memory_space<vmem>>, %arg12: memref<16x128xf32, #tpu.memory_space<vmem>>) attributes {dimension_semantics = [#tpu.dimension_semantics<parallel>], iteration_bounds = array<i64: 1>, scalar_prefetch = 0 : i64, scratch_operands = 0 : i64, tpu.core_type = #tpu.core_type<tc>, window_params = [{transform_indices = @transform_0, window_bounds = array<i64: 16, 896>}, {pipeline_mode = #tpu.pipeline_mode<synchronous>, transform_indices = @transform_1, window_bounds = array<i64: 896, 640>}, {pipeline_mode = #tpu.pipeline_mode<synchronous>, transform_indices = @transform_2, window_bounds = array<i64: 1, 640>}, {pipeline_mode = #tpu.pipeline_mode<synchronous>, transform_indices = @transform_3, window_bounds = array<i64: 640, 512>}, {pipeline_mode = #tpu.pipeline_mode<synchronous>, transform_indices = @transform_4, window_bounds = array<i64: 1, 512>}, {pipeline_mode = #tpu.pipeline_mode<synchronous>, transform_indices = @transform_5, window_bounds = array<i64: 512, 256>}, {pipeline_mode = #tpu.pipeline_mode<synchronous>, transform_indices = @transform_6, window_bounds = array<i64: 1, 256>}, {pipeline_mode = #tpu.pipeline_mode<synchronous>, transform_indices = @transform_7, window_bounds = array<i64: 256, 128>}, {pipeline_mode = #tpu.pipeline_mode<synchronous>, transform_indices = @transform_8, window_bounds = array<i64: 1, 128>}, {pipeline_mode = #tpu.pipeline_mode<synchronous>, transform_indices = @transform_9, window_bounds = array<i64: 128, 128>}, {pipeline_mode = #tpu.pipeline_mode<synchronous>, transform_indices = @transform_10, window_bounds = array<i64: 1, 128>}, {transform_indices = @transform_11, window_bounds = array<i64: 16, 128>}]} {
    %c0 = arith.constant 0 : index
    %c0_0 = arith.constant 0 : index
    %0 = vector.load %arg1[%c0, %c0_0] : memref<16x896xbf16, #tpu.memory_space<vmem>>, vector<16x896xbf16>
    %c0_1 = arith.constant 0 : index
    %c0_2 = arith.constant 0 : index
    %1 = vector.load %arg2[%c0_1, %c0_2] : memref<896x640xbf16, #tpu.memory_space<vmem>>, vector<896x640xbf16>
    %cst = arith.constant dense<0.000000e+00> : vector<16x640xf32>
    %2 = tpu.matmul %0, %1, %cst {dimension_numbers = #tpu.dot_dimension_numbers<[1], [0], [0], [1], [0, 0, 1, 1], [], []>} : vector<16x896xbf16>, vector<896x640xbf16>, vector<16x640xf32> -> vector<16x640xf32>
    %3 = arith.truncf %2 : vector<16x640xf32> to vector<16x640xbf16>
    %c0_3 = arith.constant 0 : index
    %c0_4 = arith.constant 0 : index
    %4 = vector.load %arg3[%c0_3, %c0_4] : memref<1x640xf32, #tpu.memory_space<vmem>>, vector<1x640xf32>
    %5 = arith.truncf %4 : vector<1x640xf32> to vector<1x640xbf16>
    %6 = vector.broadcast %5 : vector<1x640xbf16> to vector<16x640xbf16>
    %7 = arith.addf %3, %6 : vector<16x640xbf16>
    %cst_5 = arith.constant 0.000000e+00 : bf16
    %8 = vector.broadcast %cst_5 : bf16 to vector<16x640xbf16>
    %9 = arith.maximumf %7, %8 : vector<16x640xbf16>
    %c0_6 = arith.constant 0 : index
    %c0_7 = arith.constant 0 : index
    %10 = vector.load %arg4[%c0_6, %c0_7] : memref<640x512xbf16, #tpu.memory_space<vmem>>, vector<640x512xbf16>
    %cst_8 = arith.constant dense<0.000000e+00> : vector<16x512xf32>
    %11 = tpu.matmul %9, %10, %cst_8 {dimension_numbers = #tpu.dot_dimension_numbers<[1], [0], [0], [1], [0, 0, 1, 1], [], []>} : vector<16x640xbf16>, vector<640x512xbf16>, vector<16x512xf32> -> vector<16x512xf32>
    %12 = arith.truncf %11 : vector<16x512xf32> to vector<16x512xbf16>
    %c0_9 = arith.constant 0 : index
    %c0_10 = arith.constant 0 : index
    %13 = vector.load %arg5[%c0_9, %c0_10] : memref<1x512xf32, #tpu.memory_space<vmem>>, vector<1x512xf32>
    %14 = arith.truncf %13 : vector<1x512xf32> to vector<1x512xbf16>
    %15 = vector.broadcast %14 : vector<1x512xbf16> to vector<16x512xbf16>
    %16 = arith.addf %12, %15 : vector<16x512xbf16>
    %cst_11 = arith.constant 0.000000e+00 : bf16
    %17 = vector.broadcast %cst_11 : bf16 to vector<16x512xbf16>
    %18 = arith.maximumf %16, %17 : vector<16x512xbf16>
    %c0_12 = arith.constant 0 : index
    %c0_13 = arith.constant 0 : index
    %19 = vector.load %arg6[%c0_12, %c0_13] : memref<512x256xbf16, #tpu.memory_space<vmem>>, vector<512x256xbf16>
    %cst_14 = arith.constant dense<0.000000e+00> : vector<16x256xf32>
    %20 = tpu.matmul %18, %19, %cst_14 {dimension_numbers = #tpu.dot_dimension_numbers<[1], [0], [0], [1], [0, 0, 1, 1], [], []>} : vector<16x512xbf16>, vector<512x256xbf16>, vector<16x256xf32> -> vector<16x256xf32>
    %21 = arith.truncf %20 : vector<16x256xf32> to vector<16x256xbf16>
    %c0_15 = arith.constant 0 : index
    %c0_16 = arith.constant 0 : index
    %22 = vector.load %arg7[%c0_15, %c0_16] : memref<1x256xf32, #tpu.memory_space<vmem>>, vector<1x256xf32>
    %23 = arith.truncf %22 : vector<1x256xf32> to vector<1x256xbf16>
    %24 = vector.broadcast %23 : vector<1x256xbf16> to vector<16x256xbf16>
    %25 = arith.addf %21, %24 : vector<16x256xbf16>
    %cst_17 = arith.constant 0.000000e+00 : bf16
    %26 = vector.broadcast %cst_17 : bf16 to vector<16x256xbf16>
    %27 = arith.maximumf %25, %26 : vector<16x256xbf16>
    %c0_18 = arith.constant 0 : index
    %c0_19 = arith.constant 0 : index
    %28 = vector.load %arg8[%c0_18, %c0_19] : memref<256x128xbf16, #tpu.memory_space<vmem>>, vector<256x128xbf16>
    %cst_20 = arith.constant dense<0.000000e+00> : vector<16x128xf32>
    %29 = tpu.matmul %27, %28, %cst_20 {dimension_numbers = #tpu.dot_dimension_numbers<[1], [0], [0], [1], [0, 0, 1, 1], [], []>} : vector<16x256xbf16>, vector<256x128xbf16>, vector<16x128xf32> -> vector<16x128xf32>
    %30 = arith.truncf %29 : vector<16x128xf32> to vector<16x128xbf16>
    %c0_21 = arith.constant 0 : index
    %c0_22 = arith.constant 0 : index
    %31 = vector.load %arg9[%c0_21, %c0_22] : memref<1x128xf32, #tpu.memory_space<vmem>>, vector<1x128xf32>
    %32 = arith.truncf %31 : vector<1x128xf32> to vector<1x128xbf16>
    %33 = vector.broadcast %32 : vector<1x128xbf16> to vector<16x128xbf16>
    %34 = arith.addf %30, %33 : vector<16x128xbf16>
    %cst_23 = arith.constant 0.000000e+00 : bf16
    %35 = vector.broadcast %cst_23 : bf16 to vector<16x128xbf16>
    %36 = arith.maximumf %34, %35 : vector<16x128xbf16>
    %c0_24 = arith.constant 0 : index
    %c0_25 = arith.constant 0 : index
    %37 = vector.load %arg10[%c0_24, %c0_25] : memref<128x128xbf16, #tpu.memory_space<vmem>>, vector<128x128xbf16>
    %cst_26 = arith.constant dense<0.000000e+00> : vector<16x128xf32>
    %38 = tpu.matmul %36, %37, %cst_26 {dimension_numbers = #tpu.dot_dimension_numbers<[1], [0], [0], [1], [0, 0, 1, 1], [], []>} : vector<16x128xbf16>, vector<128x128xbf16>, vector<16x128xf32> -> vector<16x128xf32>
    %c0_27 = arith.constant 0 : index
    %c0_28 = arith.constant 0 : index
    %39 = vector.load %arg11[%c0_27, %c0_28] : memref<1x128xf32, #tpu.memory_space<vmem>>, vector<1x128xf32>
    %40 = vector.broadcast %39 : vector<1x128xf32> to vector<16x128xf32>
    %41 = arith.addf %38, %40 : vector<16x128xf32>
    %c0_29 = arith.constant 0 : index
    %c0_30 = arith.constant 0 : index
    %42 = vector.load %arg12[%c0_29, %c0_30] : memref<16x128xf32, #tpu.memory_space<vmem>>, vector<16x128xf32>
    tpu.vector_store %arg12[%c0_29, %c0_30], %41 {strides = array<i32>} : memref<16x128xf32, #tpu.memory_space<vmem>>, vector<16x128xf32>,
    return
  }
  func.func @transform_0(%arg0: i32) -> (i32, i32) {
    %c0_i32 = arith.constant 0 : i32
    %c0_i32_0 = arith.constant 0 : i32
    return %arg0, %c0_i32 : i32, i32
  }
  func.func @transform_1(%arg0: i32) -> (i32, i32) {
    %c0_i32 = arith.constant 0 : i32
    %c0_i32_0 = arith.constant 0 : i32
    %c0_i32_1 = arith.constant 0 : i32
    return %c0_i32, %c0_i32_0 : i32, i32
  }
  func.func @transform_2(%arg0: i32) -> (i32, i32) {
    %c0_i32 = arith.constant 0 : i32
    %c0_i32_0 = arith.constant 0 : i32
    %c0_i32_1 = arith.constant 0 : i32
    return %c0_i32, %c0_i32_0 : i32, i32
  }
  func.func @transform_3(%arg0: i32) -> (i32, i32) {
    %c0_i32 = arith.constant 0 : i32
    %c0_i32_0 = arith.constant 0 : i32
    %c0_i32_1 = arith.constant 0 : i32
    return %c0_i32, %c0_i32_0 : i32, i32
  }
  func.func @transform_4(%arg0: i32) -> (i32, i32) {
    %c0_i32 = arith.constant 0 : i32
    %c0_i32_0 = arith.constant 0 : i32
    %c0_i32_1 = arith.constant 0 : i32
    return %c0_i32, %c0_i32_0 : i32, i32
  }
  func.func @transform_5(%arg0: i32) -> (i32, i32) {
    %c0_i32 = arith.constant 0 : i32
    %c0_i32_0 = arith.constant 0 : i32
    %c0_i32_1 = arith.constant 0 : i32
    return %c0_i32, %c0_i32_0 : i32, i32
  }
  func.func @transform_6(%arg0: i32) -> (i32, i32) {
    %c0_i32 = arith.constant 0 : i32
    %c0_i32_0 = arith.constant 0 : i32
    %c0_i32_1 = arith.constant 0 : i32
    return %c0_i32, %c0_i32_0 : i32, i32
  }
  func.func @transform_7(%arg0: i32) -> (i32, i32) {
    %c0_i32 = arith.constant 0 : i32
    %c0_i32_0 = arith.constant 0 : i32
    %c0_i32_1 = arith.constant 0 : i32
    return %c0_i32, %c0_i32_0 : i32, i32
  }
  func.func @transform_8(%arg0: i32) -> (i32, i32) {
    %c0_i32 = arith.constant 0 : i32
    %c0_i32_0 = arith.constant 0 : i32
    %c0_i32_1 = arith.constant 0 : i32
    return %c0_i32, %c0_i32_0 : i32, i32
  }
  func.func @transform_9(%arg0: i32) -> (i32, i32) {
    %c0_i32 = arith.constant 0 : i32
    %c0_i32_0 = arith.constant 0 : i32
    %c0_i32_1 = arith.constant 0 : i32
    return %c0_i32, %c0_i32_0 : i32, i32
  }
  func.func @transform_10(%arg0: i32) -> (i32, i32) {
    %c0_i32 = arith.constant 0 : i32
    %c0_i32_0 = arith.constant 0 : i32
    %c0_i32_1 = arith.constant 0 : i32
    return %c0_i32, %c0_i32_0 : i32, i32
  }
  func.func @transform_11(%arg0: i32) -> (i32, i32) {
    %c0_i32 = arith.constant 0 : i32
    %c0_i32_0 = arith.constant 0 : i32
    return %arg0, %c0_i32 : i32, i32
  }
}

module attributes {stable_mosaic.version = 11 : i64} {
  func.func @ffn_kernel(%arg0: i32, %arg1: memref<16x896xbf16, #tpu.memory_space<vmem>>, %arg2: memref<896x640xbf16, #tpu.memory_space<vmem>>, %arg3: memref<1x640xf32, #tpu.memory_space<vmem>>, %arg4: memref<640x512xbf16, #tpu.memory_space<vmem>>, %arg5: memref<1x512xf32, #tpu.memory_space<vmem>>, %arg6: memref<512x256xbf16, #tpu.memory_space<vmem>>, %arg7: memref<1x256xf32, #tpu.memory_space<vmem>>, %arg8: memref<256x128xbf16, #tpu.memory_space<vmem>>, %arg9: memref<1x128xf32, #tpu.memory_space<vmem>>, %arg10: memref<128x128xbf16, #tpu.memory_space<vmem>>, %arg11: memref<1x128xf32, #tpu.memory_space<vmem>>, %arg12: memref<16x128xf32, #tpu.memory_space<vmem>>) attributes {dimension_semantics = [#tpu.dimension_semantics<parallel>], iteration_bounds = array<i64: 1>, scalar_prefetch = 0 : i64, scratch_operands = 0 : i64, tpu.core_type = #tpu.core_type<tc>, window_params = [{transform_indices = @transform_0, window_bounds = array<i64: 16, 896>}, {pipeline_mode = #tpu.pipeline_mode<synchronous>, transform_indices = @transform_1, window_bounds = array<i64: 896, 640>}, {pipeline_mode = #tpu.pipeline_mode<synchronous>, transform_indices = @transform_2, window_bounds = array<i64: 1, 640>}, {pipeline_mode = #tpu.pipeline_mode<synchronous>, transform_indices = @transform_3, window_bounds = array<i64: 640, 512>}, {pipeline_mode = #tpu.pipeline_mode<synchronous>, transform_indices = @transform_4, window_bounds = array<i64: 1, 512>}, {pipeline_mode = #tpu.pipeline_mode<synchronous>, transform_indices = @transform_5, window_bounds = array<i64: 512, 256>}, {pipeline_mode = #tpu.pipeline_mode<synchronous>, transform_indices = @transform_6, window_bounds = array<i64: 1, 256>}, {pipeline_mode = #tpu.pipeline_mode<synchronous>, transform_indices = @transform_7, window_bounds = array<i64: 256, 128>}, {pipeline_mode = #tpu.pipeline_mode<synchronous>, transform_indices = @transform_8, window_bounds = array<i64: 1, 128>}, {pipeline_mode = #tpu.pipeline_mode<synchronous>, transform_indices = @transform_9, window_bounds = array<i64: 128, 128>}, {pipeline_mode = #tpu.pipeline_mode<synchronous>, transform_indices = @transform_10, window_bounds = array<i64: 1, 128>}, {transform_indices = @transform_11, window_bounds = array<i64: 16, 128>}]} {
    %c0 = arith.constant 0 : index
    %c0_0 = arith.constant 0 : index
    %0 = vector.load %arg1[%c0, %c0_0] : memref<16x896xbf16, #tpu.memory_space<vmem>>, vector<16x896xbf16>
    %c0_1 = arith.constant 0 : index
    %c0_2 = arith.constant 0 : index
    %1 = vector.load %arg2[%c0_1, %c0_2] : memref<896x640xbf16, #tpu.memory_space<vmem>>, vector<896x640xbf16>
    %cst = arith.constant dense<0.000000e+00> : vector<16x640xf32>
    %2 = tpu.matmul %0, %1, %cst {dimension_numbers = #tpu.dot_dimension_numbers<[1], [0], [0], [1], [0, 0, 1, 1], [], []>} : vector<16x896xbf16>, vector<896x640xbf16>, vector<16x640xf32> -> vector<16x640xf32>
    %3 = arith.truncf %2 : vector<16x640xf32> to vector<16x640xbf16>
    %c0_3 = arith.constant 0 : index
    %c0_4 = arith.constant 0 : index
    %4 = vector.load %arg3[%c0_3, %c0_4] : memref<1x640xf32, #tpu.memory_space<vmem>>, vector<1x640xf32>
    %5 = arith.truncf %4 : vector<1x640xf32> to vector<1x640xbf16>
    %6 = vector.broadcast %5 : vector<1x640xbf16> to vector<16x640xbf16>
    %7 = arith.addf %3, %6 : vector<16x640xbf16>
    %cst_5 = arith.constant 0.000000e+00 : bf16
    %8 = vector.broadcast %cst_5 : bf16 to vector<16x640xbf16>
    %9 = arith.maximumf %7, %8 : vector<16x640xbf16>
    %c0_6 = arith.constant 0 : index
    %c0_7 = arith.constant 0 : index
    %10 = vector.load %arg4[%c0_6, %c0_7] : memref<640x512xbf16, #tpu.memory_space<vmem>>, vector<640x512xbf16>
    %cst_8 = arith.constant dense<0.000000e+00> : vector<16x512xf32>
    %11 = tpu.matmul %9, %10, %cst_8 {dimension_numbers = #tpu.dot_dimension_numbers<[1], [0], [0], [1], [0, 0, 1, 1], [], []>} : vector<16x640xbf16>, vector<640x512xbf16>, vector<16x512xf32> -> vector<16x512xf32>
    %12 = arith.truncf %11 : vector<16x512xf32> to vector<16x512xbf16>
    %c0_9 = arith.constant 0 : index
    %c0_10 = arith.constant 0 : index
    %13 = vector.load %arg5[%c0_9, %c0_10] : memref<1x512xf32, #tpu.memory_space<vmem>>, vector<1x512xf32>
    %14 = arith.truncf %13 : vector<1x512xf32> to vector<1x512xbf16>
    %15 = vector.broadcast %14 : vector<1x512xbf16> to vector<16x512xbf16>
    %16 = arith.addf %12, %15 : vector<16x512xbf16>
    %cst_11 = arith.constant 0.000000e+00 : bf16
    %17 = vector.broadcast %cst_11 : bf16 to vector<16x512xbf16>
    %18 = arith.maximumf %16, %17 : vector<16x512xbf16>
    %c0_12 = arith.constant 0 : index
    %c0_13 = arith.constant 0 : index
    %19 = vector.load %arg6[%c0_12, %c0_13] : memref<512x256xbf16, #tpu.memory_space<vmem>>, vector<512x256xbf16>
    %cst_14 = arith.constant dense<0.000000e+00> : vector<16x256xf32>
    %20 = tpu.matmul %18, %19, %cst_14 {dimension_numbers = #tpu.dot_dimension_numbers<[1], [0], [0], [1], [0, 0, 1, 1], [], []>} : vector<16x512xbf16>, vector<512x256xbf16>, vector<16x256xf32> -> vector<16x256xf32>
    %21 = arith.truncf %20 : vector<16x256xf32> to vector<16x256xbf16>
    %c0_15 = arith.constant 0 : index
    %c0_16 = arith.constant 0 : index
    %22 = vector.load %arg7[%c0_15, %c0_16] : memref<1x256xf32, #tpu.memory_space<vmem>>, vector<1x256xf32>
    %23 = arith.truncf %22 : vector<1x256xf32> to vector<1x256xbf16>
    %24 = vector.broadcast %23 : vector<1x256xbf16> to vector<16x256xbf16>
    %25 = arith.addf %21, %24 : vector<16x256xbf16>
    %cst_17 = arith.constant 0.000000e+00 : bf16
    %26 = vector.broadcast %cst_17 : bf16 to vector<16x256xbf16>
    %27 = arith.maximumf %25, %26 : vector<16x256xbf16>
    %c0_18 = arith.constant 0 : index
    %c0_19 = arith.constant 0 : index
    %28 = vector.load %arg8[%c0_18, %c0_19] : memref<256x128xbf16, #tpu.memory_space<vmem>>, vector<256x128xbf16>
    %cst_20 = arith.constant dense<0.000000e+00> : vector<16x128xf32>
    %29 = tpu.matmul %27, %28, %cst_20 {dimension_numbers = #tpu.dot_dimension_numbers<[1], [0], [0], [1], [0, 0, 1, 1], [], []>} : vector<16x256xbf16>, vector<256x128xbf16>, vector<16x128xf32> -> vector<16x128xf32>
    %30 = arith.truncf %29 : vector<16x128xf32> to vector<16x128xbf16>
    %c0_21 = arith.constant 0 : index
    %c0_22 = arith.constant 0 : index
    %31 = vector.load %arg9[%c0_21, %c0_22] : memref<1x128xf32, #tpu.memory_space<vmem>>, vector<1x128xf32>
    %32 = arith.truncf %31 : vector<1x128xf32> to vector<1x128xbf16>
    %33 = vector.broadcast %32 : vector<1x128xbf16> to vector<16x128xbf16>
    %34 = arith.addf %30, %33 : vector<16x128xbf16>
    %cst_23 = arith.constant 0.000000e+00 : bf16
    %35 = vector.broadcast %cst_23 : bf16 to vector<16x128xbf16>
    %36 = arith.maximumf %34, %35 : vector<16x128xbf16>
    %c0_24 = arith.constant 0 : index
    %c0_25 = arith.constant 0 : index
    %37 = vector.load %arg10[%c0_24, %c0_25] : memref<128x128xbf16, #tpu.memory_space<vmem>>, vector<128x128xbf16>
    %cst_26 = arith.constant dense<0.000000e+00> : vector<16x128xf32>
    %38 = tpu.matmul %36, %37, %cst_26 {dimension_numbers = #tpu.dot_dimension_numbers<[1], [0], [0], [1], [0, 0, 1, 1], [], []>} : vector<16x128xbf16>, vector<128x128xbf16>, vector<16x128xf32> -> vector<16x128xf32>
    %c0_27 = arith.constant 0 : index
    %c0_28 = arith.constant 0 : index
    %39 = vector.load %arg11[%c0_27, %c0_28] : memref<1x128xf32, #tpu.memory_space<vmem>>, vector<1x128xf32>
    %40 = vector.broadcast %39 : vector<1x128xf32> to vector<16x128xf32>
    %41 = arith.addf %38, %40 : vector<16x128xf32>
    %c0_29 = arith.constant 0 : index
    %c0_30 = arith.constant 0 : index
    %42 = vector.load %arg12[%c0_29, %c0_30] : memref<16x128xf32, #tpu.memory_space<vmem>>, vector<16x128xf32>
    tpu.vector_store %arg12[%c0_29, %c0_30], %41 {strides = array<i32>} : memref<16x128xf32, #tpu.memory_space<vmem>>, vector<16x128xf32>,
    return
  }
  func.func @transform_0(%arg0: i32) -> (i32, i32) {
    %c0_i32 = arith.constant 0 : i32
    %c0_i32_0 = arith.constant 0 : i32
    return %arg0, %c0_i32 : i32, i32
  }
  func.func @transform_1(%arg0: i32) -> (i32, i32) {
    %c0_i32 = arith.constant 0 : i32
    %c0_i32_0 = arith.constant 0 : i32
    %c0_i32_1 = arith.constant 0 : i32
    return %c0_i32, %c0_i32_0 : i32, i32
  }
  func.func @transform_2(%arg0: i32) -> (i32, i32) {
    %c0_i32 = arith.constant 0 : i32
    %c0_i32_0 = arith.constant 0 : i32
    %c0_i32_1 = arith.constant 0 : i32
    return %c0_i32, %c0_i32_0 : i32, i32
  }
  func.func @transform_3(%arg0: i32) -> (i32, i32) {
    %c0_i32 = arith.constant 0 : i32
    %c0_i32_0 = arith.constant 0 : i32
    %c0_i32_1 = arith.constant 0 : i32
    return %c0_i32, %c0_i32_0 : i32, i32
  }
  func.func @transform_4(%arg0: i32) -> (i32, i32) {
    %c0_i32 = arith.constant 0 : i32
    %c0_i32_0 = arith.constant 0 : i32
    %c0_i32_1 = arith.constant 0 : i32
    return %c0_i32, %c0_i32_0 : i32, i32
  }
  func.func @transform_5(%arg0: i32) -> (i32, i32) {
    %c0_i32 = arith.constant 0 : i32
    %c0_i32_0 = arith.constant 0 : i32
    %c0_i32_1 = arith.constant 0 : i32
    return %c0_i32, %c0_i32_0 : i32, i32
  }
  func.func @transform_6(%arg0: i32) -> (i32, i32) {
    %c0_i32 = arith.constant 0 : i32
    %c0_i32_0 = arith.constant 0 : i32
    %c0_i32_1 = arith.constant 0 : i32
    return %c0_i32, %c0_i32_0 : i32, i32
  }
  func.func @transform_7(%arg0: i32) -> (i32, i32) {
    %c0_i32 = arith.constant 0 : i32
    %c0_i32_0 = arith.constant 0 : i32
    %c0_i32_1 = arith.constant 0 : i32
    return %c0_i32, %c0_i32_0 : i32, i32
  }
  func.func @transform_8(%arg0: i32) -> (i32, i32) {
    %c0_i32 = arith.constant 0 : i32
    %c0_i32_0 = arith.constant 0 : i32
    %c0_i32_1 = arith.constant 0 : i32
    return %c0_i32, %c0_i32_0 : i32, i32
  }
  func.func @transform_9(%arg0: i32) -> (i32, i32) {
    %c0_i32 = arith.constant 0 : i32
    %c0_i32_0 = arith.constant 0 : i32
    %c0_i32_1 = arith.constant 0 : i32
    return %c0_i32, %c0_i32_0 : i32, i32
  }
  func.func @transform_10(%arg0: i32) -> (i32, i32) {
    %c0_i32 = arith.constant 0 : i32
    %c0_i32_0 = arith.constant 0 : i32
    %c0_i32_1 = arith.constant 0 : i32
    return %c0_i32, %c0_i32_0 : i32, i32
  }
  func.func @transform_11(%arg0: i32) -> (i32, i32) {
    %c0_i32 = arith.constant 0 : i32
    %c0_i32_0 = arith.constant 0 : i32
    return %arg0, %c0_i32 : i32, i32
  }
}

</mosaic_0001>

<llo_original>
// kernel: tpu_custom_call.1
$region0: #{tpu_custom_call.1}
  #allocation0 [shape = 'u32[]', space=smem, size = 0x4, offset = 0x4, fixed_abs, tag = 'smem constant byte address 0x4 - core index']
  #allocation1 [shape = 'u32[144,128]{1,0:T(1,128)}', space=vmem, size = 0x12000, scoped, tag = 'internal scratch']
  %s0 = inlined_call_operand.hbm [shape: bf16[16,896], index: 0, kind: input, shape index: {}]
  %s1 = inlined_call_operand.hbm [shape: bf16[896,640], index: 1, kind: input, shape index: {}]
  %s2 = inlined_call_operand.hbm [shape: f32[1,640], index: 2, kind: input, shape index: {}]
  %s3 = inlined_call_operand.hbm [shape: bf16[640,512], index: 3, kind: input, shape index: {}]
  %s4 = inlined_call_operand.hbm [shape: f32[1,512], index: 4, kind: input, shape index: {}]
  %s5 = inlined_call_operand.hbm [shape: bf16[512,256], index: 5, kind: input, shape index: {}]
  %s6 = inlined_call_operand.hbm [shape: f32[1,256], index: 6, kind: input, shape index: {}]
  %s7 = inlined_call_operand.hbm [shape: bf16[256,128], index: 7, kind: input, shape index: {}]
  %s8 = inlined_call_operand.hbm [shape: f32[1,128], index: 8, kind: input, shape index: {}]
  %s9 = inlined_call_operand.hbm [shape: bf16[128,128], index: 9, kind: input, shape index: {}]
  %s10 = inlined_call_operand.hbm [shape: f32[1,128], index: 10, kind: input, shape index: {}]
  %s11 = inlined_call_operand.hbm [shape: f32[16,128], index: 11, kind: output, shape index: {}]
  %s12 = sld [smem:[#allocation0]]
  $region98: #{tpu_custom_call.1} parent=0
    _
  %s14 = ssub.s32 1, %s12
  %s15 = scalar_select 0, %s14, %s12
  $region1: #{tpu_custom_call.1} parent=0
    #allocation2 [shape = 'u8[28672]{0}', space=vmem, size = 0x7000, scoped, tag = 'input window, operand 0, single buffered']
    #allocation3 [shape = 's32[1]{0}', space=sflag, size = 0x4, scoped, tag = 'scoped memory for tpu_custom_call.1']
    #allocation4 [shape = 's32[1]{0}', space=sflag, size = 0x4, scoped, tag = 'scoped memory for tpu_custom_call.1']
    #allocation5 [shape = 'u8[1146880]{0}', space=vmem, size = 0x118000, scoped, tag = 'input window, operand 1, single buffered']
    #allocation6 [shape = 's32[1]{0}', space=sflag, size = 0x4, scoped, tag = 'scoped memory for tpu_custom_call.1']
    #allocation7 [shape = 'u8[2560]{0}', space=vmem, size = 0xc00, scoped, tag = 'input window, operand 2, single buffered']
    #allocation8 [shape = 'u8[655360]{0}', space=vmem, size = 0xa0000, scoped, tag = 'input window, operand 3, single buffered']
    #allocation9 [shape = 's32[1]{0}', space=sflag, size = 0x4, scoped, tag = 'scoped memory for tpu_custom_call.1']
    #allocation10 [shape = 'u8[2048]{0}', space=vmem, size = 0x800, scoped, tag = 'input window, operand 4, single buffered']
    #allocation11 [shape = 'u8[262144]{0}', space=vmem, size = 0x40000, scoped, tag = 'input window, operand 5, single buffered']
    #allocation12 [shape = 's32[1]{0}', space=sflag, size = 0x4, scoped, tag = 'scoped memory for tpu_custom_call.1']
    #allocation13 [shape = 'u8[1024]{0}', space=vmem, size = 0x400, scoped, tag = 'input window, operand 6, single buffered']
    #allocation14 [shape = 'u8[65536]{0}', space=vmem, size = 0x10000, scoped, tag = 'input window, operand 7, single buffered']
    #allocation15 [shape = 's32[1]{0}', space=sflag, size = 0x4, scoped, tag = 'scoped memory for tpu_custom_call.1']
    #allocation16 [shape = 'u8[512]{0}', space=vmem, size = 0x400, scoped, tag = 'input window, operand 8, single buffered']
    #allocation17 [shape = 'u8[32768]{0}', space=vmem, size = 0x8000, scoped, tag = 'input window, operand 9, single buffered']
    #allocation18 [shape = 's32[1]{0}', space=sflag, size = 0x4, scoped, tag = 'scoped memory for tpu_custom_call.1']
    #allocation19 [shape = 'u8[512]{0}', space=vmem, size = 0x400, scoped, tag = 'input window, operand 10, single buffered']
    #allocation20 [shape = 'u8[8192]{0}', space=vmem, size = 0x2000, scoped, tag = 'output window, operand 0, single buffered']
    %16 = vsyncpa [#allocation3], 0
    %17 = vsyncpa [#allocation6], 0
    %18 = vsyncpa [#allocation9], 0
    %19 = vsyncpa [#allocation12], 0
    %20 = vsyncpa [#allocation15], 0
    %21 = vsyncpa [#allocation18], 0
    %22 = vsyncpa [#allocation4], 0
    // Predicated region
    $region2: #{tpu_custom_call.1} parent=1 // pred_check
      _
    $region3: #{tpu_custom_call.1} parent=1 // pred_check_branch
      %24 = sbr.rel (0) target = $region5
    $region4: #{tpu_custom_call.1} parent=1 // pred_region
      %s26 = ssub.s32 896, 896
      %27 = vsyncadd [#allocation3], %s26
      %s28 = sshll.u32 [#allocation2], 4
      %s29 = int_to_ptr.vmem [resolvable:$true] %s28
      %34 = dma.hbm_to_vmem [thread:$0]  %s0, 896, %s29, [#allocation3], 448, 448, 28
    $region5: #{tpu_custom_call.1} parent=1 // pred_fallthru
      _
    // Predicated region
    $region6: #{tpu_custom_call.1} parent=1 // pred_check
      _
    $region7: #{tpu_custom_call.1} parent=1 // pred_check_branch
      %36 = sbr.rel (0) target = $region9
    $region8: #{tpu_custom_call.1} parent=1 // pred_region
      %s38 = ssub.s32 35840, 35840
      %39 = vsyncadd [#allocation6], %s38
      %s40 = sshll.u32 [#allocation5], 4
      %s41 = int_to_ptr.vmem [resolvable:$true] %s40
      %46 = dma.hbm_to_vmem [thread:$0]  %s1, 35840, %s41, [#allocation6], 320, 320, 20
    $region9: #{tpu_custom_call.1} parent=1 // pred_fallthru
      _
    // Predicated region
    $region10: #{tpu_custom_call.1} parent=1 // pred_check
      _
    $region11: #{tpu_custom_call.1} parent=1 // pred_check_branch
      %48 = sbr.rel (0) target = $region13
    $region12: #{tpu_custom_call.1} parent=1 // pred_region
      %s50 = ssub.s32 80, 80
      %51 = vsyncadd [#allocation6], %s50
      %s53 = sshll.u32 [#allocation7], 4
      %s54 = int_to_ptr.vmem [resolvable:$true] %s53
      %56 = dma.hbm_to_vmem [thread:$0]  %s2, 80, %s54, [#allocation6]
    $region13: #{tpu_custom_call.1} parent=1 // pred_fallthru
      _
    // Predicated region
    $region14: #{tpu_custom_call.1} parent=1 // pred_check
      _
    $region15: #{tpu_custom_call.1} parent=1 // pred_check_branch
      %58 = sbr.rel (0) target = $region17
    $region16: #{tpu_custom_call.1} parent=1 // pred_region
      %s60 = ssub.s32 20480, 20480
      %61 = vsyncadd [#allocation9], %s60
      %s62 = sshll.u32 [#allocation8], 4
      %s63 = int_to_ptr.vmem [resolvable:$true] %s62
      %68 = dma.hbm_to_vmem [thread:$0]  %s3, 20480, %s63, [#allocation9], 256, 256, 16
    $region17: #{tpu_custom_call.1} parent=1 // pred_fallthru
      _
    // Predicated region
    $region18: #{tpu_custom_call.1} parent=1 // pred_check
      _
    $region19: #{tpu_custom_call.1} parent=1 // pred_check_branch
      %70 = sbr.rel (0) target = $region21
    $region20: #{tpu_custom_call.1} parent=1 // pred_region
      %s72 = ssub.s32 64, 64
      %73 = vsyncadd [#allocation9], %s72
      %s75 = sshll.u32 [#allocation10], 4
      %s76 = int_to_ptr.vmem [resolvable:$true] %s75
      %78 = dma.hbm_to_vmem [thread:$0]  %s4, 64, %s76, [#allocation9]
    $region21: #{tpu_custom_call.1} parent=1 // pred_fallthru
      _
    // Predicated region
    $region22: #{tpu_custom_call.1} parent=1 // pred_check
      _
    $region23: #{tpu_custom_call.1} parent=1 // pred_check_branch
      %80 = sbr.rel (0) target = $region25
    $region24: #{tpu_custom_call.1} parent=1 // pred_region
      %s82 = ssub.s32 8192, 8192
      %83 = vsyncadd [#allocation12], %s82
      %s84 = sshll.u32 [#allocation11], 4
      %s85 = int_to_ptr.vmem [resolvable:$true] %s84
      %90 = dma.hbm_to_vmem [thread:$0]  %s5, 8192, %s85, [#allocation12], 128, 128, 8
    $region25: #{tpu_custom_call.1} parent=1 // pred_fallthru
      _
    // Predicated region
    $region26: #{tpu_custom_call.1} parent=1 // pred_check
      _
    $region27: #{tpu_custom_call.1} parent=1 // pred_check_branch
      %92 = sbr.rel (0) target = $region29
    $region28: #{tpu_custom_call.1} parent=1 // pred_region
      %s94 = ssub.s32 32, 32
      %95 = vsyncadd [#allocation12], %s94
      %s97 = sshll.u32 [#allocation13], 4
      %s98 = int_to_ptr.vmem [resolvable:$true] %s97
      %100 = dma.hbm_to_vmem [thread:$0]  %s6, 32, %s98, [#allocation12]
    $region29: #{tpu_custom_call.1} parent=1 // pred_fallthru
      _
    // Predicated region
    $region30: #{tpu_custom_call.1} parent=1 // pred_check
      _
    $region31: #{tpu_custom_call.1} parent=1 // pred_check_branch
      %102 = sbr.rel (0) target = $region33
    $region32: #{tpu_custom_call.1} parent=1 // pred_region
      %s104 = ssub.s32 2048, 2048
      %105 = vsyncadd [#allocation15], %s104
      %s106 = sshll.u32 [#allocation14], 4
      %s107 = int_to_ptr.vmem [resolvable:$true] %s106
      %112 = dma.hbm_to_vmem [thread:$0]  %s7, 2048, %s107, [#allocation15], 64, 64, 4
    $region33: #{tpu_custom_call.1} parent=1 // pred_fallthru
      _
    // Predicated region
    $region34: #{tpu_custom_call.1} parent=1 // pred_check
      _
    $region35: #{tpu_custom_call.1} parent=1 // pred_check_branch
      %114 = sbr.rel (0) target = $region37
    $region36: #{tpu_custom_call.1} parent=1 // pred_region
      %s116 = ssub.s32 16, 16
      %117 = vsyncadd [#allocation15], %s116
      %s119 = sshll.u32 [#allocation16], 4
      %s120 = int_to_ptr.vmem [resolvable:$true] %s119
      %122 = dma.hbm_to_vmem [thread:$0]  %s8, 16, %s120, [#allocation15]
    $region37: #{tpu_custom_call.1} parent=1 // pred_fallthru
      _
    // Predicated region
    $region38: #{tpu_custom_call.1} parent=1 // pred_check
      _
    $region39: #{tpu_custom_call.1} parent=1 // pred_check_branch
      %124 = sbr.rel (0) target = $region41
    $region40: #{tpu_custom_call.1} parent=1 // pred_region
      %s126 = ssub.s32 1024, 1024
      %127 = vsyncadd [#allocation18], %s126
      %s128 = sshll.u32 [#allocation17], 4
      %s129 = int_to_ptr.vmem [resolvable:$true] %s128
      %134 = dma.hbm_to_vmem [thread:$0]  %s9, 1024, %s129, [#allocation18], 64, 64, 4
    $region41: #{tpu_custom_call.1} parent=1 // pred_fallthru
      _
    // Predicated region
    $region42: #{tpu_custom_call.1} parent=1 // pred_check
      _
    $region43: #{tpu_custom_call.1} parent=1 // pred_check_branch
      %136 = sbr.rel (0) target = $region45
    $region44: #{tpu_custom_call.1} parent=1 // pred_region
      %s138 = ssub.s32 16, 16
      %139 = vsyncadd [#allocation18], %s138
      %s141 = sshll.u32 [#allocation19], 4
      %s142 = int_to_ptr.vmem [resolvable:$true] %s141
      %144 = dma.hbm_to_vmem [thread:$0]  %s10, 16, %s142, [#allocation18]
    $region45: #{tpu_custom_call.1} parent=1 // pred_fallthru
      _
    // Predicated region
    $region46: #{tpu_custom_call.1} parent=1 // pred_check
      _
    $region47: #{tpu_custom_call.1} parent=1 // pred_check_branch
      %146 = sbr.rel (0) target = $region49
    $region48: #{tpu_custom_call.1} parent=1 // pred_region
      %147 = dma.done [#allocation3], 896
    $region49: #{tpu_custom_call.1} parent=1 // pred_fallthru
      _
    // Predicated region
    $region50: #{tpu_custom_call.1} parent=1 // pred_check
      _
    $region51: #{tpu_custom_call.1} parent=1 // pred_check_branch
      %149 = sbr.rel (0) target = $region53
    $region52: #{tpu_custom_call.1} parent=1 // pred_region
      %150 = dma.done [#allocation6], 35840
    $region53: #{tpu_custom_call.1} parent=1 // pred_fallthru
      _
    // Predicated region
    $region54: #{tpu_custom_call.1} parent=1 // pred_check
      _
    $region55: #{tpu_custom_call.1} parent=1 // pred_check_branch
      %152 = sbr.rel (0) target = $region57
    $region56: #{tpu_custom_call.1} parent=1 // pred_region
      %153 = dma.done [#allocation6], 80
    $region57: #{tpu_custom_call.1} parent=1 // pred_fallthru
      _
    // Predicated region
    $region58: #{tpu_custom_call.1} parent=1 // pred_check
      _
    $region59: #{tpu_custom_call.1} parent=1 // pred_check_branch
      %155 = sbr.rel (0) target = $region61
    $region60: #{tpu_custom_call.1} parent=1 // pred_region
      %156 = dma.done [#allocation9], 20480
    $region61: #{tpu_custom_call.1} parent=1 // pred_fallthru
      _
    // Predicated region
    $region62: #{tpu_custom_call.1} parent=1 // pred_check
      _
    $region63: #{tpu_custom_call.1} parent=1 // pred_check_branch
      %158 = sbr.rel (0) target = $region65
    $region64: #{tpu_custom_call.1} parent=1 // pred_region
      %159 = dma.done [#allocation9], 64
    $region65: #{tpu_custom_call.1} parent=1 // pred_fallthru
      _
    // Predicated region
    $region66: #{tpu_custom_call.1} parent=1 // pred_check
      _
    $region67: #{tpu_custom_call.1} parent=1 // pred_check_branch
      %161 = sbr.rel (0) target = $region69
    $region68: #{tpu_custom_call.1} parent=1 // pred_region
      %162 = dma.done [#allocation12], 8192
    $region69: #{tpu_custom_call.1} parent=1 // pred_fallthru
      _
    // Predicated region
    $region70: #{tpu_custom_call.1} parent=1 // pred_check
      _
    $region71: #{tpu_custom_call.1} parent=1 // pred_check_branch
      %164 = sbr.rel (0) target = $region73
    $region72: #{tpu_custom_call.1} parent=1 // pred_region
      %165 = dma.done [#allocation12], 32
    $region73: #{tpu_custom_call.1} parent=1 // pred_fallthru
      _
    // Predicated region
    $region74: #{tpu_custom_call.1} parent=1 // pred_check
      _
    $region75: #{tpu_custom_call.1} parent=1 // pred_check_branch
      %167 = sbr.rel (0) target = $region77
    $region76: #{tpu_custom_call.1} parent=1 // pred_region
      %168 = dma.done [#allocation15], 2048
    $region77: #{tpu_custom_call.1} parent=1 // pred_fallthru
      _
    // Predicated region
    $region78: #{tpu_custom_call.1} parent=1 // pred_check
      _
    $region79: #{tpu_custom_call.1} parent=1 // pred_check_branch
      %170 = sbr.rel (0) target = $region81
    $region80: #{tpu_custom_call.1} parent=1 // pred_region
      %171 = dma.done [#allocation15], 16
    $region81: #{tpu_custom_call.1} parent=1 // pred_fallthru
      _
    // Predicated region
    $region82: #{tpu_custom_call.1} parent=1 // pred_check
      _
    $region83: #{tpu_custom_call.1} parent=1 // pred_check_branch
      %173 = sbr.rel (0) target = $region85
    $region84: #{tpu_custom_call.1} parent=1 // pred_region
      %174 = dma.done [#allocation18], 1024
    $region85: #{tpu_custom_call.1} parent=1 // pred_fallthru
      _
    // Predicated region
    $region86: #{tpu_custom_call.1} parent=1 // pred_check
      _
    $region87: #{tpu_custom_call.1} parent=1 // pred_check_branch
      %176 = sbr.rel (0) target = $region89
    $region88: #{tpu_custom_call.1} parent=1 // pred_region
      %177 = dma.done [#allocation18], 16
    $region89: #{tpu_custom_call.1} parent=1 // pred_fallthru
      _
    %v179 = vld [vmem:[#allocation2] sm:$0xff]
    %v180 = vld [vmem:[#allocation2 + $0x8] sm:$0xff]
    %v181 = vld [vmem:[#allocation2 + $0x10] sm:$0xff]
    %v182 = vld [vmem:[#allocation2 + $0x18] sm:$0xf]
    %v183 = vld [vmem:[#allocation2 + $0x1c] sm:$0xff]
    %v184 = vld [vmem:[#allocation2 + $0x24] sm:$0xff]
    %v185 = vld [vmem:[#allocation2 + $0x2c] sm:$0xff]
    %v186 = vld [vmem:[#allocation2 + $0x34] sm:$0xf]
    %v187 = vld [vmem:[#allocation5] sm:$0xff]
    %v188 = vld [vmem:[#allocation5 + $0x8] sm:$0xff]
    %v189 = vld [vmem:[#allocation5 + $0x10] sm:$0xf]
    %v190 = vld [vmem:[#allocation5 + $0x14] sm:$0xff]
    %v191 = vld [vmem:[#allocation5 + $0x1c] sm:$0xff]
    %v192 = vld [vmem:[#allocation5 + $0x24] sm:$0xf]
    %v193 = vld [vmem:[#allocation5 + $0x28] sm:$0xff]
    %v194 = vld [vmem:[#allocation5 + $0x30] sm:$0xff]
    %v195 = vld [vmem:[#allocation5 + $0x38] sm:$0xf]
    %v196 = vld [vmem:[#allocation5 + $0x3c] sm:$0xff]
    %v197 = vld [vmem:[#allocation5 + $0x44] sm:$0xff]
    %v198 = vld [vmem:[#allocation5 + $0x4c] sm:$0xf]
    %v199 = vld [vmem:[#allocation5 + $0x50] sm:$0xff]
    %v200 = vld [vmem:[#allocation5 + $0x58] sm:$0xff]
    %v201 = vld [vmem:[#allocation5 + $0x60] sm:$0xf]
    %v202 = vld [vmem:[#allocation5 + $0x64] sm:$0xff]
    %v203 = vld [vmem:[#allocation5 + $0x6c] sm:$0xff]
    %v204 = vld [vmem:[#allocation5 + $0x74] sm:$0xf]
    %v205 = vld [vmem:[#allocation5 + $0x78] sm:$0xff]
    %v206 = vld [vmem:[#allocation5 + $0x80] sm:$0xff]
    %v207 = vld [vmem:[#allocation5 + $0x88] sm:$0xf]
    %v208 = vld [vmem:[#allocation5 + $0x8c] sm:$0xff]
    %v209 = vld [vmem:[#allocation5 + $0x94] sm:$0xff]
    %v210 = vld [vmem:[#allocation5 + $0x9c] sm:$0xf]
    %v211 = vld [vmem:[#allocation5 + $0xa0] sm:$0xff]
    %v212 = vld [vmem:[#allocation5 + $0xa8] sm:$0xff]
    %v213 = vld [vmem:[#allocation5 + $0xb0] sm:$0xf]
    %v214 = vld [vmem:[#allocation5 + $0xb4] sm:$0xff]
    %v215 = vld [vmem:[#allocation5 + $0xbc] sm:$0xff]
    %v216 = vld [vmem:[#allocation5 + $0xc4] sm:$0xf]
    %v217 = vld [vmem:[#allocation5 + $0xc8] sm:$0xff]
    %v218 = vld [vmem:[#allocation5 + $0xd0] sm:$0xff]
    %v219 = vld [vmem:[#allocation5 + $0xd8] sm:$0xf]
    %v220 = vld [vmem:[#allocation5 + $0xdc] sm:$0xff]
    %v221 = vld [vmem:[#allocation5 + $0xe4] sm:$0xff]
    %v222 = vld [vmem:[#allocation5 + $0xec] sm:$0xf]
    %v223 = vld [vmem:[#allocation5 + $0xf0] sm:$0xff]
    %v224 = vld [vmem:[#allocation5 + $0xf8] sm:$0xff]
    %v225 = vld [vmem:[#allocation5 + $0x100] sm:$0xf]
    %v226 = vld [vmem:[#allocation5 + $0x104] sm:$0xff]
    %v227 = vld [vmem:[#allocation5 + $0x10c] sm:$0xff]
    %v228 = vld [vmem:[#allocation5 + $0x114] sm:$0xf]
    %v229 = vld [vmem:[#allocation5 + $0x118] sm:$0xff]
    %v230 = vld [vmem:[#allocation5 + $0x120] sm:$0xff]
    %v231 = vld [vmem:[#allocation5 + $0x128] sm:$0xf]
    %v232 = vld [vmem:[#allocation5 + $0x12c] sm:$0xff]
    %v233 = vld [vmem:[#allocation5 + $0x134] sm:$0xff]
    %v234 = vld [vmem:[#allocation5 + $0x13c] sm:$0xf]
    %v235 = vld [vmem:[#allocation5 + $0x140] sm:$0xff]
    %v236 = vld [vmem:[#allocation5 + $0x148] sm:$0xff]
    %v237 = vld [vmem:[#allocation5 + $0x150] sm:$0xf]
    %v238 = vld [vmem:[#allocation5 + $0x154] sm:$0xff]
    %v239 = vld [vmem:[#allocation5 + $0x15c] sm:$0xff]
    %v240 = vld [vmem:[#allocation5 + $0x164] sm:$0xf]
    %v241 = vld [vmem:[#allocation5 + $0x168] sm:$0xff]
    %v242 = vld [vmem:[#allocation5 + $0x170] sm:$0xff]
    %v243 = vld [vmem:[#allocation5 + $0x178] sm:$0xf]
    %v244 = vld [vmem:[#allocation5 + $0x17c] sm:$0xff]
    %v245 = vld [vmem:[#allocation5 + $0x184] sm:$0xff]
    %v246 = vld [vmem:[#allocation5 + $0x18c] sm:$0xf]
    %v247 = vld [vmem:[#allocation5 + $0x190] sm:$0xff]
    %v248 = vld [vmem:[#allocation5 + $0x198] sm:$0xff]
    %v249 = vld [vmem:[#allocation5 + $0x1a0] sm:$0xf]
    %v250 = vld [vmem:[#allocation5 + $0x1a4] sm:$0xff]
    %v251 = vld [vmem:[#allocation5 + $0x1ac] sm:$0xff]
    %v252 = vld [vmem:[#allocation5 + $0x1b4] sm:$0xf]
    %v253 = vld [vmem:[#allocation5 + $0x1b8] sm:$0xff]
    %v254 = vld [vmem:[#allocation5 + $0x1c0] sm:$0xff]
    %v255 = vld [vmem:[#allocation5 + $0x1c8] sm:$0xf]
    %v256 = vld [vmem:[#allocation5 + $0x1cc] sm:$0xff]
    %v257 = vld [vmem:[#allocation5 + $0x1d4] sm:$0xff]
    %v258 = vld [vmem:[#allocation5 + $0x1dc] sm:$0xf]
    %v259 = vld [vmem:[#allocation5 + $0x1e0] sm:$0xff]
    %v260 = vld [vmem:[#allocation5 + $0x1e8] sm:$0xff]
    %v261 = vld [vmem:[#allocation5 + $0x1f0] sm:$0xf]
    %v262 = vld [vmem:[#allocation5 + $0x1f4] sm:$0xff]
    %v263 = vld [vmem:[#allocation5 + $0x1fc] sm:$0xff]
    %v264 = vld [vmem:[#allocation5 + $0x204] sm:$0xf]
    %v265 = vld [vmem:[#allocation5 + $0x208] sm:$0xff]
    %v266 = vld [vmem:[#allocation5 + $0x210] sm:$0xff]
    %v267 = vld [vmem:[#allocation5 + $0x218] sm:$0xf]
    %v268 = vld [vmem:[#allocation5 + $0x21c] sm:$0xff]
    %v269 = vld [vmem:[#allocation5 + $0x224] sm:$0xff]
    %v270 = vld [vmem:[#allocation5 + $0x22c] sm:$0xf]
    %v271 = vld [vmem:[#allocation5 + $0x230] sm:$0xff]
    %v272 = vld [vmem:[#allocation5 + $0x238] sm:$0xff]
    %v273 = vld [vmem:[#allocation5 + $0x240] sm:$0xf]
    %v274 = vld [vmem:[#allocation5 + $0x244] sm:$0xff]
    %v275 = vld [vmem:[#allocation5 + $0x24c] sm:$0xff]
    %v276 = vld [vmem:[#allocation5 + $0x254] sm:$0xf]
    %v277 = vld [vmem:[#allocation5 + $0x258] sm:$0xff]
    %v278 = vld [vmem:[#allocation5 + $0x260] sm:$0xff]
    %v279 = vld [vmem:[#allocation5 + $0x268] sm:$0xf]
    %v280 = vld [vmem:[#allocation5 + $0x26c] sm:$0xff]
    %v281 = vld [vmem:[#allocation5 + $0x274] sm:$0xff]
    %v282 = vld [vmem:[#allocation5 + $0x27c] sm:$0xf]
    %v283 = vld [vmem:[#allocation5 + $0x280] sm:$0xff]
    %v284 = vld [vmem:[#allocation5 + $0x288] sm:$0xff]
    %v285 = vld [vmem:[#allocation5 + $0x290] sm:$0xf]
    %v286 = vld [vmem:[#allocation5 + $0x294] sm:$0xff]
    %v287 = vld [vmem:[#allocation5 + $0x29c] sm:$0xff]
    %v288 = vld [vmem:[#allocation5 + $0x2a4] sm:$0xf]
    %v289 = vld [vmem:[#allocation5 + $0x2a8] sm:$0xff]
    %v290 = vld [vmem:[#allocation5 + $0x2b0] sm:$0xff]
    %v291 = vld [vmem:[#allocation5 + $0x2b8] sm:$0xf]
    %v292 = vld [vmem:[#allocation5 + $0x2bc] sm:$0xff]
    %v293 = vld [vmem:[#allocation5 + $0x2c4] sm:$0xff]
    %v294 = vld [vmem:[#allocation5 + $0x2cc] sm:$0xf]
    %v295 = vld [vmem:[#allocation5 + $0x2d0] sm:$0xff]
    %v296 = vld [vmem:[#allocation5 + $0x2d8] sm:$0xff]
    %v297 = vld [vmem:[#allocation5 + $0x2e0] sm:$0xf]
    %v298 = vld [vmem:[#allocation5 + $0x2e4] sm:$0xff]
    %v299 = vld [vmem:[#allocation5 + $0x2ec] sm:$0xff]
    %v300 = vld [vmem:[#allocation5 + $0x2f4] sm:$0xf]
    %v301 = vld [vmem:[#allocation5 + $0x2f8] sm:$0xff]
    %v302 = vld [vmem:[#allocation5 + $0x300] sm:$0xff]
    %v303 = vld [vmem:[#allocation5 + $0x308] sm:$0xf]
    %v304 = vld [vmem:[#allocation5 + $0x30c] sm:$0xff]
    %v305 = vld [vmem:[#allocation5 + $0x314] sm:$0xff]
    %v306 = vld [vmem:[#allocation5 + $0x31c] sm:$0xf]
    %v307 = vld [vmem:[#allocation5 + $0x320] sm:$0xff]
    %v308 = vld [vmem:[#allocation5 + $0x328] sm:$0xff]
    %v309 = vld [vmem:[#allocation5 + $0x330] sm:$0xf]
    %v310 = vld [vmem:[#allocation5 + $0x334] sm:$0xff]
    %v311 = vld [vmem:[#allocation5 + $0x33c] sm:$0xff]
    %v312 = vld [vmem:[#allocation5 + $0x344] sm:$0xf]
    %v313 = vld [vmem:[#allocation5 + $0x348] sm:$0xff]
    %v314 = vld [vmem:[#allocation5 + $0x350] sm:$0xff]
    %v315 = vld [vmem:[#allocation5 + $0x358] sm:$0xf]
    %v316 = vld [vmem:[#allocation5 + $0x35c] sm:$0xff]
    %v317 = vld [vmem:[#allocation5 + $0x364] sm:$0xff]
    %v318 = vld [vmem:[#allocation5 + $0x36c] sm:$0xf]
    %v319 = vld [vmem:[#allocation5 + $0x370] sm:$0xff]
    %v320 = vld [vmem:[#allocation5 + $0x378] sm:$0xff]
    %v321 = vld [vmem:[#allocation5 + $0x380] sm:$0xf]
    %v322 = vld [vmem:[#allocation5 + $0x384] sm:$0xff]
    %v323 = vld [vmem:[#allocation5 + $0x38c] sm:$0xff]
    %v324 = vld [vmem:[#allocation5 + $0x394] sm:$0xf]
    %v325 = vld [vmem:[#allocation5 + $0x398] sm:$0xff]
    %v326 = vld [vmem:[#allocation5 + $0x3a0] sm:$0xff]
    %v327 = vld [vmem:[#allocation5 + $0x3a8] sm:$0xf]
    %v328 = vld [vmem:[#allocation5 + $0x3ac] sm:$0xff]
    %v329 = vld [vmem:[#allocation5 + $0x3b4] sm:$0xff]
    %v330 = vld [vmem:[#allocation5 + $0x3bc] sm:$0xf]
    %v331 = vld [vmem:[#allocation5 + $0x3c0] sm:$0xff]
    %v332 = vld [vmem:[#allocation5 + $0x3c8] sm:$0xff]
    %v333 = vld [vmem:[#allocation5 + $0x3d0] sm:$0xf]
    %v334 = vld [vmem:[#allocation5 + $0x3d4] sm:$0xff]
    %v335 = vld [vmem:[#allocation5 + $0x3dc] sm:$0xff]
    %v336 = vld [vmem:[#allocation5 + $0x3e4] sm:$0xf]
    %v337 = vld [vmem:[#allocation5 + $0x3e8] sm:$0xff]
    %v338 = vld [vmem:[#allocation5 + $0x3f0] sm:$0xff]
    %v339 = vld [vmem:[#allocation5 + $0x3f8] sm:$0xf]
    %v340 = vld [vmem:[#allocation5 + $0x3fc] sm:$0xff]
    %v341 = vld [vmem:[#allocation5 + $0x404] sm:$0xff]
    %v342 = vld [vmem:[#allocation5 + $0x40c] sm:$0xf]
    %v343 = vld [vmem:[#allocation5 + $0x410] sm:$0xff]
    %v344 = vld [vmem:[#allocation5 + $0x418] sm:$0xff]
    %v345 = vld [vmem:[#allocation5 + $0x420] sm:$0xf]
    %v346 = vld [vmem:[#allocation5 + $0x424] sm:$0xff]
    %v347 = vld [vmem:[#allocation5 + $0x42c] sm:$0xff]
    %v348 = vld [vmem:[#allocation5 + $0x434] sm:$0xf]
    %v349 = vld [vmem:[#allocation5 + $0x438] sm:$0xff]
    %v350 = vld [vmem:[#allocation5 + $0x440] sm:$0xff]
    %v351 = vld [vmem:[#allocation5 + $0x448] sm:$0xf]
    %v352 = vld [vmem:[#allocation5 + $0x44c] sm:$0xff]
    %v353 = vld [vmem:[#allocation5 + $0x454] sm:$0xff]
    %v354 = vld [vmem:[#allocation5 + $0x45c] sm:$0xf]
    %v355 = vld [vmem:[#allocation5 + $0x460] sm:$0xff]
    %v356 = vld [vmem:[#allocation5 + $0x468] sm:$0xff]
    %v357 = vld [vmem:[#allocation5 + $0x470] sm:$0xf]
    %v358 = vld [vmem:[#allocation5 + $0x474] sm:$0xff]
    %v359 = vld [vmem:[#allocation5 + $0x47c] sm:$0xff]
    %v360 = vld [vmem:[#allocation5 + $0x484] sm:$0xf]
    %v361 = vld [vmem:[#allocation5 + $0x488] sm:$0xff]
    %v362 = vld [vmem:[#allocation5 + $0x490] sm:$0xff]
    %v363 = vld [vmem:[#allocation5 + $0x498] sm:$0xf]
    %v364 = vld [vmem:[#allocation5 + $0x49c] sm:$0xff]
    %v365 = vld [vmem:[#allocation5 + $0x4a4] sm:$0xff]
    %v366 = vld [vmem:[#allocation5 + $0x4ac] sm:$0xf]
    %v367 = vld [vmem:[#allocation5 + $0x4b0] sm:$0xff]
    %v368 = vld [vmem:[#allocation5 + $0x4b8] sm:$0xff]
    %v369 = vld [vmem:[#allocation5 + $0x4c0] sm:$0xf]
    %v370 = vld [vmem:[#allocation5 + $0x4c4] sm:$0xff]
    %v371 = vld [vmem:[#allocation5 + $0x4cc] sm:$0xff]
    %v372 = vld [vmem:[#allocation5 + $0x4d4] sm:$0xf]
    %v373 = vld [vmem:[#allocation5 + $0x4d8] sm:$0xff]
    %v374 = vld [vmem:[#allocation5 + $0x4e0] sm:$0xff]
    %v375 = vld [vmem:[#allocation5 + $0x4e8] sm:$0xf]
    %v376 = vld [vmem:[#allocation5 + $0x4ec] sm:$0xff]
    %v377 = vld [vmem:[#allocation5 + $0x4f4] sm:$0xff]
    %v378 = vld [vmem:[#allocation5 + $0x4fc] sm:$0xf]
    %v379 = vld [vmem:[#allocation5 + $0x500] sm:$0xff]
    %v380 = vld [vmem:[#allocation5 + $0x508] sm:$0xff]
    %v381 = vld [vmem:[#allocation5 + $0x510] sm:$0xf]
    %v382 = vld [vmem:[#allocation5 + $0x514] sm:$0xff]
    %v383 = vld [vmem:[#allocation5 + $0x51c] sm:$0xff]
    %v384 = vld [vmem:[#allocation5 + $0x524] sm:$0xf]
    %v385 = vld [vmem:[#allocation5 + $0x528] sm:$0xff]
    %v386 = vld [vmem:[#allocation5 + $0x530] sm:$0xff]
    %v387 = vld [vmem:[#allocation5 + $0x538] sm:$0xf]
    %v388 = vld [vmem:[#allocation5 + $0x53c] sm:$0xff]
    %v389 = vld [vmem:[#allocation5 + $0x544] sm:$0xff]
    %v390 = vld [vmem:[#allocation5 + $0x54c] sm:$0xf]
    %v391 = vld [vmem:[#allocation5 + $0x550] sm:$0xff]
    %v392 = vld [vmem:[#allocation5 + $0x558] sm:$0xff]
    %v393 = vld [vmem:[#allocation5 + $0x560] sm:$0xf]
    %v394 = vld [vmem:[#allocation5 + $0x564] sm:$0xff]
    %v395 = vld [vmem:[#allocation5 + $0x56c] sm:$0xff]
    %v396 = vld [vmem:[#allocation5 + $0x574] sm:$0xf]
    %v397 = vld [vmem:[#allocation5 + $0x578] sm:$0xff]
    %v398 = vld [vmem:[#allocation5 + $0x580] sm:$0xff]
    %v399 = vld [vmem:[#allocation5 + $0x588] sm:$0xf]
    %v400 = vld [vmem:[#allocation5 + $0x58c] sm:$0xff]
    %v401 = vld [vmem:[#allocation5 + $0x594] sm:$0xff]
    %v402 = vld [vmem:[#allocation5 + $0x59c] sm:$0xf]
    %v403 = vld [vmem:[#allocation5 + $0x5a0] sm:$0xff]
    %v404 = vld [vmem:[#allocation5 + $0x5a8] sm:$0xff]
    %v405 = vld [vmem:[#allocation5 + $0x5b0] sm:$0xf]
    %v406 = vld [vmem:[#allocation5 + $0x5b4] sm:$0xff]
    %v407 = vld [vmem:[#allocation5 + $0x5bc] sm:$0xff]
    %v408 = vld [vmem:[#allocation5 + $0x5c4] sm:$0xf]
    %v409 = vld [vmem:[#allocation5 + $0x5c8] sm:$0xff]
    %v410 = vld [vmem:[#allocation5 + $0x5d0] sm:$0xff]
    %v411 = vld [vmem:[#allocation5 + $0x5d8] sm:$0xf]
    %v412 = vld [vmem:[#allocation5 + $0x5dc] sm:$0xff]
    %v413 = vld [vmem:[#allocation5 + $0x5e4] sm:$0xff]
    %v414 = vld [vmem:[#allocation5 + $0x5ec] sm:$0xf]
    %v415 = vld [vmem:[#allocation5 + $0x5f0] sm:$0xff]
    %v416 = vld [vmem:[#allocation5 + $0x5f8] sm:$0xff]
    %v417 = vld [vmem:[#allocation5 + $0x600] sm:$0xf]
    %v418 = vld [vmem:[#allocation5 + $0x604] sm:$0xff]
    %v419 = vld [vmem:[#allocation5 + $0x60c] sm:$0xff]
    %v420 = vld [vmem:[#allocation5 + $0x614] sm:$0xf]
    %v421 = vld [vmem:[#allocation5 + $0x618] sm:$0xff]
    %v422 = vld [vmem:[#allocation5 + $0x620] sm:$0xff]
    %v423 = vld [vmem:[#allocation5 + $0x628] sm:$0xf]
    %v424 = vld [vmem:[#allocation5 + $0x62c] sm:$0xff]
    %v425 = vld [vmem:[#allocation5 + $0x634] sm:$0xff]
    %v426 = vld [vmem:[#allocation5 + $0x63c] sm:$0xf]
    %v427 = vld [vmem:[#allocation5 + $0x640] sm:$0xff]
    %v428 = vld [vmem:[#allocation5 + $0x648] sm:$0xff]
    %v429 = vld [vmem:[#allocation5 + $0x650] sm:$0xf]
    %v430 = vld [vmem:[#allocation5 + $0x654] sm:$0xff]
    %v431 = vld [vmem:[#allocation5 + $0x65c] sm:$0xff]
    %v432 = vld [vmem:[#allocation5 + $0x664] sm:$0xf]
    %v433 = vld [vmem:[#allocation5 + $0x668] sm:$0xff]
    %v434 = vld [vmem:[#allocation5 + $0x670] sm:$0xff]
    %v435 = vld [vmem:[#allocation5 + $0x678] sm:$0xf]
    %v436 = vld [vmem:[#allocation5 + $0x67c] sm:$0xff]
    %v437 = vld [vmem:[#allocation5 + $0x684] sm:$0xff]
    %v438 = vld [vmem:[#allocation5 + $0x68c] sm:$0xf]
    %v439 = vld [vmem:[#allocation5 + $0x690] sm:$0xff]
    %v440 = vld [vmem:[#allocation5 + $0x698] sm:$0xff]
    %v441 = vld [vmem:[#allocation5 + $0x6a0] sm:$0xf]
    %v442 = vld [vmem:[#allocation5 + $0x6a4] sm:$0xff]
    %v443 = vld [vmem:[#allocation5 + $0x6ac] sm:$0xff]
    %v444 = vld [vmem:[#allocation5 + $0x6b4] sm:$0xf]
    %v445 = vld [vmem:[#allocation5 + $0x6b8] sm:$0xff]
    %v446 = vld [vmem:[#allocation5 + $0x6c0] sm:$0xff]
    %v447 = vld [vmem:[#allocation5 + $0x6c8] sm:$0xf]
    %v448 = vld [vmem:[#allocation5 + $0x6cc] sm:$0xff]
    %v449 = vld [vmem:[#allocation5 + $0x6d4] sm:$0xff]
    %v450 = vld [vmem:[#allocation5 + $0x6dc] sm:$0xf]
    %v451 = vld [vmem:[#allocation5 + $0x6e0] sm:$0xff]
    %v452 = vld [vmem:[#allocation5 + $0x6e8] sm:$0xff]
    %v453 = vld [vmem:[#allocation5 + $0x6f0] sm:$0xf]
    %v454 = vld [vmem:[#allocation5 + $0x6f4] sm:$0xff]
    %v455 = vld [vmem:[#allocation5 + $0x6fc] sm:$0xff]
    %v456 = vld [vmem:[#allocation5 + $0x704] sm:$0xf]
    %v457 = vld [vmem:[#allocation5 + $0x708] sm:$0xff]
    %v458 = vld [vmem:[#allocation5 + $0x710] sm:$0xff]
    %v459 = vld [vmem:[#allocation5 + $0x718] sm:$0xf]
    %v460 = vld [vmem:[#allocation5 + $0x71c] sm:$0xff]
    %v461 = vld [vmem:[#allocation5 + $0x724] sm:$0xff]
    %v462 = vld [vmem:[#allocation5 + $0x72c] sm:$0xf]
    %v463 = vld [vmem:[#allocation5 + $0x730] sm:$0xff]
    %v464 = vld [vmem:[#allocation5 + $0x738] sm:$0xff]
    %v465 = vld [vmem:[#allocation5 + $0x740] sm:$0xf]
    %v466 = vld [vmem:[#allocation5 + $0x744] sm:$0xff]
    %v467 = vld [vmem:[#allocation5 + $0x74c] sm:$0xff]
    %v468 = vld [vmem:[#allocation5 + $0x754] sm:$0xf]
    %v469 = vld [vmem:[#allocation5 + $0x758] sm:$0xff]
    %v470 = vld [vmem:[#allocation5 + $0x760] sm:$0xff]
    %v471 = vld [vmem:[#allocation5 + $0x768] sm:$0xf]
    %v472 = vld [vmem:[#allocation5 + $0x76c] sm:$0xff]
    %v473 = vld [vmem:[#allocation5 + $0x774] sm:$0xff]
    %v474 = vld [vmem:[#allocation5 + $0x77c] sm:$0xf]
    %v475 = vld [vmem:[#allocation5 + $0x780] sm:$0xff]
    %v476 = vld [vmem:[#allocation5 + $0x788] sm:$0xff]
    %v477 = vld [vmem:[#allocation5 + $0x790] sm:$0xf]
    %v478 = vld [vmem:[#allocation5 + $0x794] sm:$0xff]
    %v479 = vld [vmem:[#allocation5 + $0x79c] sm:$0xff]
    %v480 = vld [vmem:[#allocation5 + $0x7a4] sm:$0xf]
    %v481 = vld [vmem:[#allocation5 + $0x7a8] sm:$0xff]
    %v482 = vld [vmem:[#allocation5 + $0x7b0] sm:$0xff]
    %v483 = vld [vmem:[#allocation5 + $0x7b8] sm:$0xf]
    %v484 = vld [vmem:[#allocation5 + $0x7bc] sm:$0xff]
    %v485 = vld [vmem:[#allocation5 + $0x7c4] sm:$0xff]
    %v486 = vld [vmem:[#allocation5 + $0x7cc] sm:$0xf]
    %v487 = vld [vmem:[#allocation5 + $0x7d0] sm:$0xff]
    %v488 = vld [vmem:[#allocation5 + $0x7d8] sm:$0xff]
    %v489 = vld [vmem:[#allocation5 + $0x7e0] sm:$0xf]
    %v490 = vld [vmem:[#allocation5 + $0x7e4] sm:$0xff]
    %v491 = vld [vmem:[#allocation5 + $0x7ec] sm:$0xff]
    %v492 = vld [vmem:[#allocation5 + $0x7f4] sm:$0xf]
    %v493 = vld [vmem:[#allocation5 + $0x7f8] sm:$0xff]
    %v494 = vld [vmem:[#allocation5 + $0x800] sm:$0xff]
    %v495 = vld [vmem:[#allocation5 + $0x808] sm:$0xf]
    %v496 = vld [vmem:[#allocation5 + $0x80c] sm:$0xff]
    %v497 = vld [vmem:[#allocation5 + $0x814] sm:$0xff]
    %v498 = vld [vmem:[#allocation5 + $0x81c] sm:$0xf]
    %v499 = vld [vmem:[#allocation5 + $0x820] sm:$0xff]
    %v500 = vld [vmem:[#allocation5 + $0x828] sm:$0xff]
    %v501 = vld [vmem:[#allocation5 + $0x830] sm:$0xf]
    %v502 = vld [vmem:[#allocation5 + $0x834] sm:$0xff]
    %v503 = vld [vmem:[#allocation5 + $0x83c] sm:$0xff]
    %v504 = vld [vmem:[#allocation5 + $0x844] sm:$0xf]
    %v505 = vld [vmem:[#allocation5 + $0x848] sm:$0xff]
    %v506 = vld [vmem:[#allocation5 + $0x850] sm:$0xff]
    %v507 = vld [vmem:[#allocation5 + $0x858] sm:$0xf]
    %v508 = vld [vmem:[#allocation5 + $0x85c] sm:$0xff]
    %v509 = vld [vmem:[#allocation5 + $0x864] sm:$0xff]
    %v510 = vld [vmem:[#allocation5 + $0x86c] sm:$0xf]
    %v511 = vld [vmem:[#allocation5 + $0x870] sm:$0xff]
    %v512 = vld [vmem:[#allocation5 + $0x878] sm:$0xff]
    %v513 = vld [vmem:[#allocation5 + $0x880] sm:$0xf]
    %v514 = vld [vmem:[#allocation5 + $0x884] sm:$0xff]
    %v515 = vld [vmem:[#allocation5 + $0x88c] sm:$0xff]
    %v516 = vld [vmem:[#allocation5 + $0x894] sm:$0xf]
    %v517 = vld [vmem:[#allocation5 + $0x898] sm:$0xff]
    %v518 = vld [vmem:[#allocation5 + $0x8a0] sm:$0xff]
    %v519 = vld [vmem:[#allocation5 + $0x8a8] sm:$0xf]
    %v520 = vld [vmem:[#allocation5 + $0x8ac] sm:$0xff]
    %v521 = vld [vmem:[#allocation5 + $0x8b4] sm:$0xff]
    %v522 = vld [vmem:[#allocation5 + $0x8bc] sm:$0xf]
    %v531 = vunpack.c.l.b16 %v179
    %v532 = vunpack.c.h.b16 %v179
    %v533 = vunpack.c.l.b16 %v180
    %v534 = vunpack.c.h.b16 %v180
    %v535 = vunpack.c.l.b16 %v181
    %v536 = vunpack.c.h.b16 %v181
    %v537 = vunpack.c.l.b16 %v182
    %v538 = vunpack.c.l.b16 %v183
    %v539 = vunpack.c.h.b16 %v183
    %v540 = vunpack.c.l.b16 %v184
    %v541 = vunpack.c.h.b16 %v184
    %v542 = vunpack.c.l.b16 %v185
    %v543 = vunpack.c.h.b16 %v185
    %v544 = vunpack.c.l.b16 %v186
    %v545 = vpack.c.b16 %v538, %v531
    %v546 = vpack.c.b16 %v539, %v532
    %v547 = vpack.c.b16 %v540, %v533
    %v548 = vpack.c.b16 %v541, %v534
    %v549 = vpack.c.b16 %v542, %v535
    %v550 = vpack.c.b16 %v543, %v536
    %v551 = vpack.c.b16 %v544, %v537
    %v895 = vunpack.c.l.b16 %v187
    %v896 = vunpack.c.h.b16 %v187
    %v897 = vunpack.c.l.b16 %v188
    %v898 = vunpack.c.h.b16 %v188
    %v899 = vunpack.c.l.b16 %v189
    %v900 = vunpack.c.l.b16 %v190
    %v901 = vunpack.c.h.b16 %v190
    %v902 = vunpack.c.l.b16 %v191
    %v903 = vunpack.c.h.b16 %v191
    %v904 = vunpack.c.l.b16 %v192
    %v905 = vunpack.c.l.b16 %v193
    %v906 = vunpack.c.h.b16 %v193
    %v907 = vunpack.c.l.b16 %v194
    %v908 = vunpack.c.h.b16 %v194
    %v909 = vunpack.c.l.b16 %v195
    %v910 = vunpack.c.l.b16 %v196
    %v911 = vunpack.c.h.b16 %v196
    %v912 = vunpack.c.l.b16 %v197
    %v913 = vunpack.c.h.b16 %v197
    %v914 = vunpack.c.l.b16 %v198
    %v915 = vunpack.c.l.b16 %v199
    %v916 = vunpack.c.h.b16 %v199
    %v917 = vunpack.c.l.b16 %v200
    %v918 = vunpack.c.h.b16 %v200
    %v919 = vunpack.c.l.b16 %v201
    %v920 = vunpack.c.l.b16 %v202
    %v921 = vunpack.c.h.b16 %v202
    %v922 = vunpack.c.l.b16 %v203
    %v923 = vunpack.c.h.b16 %v203
    %v924 = vunpack.c.l.b16 %v204
    %v925 = vunpack.c.l.b16 %v205
    %v926 = vunpack.c.h.b16 %v205
    %v927 = vunpack.c.l.b16 %v206
    %v928 = vunpack.c.h.b16 %v206
    %v929 = vunpack.c.l.b16 %v207
    %v930 = vunpack.c.l.b16 %v208
    %v931 = vunpack.c.h.b16 %v208
    %v932 = vunpack.c.l.b16 %v209
    %v933 = vunpack.c.h.b16 %v209
    %v934 = vunpack.c.l.b16 %v210
    %v935 = vunpack.c.l.b16 %v211
    %v936 = vunpack.c.h.b16 %v211
    %v937 = vunpack.c.l.b16 %v212
    %v938 = vunpack.c.h.b16 %v212
    %v939 = vunpack.c.l.b16 %v213
    %v940 = vunpack.c.l.b16 %v214
    %v941 = vunpack.c.h.b16 %v214
    %v942 = vunpack.c.l.b16 %v215
    %v943 = vunpack.c.h.b16 %v215
    %v944 = vunpack.c.l.b16 %v216
    %v945 = vunpack.c.l.b16 %v217
    %v946 = vunpack.c.h.b16 %v217
    %v947 = vunpack.c.l.b16 %v218
    %v948 = vunpack.c.h.b16 %v218
    %v949 = vunpack.c.l.b16 %v219
    %v950 = vunpack.c.l.b16 %v220
    %v951 = vunpack.c.h.b16 %v220
    %v952 = vunpack.c.l.b16 %v221
    %v953 = vunpack.c.h.b16 %v221
    %v954 = vunpack.c.l.b16 %v222
    %v955 = vunpack.c.l.b16 %v223
    %v956 = vunpack.c.h.b16 %v223
    %v957 = vunpack.c.l.b16 %v224
    %v958 = vunpack.c.h.b16 %v224
    %v959 = vunpack.c.l.b16 %v225
    %v960 = vunpack.c.l.b16 %v226
    %v961 = vunpack.c.h.b16 %v226
    %v962 = vunpack.c.l.b16 %v227
    %v963 = vunpack.c.h.b16 %v227
    %v964 = vunpack.c.l.b16 %v228
    %v965 = vunpack.c.l.b16 %v229
    %v966 = vunpack.c.h.b16 %v229
    %v967 = vunpack.c.l.b16 %v230
    %v968 = vunpack.c.h.b16 %v230
    %v969 = vunpack.c.l.b16 %v231
    %v970 = vunpack.c.l.b16 %v232
    %v971 = vunpack.c.h.b16 %v232
    %v972 = vunpack.c.l.b16 %v233
    %v973 = vunpack.c.h.b16 %v233
    %v974 = vunpack.c.l.b16 %v234
    %v975 = vunpack.c.l.b16 %v235
    %v976 = vunpack.c.h.b16 %v235
    %v977 = vunpack.c.l.b16 %v236
    %v978 = vunpack.c.h.b16 %v236
    %v979 = vunpack.c.l.b16 %v237
    %v980 = vunpack.c.l.b16 %v238
    %v981 = vunpack.c.h.b16 %v238
    %v982 = vunpack.c.l.b16 %v239
    %v983 = vunpack.c.h.b16 %v239
    %v984 = vunpack.c.l.b16 %v240
    %v985 = vunpack.c.l.b16 %v241
    %v986 = vunpack.c.h.b16 %v241
    %v987 = vunpack.c.l.b16 %v242
    %v988 = vunpack.c.h.b16 %v242
    %v989 = vunpack.c.l.b16 %v243
    %v990 = vunpack.c.l.b16 %v244
    %v991 = vunpack.c.h.b16 %v244
    %v992 = vunpack.c.l.b16 %v245
    %v993 = vunpack.c.h.b16 %v245
    %v994 = vunpack.c.l.b16 %v246
    %v995 = vunpack.c.l.b16 %v247
    %v996 = vunpack.c.h.b16 %v247
    %v997 = vunpack.c.l.b16 %v248
    %v998 = vunpack.c.h.b16 %v248
    %v999 = vunpack.c.l.b16 %v249
    %v1000 = vunpack.c.l.b16 %v250
    %v1001 = vunpack.c.h.b16 %v250
    %v1002 = vunpack.c.l.b16 %v251
    %v1003 = vunpack.c.h.b16 %v251
    %v1004 = vunpack.c.l.b16 %v252
    %v1005 = vunpack.c.l.b16 %v253
    %v1006 = vunpack.c.h.b16 %v253
    %v1007 = vunpack.c.l.b16 %v254
    %v1008 = vunpack.c.h.b16 %v254
    %v1009 = vunpack.c.l.b16 %v255
    %v1010 = vunpack.c.l.b16 %v256
    %v1011 = vunpack.c.h.b16 %v256
    %v1012 = vunpack.c.l.b16 %v257
    %v1013 = vunpack.c.h.b16 %v257
    %v1014 = vunpack.c.l.b16 %v258
    %v1015 = vunpack.c.l.b16 %v259
    %v1016 = vunpack.c.h.b16 %v259
    %v1017 = vunpack.c.l.b16 %v260
    %v1018 = vunpack.c.h.b16 %v260
    %v1019 = vunpack.c.l.b16 %v261
    %v1020 = vunpack.c.l.b16 %v262
    %v1021 = vunpack.c.h.b16 %v262
    %v1022 = vunpack.c.l.b16 %v263
    %v1023 = vunpack.c.h.b16 %v263
    %v1024 = vunpack.c.l.b16 %v264
    %v1025 = vunpack.c.l.b16 %v265
    %v1026 = vunpack.c.h.b16 %v265
    %v1027 = vunpack.c.l.b16 %v266
    %v1028 = vunpack.c.h.b16 %v266
    %v1029 = vunpack.c.l.b16 %v267
    %v1030 = vunpack.c.l.b16 %v268
    %v1031 = vunpack.c.h.b16 %v268
    %v1032 = vunpack.c.l.b16 %v269
    %v1033 = vunpack.c.h.b16 %v269
    %v1034 = vunpack.c.l.b16 %v270
    %v1035 = vunpack.c.l.b16 %v271
    %v1036 = vunpack.c.h.b16 %v271
    %v1037 = vunpack.c.l.b16 %v272
    %v1038 = vunpack.c.h.b16 %v272
    %v1039 = vunpack.c.l.b16 %v273
    %v1040 = vunpack.c.l.b16 %v274
    %v1041 = vunpack.c.h.b16 %v274
    %v1042 = vunpack.c.l.b16 %v275
    %v1043 = vunpack.c.h.b16 %v275
    %v1044 = vunpack.c.l.b16 %v276
    %v1045 = vunpack.c.l.b16 %v277
    %v1046 = vunpack.c.h.b16 %v277
    %v1047 = vunpack.c.l.b16 %v278
    %v1048 = vunpack.c.h.b16 %v278
    %v1049 = vunpack.c.l.b16 %v279
    %v1050 = vunpack.c.l.b16 %v280
    %v1051 = vunpack.c.h.b16 %v280
    %v1052 = vunpack.c.l.b16 %v281
    %v1053 = vunpack.c.h.b16 %v281
    %v1054 = vunpack.c.l.b16 %v282
    %v1055 = vunpack.c.l.b16 %v283
    %v1056 = vunpack.c.h.b16 %v283
    %v1057 = vunpack.c.l.b16 %v284
    %v1058 = vunpack.c.h.b16 %v284
    %v1059 = vunpack.c.l.b16 %v285
    %v1060 = vunpack.c.l.b16 %v286
    %v1061 = vunpack.c.h.b16 %v286
    %v1062 = vunpack.c.l.b16 %v287
    %v1063 = vunpack.c.h.b16 %v287
    %v1064 = vunpack.c.l.b16 %v288
    %v1065 = vunpack.c.l.b16 %v289
    %v1066 = vunpack.c.h.b16 %v289
    %v1067 = vunpack.c.l.b16 %v290
    %v1068 = vunpack.c.h.b16 %v290
    %v1069 = vunpack.c.l.b16 %v291
    %v1070 = vunpack.c.l.b16 %v292
    %v1071 = vunpack.c.h.b16 %v292
    %v1072 = vunpack.c.l.b16 %v293
    %v1073 = vunpack.c.h.b16 %v293
    %v1074 = vunpack.c.l.b16 %v294
    %v1075 = vunpack.c.l.b16 %v295
    %v1076 = vunpack.c.h.b16 %v295
    %v1077 = vunpack.c.l.b16 %v296
    %v1078 = vunpack.c.h.b16 %v296
    %v1079 = vunpack.c.l.b16 %v297
    %v1080 = vunpack.c.l.b16 %v298
    %v1081 = vunpack.c.h.b16 %v298
    %v1082 = vunpack.c.l.b16 %v299
    %v1083 = vunpack.c.h.b16 %v299
    %v1084 = vunpack.c.l.b16 %v300
    %v1085 = vunpack.c.l.b16 %v301
    %v1086 = vunpack.c.h.b16 %v301
    %v1087 = vunpack.c.l.b16 %v302
    %v1088 = vunpack.c.h.b16 %v302
    %v1089 = vunpack.c.l.b16 %v303
    %v1090 = vunpack.c.l.b16 %v304
    %v1091 = vunpack.c.h.b16 %v304
    %v1092 = vunpack.c.l.b16 %v305
    %v1093 = vunpack.c.h.b16 %v305
    %v1094 = vunpack.c.l.b16 %v306
    %v1095 = vunpack.c.l.b16 %v307
    %v1096 = vunpack.c.h.b16 %v307
    %v1097 = vunpack.c.l.b16 %v308
    %v1098 = vunpack.c.h.b16 %v308
    %v1099 = vunpack.c.l.b16 %v309
    %v1100 = vunpack.c.l.b16 %v310
    %v1101 = vunpack.c.h.b16 %v310
    %v1102 = vunpack.c.l.b16 %v311
    %v1103 = vunpack.c.h.b16 %v311
    %v1104 = vunpack.c.l.b16 %v312
    %v1105 = vunpack.c.l.b16 %v313
    %v1106 = vunpack.c.h.b16 %v313
    %v1107 = vunpack.c.l.b16 %v314
    %v1108 = vunpack.c.h.b16 %v314
    %v1109 = vunpack.c.l.b16 %v315
    %v1110 = vunpack.c.l.b16 %v316
    %v1111 = vunpack.c.h.b16 %v316
    %v1112 = vunpack.c.l.b16 %v317
    %v1113 = vunpack.c.h.b16 %v317
    %v1114 = vunpack.c.l.b16 %v318
    %v1115 = vunpack.c.l.b16 %v319
    %v1116 = vunpack.c.h.b16 %v319
    %v1117 = vunpack.c.l.b16 %v320
    %v1118 = vunpack.c.h.b16 %v320
    %v1119 = vunpack.c.l.b16 %v321
    %v1120 = vunpack.c.l.b16 %v322
    %v1121 = vunpack.c.h.b16 %v322
    %v1122 = vunpack.c.l.b16 %v323
    %v1123 = vunpack.c.h.b16 %v323
    %v1124 = vunpack.c.l.b16 %v324
    %v1125 = vunpack.c.l.b16 %v325
    %v1126 = vunpack.c.h.b16 %v325
    %v1127 = vunpack.c.l.b16 %v326
    %v1128 = vunpack.c.h.b16 %v326
    %v1129 = vunpack.c.l.b16 %v327
    %v1130 = vunpack.c.l.b16 %v328
    %v1131 = vunpack.c.h.b16 %v328
    %v1132 = vunpack.c.l.b16 %v329
    %v1133 = vunpack.c.h.b16 %v329
    %v1134 = vunpack.c.l.b16 %v330
    %v1135 = vunpack.c.l.b16 %v331
    %v1136 = vunpack.c.h.b16 %v331
    %v1137 = vunpack.c.l.b16 %v332
    %v1138 = vunpack.c.h.b16 %v332
    %v1139 = vunpack.c.l.b16 %v333
    %v1140 = vunpack.c.l.b16 %v334
    %v1141 = vunpack.c.h.b16 %v334
    %v1142 = vunpack.c.l.b16 %v335
    %v1143 = vunpack.c.h.b16 %v335
    %v1144 = vunpack.c.l.b16 %v336
    %v1145 = vunpack.c.l.b16 %v337
    %v1146 = vunpack.c.h.b16 %v337
    %v1147 = vunpack.c.l.b16 %v338
    %v1148 = vunpack.c.h.b16 %v338
    %v1149 = vunpack.c.l.b16 %v339
    %v1150 = vunpack.c.l.b16 %v340
    %v1151 = vunpack.c.h.b16 %v340
    %v1152 = vunpack.c.l.b16 %v341
    %v1153 = vunpack.c.h.b16 %v341
    %v1154 = vunpack.c.l.b16 %v342
    %v1155 = vunpack.c.l.b16 %v343
    %v1156 = vunpack.c.h.b16 %v343
    %v1157 = vunpack.c.l.b16 %v344
    %v1158 = vunpack.c.h.b16 %v344
    %v1159 = vunpack.c.l.b16 %v345
    %v1160 = vunpack.c.l.b16 %v346
    %v1161 = vunpack.c.h.b16 %v346
    %v1162 = vunpack.c.l.b16 %v347
    %v1163 = vunpack.c.h.b16 %v347
    %v1164 = vunpack.c.l.b16 %v348
    %v1165 = vunpack.c.l.b16 %v349
    %v1166 = vunpack.c.h.b16 %v349
    %v1167 = vunpack.c.l.b16 %v350
    %v1168 = vunpack.c.h.b16 %v350
    %v1169 = vunpack.c.l.b16 %v351
    %v1170 = vunpack.c.l.b16 %v352
    %v1171 = vunpack.c.h.b16 %v352
    %v1172 = vunpack.c.l.b16 %v353
    %v1173 = vunpack.c.h.b16 %v353
    %v1174 = vunpack.c.l.b16 %v354
    %v1175 = vunpack.c.l.b16 %v355
    %v1176 = vunpack.c.h.b16 %v355
    %v1177 = vunpack.c.l.b16 %v356
    %v1178 = vunpack.c.h.b16 %v356
    %v1179 = vunpack.c.l.b16 %v357
    %v1180 = vunpack.c.l.b16 %v358
    %v1181 = vunpack.c.h.b16 %v358
    %v1182 = vunpack.c.l.b16 %v359
    %v1183 = vunpack.c.h.b16 %v359
    %v1184 = vunpack.c.l.b16 %v360
    %v1185 = vunpack.c.l.b16 %v361
    %v1186 = vunpack.c.h.b16 %v361
    %v1187 = vunpack.c.l.b16 %v362
    %v1188 = vunpack.c.h.b16 %v362
    %v1189 = vunpack.c.l.b16 %v363
    %v1190 = vunpack.c.l.b16 %v364
    %v1191 = vunpack.c.h.b16 %v364
    %v1192 = vunpack.c.l.b16 %v365
    %v1193 = vunpack.c.h.b16 %v365
    %v1194 = vunpack.c.l.b16 %v366
    %v1195 = vunpack.c.l.b16 %v367
    %v1196 = vunpack.c.h.b16 %v367
    %v1197 = vunpack.c.l.b16 %v368
    %v1198 = vunpack.c.h.b16 %v368
    %v1199 = vunpack.c.l.b16 %v369
    %v1200 = vunpack.c.l.b16 %v370
    %v1201 = vunpack.c.h.b16 %v370
    %v1202 = vunpack.c.l.b16 %v371
    %v1203 = vunpack.c.h.b16 %v371
    %v1204 = vunpack.c.l.b16 %v372
    %v1205 = vunpack.c.l.b16 %v373
    %v1206 = vunpack.c.h.b16 %v373
    %v1207 = vunpack.c.l.b16 %v374
    %v1208 = vunpack.c.h.b16 %v374
    %v1209 = vunpack.c.l.b16 %v375
    %v1210 = vunpack.c.l.b16 %v376
    %v1211 = vunpack.c.h.b16 %v376
    %v1212 = vunpack.c.l.b16 %v377
    %v1213 = vunpack.c.h.b16 %v377
    %v1214 = vunpack.c.l.b16 %v378
    %v1215 = vunpack.c.l.b16 %v379
    %v1216 = vunpack.c.h.b16 %v379
    %v1217 = vunpack.c.l.b16 %v380
    %v1218 = vunpack.c.h.b16 %v380
    %v1219 = vunpack.c.l.b16 %v381
    %v1220 = vunpack.c.l.b16 %v382
    %v1221 = vunpack.c.h.b16 %v382
    %v1222 = vunpack.c.l.b16 %v383
    %v1223 = vunpack.c.h.b16 %v383
    %v1224 = vunpack.c.l.b16 %v384
    %v1225 = vunpack.c.l.b16 %v385
    %v1226 = vunpack.c.h.b16 %v385
    %v1227 = vunpack.c.l.b16 %v386
    %v1228 = vunpack.c.h.b16 %v386
    %v1229 = vunpack.c.l.b16 %v387
    %v1230 = vunpack.c.l.b16 %v388
    %v1231 = vunpack.c.h.b16 %v388
    %v1232 = vunpack.c.l.b16 %v389
    %v1233 = vunpack.c.h.b16 %v389
    %v1234 = vunpack.c.l.b16 %v390
    %v1235 = vunpack.c.l.b16 %v391
    %v1236 = vunpack.c.h.b16 %v391
    %v1237 = vunpack.c.l.b16 %v392
    %v1238 = vunpack.c.h.b16 %v392
    %v1239 = vunpack.c.l.b16 %v393
    %v1240 = vunpack.c.l.b16 %v394
    %v1241 = vunpack.c.h.b16 %v394
    %v1242 = vunpack.c.l.b16 %v395
    %v1243 = vunpack.c.h.b16 %v395
    %v1244 = vunpack.c.l.b16 %v396
    %v1245 = vunpack.c.l.b16 %v397
    %v1246 = vunpack.c.h.b16 %v397
    %v1247 = vunpack.c.l.b16 %v398
    %v1248 = vunpack.c.h.b16 %v398
    %v1249 = vunpack.c.l.b16 %v399
    %v1250 = vunpack.c.l.b16 %v400
    %v1251 = vunpack.c.h.b16 %v400
    %v1252 = vunpack.c.l.b16 %v401
    %v1253 = vunpack.c.h.b16 %v401
    %v1254 = vunpack.c.l.b16 %v402
    %v1255 = vunpack.c.l.b16 %v403
    %v1256 = vunpack.c.h.b16 %v403
    %v1257 = vunpack.c.l.b16 %v404
    %v1258 = vunpack.c.h.b16 %v404
    %v1259 = vunpack.c.l.b16 %v405
    %v1260 = vunpack.c.l.b16 %v406
    %v1261 = vunpack.c.h.b16 %v406
    %v1262 = vunpack.c.l.b16 %v407
    %v1263 = vunpack.c.h.b16 %v407
    %v1264 = vunpack.c.l.b16 %v408
    %v1265 = vunpack.c.l.b16 %v409
    %v1266 = vunpack.c.h.b16 %v409
    %v1267 = vunpack.c.l.b16 %v410
    %v1268 = vunpack.c.h.b16 %v410
    %v1269 = vunpack.c.l.b16 %v411
    %v1270 = vunpack.c.l.b16 %v412
    %v1271 = vunpack.c.h.b16 %v412
    %v1272 = vunpack.c.l.b16 %v413
    %v1273 = vunpack.c.h.b16 %v413
    %v1274 = vunpack.c.l.b16 %v414
    %v1275 = vunpack.c.l.b16 %v415
    %v1276 = vunpack.c.h.b16 %v415
    %v1277 = vunpack.c.l.b16 %v416
    %v1278 = vunpack.c.h.b16 %v416
    %v1279 = vunpack.c.l.b16 %v417
    %v1280 = vunpack.c.l.b16 %v418
    %v1281 = vunpack.c.h.b16 %v418
    %v1282 = vunpack.c.l.b16 %v419
    %v1283 = vunpack.c.h.b16 %v419
    %v1284 = vunpack.c.l.b16 %v420
    %v1285 = vunpack.c.l.b16 %v421
    %v1286 = vunpack.c.h.b16 %v421
    %v1287 = vunpack.c.l.b16 %v422
    %v1288 = vunpack.c.h.b16 %v422
    %v1289 = vunpack.c.l.b16 %v423
    %v1290 = vunpack.c.l.b16 %v424
    %v1291 = vunpack.c.h.b16 %v424
    %v1292 = vunpack.c.l.b16 %v425
    %v1293 = vunpack.c.h.b16 %v425
    %v1294 = vunpack.c.l.b16 %v426
    %v1295 = vunpack.c.l.b16 %v427
    %v1296 = vunpack.c.h.b16 %v427
    %v1297 = vunpack.c.l.b16 %v428
    %v1298 = vunpack.c.h.b16 %v428
    %v1299 = vunpack.c.l.b16 %v429
    %v1300 = vunpack.c.l.b16 %v430
    %v1301 = vunpack.c.h.b16 %v430
    %v1302 = vunpack.c.l.b16 %v431
    %v1303 = vunpack.c.h.b16 %v431
    %v1304 = vunpack.c.l.b16 %v432
    %v1305 = vunpack.c.l.b16 %v433
    %v1306 = vunpack.c.h.b16 %v433
    %v1307 = vunpack.c.l.b16 %v434
    %v1308 = vunpack.c.h.b16 %v434
    %v1309 = vunpack.c.l.b16 %v435
    %v1310 = vunpack.c.l.b16 %v436
    %v1311 = vunpack.c.h.b16 %v436
    %v1312 = vunpack.c.l.b16 %v437
    %v1313 = vunpack.c.h.b16 %v437
    %v1314 = vunpack.c.l.b16 %v438
    %v1315 = vunpack.c.l.b16 %v439
    %v1316 = vunpack.c.h.b16 %v439
    %v1317 = vunpack.c.l.b16 %v440
    %v1318 = vunpack.c.h.b16 %v440
    %v1319 = vunpack.c.l.b16 %v441
    %v1320 = vunpack.c.l.b16 %v442
    %v1321 = vunpack.c.h.b16 %v442
    %v1322 = vunpack.c.l.b16 %v443
    %v1323 = vunpack.c.h.b16 %v443
    %v1324 = vunpack.c.l.b16 %v444
    %v1325 = vunpack.c.l.b16 %v445
    %v1326 = vunpack.c.h.b16 %v445
    %v1327 = vunpack.c.l.b16 %v446
    %v1328 = vunpack.c.h.b16 %v446
    %v1329 = vunpack.c.l.b16 %v447
    %v1330 = vunpack.c.l.b16 %v448
    %v1331 = vunpack.c.h.b16 %v448
    %v1332 = vunpack.c.l.b16 %v449
    %v1333 = vunpack.c.h.b16 %v449
    %v1334 = vunpack.c.l.b16 %v450
    %v1335 = vunpack.c.l.b16 %v451
    %v1336 = vunpack.c.h.b16 %v451
    %v1337 = vunpack.c.l.b16 %v452
    %v1338 = vunpack.c.h.b16 %v452
    %v1339 = vunpack.c.l.b16 %v453
    %v1340 = vunpack.c.l.b16 %v454
    %v1341 = vunpack.c.h.b16 %v454
    %v1342 = vunpack.c.l.b16 %v455
    %v1343 = vunpack.c.h.b16 %v455
    %v1344 = vunpack.c.l.b16 %v456
    %v1345 = vunpack.c.l.b16 %v457
    %v1346 = vunpack.c.h.b16 %v457
    %v1347 = vunpack.c.l.b16 %v458
    %v1348 = vunpack.c.h.b16 %v458
    %v1349 = vunpack.c.l.b16 %v459
    %v1350 = vunpack.c.l.b16 %v460
    %v1351 = vunpack.c.h.b16 %v460
    %v1352 = vunpack.c.l.b16 %v461
    %v1353 = vunpack.c.h.b16 %v461
    %v1354 = vunpack.c.l.b16 %v462
    %v1355 = vunpack.c.l.b16 %v463
    %v1356 = vunpack.c.h.b16 %v463
    %v1357 = vunpack.c.l.b16 %v464
    %v1358 = vunpack.c.h.b16 %v464
    %v1359 = vunpack.c.l.b16 %v465
    %v1360 = vunpack.c.l.b16 %v466
    %v1361 = vunpack.c.h.b16 %v466
    %v1362 = vunpack.c.l.b16 %v467
    %v1363 = vunpack.c.h.b16 %v467
    %v1364 = vunpack.c.l.b16 %v468
    %v1365 = vunpack.c.l.b16 %v469
    %v1366 = vunpack.c.h.b16 %v469
    %v1367 = vunpack.c.l.b16 %v470
    %v1368 = vunpack.c.h.b16 %v470
    %v1369 = vunpack.c.l.b16 %v471
    %v1370 = vunpack.c.l.b16 %v472
    %v1371 = vunpack.c.h.b16 %v472
    %v1372 = vunpack.c.l.b16 %v473
    %v1373 = vunpack.c.h.b16 %v473
    %v1374 = vunpack.c.l.b16 %v474
    %v1375 = vunpack.c.l.b16 %v475
    %v1376 = vunpack.c.h.b16 %v475
    %v1377 = vunpack.c.l.b16 %v476
    %v1378 = vunpack.c.h.b16 %v476
    %v1379 = vunpack.c.l.b16 %v477
    %v1380 = vunpack.c.l.b16 %v478
    %v1381 = vunpack.c.h.b16 %v478
    %v1382 = vunpack.c.l.b16 %v479
    %v1383 = vunpack.c.h.b16 %v479
    %v1384 = vunpack.c.l.b16 %v480
    %v1385 = vunpack.c.l.b16 %v481
    %v1386 = vunpack.c.h.b16 %v481
    %v1387 = vunpack.c.l.b16 %v482
    %v1388 = vunpack.c.h.b16 %v482
    %v1389 = vunpack.c.l.b16 %v483
    %v1390 = vunpack.c.l.b16 %v484
    %v1391 = vunpack.c.h.b16 %v484
    %v1392 = vunpack.c.l.b16 %v485
    %v1393 = vunpack.c.h.b16 %v485
    %v1394 = vunpack.c.l.b16 %v486
    %v1395 = vunpack.c.l.b16 %v487
    %v1396 = vunpack.c.h.b16 %v487
    %v1397 = vunpack.c.l.b16 %v488
    %v1398 = vunpack.c.h.b16 %v488
    %v1399 = vunpack.c.l.b16 %v489
    %v1400 = vunpack.c.l.b16 %v490
    %v1401 = vunpack.c.h.b16 %v490
    %v1402 = vunpack.c.l.b16 %v491
    %v1403 = vunpack.c.h.b16 %v491
    %v1404 = vunpack.c.l.b16 %v492
    %v1405 = vunpack.c.l.b16 %v493
    %v1406 = vunpack.c.h.b16 %v493
    %v1407 = vunpack.c.l.b16 %v494
    %v1408 = vunpack.c.h.b16 %v494
    %v1409 = vunpack.c.l.b16 %v495
    %v1410 = vunpack.c.l.b16 %v496
    %v1411 = vunpack.c.h.b16 %v496
    %v1412 = vunpack.c.l.b16 %v497
    %v1413 = vunpack.c.h.b16 %v497
    %v1414 = vunpack.c.l.b16 %v498
    %v1415 = vunpack.c.l.b16 %v499
    %v1416 = vunpack.c.h.b16 %v499
    %v1417 = vunpack.c.l.b16 %v500
    %v1418 = vunpack.c.h.b16 %v500
    %v1419 = vunpack.c.l.b16 %v501
    %v1420 = vunpack.c.l.b16 %v502
    %v1421 = vunpack.c.h.b16 %v502
    %v1422 = vunpack.c.l.b16 %v503
    %v1423 = vunpack.c.h.b16 %v503
    %v1424 = vunpack.c.l.b16 %v504
    %v1425 = vunpack.c.l.b16 %v505
    %v1426 = vunpack.c.h.b16 %v505
    %v1427 = vunpack.c.l.b16 %v506
    %v1428 = vunpack.c.h.b16 %v506
    %v1429 = vunpack.c.l.b16 %v507
    %v1430 = vunpack.c.l.b16 %v508
    %v1431 = vunpack.c.h.b16 %v508
    %v1432 = vunpack.c.l.b16 %v509
    %v1433 = vunpack.c.h.b16 %v509
    %v1434 = vunpack.c.l.b16 %v510
    %v1435 = vunpack.c.l.b16 %v511
    %v1436 = vunpack.c.h.b16 %v511
    %v1437 = vunpack.c.l.b16 %v512
    %v1438 = vunpack.c.h.b16 %v512
    %v1439 = vunpack.c.l.b16 %v513
    %v1440 = vunpack.c.l.b16 %v514
    %v1441 = vunpack.c.h.b16 %v514
    %v1442 = vunpack.c.l.b16 %v515
    %v1443 = vunpack.c.h.b16 %v515
    %v1444 = vunpack.c.l.b16 %v516
    %v1445 = vunpack.c.l.b16 %v517
    %v1446 = vunpack.c.h.b16 %v517
    %v1447 = vunpack.c.l.b16 %v518
    %v1448 = vunpack.c.h.b16 %v518
    %v1449 = vunpack.c.l.b16 %v519
    %v1450 = vunpack.c.l.b16 %v520
    %v1451 = vunpack.c.h.b16 %v520
    %v1452 = vunpack.c.l.b16 %v521
    %v1453 = vunpack.c.h.b16 %v521
    %v1454 = vunpack.c.l.b16 %v522
    %v1455 = vpack.c.b16 %v900, %v895
    %v1456 = vpack.c.b16 %v901, %v896
    %v1457 = vpack.c.b16 %v902, %v897
    %v1458 = vpack.c.b16 %v903, %v898
    %v1459 = vpack.c.b16 %v904, %v899
    %v1460 = vpack.c.b16 %v910, %v905
    %v1461 = vpack.c.b16 %v911, %v906
    %v1462 = vpack.c.b16 %v912, %v907
    %v1463 = vpack.c.b16 %v913, %v908
    %v1464 = vpack.c.b16 %v914, %v909
    %v1465 = vpack.c.b16 %v920, %v915
    %v1466 = vpack.c.b16 %v921, %v916
    %v1467 = vpack.c.b16 %v922, %v917
    %v1468 = vpack.c.b16 %v923, %v918
    %v1469 = vpack.c.b16 %v924, %v919
    %v1470 = vpack.c.b16 %v930, %v925
    %v1471 = vpack.c.b16 %v931, %v926
    %v1472 = vpack.c.b16 %v932, %v927
    %v1473 = vpack.c.b16 %v933, %v928
    %v1474 = vpack.c.b16 %v934, %v929
    %v1475 = vpack.c.b16 %v940, %v935
    %v1476 = vpack.c.b16 %v941, %v936
    %v1477 = vpack.c.b16 %v942, %v937
    %v1478 = vpack.c.b16 %v943, %v938
    %v1479 = vpack.c.b16 %v944, %v939
    %v1480 = vpack.c.b16 %v950, %v945
    %v1481 = vpack.c.b16 %v951, %v946
    %v1482 = vpack.c.b16 %v952, %v947
    %v1483 = vpack.c.b16 %v953, %v948
    %v1484 = vpack.c.b16 %v954, %v949
    %v1485 = vpack.c.b16 %v960, %v955
    %v1486 = vpack.c.b16 %v961, %v956
    %v1487 = vpack.c.b16 %v962, %v957
    %v1488 = vpack.c.b16 %v963, %v958
    %v1489 = vpack.c.b16 %v964, %v959
    %v1490 = vpack.c.b16 %v970, %v965
    %v1491 = vpack.c.b16 %v971, %v966
    %v1492 = vpack.c.b16 %v972, %v967
    %v1493 = vpack.c.b16 %v973, %v968
    %v1494 = vpack.c.b16 %v974, %v969
    %v1495 = vpack.c.b16 %v980, %v975
    %v1496 = vpack.c.b16 %v981, %v976
    %v1497 = vpack.c.b16 %v982, %v977
    %v1498 = vpack.c.b16 %v983, %v978
    %v1499 = vpack.c.b16 %v984, %v979
    %v1500 = vpack.c.b16 %v990, %v985
    %v1501 = vpack.c.b16 %v991, %v986
    %v1502 = vpack.c.b16 %v992, %v987
    %v1503 = vpack.c.b16 %v993, %v988
    %v1504 = vpack.c.b16 %v994, %v989
    %v1505 = vpack.c.b16 %v1000, %v995
    %v1506 = vpack.c.b16 %v1001, %v996
    %v1507 = vpack.c.b16 %v1002, %v997
    %v1508 = vpack.c.b16 %v1003, %v998
    %v1509 = vpack.c.b16 %v1004, %v999
    %v1510 = vpack.c.b16 %v1010, %v1005
    %v1511 = vpack.c.b16 %v1011, %v1006
    %v1512 = vpack.c.b16 %v1012, %v1007
    %v1513 = vpack.c.b16 %v1013, %v1008
    %v1514 = vpack.c.b16 %v1014, %v1009
    %v1515 = vpack.c.b16 %v1020, %v1015
    %v1516 = vpack.c.b16 %v1021, %v1016
    %v1517 = vpack.c.b16 %v1022, %v1017
    %v1518 = vpack.c.b16 %v1023, %v1018
    %v1519 = vpack.c.b16 %v1024, %v1019
    %v1520 = vpack.c.b16 %v1030, %v1025
    %v1521 = vpack.c.b16 %v1031, %v1026
    %v1522 = vpack.c.b16 %v1032, %v1027
    %v1523 = vpack.c.b16 %v1033, %v1028
    %v1524 = vpack.c.b16 %v1034, %v1029
    %v1525 = vpack.c.b16 %v1040, %v1035
    %v1526 = vpack.c.b16 %v1041, %v1036
    %v1527 = vpack.c.b16 %v1042, %v1037
    %v1528 = vpack.c.b16 %v1043, %v1038
    %v1529 = vpack.c.b16 %v1044, %v1039
    %v1530 = vpack.c.b16 %v1050, %v1045
    %v1531 = vpack.c.b16 %v1051, %v1046
    %v1532 = vpack.c.b16 %v1052, %v1047
    %v1533 = vpack.c.b16 %v1053, %v1048
    %v1534 = vpack.c.b16 %v1054, %v1049
    %v1535 = vpack.c.b16 %v1060, %v1055
    %v1536 = vpack.c.b16 %v1061, %v1056
    %v1537 = vpack.c.b16 %v1062, %v1057
    %v1538 = vpack.c.b16 %v1063, %v1058
    %v1539 = vpack.c.b16 %v1064, %v1059
    %v1540 = vpack.c.b16 %v1070, %v1065
    %v1541 = vpack.c.b16 %v1071, %v1066
    %v1542 = vpack.c.b16 %v1072, %v1067
    %v1543 = vpack.c.b16 %v1073, %v1068
    %v1544 = vpack.c.b16 %v1074, %v1069
    %v1545 = vpack.c.b16 %v1080, %v1075
    %v1546 = vpack.c.b16 %v1081, %v1076
    %v1547 = vpack.c.b16 %v1082, %v1077
    %v1548 = vpack.c.b16 %v1083, %v1078
    %v1549 = vpack.c.b16 %v1084, %v1079
    %v1550 = vpack.c.b16 %v1090, %v1085
    %v1551 = vpack.c.b16 %v1091, %v1086
    %v1552 = vpack.c.b16 %v1092, %v1087
    %v1553 = vpack.c.b16 %v1093, %v1088
    %v1554 = vpack.c.b16 %v1094, %v1089
    %v1555 = vpack.c.b16 %v1100, %v1095
    %v1556 = vpack.c.b16 %v1101, %v1096
    %v1557 = vpack.c.b16 %v1102, %v1097
    %v1558 = vpack.c.b16 %v1103, %v1098
    %v1559 = vpack.c.b16 %v1104, %v1099
    %v1560 = vpack.c.b16 %v1110, %v1105
    %v1561 = vpack.c.b16 %v1111, %v1106
    %v1562 = vpack.c.b16 %v1112, %v1107
    %v1563 = vpack.c.b16 %v1113, %v1108
    %v1564 = vpack.c.b16 %v1114, %v1109
    %v1565 = vpack.c.b16 %v1120, %v1115
    %v1566 = vpack.c.b16 %v1121, %v1116
    %v1567 = vpack.c.b16 %v1122, %v1117
    %v1568 = vpack.c.b16 %v1123, %v1118
    %v1569 = vpack.c.b16 %v1124, %v1119
    %v1570 = vpack.c.b16 %v1130, %v1125
    %v1571 = vpack.c.b16 %v1131, %v1126
    %v1572 = vpack.c.b16 %v1132, %v1127
    %v1573 = vpack.c.b16 %v1133, %v1128
    %v1574 = vpack.c.b16 %v1134, %v1129
    %v1575 = vpack.c.b16 %v1140, %v1135
    %v1576 = vpack.c.b16 %v1141, %v1136
    %v1577 = vpack.c.b16 %v1142, %v1137
    %v1578 = vpack.c.b16 %v1143, %v1138
    %v1579 = vpack.c.b16 %v1144, %v1139
    %v1580 = vpack.c.b16 %v1150, %v1145
    %v1581 = vpack.c.b16 %v1151, %v1146
    %v1582 = vpack.c.b16 %v1152, %v1147
    %v1583 = vpack.c.b16 %v1153, %v1148
    %v1584 = vpack.c.b16 %v1154, %v1149
    %v1585 = vpack.c.b16 %v1160, %v1155
    %v1586 = vpack.c.b16 %v1161, %v1156
    %v1587 = vpack.c.b16 %v1162, %v1157
    %v1588 = vpack.c.b16 %v1163, %v1158
    %v1589 = vpack.c.b16 %v1164, %v1159
    %v1590 = vpack.c.b16 %v1170, %v1165
    %v1591 = vpack.c.b16 %v1171, %v1166
    %v1592 = vpack.c.b16 %v1172, %v1167
    %v1593 = vpack.c.b16 %v1173, %v1168
    %v1594 = vpack.c.b16 %v1174, %v1169
    %v1595 = vpack.c.b16 %v1180, %v1175
    %v1596 = vpack.c.b16 %v1181, %v1176
    %v1597 = vpack.c.b16 %v1182, %v1177
    %v1598 = vpack.c.b16 %v1183, %v1178
    %v1599 = vpack.c.b16 %v1184, %v1179
    %v1600 = vpack.c.b16 %v1190, %v1185
    %v1601 = vpack.c.b16 %v1191, %v1186
    %v1602 = vpack.c.b16 %v1192, %v1187
    %v1603 = vpack.c.b16 %v1193, %v1188
    %v1604 = vpack.c.b16 %v1194, %v1189
    %v1605 = vpack.c.b16 %v1200, %v1195
    %v1606 = vpack.c.b16 %v1201, %v1196
    %v1607 = vpack.c.b16 %v1202, %v1197
    %v1608 = vpack.c.b16 %v1203, %v1198
    %v1609 = vpack.c.b16 %v1204, %v1199
    %v1610 = vpack.c.b16 %v1210, %v1205
    %v1611 = vpack.c.b16 %v1211, %v1206
    %v1612 = vpack.c.b16 %v1212, %v1207
    %v1613 = vpack.c.b16 %v1213, %v1208
    %v1614 = vpack.c.b16 %v1214, %v1209
    %v1615 = vpack.c.b16 %v1220, %v1215
    %v1616 = vpack.c.b16 %v1221, %v1216
    %v1617 = vpack.c.b16 %v1222, %v1217
    %v1618 = vpack.c.b16 %v1223, %v1218
    %v1619 = vpack.c.b16 %v1224, %v1219
    %v1620 = vpack.c.b16 %v1230, %v1225
    %v1621 = vpack.c.b16 %v1231, %v1226
    %v1622 = vpack.c.b16 %v1232, %v1227
    %v1623 = vpack.c.b16 %v1233, %v1228
    %v1624 = vpack.c.b16 %v1234, %v1229
    %v1625 = vpack.c.b16 %v1240, %v1235
    %v1626 = vpack.c.b16 %v1241, %v1236
    %v1627 = vpack.c.b16 %v1242, %v1237
    %v1628 = vpack.c.b16 %v1243, %v1238
    %v1629 = vpack.c.b16 %v1244, %v1239
    %v1630 = vpack.c.b16 %v1250, %v1245
    %v1631 = vpack.c.b16 %v1251, %v1246
    %v1632 = vpack.c.b16 %v1252, %v1247
    %v1633 = vpack.c.b16 %v1253, %v1248
    %v1634 = vpack.c.b16 %v1254, %v1249
    %v1635 = vpack.c.b16 %v1260, %v1255
    %v1636 = vpack.c.b16 %v1261, %v1256
    %v1637 = vpack.c.b16 %v1262, %v1257
    %v1638 = vpack.c.b16 %v1263, %v1258
    %v1639 = vpack.c.b16 %v1264, %v1259
    %v1640 = vpack.c.b16 %v1270, %v1265
    %v1641 = vpack.c.b16 %v1271, %v1266
    %v1642 = vpack.c.b16 %v1272, %v1267
    %v1643 = vpack.c.b16 %v1273, %v1268
    %v1644 = vpack.c.b16 %v1274, %v1269
    %v1645 = vpack.c.b16 %v1280, %v1275
    %v1646 = vpack.c.b16 %v1281, %v1276
    %v1647 = vpack.c.b16 %v1282, %v1277
    %v1648 = vpack.c.b16 %v1283, %v1278
    %v1649 = vpack.c.b16 %v1284, %v1279
    %v1650 = vpack.c.b16 %v1290, %v1285
    %v1651 = vpack.c.b16 %v1291, %v1286
    %v1652 = vpack.c.b16 %v1292, %v1287
    %v1653 = vpack.c.b16 %v1293, %v1288
    %v1654 = vpack.c.b16 %v1294, %v1289
    %v1655 = vpack.c.b16 %v1300, %v1295
    %v1656 = vpack.c.b16 %v1301, %v1296
    %v1657 = vpack.c.b16 %v1302, %v1297
    %v1658 = vpack.c.b16 %v1303, %v1298
    %v1659 = vpack.c.b16 %v1304, %v1299
    %v1660 = vpack.c.b16 %v1310, %v1305
    %v1661 = vpack.c.b16 %v1311, %v1306
    %v1662 = vpack.c.b16 %v1312, %v1307
    %v1663 = vpack.c.b16 %v1313, %v1308
    %v1664 = vpack.c.b16 %v1314, %v1309
    %v1665 = vpack.c.b16 %v1320, %v1315
    %v1666 = vpack.c.b16 %v1321, %v1316
    %v1667 = vpack.c.b16 %v1322, %v1317
    %v1668 = vpack.c.b16 %v1323, %v1318
    %v1669 = vpack.c.b16 %v1324, %v1319
    %v1670 = vpack.c.b16 %v1330, %v1325
    %v1671 = vpack.c.b16 %v1331, %v1326
    %v1672 = vpack.c.b16 %v1332, %v1327
    %v1673 = vpack.c.b16 %v1333, %v1328
    %v1674 = vpack.c.b16 %v1334, %v1329
    %v1675 = vpack.c.b16 %v1340, %v1335
    %v1676 = vpack.c.b16 %v1341, %v1336
    %v1677 = vpack.c.b16 %v1342, %v1337
    %v1678 = vpack.c.b16 %v1343, %v1338
    %v1679 = vpack.c.b16 %v1344, %v1339
    %v1680 = vpack.c.b16 %v1350, %v1345
    %v1681 = vpack.c.b16 %v1351, %v1346
    %v1682 = vpack.c.b16 %v1352, %v1347
    %v1683 = vpack.c.b16 %v1353, %v1348
    %v1684 = vpack.c.b16 %v1354, %v1349
    %v1685 = vpack.c.b16 %v1360, %v1355
    %v1686 = vpack.c.b16 %v1361, %v1356
    %v1687 = vpack.c.b16 %v1362, %v1357
    %v1688 = vpack.c.b16 %v1363, %v1358
    %v1689 = vpack.c.b16 %v1364, %v1359
    %v1690 = vpack.c.b16 %v1370, %v1365
    %v1691 = vpack.c.b16 %v1371, %v1366
    %v1692 = vpack.c.b16 %v1372, %v1367
    %v1693 = vpack.c.b16 %v1373, %v1368
    %v1694 = vpack.c.b16 %v1374, %v1369
    %v1695 = vpack.c.b16 %v1380, %v1375
    %v1696 = vpack.c.b16 %v1381, %v1376
    %v1697 = vpack.c.b16 %v1382, %v1377
    %v1698 = vpack.c.b16 %v1383, %v1378
    %v1699 = vpack.c.b16 %v1384, %v1379
    %v1700 = vpack.c.b16 %v1390, %v1385
    %v1701 = vpack.c.b16 %v1391, %v1386
    %v1702 = vpack.c.b16 %v1392, %v1387
    %v1703 = vpack.c.b16 %v1393, %v1388
    %v1704 = vpack.c.b16 %v1394, %v1389
    %v1705 = vpack.c.b16 %v1400, %v1395
    %v1706 = vpack.c.b16 %v1401, %v1396
    %v1707 = vpack.c.b16 %v1402, %v1397
    %v1708 = vpack.c.b16 %v1403, %v1398
    %v1709 = vpack.c.b16 %v1404, %v1399
    %v1710 = vpack.c.b16 %v1410, %v1405
    %v1711 = vpack.c.b16 %v1411, %v1406
    %v1712 = vpack.c.b16 %v1412, %v1407
    %v1713 = vpack.c.b16 %v1413, %v1408
    %v1714 = vpack.c.b16 %v1414, %v1409
    %v1715 = vpack.c.b16 %v1420, %v1415
    %v1716 = vpack.c.b16 %v1421, %v1416
    %v1717 = vpack.c.b16 %v1422, %v1417
    %v1718 = vpack.c.b16 %v1423, %v1418
    %v1719 = vpack.c.b16 %v1424, %v1419
    %v1720 = vpack.c.b16 %v1430, %v1425
    %v1721 = vpack.c.b16 %v1431, %v1426
    %v1722 = vpack.c.b16 %v1432, %v1427
    %v1723 = vpack.c.b16 %v1433, %v1428
    %v1724 = vpack.c.b16 %v1434, %v1429
    %v1725 = vpack.c.b16 %v1440, %v1435
    %v1726 = vpack.c.b16 %v1441, %v1436
    %v1727 = vpack.c.b16 %v1442, %v1437
    %v1728 = vpack.c.b16 %v1443, %v1438
    %v1729 = vpack.c.b16 %v1444, %v1439
    %v1730 = vpack.c.b16 %v1450, %v1445
    %v1731 = vpack.c.b16 %v1451, %v1446
    %v1732 = vpack.c.b16 %v1452, %v1447
    %v1733 = vpack.c.b16 %v1453, %v1448
    %v1734 = vpack.c.b16 %v1454, %v1449
    %2015 = vmatprep.subr.bf16.mxu0 %v1491
    %2016 = vmatpush1.bf16.msra.mxu0 %v1490
    %2017 = vmatprep.subr.bf16.mxu0 %v1486
    %2018 = vmatpush1.bf16.msra.mxu0 %v1485
    %2019 = vmatprep.subr.bf16.mxu0 %v1481
    %2020 = vmatpush1.bf16.msra.mxu0 %v1480
    %2021 = vmatprep.subr.bf16.mxu0 %v1476
    %2022 = vmatpush1.bf16.msra.mxu0 %v1475
    %2023 = vmatprep.subr.bf16.mxu0 %v1471
    %2024 = vmatpush1.bf16.msra.mxu0 %v1470
    %2025 = vmatprep.subr.bf16.mxu0 %v1466
    %2026 = vmatpush1.bf16.msra.mxu0 %v1465
    %2027 = vmatprep.subr.bf16.mxu0 %v1461
    %2028 = vmatpush1.bf16.msra.mxu0 %v1460
    %2029 = vmatprep.subr.bf16.mxu0 %v1456
    %2030 = vmatpush1.bf16.msra.mxu0 %v1455
    %2031 = vmatprep.subr.bf16.mxu0 %v1531
    %2032 = vmatpush2.bf16.msra.mxu0 %v1530
    %2033 = vmatprep.subr.bf16.mxu0 %v1526
    %2034 = vmatpush2.bf16.msra.mxu0 %v1525
    %2035 = vmatprep.subr.bf16.mxu0 %v1521
    %2036 = vmatpush2.bf16.msra.mxu0 %v1520
    %2037 = vmatprep.subr.bf16.mxu0 %v1516
    %2038 = vmatpush2.bf16.msra.mxu0 %v1515
    %2039 = vmatprep.subr.bf16.mxu0 %v1511
    %2040 = vmatpush2.bf16.msra.mxu0 %v1510
    %2041 = vmatprep.subr.bf16.mxu0 %v1506
    %2042 = vmatpush2.bf16.msra.mxu0 %v1505
    %2043 = vmatprep.subr.bf16.mxu0 %v1501
    %2044 = vmatpush2.bf16.msra.mxu0 %v1500
    %2045 = vmatprep.subr.bf16.mxu0 %v1496
    %2046 = vmatpush2.bf16.msra.mxu0 %v1495
    %2047 = vmatprep.mubr.bf16.mxu0 %v546
    %2048 = vmatmul.mubr.bf16.gmra.mxu0 %v545
    %v2049 = vpop.f32.mrf.mxu0
    %v2050 = vadd.f32 0.0, %v2049
    %v2051 = vpop.f32.mrf.mxu0
    %v2052 = vadd.f32 0.0, %v2051
    %v2053 = vpop.f32.mrf.mxu0
    %v2054 = vadd.f32 0.0, %v2053
    %v2055 = vpop.f32.mrf.mxu0
    %v2056 = vadd.f32 0.0, %v2055
    %2057 = vdwg.mxu0
    %2058 = vmatprep.subr.bf16.mxu0 %v1571
    %2059 = vmatpush1.bf16.msra.mxu0 %v1570
    %2060 = vmatprep.subr.bf16.mxu0 %v1566
    %2061 = vmatpush1.bf16.msra.mxu0 %v1565
    %2062 = vmatprep.subr.bf16.mxu0 %v1561
    %2063 = vmatpush1.bf16.msra.mxu0 %v1560
    %2064 = vmatprep.subr.bf16.mxu0 %v1556
    %2065 = vmatpush1.bf16.msra.mxu0 %v1555
    %2066 = vmatprep.subr.bf16.mxu0 %v1551
    %2067 = vmatpush1.bf16.msra.mxu0 %v1550
    %2068 = vmatprep.subr.bf16.mxu0 %v1546
    %2069 = vmatpush1.bf16.msra.mxu0 %v1545
    %2070 = vmatprep.subr.bf16.mxu0 %v1541
    %2071 = vmatpush1.bf16.msra.mxu0 %v1540
    %2072 = vmatprep.subr.bf16.mxu0 %v1536
    %2073 = vmatpush1.bf16.msra.mxu0 %v1535
    %2074 = vmatprep.subr.bf16.mxu0 %v1611
    %2075 = vmatpush2.bf16.msra.mxu0 %v1610
    %2076 = vmatprep.subr.bf16.mxu0 %v1606
    %2077 = vmatpush2.bf16.msra.mxu0 %v1605
    %2078 = vmatprep.subr.bf16.mxu0 %v1601
    %2079 = vmatpush2.bf16.msra.mxu0 %v1600
    %2080 = vmatprep.subr.bf16.mxu0 %v1596
    %2081 = vmatpush2.bf16.msra.mxu0 %v1595
    %2082 = vmatprep.subr.bf16.mxu0 %v1591
    %2083 = vmatpush2.bf16.msra.mxu0 %v1590
    %2084 = vmatprep.subr.bf16.mxu0 %v1586
    %2085 = vmatpush2.bf16.msra.mxu0 %v1585
    %2086 = vmatprep.subr.bf16.mxu0 %v1581
    %2087 = vmatpush2.bf16.msra.mxu0 %v1580
    %2088 = vmatprep.subr.bf16.mxu0 %v1576
    %2089 = vmatpush2.bf16.msra.mxu0 %v1575
    %2090 = vmatprep.mubr.bf16.mxu0 %v548
    %2091 = vmatmul.mubr.bf16.gmra.mxu0 %v547
    %v2092 = vpop.f32.mrf.mxu0
    %v2093 = vadd.f32 %v2050, %v2092
    %v2094 = vpop.f32.mrf.mxu0
    %v2095 = vadd.f32 %v2052, %v2094
    %v2096 = vpop.f32.mrf.mxu0
    %v2097 = vadd.f32 %v2054, %v2096
    %v2098 = vpop.f32.mrf.mxu0
    %v2099 = vadd.f32 %v2056, %v2098
    %2100 = vdwg.mxu0
    %2101 = vmatprep.subr.bf16.mxu0 %v1651
    %2102 = vmatpush1.bf16.msra.mxu0 %v1650
    %2103 = vmatprep.subr.bf16.mxu0 %v1646
    %2104 = vmatpush1.bf16.msra.mxu0 %v1645
    %2105 = vmatprep.subr.bf16.mxu0 %v1641
    %2106 = vmatpush1.bf16.msra.mxu0 %v1640
    %2107 = vmatprep.subr.bf16.mxu0 %v1636
    %2108 = vmatpush1.bf16.msra.mxu0 %v1635
    %2109 = vmatprep.subr.bf16.mxu0 %v1631
    %2110 = vmatpush1.bf16.msra.mxu0 %v1630
    %2111 = vmatprep.subr.bf16.mxu0 %v1626
    %2112 = vmatpush1.bf16.msra.mxu0 %v1625
    %2113 = vmatprep.subr.bf16.mxu0 %v1621
    %2114 = vmatpush1.bf16.msra.mxu0 %v1620
    %2115 = vmatprep.subr.bf16.mxu0 %v1616
    %2116 = vmatpush1.bf16.msra.mxu0 %v1615
    %2117 = vmatprep.subr.bf16.mxu0 %v1691
    %2118 = vmatpush2.bf16.msra.mxu0 %v1690
    %2119 = vmatprep.subr.bf16.mxu0 %v1686
    %2120 = vmatpush2.bf16.msra.mxu0 %v1685
    %2121 = vmatprep.subr.bf16.mxu0 %v1681
    %2122 = vmatpush2.bf16.msra.mxu0 %v1680
    %2123 = vmatprep.subr.bf16.mxu0 %v1676
    %2124 = vmatpush2.bf16.msra.mxu0 %v1675
    %2125 = vmatprep.subr.bf16.mxu0 %v1671
    %2126 = vmatpush2.bf16.msra.mxu0 %v1670
    %2127 = vmatprep.subr.bf16.mxu0 %v1666
    %2128 = vmatpush2.bf16.msra.mxu0 %v1665
    %2129 = vmatprep.subr.bf16.mxu0 %v1661
    %2130 = vmatpush2.bf16.msra.mxu0 %v1660
    %2131 = vmatprep.subr.bf16.mxu0 %v1656
    %2132 = vmatpush2.bf16.msra.mxu0 %v1655
    %2133 = vmatprep.mubr.bf16.mxu0 %v550
    %2134 = vmatmul.mubr.bf16.gmra.mxu0 %v549
    %v2135 = vpop.f32.mrf.mxu0
    %v2136 = vadd.f32 %v2093, %v2135
    %v2137 = vpop.f32.mrf.mxu0
    %v2138 = vadd.f32 %v2095, %v2137
    %v2139 = vpop.f32.mrf.mxu0
    %v2140 = vadd.f32 %v2097, %v2139
    %v2141 = vpop.f32.mrf.mxu0
    %v2142 = vadd.f32 %v2099, %v2141
    %2143 = vdwg.mxu0
    %2144 = vmatprep.subr.bf16.mxu0 %v1731
    %2145 = vmatpush1.bf16.msra.mxu0 %v1730
    %2146 = vmatprep.subr.bf16.mxu0 %v1726
    %2147 = vmatpush1.bf16.msra.mxu0 %v1725
    %2148 = vmatprep.subr.bf16.mxu0 %v1721
    %2149 = vmatpush1.bf16.msra.mxu0 %v1720
    %2150 = vmatprep.subr.bf16.mxu0 %v1716
    %2151 = vmatpush1.bf16.msra.mxu0 %v1715
    %2152 = vmatprep.subr.bf16.mxu0 %v1711
    %2153 = vmatpush1.bf16.msra.mxu0 %v1710
    %2154 = vmatprep.subr.bf16.mxu0 %v1706
    %2155 = vmatpush1.bf16.msra.mxu0 %v1705
    %2156 = vmatprep.subr.bf16.mxu0 %v1701
    %2157 = vmatpush1.bf16.msra.mxu0 %v1700
    %2158 = vmatprep.subr.bf16.mxu0 %v1696
    %2159 = vmatpush1.bf16.msra.mxu0 %v1695
    %2160 = vmatprep.subr.bf16.mxu0 0
    %2161 = vmatpush2.bf16.msra.mxu0 0
    %2162 = vmatprep.subr.bf16.mxu0 0
    %2163 = vmatpush2.bf16.msra.mxu0 0
    %2164 = vmatprep.subr.bf16.mxu0 0
    %2165 = vmatpush2.bf16.msra.mxu0 0
    %2166 = vmatprep.subr.bf16.mxu0 0
    %2167 = vmatpush2.bf16.msra.mxu0 0
    %2168 = vmatprep.subr.bf16.mxu0 0
    %2169 = vmatpush2.bf16.msra.mxu0 0
    %2170 = vmatprep.subr.bf16.mxu0 0
    %2171 = vmatpush2.bf16.msra.mxu0 0
    %2172 = vmatprep.subr.bf16.mxu0 0
    %2173 = vmatpush2.bf16.msra.mxu0 0
    %2174 = vmatprep.subr.bf16.mxu0 0
    %2175 = vmatpush2.bf16.msra.mxu0 0
    %2176 = vmatprep.mubr.bf16.mxu0 0
    %2177 = vmatmul.mubr.bf16.gmra.mxu0 %v551
    %v2178 = vpop.f32.mrf.mxu0
    %v2179 = vadd.f32 %v2136, %v2178
    %v2180 = vpop.f32.mrf.mxu0
    %v2181 = vadd.f32 %v2138, %v2180
    %v2182 = vpop.f32.mrf.mxu0
    %v2183 = vadd.f32 %v2140, %v2182
    %v2184 = vpop.f32.mrf.mxu0
    %v2185 = vadd.f32 %v2142, %v2184
    %2186 = vdwg.mxu0
    %2187 = vmatprep.subr.bf16.mxu0 %v1493
    %2188 = vmatpush1.bf16.msra.mxu0 %v1492
    %2189 = vmatprep.subr.bf16.mxu0 %v1488
    %2190 = vmatpush1.bf16.msra.mxu0 %v1487
    %2191 = vmatprep.subr.bf16.mxu0 %v1483
    %2192 = vmatpush1.bf16.msra.mxu0 %v1482
    %2193 = vmatprep.subr.bf16.mxu0 %v1478
    %2194 = vmatpush1.bf16.msra.mxu0 %v1477
    %2195 = vmatprep.subr.bf16.mxu0 %v1473
    %2196 = vmatpush1.bf16.msra.mxu0 %v1472
    %2197 = vmatprep.subr.bf16.mxu0 %v1468
    %2198 = vmatpush1.bf16.msra.mxu0 %v1467
    %2199 = vmatprep.subr.bf16.mxu0 %v1463
    %2200 = vmatpush1.bf16.msra.mxu0 %v1462
    %2201 = vmatprep.subr.bf16.mxu0 %v1458
    %2202 = vmatpush1.bf16.msra.mxu0 %v1457
    %2203 = vmatprep.subr.bf16.mxu0 %v1533
    %2204 = vmatpush2.bf16.msra.mxu0 %v1532
    %2205 = vmatprep.subr.bf16.mxu0 %v1528
    %2206 = vmatpush2.bf16.msra.mxu0 %v1527
    %2207 = vmatprep.subr.bf16.mxu0 %v1523
    %2208 = vmatpush2.bf16.msra.mxu0 %v1522
    %2209 = vmatprep.subr.bf16.mxu0 %v1518
    %2210 = vmatpush2.bf16.msra.mxu0 %v1517
    %2211 = vmatprep.subr.bf16.mxu0 %v1513
    %2212 = vmatpush2.bf16.msra.mxu0 %v1512
    %2213 = vmatprep.subr.bf16.mxu0 %v1508
    %2214 = vmatpush2.bf16.msra.mxu0 %v1507
    %2215 = vmatprep.subr.bf16.mxu0 %v1503
    %2216 = vmatpush2.bf16.msra.mxu0 %v1502
    %2217 = vmatprep.subr.bf16.mxu0 %v1498
    %2218 = vmatpush2.bf16.msra.mxu0 %v1497
    %2219 = vmatprep.mubr.bf16.mxu0 %v546
    %2220 = vmatmul.mubr.bf16.gmra.mxu0 %v545
    %v2221 = vpop.f32.mrf.mxu0
    %v2222 = vadd.f32 0.0, %v2221
    %v2223 = vpop.f32.mrf.mxu0
    %v2224 = vadd.f32 0.0, %v2223
    %v2225 = vpop.f32.mrf.mxu0
    %v2226 = vadd.f32 0.0, %v2225
    %v2227 = vpop.f32.mrf.mxu0
    %v2228 = vadd.f32 0.0, %v2227
    %2229 = vdwg.mxu0
    %2230 = vmatprep.subr.bf16.mxu0 %v1573
    %2231 = vmatpush1.bf16.msra.mxu0 %v1572
    %2232 = vmatprep.subr.bf16.mxu0 %v1568
    %2233 = vmatpush1.bf16.msra.mxu0 %v1567
    %2234 = vmatprep.subr.bf16.mxu0 %v1563
    %2235 = vmatpush1.bf16.msra.mxu0 %v1562
    %2236 = vmatprep.subr.bf16.mxu0 %v1558
    %2237 = vmatpush1.bf16.msra.mxu0 %v1557
    %2238 = vmatprep.subr.bf16.mxu0 %v1553
    %2239 = vmatpush1.bf16.msra.mxu0 %v1552
    %2240 = vmatprep.subr.bf16.mxu0 %v1548
    %2241 = vmatpush1.bf16.msra.mxu0 %v1547
    %2242 = vmatprep.subr.bf16.mxu0 %v1543
    %2243 = vmatpush1.bf16.msra.mxu0 %v1542
    %2244 = vmatprep.subr.bf16.mxu0 %v1538
    %2245 = vmatpush1.bf16.msra.mxu0 %v1537
    %2246 = vmatprep.subr.bf16.mxu0 %v1613
    %2247 = vmatpush2.bf16.msra.mxu0 %v1612
    %2248 = vmatprep.subr.bf16.mxu0 %v1608
    %2249 = vmatpush2.bf16.msra.mxu0 %v1607
    %2250 = vmatprep.subr.bf16.mxu0 %v1603
    %2251 = vmatpush2.bf16.msra.mxu0 %v1602
    %2252 = vmatprep.subr.bf16.mxu0 %v1598
    %2253 = vmatpush2.bf16.msra.mxu0 %v1597
    %2254 = vmatprep.subr.bf16.mxu0 %v1593
    %2255 = vmatpush2.bf16.msra.mxu0 %v1592
    %2256 = vmatprep.subr.bf16.mxu0 %v1588
    %2257 = vmatpush2.bf16.msra.mxu0 %v1587
    %2258 = vmatprep.subr.bf16.mxu0 %v1583
    %2259 = vmatpush2.bf16.msra.mxu0 %v1582
    %2260 = vmatprep.subr.bf16.mxu0 %v1578
    %2261 = vmatpush2.bf16.msra.mxu0 %v1577
    %2262 = vmatprep.mubr.bf16.mxu0 %v548
    %2263 = vmatmul.mubr.bf16.gmra.mxu0 %v547
    %v2264 = vpop.f32.mrf.mxu0
    %v2265 = vadd.f32 %v2222, %v2264
    %v2266 = vpop.f32.mrf.mxu0
    %v2267 = vadd.f32 %v2224, %v2266
    %v2268 = vpop.f32.mrf.mxu0
    %v2269 = vadd.f32 %v2226, %v2268
    %v2270 = vpop.f32.mrf.mxu0
    %v2271 = vadd.f32 %v2228, %v2270
    %2272 = vdwg.mxu0
    %2273 = vmatprep.subr.bf16.mxu0 %v1653
    %2274 = vmatpush1.bf16.msra.mxu0 %v1652
    %2275 = vmatprep.subr.bf16.mxu0 %v1648
    %2276 = vmatpush1.bf16.msra.mxu0 %v1647
    %2277 = vmatprep.subr.bf16.mxu0 %v1643
    %2278 = vmatpush1.bf16.msra.mxu0 %v1642
    %2279 = vmatprep.subr.bf16.mxu0 %v1638
    %2280 = vmatpush1.bf16.msra.mxu0 %v1637
    %2281 = vmatprep.subr.bf16.mxu0 %v1633
    %2282 = vmatpush1.bf16.msra.mxu0 %v1632
    %2283 = vmatprep.subr.bf16.mxu0 %v1628
    %2284 = vmatpush1.bf16.msra.mxu0 %v1627
    %2285 = vmatprep.subr.bf16.mxu0 %v1623
    %2286 = vmatpush1.bf16.msra.mxu0 %v1622
    %2287 = vmatprep.subr.bf16.mxu0 %v1618
    %2288 = vmatpush1.bf16.msra.mxu0 %v1617
    %2289 = vmatprep.subr.bf16.mxu0 %v1693
    %2290 = vmatpush2.bf16.msra.mxu0 %v1692
    %2291 = vmatprep.subr.bf16.mxu0 %v1688
    %2292 = vmatpush2.bf16.msra.mxu0 %v1687
    %2293 = vmatprep.subr.bf16.mxu0 %v1683
    %2294 = vmatpush2.bf16.msra.mxu0 %v1682
    %2295 = vmatprep.subr.bf16.mxu0 %v1678
    %2296 = vmatpush2.bf16.msra.mxu0 %v1677
    %2297 = vmatprep.subr.bf16.mxu0 %v1673
    %2298 = vmatpush2.bf16.msra.mxu0 %v1672
    %2299 = vmatprep.subr.bf16.mxu0 %v1668
    %2300 = vmatpush2.bf16.msra.mxu0 %v1667
    %2301 = vmatprep.subr.bf16.mxu0 %v1663
    %2302 = vmatpush2.bf16.msra.mxu0 %v1662
    %2303 = vmatprep.subr.bf16.mxu0 %v1658
    %2304 = vmatpush2.bf16.msra.mxu0 %v1657
    %2305 = vmatprep.mubr.bf16.mxu0 %v550
    %2306 = vmatmul.mubr.bf16.gmra.mxu0 %v549
    %v2307 = vpop.f32.mrf.mxu0
    %v2308 = vadd.f32 %v2265, %v2307
    %v2309 = vpop.f32.mrf.mxu0
    %v2310 = vadd.f32 %v2267, %v2309
    %v2311 = vpop.f32.mrf.mxu0
    %v2312 = vadd.f32 %v2269, %v2311
    %v2313 = vpop.f32.mrf.mxu0
    %v2314 = vadd.f32 %v2271, %v2313
    %2315 = vdwg.mxu0
    %2316 = vmatprep.subr.bf16.mxu0 %v1733
    %2317 = vmatpush1.bf16.msra.mxu0 %v1732
    %2318 = vmatprep.subr.bf16.mxu0 %v1728
    %2319 = vmatpush1.bf16.msra.mxu0 %v1727
    %2320 = vmatprep.subr.bf16.mxu0 %v1723
    %2321 = vmatpush1.bf16.msra.mxu0 %v1722
    %2322 = vmatprep.subr.bf16.mxu0 %v1718
    %2323 = vmatpush1.bf16.msra.mxu0 %v1717
    %2324 = vmatprep.subr.bf16.mxu0 %v1713
    %2325 = vmatpush1.bf16.msra.mxu0 %v1712
    %2326 = vmatprep.subr.bf16.mxu0 %v1708
    %2327 = vmatpush1.bf16.msra.mxu0 %v1707
    %2328 = vmatprep.subr.bf16.mxu0 %v1703
    %2329 = vmatpush1.bf16.msra.mxu0 %v1702
    %2330 = vmatprep.subr.bf16.mxu0 %v1698
    %2331 = vmatpush1.bf16.msra.mxu0 %v1697
    %2332 = vmatprep.subr.bf16.mxu0 0
    %2333 = vmatpush2.bf16.msra.mxu0 0
    %2334 = vmatprep.subr.bf16.mxu0 0
    %2335 = vmatpush2.bf16.msra.mxu0 0
    %2336 = vmatprep.subr.bf16.mxu0 0
    %2337 = vmatpush2.bf16.msra.mxu0 0
    %2338 = vmatprep.subr.bf16.mxu0 0
    %2339 = vmatpush2.bf16.msra.mxu0 0
    %2340 = vmatprep.subr.bf16.mxu0 0
    %2341 = vmatpush2.bf16.msra.mxu0 0
    %2342 = vmatprep.subr.bf16.mxu0 0
    %2343 = vmatpush2.bf16.msra.mxu0 0
    %2344 = vmatprep.subr.bf16.mxu0 0
    %2345 = vmatpush2.bf16.msra.mxu0 0
    %2346 = vmatprep.subr.bf16.mxu0 0
    %2347 = vmatpush2.bf16.msra.mxu0 0
    %2348 = vmatprep.mubr.bf16.mxu0 0
    %2349 = vmatmul.mubr.bf16.gmra.mxu0 %v551
    %v2350 = vpop.f32.mrf.mxu0
    %v2351 = vadd.f32 %v2308, %v2350
    %v2352 = vpop.f32.mrf.mxu0
    %v2353 = vadd.f32 %v2310, %v2352
    %v2354 = vpop.f32.mrf.mxu0
    %v2355 = vadd.f32 %v2312, %v2354
    %v2356 = vpop.f32.mrf.mxu0
    %v2357 = vadd.f32 %v2314, %v2356
    %2358 = vdwg.mxu0
    %2359 = vmatprep.subr.bf16.mxu0 0
    %2360 = vmatpush1.bf16.msra.mxu0 %v1494
    %2361 = vmatprep.subr.bf16.mxu0 0
    %2362 = vmatpush1.bf16.msra.mxu0 %v1489
    %2363 = vmatprep.subr.bf16.mxu0 0
    %2364 = vmatpush1.bf16.msra.mxu0 %v1484
    %2365 = vmatprep.subr.bf16.mxu0 0
    %2366 = vmatpush1.bf16.msra.mxu0 %v1479
    %2367 = vmatprep.subr.bf16.mxu0 0
    %2368 = vmatpush1.bf16.msra.mxu0 %v1474
    %2369 = vmatprep.subr.bf16.mxu0 0
    %2370 = vmatpush1.bf16.msra.mxu0 %v1469
    %2371 = vmatprep.subr.bf16.mxu0 0
    %2372 = vmatpush1.bf16.msra.mxu0 %v1464
    %2373 = vmatprep.subr.bf16.mxu0 0
    %2374 = vmatpush1.bf16.msra.mxu0 %v1459
    %2375 = vmatprep.subr.bf16.mxu0 0
    %2376 = vmatpush2.bf16.msra.mxu0 %v1534
    %2377 = vmatprep.subr.bf16.mxu0 0
    %2378 = vmatpush2.bf16.msra.mxu0 %v1529
    %2379 = vmatprep.subr.bf16.mxu0 0
    %2380 = vmatpush2.bf16.msra.mxu0 %v1524
    %2381 = vmatprep.subr.bf16.mxu0 0
    %2382 = vmatpush2.bf16.msra.mxu0 %v1519
    %2383 = vmatprep.subr.bf16.mxu0 0
    %2384 = vmatpush2.bf16.msra.mxu0 %v1514
    %2385 = vmatprep.subr.bf16.mxu0 0
    %2386 = vmatpush2.bf16.msra.mxu0 %v1509
    %2387 = vmatprep.subr.bf16.mxu0 0
    %2388 = vmatpush2.bf16.msra.mxu0 %v1504
    %2389 = vmatprep.subr.bf16.mxu0 0
    %2390 = vmatpush2.bf16.msra.mxu0 %v1499
    %2391 = vmatprep.mubr.bf16.mxu0 %v546
    %2392 = vmatmul.mubr.bf16.gmra.mxu0 %v545
    %v2393 = vpop.f32.mrf.mxu0
    %v2394 = vadd.f32 0.0, %v2393
    %v2395 = vpop.f32.mrf.mxu0
    %v2396 = vpop.f32.mrf.mxu0
    %v2397 = vadd.f32 0.0, %v2396
    %v2398 = vpop.f32.mrf.mxu0
    %2399 = vdwg.mxu0
    %2400 = vmatprep.subr.bf16.mxu0 0
    %2401 = vmatpush1.bf16.msra.mxu0 %v1574
    %2402 = vmatprep.subr.bf16.mxu0 0
    %2403 = vmatpush1.bf16.msra.mxu0 %v1569
    %2404 = vmatprep.subr.bf16.mxu0 0
    %2405 = vmatpush1.bf16.msra.mxu0 %v1564
    %2406 = vmatprep.subr.bf16.mxu0 0
    %2407 = vmatpush1.bf16.msra.mxu0 %v1559
    %2408 = vmatprep.subr.bf16.mxu0 0
    %2409 = vmatpush1.bf16.msra.mxu0 %v1554
    %2410 = vmatprep.subr.bf16.mxu0 0
    %2411 = vmatpush1.bf16.msra.mxu0 %v1549
    %2412 = vmatprep.subr.bf16.mxu0 0
    %2413 = vmatpush1.bf16.msra.mxu0 %v1544
    %2414 = vmatprep.subr.bf16.mxu0 0
    %2415 = vmatpush1.bf16.msra.mxu0 %v1539
    %2416 = vmatprep.subr.bf16.mxu0 0
    %2417 = vmatpush2.bf16.msra.mxu0 %v1614
    %2418 = vmatprep.subr.bf16.mxu0 0
    %2419 = vmatpush2.bf16.msra.mxu0 %v1609
    %2420 = vmatprep.subr.bf16.mxu0 0
    %2421 = vmatpush2.bf16.msra.mxu0 %v1604
    %2422 = vmatprep.subr.bf16.mxu0 0
    %2423 = vmatpush2.bf16.msra.mxu0 %v1599
    %2424 = vmatprep.subr.bf16.mxu0 0
    %2425 = vmatpush2.bf16.msra.mxu0 %v1594
    %2426 = vmatprep.subr.bf16.mxu0 0
    %2427 = vmatpush2.bf16.msra.mxu0 %v1589
    %2428 = vmatprep.subr.bf16.mxu0 0
    %2429 = vmatpush2.bf16.msra.mxu0 %v1584
    %2430 = vmatprep.subr.bf16.mxu0 0
    %2431 = vmatpush2.bf16.msra.mxu0 %v1579
    %2432 = vmatprep.mubr.bf16.mxu0 %v548
    %2433 = vmatmul.mubr.bf16.gmra.mxu0 %v547
    %v2434 = vpop.f32.mrf.mxu0
    %v2435 = vadd.f32 %v2394, %v2434
    %v2436 = vpop.f32.mrf.mxu0
    %v2437 = vpop.f32.mrf.mxu0
    %v2438 = vadd.f32 %v2397, %v2437
    %v2439 = vpop.f32.mrf.mxu0
    %2440 = vdwg.mxu0
    %2441 = vmatprep.subr.bf16.mxu0 0
    %2442 = vmatpush1.bf16.msra.mxu0 %v1654
    %2443 = vmatprep.subr.bf16.mxu0 0
    %2444 = vmatpush1.bf16.msra.mxu0 %v1649
    %2445 = vmatprep.subr.bf16.mxu0 0
    %2446 = vmatpush1.bf16.msra.mxu0 %v1644
    %2447 = vmatprep.subr.bf16.mxu0 0
    %2448 = vmatpush1.bf16.msra.mxu0 %v1639
    %2449 = vmatprep.subr.bf16.mxu0 0
    %2450 = vmatpush1.bf16.msra.mxu0 %v1634
    %2451 = vmatprep.subr.bf16.mxu0 0
    %2452 = vmatpush1.bf16.msra.mxu0 %v1629
    %2453 = vmatprep.subr.bf16.mxu0 0
    %2454 = vmatpush1.bf16.msra.mxu0 %v1624
    %2455 = vmatprep.subr.bf16.mxu0 0
    %2456 = vmatpush1.bf16.msra.mxu0 %v1619
    %2457 = vmatprep.subr.bf16.mxu0 0
    %2458 = vmatpush2.bf16.msra.mxu0 %v1694
    %2459 = vmatprep.subr.bf16.mxu0 0
    %2460 = vmatpush2.bf16.msra.mxu0 %v1689
    %2461 = vmatprep.subr.bf16.mxu0 0
    %2462 = vmatpush2.bf16.msra.mxu0 %v1684
    %2463 = vmatprep.subr.bf16.mxu0 0
    %2464 = vmatpush2.bf16.msra.mxu0 %v1679
    %2465 = vmatprep.subr.bf16.mxu0 0
    %2466 = vmatpush2.bf16.msra.mxu0 %v1674
    %2467 = vmatprep.subr.bf16.mxu0 0
    %2468 = vmatpush2.bf16.msra.mxu0 %v1669
    %2469 = vmatprep.subr.bf16.mxu0 0
    %2470 = vmatpush2.bf16.msra.mxu0 %v1664
    %2471 = vmatprep.subr.bf16.mxu0 0
    %2472 = vmatpush2.bf16.msra.mxu0 %v1659
    %2473 = vmatprep.mubr.bf16.mxu0 %v550
    %2474 = vmatmul.mubr.bf16.gmra.mxu0 %v549
    %v2475 = vpop.f32.mrf.mxu0
    %v2476 = vadd.f32 %v2435, %v2475
    %v2477 = vpop.f32.mrf.mxu0
    %v2478 = vpop.f32.mrf.mxu0
    %v2479 = vadd.f32 %v2438, %v2478
    %v2480 = vpop.f32.mrf.mxu0
    %2481 = vdwg.mxu0
    %2482 = vmatprep.subr.bf16.mxu0 0
    %2483 = vmatpush1.bf16.msra.mxu0 %v1734
    %2484 = vmatprep.subr.bf16.mxu0 0
    %2485 = vmatpush1.bf16.msra.mxu0 %v1729
    %2486 = vmatprep.subr.bf16.mxu0 0
    %2487 = vmatpush1.bf16.msra.mxu0 %v1724
    %2488 = vmatprep.subr.bf16.mxu0 0
    %2489 = vmatpush1.bf16.msra.mxu0 %v1719
    %2490 = vmatprep.subr.bf16.mxu0 0
    %2491 = vmatpush1.bf16.msra.mxu0 %v1714
    %2492 = vmatprep.subr.bf16.mxu0 0
    %2493 = vmatpush1.bf16.msra.mxu0 %v1709
    %2494 = vmatprep.subr.bf16.mxu0 0
    %2495 = vmatpush1.bf16.msra.mxu0 %v1704
    %2496 = vmatprep.subr.bf16.mxu0 0
    %2497 = vmatpush1.bf16.msra.mxu0 %v1699
    %2498 = vmatprep.subr.bf16.mxu0 0
    %2499 = vmatpush2.bf16.msra.mxu0 0
    %2500 = vmatprep.subr.bf16.mxu0 0
    %2501 = vmatpush2.bf16.msra.mxu0 0
    %2502 = vmatprep.subr.bf16.mxu0 0
    %2503 = vmatpush2.bf16.msra.mxu0 0
    %2504 = vmatprep.subr.bf16.mxu0 0
    %2505 = vmatpush2.bf16.msra.mxu0 0
    %2506 = vmatprep.subr.bf16.mxu0 0
    %2507 = vmatpush2.bf16.msra.mxu0 0
    %2508 = vmatprep.subr.bf16.mxu0 0
    %2509 = vmatpush2.bf16.msra.mxu0 0
    %2510 = vmatprep.subr.bf16.mxu0 0
    %2511 = vmatpush2.bf16.msra.mxu0 0
    %2512 = vmatprep.subr.bf16.mxu0 0
    %2513 = vmatpush2.bf16.msra.mxu0 0
    %2514 = vmatprep.mubr.bf16.mxu0 0
    %2515 = vmatmul.mubr.bf16.gmra.mxu0 %v551
    %v2516 = vpop.f32.mrf.mxu0
    %v2517 = vadd.f32 %v2476, %v2516
    %v2518 = vpop.f32.mrf.mxu0
    %v2519 = vpop.f32.mrf.mxu0
    %v2520 = vadd.f32 %v2479, %v2519
    %v2521 = vpop.f32.mrf.mxu0
    %2522 = vdwg.mxu0
    %v2523 = vpack.c.bf16 %v2183, %v2179
    %v2524 = vpack.c.bf16 %v2185, %v2181
    %v2525 = vpack.c.bf16 %v2355, %v2351
    %v2526 = vpack.c.bf16 %v2357, %v2353
    %v2527 = vpack.c.bf16 %v2520, %v2517
    %v2528 = vld [vmem:[#allocation7] sm:$0x1f]
    %v2530 = vlaneseq
    %v2531 = vshrl.u32 %v2530, 7
    %v2532 = vsub.s32 0, %v2531
    %v2533 = vrot.slane %v2528, %v2532
    %v2534 = vlaneseq
    %v2535 = vshrl.u32 %v2534, 7
    %v2536 = vsub.s32 1, %v2535
    %v2537 = vrot.slane %v2528, %v2536
    %v2538 = vlaneseq
    %v2539 = vshrl.u32 %v2538, 7
    %v2540 = vsub.s32 2, %v2539
    %v2541 = vrot.slane %v2528, %v2540
    %v2542 = vlaneseq
    %v2543 = vshrl.u32 %v2542, 7
    %v2544 = vsub.s32 3, %v2543
    %v2545 = vrot.slane %v2528, %v2544
    %v2546 = vlaneseq
    %v2547 = vshrl.u32 %v2546, 7
    %v2548 = vsub.s32 4, %v2547
    %v2549 = vrot.slane %v2528, %v2548
    %v2555 = vpack.c.bf16 %v2533, %v2533
    %v2556 = vpack.c.bf16 %v2537, %v2537
    %v2557 = vpack.c.bf16 %v2541, %v2541
    %v2558 = vpack.c.bf16 %v2545, %v2545
    %v2559 = vpack.c.bf16 %v2549, %v2549
    %v2561 = vpack.i.b16 %v2555, %v2555
    %v2563 = vlaneseq
    %v2564 = vshrl.u32 %v2563, 7
    %v2565 = vsub.s32 0, %v2564
    %v2566 = vrot.slane %v2561, %v2565
    %v2568 = vpack.i.b16 %v2556, %v2556
    %v2570 = vlaneseq
    %v2571 = vshrl.u32 %v2570, 7
    %v2572 = vsub.s32 0, %v2571
    %v2573 = vrot.slane %v2568, %v2572
    %v2575 = vpack.i.b16 %v2557, %v2557
    %v2577 = vlaneseq
    %v2578 = vshrl.u32 %v2577, 7
    %v2579 = vsub.s32 0, %v2578
    %v2580 = vrot.slane %v2575, %v2579
    %v2582 = vpack.i.b16 %v2558, %v2558
    %v2584 = vlaneseq
    %v2585 = vshrl.u32 %v2584, 7
    %v2586 = vsub.s32 0, %v2585
    %v2587 = vrot.slane %v2582, %v2586
    %v2589 = vpack.i.b16 %v2559, %v2559
    %v2591 = vlaneseq
    %v2592 = vshrl.u32 %v2591, 7
    %v2593 = vsub.s32 0, %v2592
    %v2594 = vrot.slane %v2589, %v2593
    %v2595 = vadd.bf16 %v2523, %v2566
    %v2596 = vadd.bf16 %v2524, %v2573
    %v2597 = vadd.bf16 %v2525, %v2580
    %v2598 = vadd.bf16 %v2526, %v2587
    %v2599 = vadd.bf16 %v2527, %v2594
    %v2600 = vmax.bf16 %v2595, 0
    %v2601 = vmax.bf16 %v2596, 0
    %v2602 = vmax.bf16 %v2597, 0
    %v2603 = vmax.bf16 %v2598, 0
    %v2604 = vmax.bf16 %v2599, 0
    %v2605 = vld [vmem:[#allocation8] sm:$0xff]
    %v2606 = vld [vmem:[#allocation8 + $0x8] sm:$0xff]
    %v2607 = vld [vmem:[#allocation8 + $0x10] sm:$0xff]
    %v2608 = vld [vmem:[#allocation8 + $0x18] sm:$0xff]
    %v2609 = vld [vmem:[#allocation8 + $0x20] sm:$0xff]
    %v2610 = vld [vmem:[#allocation8 + $0x28] sm:$0xff]
    %v2611 = vld [vmem:[#allocation8 + $0x30] sm:$0xff]
    %v2612 = vld [vmem:[#allocation8 + $0x38] sm:$0xff]
    %v2613 = vld [vmem:[#allocation8 + $0x40] sm:$0xff]
    %v2614 = vld [vmem:[#allocation8 + $0x48] sm:$0xff]
    %v2615 = vld [vmem:[#allocation8 + $0x50] sm:$0xff]
    %v2616 = vld [vmem:[#allocation8 + $0x58] sm:$0xff]
    %v2617 = vld [vmem:[#allocation8 + $0x60] sm:$0xff]
    %v2618 = vld [vmem:[#allocation8 + $0x68] sm:$0xff]
    %v2619 = vld [vmem:[#allocation8 + $0x70] sm:$0xff]
    %v2620 = vld [vmem:[#allocation8 + $0x78] sm:$0xff]
    %v2621 = vld [vmem:[#allocation8 + $0x80] sm:$0xff]
    %v2622 = vld [vmem:[#allocation8 + $0x88] sm:$0xff]
    %v2623 = vld [vmem:[#allocation8 + $0x90] sm:$0xff]
    %v2624 = vld [vmem:[#allocation8 + $0x98] sm:$0xff]
    %v2625 = vld [vmem:[#allocation8 + $0xa0] sm:$0xff]
    %v2626 = vld [vmem:[#allocation8 + $0xa8] sm:$0xff]
    %v2627 = vld [vmem:[#allocation8 + $0xb0] sm:$0xff]
    %v2628 = vld [vmem:[#allocation8 + $0xb8] sm:$0xff]
    %v2629 = vld [vmem:[#allocation8 + $0xc0] sm:$0xff]
    %v2630 = vld [vmem:[#allocation8 + $0xc8] sm:$0xff]
    %v2631 = vld [vmem:[#allocation8 + $0xd0] sm:$0xff]
    %v2632 = vld [vmem:[#allocation8 + $0xd8] sm:$0xff]
    %v2633 = vld [vmem:[#allocation8 + $0xe0] sm:$0xff]
    %v2634 = vld [vmem:[#allocation8 + $0xe8] sm:$0xff]
    %v2635 = vld [vmem:[#allocation8 + $0xf0] sm:$0xff]
    %v2636 = vld [vmem:[#allocation8 + $0xf8] sm:$0xff]
    %v2637 = vld [vmem:[#allocation8 + $0x100] sm:$0xff]
    %v2638 = vld [vmem:[#allocation8 + $0x108] sm:$0xff]
    %v2639 = vld [vmem:[#allocation8 + $0x110] sm:$0xff]
    %v2640 = vld [vmem:[#allocation8 + $0x118] sm:$0xff]
    %v2641 = vld [vmem:[#allocation8 + $0x120] sm:$0xff]
    %v2642 = vld [vmem:[#allocation8 + $0x128] sm:$0xff]
    %v2643 = vld [vmem:[#allocation8 + $0x130] sm:$0xff]
    %v2644 = vld [vmem:[#allocation8 + $0x138] sm:$0xff]
    %v2645 = vld [vmem:[#allocation8 + $0x140] sm:$0xff]
    %v2646 = vld [vmem:[#allocation8 + $0x148] sm:$0xff]
    %v2647 = vld [vmem:[#allocation8 + $0x150] sm:$0xff]
    %v2648 = vld [vmem:[#allocation8 + $0x158] sm:$0xff]
    %v2649 = vld [vmem:[#allocation8 + $0x160] sm:$0xff]
    %v2650 = vld [vmem:[#allocation8 + $0x168] sm:$0xff]
    %v2651 = vld [vmem:[#allocation8 + $0x170] sm:$0xff]
    %v2652 = vld [vmem:[#allocation8 + $0x178] sm:$0xff]
    %v2653 = vld [vmem:[#allocation8 + $0x180] sm:$0xff]
    %v2654 = vld [vmem:[#allocation8 + $0x188] sm:$0xff]
    %v2655 = vld [vmem:[#allocation8 + $0x190] sm:$0xff]
    %v2656 = vld [vmem:[#allocation8 + $0x198] sm:$0xff]
    %v2657 = vld [vmem:[#allocation8 + $0x1a0] sm:$0xff]
    %v2658 = vld [vmem:[#allocation8 + $0x1a8] sm:$0xff]
    %v2659 = vld [vmem:[#allocation8 + $0x1b0] sm:$0xff]
    %v2660 = vld [vmem:[#allocation8 + $0x1b8] sm:$0xff]
    %v2661 = vld [vmem:[#allocation8 + $0x1c0] sm:$0xff]
    %v2662 = vld [vmem:[#allocation8 + $0x1c8] sm:$0xff]
    %v2663 = vld [vmem:[#allocation8 + $0x1d0] sm:$0xff]
    %v2664 = vld [vmem:[#allocation8 + $0x1d8] sm:$0xff]
    %v2665 = vld [vmem:[#allocation8 + $0x1e0] sm:$0xff]
    %v2666 = vld [vmem:[#allocation8 + $0x1e8] sm:$0xff]
    %v2667 = vld [vmem:[#allocation8 + $0x1f0] sm:$0xff]
    %v2668 = vld [vmem:[#allocation8 + $0x1f8] sm:$0xff]
    %v2669 = vld [vmem:[#allocation8 + $0x200] sm:$0xff]
    %v2670 = vld [vmem:[#allocation8 + $0x208] sm:$0xff]
    %v2671 = vld [vmem:[#allocation8 + $0x210] sm:$0xff]
    %v2672 = vld [vmem:[#allocation8 + $0x218] sm:$0xff]
    %v2673 = vld [vmem:[#allocation8 + $0x220] sm:$0xff]
    %v2674 = vld [vmem:[#allocation8 + $0x228] sm:$0xff]
    %v2675 = vld [vmem:[#allocation8 + $0x230] sm:$0xff]
    %v2676 = vld [vmem:[#allocation8 + $0x238] sm:$0xff]
    %v2677 = vld [vmem:[#allocation8 + $0x240] sm:$0xff]
    %v2678 = vld [vmem:[#allocation8 + $0x248] sm:$0xff]
    %v2679 = vld [vmem:[#allocation8 + $0x250] sm:$0xff]
    %v2680 = vld [vmem:[#allocation8 + $0x258] sm:$0xff]
    %v2681 = vld [vmem:[#allocation8 + $0x260] sm:$0xff]
    %v2682 = vld [vmem:[#allocation8 + $0x268] sm:$0xff]
    %v2683 = vld [vmem:[#allocation8 + $0x270] sm:$0xff]
    %v2684 = vld [vmem:[#allocation8 + $0x278] sm:$0xff]
    %v2685 = vld [vmem:[#allocation8 + $0x280] sm:$0xff]
    %v2686 = vld [vmem:[#allocation8 + $0x288] sm:$0xff]
    %v2687 = vld [vmem:[#allocation8 + $0x290] sm:$0xff]
    %v2688 = vld [vmem:[#allocation8 + $0x298] sm:$0xff]
    %v2689 = vld [vmem:[#allocation8 + $0x2a0] sm:$0xff]
    %v2690 = vld [vmem:[#allocation8 + $0x2a8] sm:$0xff]
    %v2691 = vld [vmem:[#allocation8 + $0x2b0] sm:$0xff]
    %v2692 = vld [vmem:[#allocation8 + $0x2b8] sm:$0xff]
    %v2693 = vld [vmem:[#allocation8 + $0x2c0] sm:$0xff]
    %v2694 = vld [vmem:[#allocation8 + $0x2c8] sm:$0xff]
    %v2695 = vld [vmem:[#allocation8 + $0x2d0] sm:$0xff]
    %v2696 = vld [vmem:[#allocation8 + $0x2d8] sm:$0xff]
    %v2697 = vld [vmem:[#allocation8 + $0x2e0] sm:$0xff]
    %v2698 = vld [vmem:[#allocation8 + $0x2e8] sm:$0xff]
    %v2699 = vld [vmem:[#allocation8 + $0x2f0] sm:$0xff]
    %v2700 = vld [vmem:[#allocation8 + $0x2f8] sm:$0xff]
    %v2701 = vld [vmem:[#allocation8 + $0x300] sm:$0xff]
    %v2702 = vld [vmem:[#allocation8 + $0x308] sm:$0xff]
    %v2703 = vld [vmem:[#allocation8 + $0x310] sm:$0xff]
    %v2704 = vld [vmem:[#allocation8 + $0x318] sm:$0xff]
    %v2705 = vld [vmem:[#allocation8 + $0x320] sm:$0xff]
    %v2706 = vld [vmem:[#allocation8 + $0x328] sm:$0xff]
    %v2707 = vld [vmem:[#allocation8 + $0x330] sm:$0xff]
    %v2708 = vld [vmem:[#allocation8 + $0x338] sm:$0xff]
    %v2709 = vld [vmem:[#allocation8 + $0x340] sm:$0xff]
    %v2710 = vld [vmem:[#allocation8 + $0x348] sm:$0xff]
    %v2711 = vld [vmem:[#allocation8 + $0x350] sm:$0xff]
    %v2712 = vld [vmem:[#allocation8 + $0x358] sm:$0xff]
    %v2713 = vld [vmem:[#allocation8 + $0x360] sm:$0xff]
    %v2714 = vld [vmem:[#allocation8 + $0x368] sm:$0xff]
    %v2715 = vld [vmem:[#allocation8 + $0x370] sm:$0xff]
    %v2716 = vld [vmem:[#allocation8 + $0x378] sm:$0xff]
    %v2717 = vld [vmem:[#allocation8 + $0x380] sm:$0xff]
    %v2718 = vld [vmem:[#allocation8 + $0x388] sm:$0xff]
    %v2719 = vld [vmem:[#allocation8 + $0x390] sm:$0xff]
    %v2720 = vld [vmem:[#allocation8 + $0x398] sm:$0xff]
    %v2721 = vld [vmem:[#allocation8 + $0x3a0] sm:$0xff]
    %v2722 = vld [vmem:[#allocation8 + $0x3a8] sm:$0xff]
    %v2723 = vld [vmem:[#allocation8 + $0x3b0] sm:$0xff]
    %v2724 = vld [vmem:[#allocation8 + $0x3b8] sm:$0xff]
    %v2725 = vld [vmem:[#allocation8 + $0x3c0] sm:$0xff]
    %v2726 = vld [vmem:[#allocation8 + $0x3c8] sm:$0xff]
    %v2727 = vld [vmem:[#allocation8 + $0x3d0] sm:$0xff]
    %v2728 = vld [vmem:[#allocation8 + $0x3d8] sm:$0xff]
    %v2729 = vld [vmem:[#allocation8 + $0x3e0] sm:$0xff]
    %v2730 = vld [vmem:[#allocation8 + $0x3e8] sm:$0xff]
    %v2731 = vld [vmem:[#allocation8 + $0x3f0] sm:$0xff]
    %v2732 = vld [vmem:[#allocation8 + $0x3f8] sm:$0xff]
    %v2733 = vld [vmem:[#allocation8 + $0x400] sm:$0xff]
    %v2734 = vld [vmem:[#allocation8 + $0x408] sm:$0xff]
    %v2735 = vld [vmem:[#allocation8 + $0x410] sm:$0xff]
    %v2736 = vld [vmem:[#allocation8 + $0x418] sm:$0xff]
    %v2737 = vld [vmem:[#allocation8 + $0x420] sm:$0xff]
    %v2738 = vld [vmem:[#allocation8 + $0x428] sm:$0xff]
    %v2739 = vld [vmem:[#allocation8 + $0x430] sm:$0xff]
    %v2740 = vld [vmem:[#allocation8 + $0x438] sm:$0xff]
    %v2741 = vld [vmem:[#allocation8 + $0x440] sm:$0xff]
    %v2742 = vld [vmem:[#allocation8 + $0x448] sm:$0xff]
    %v2743 = vld [vmem:[#allocation8 + $0x450] sm:$0xff]
    %v2744 = vld [vmem:[#allocation8 + $0x458] sm:$0xff]
    %v2745 = vld [vmem:[#allocation8 + $0x460] sm:$0xff]
    %v2746 = vld [vmem:[#allocation8 + $0x468] sm:$0xff]
    %v2747 = vld [vmem:[#allocation8 + $0x470] sm:$0xff]
    %v2748 = vld [vmem:[#allocation8 + $0x478] sm:$0xff]
    %v2749 = vld [vmem:[#allocation8 + $0x480] sm:$0xff]
    %v2750 = vld [vmem:[#allocation8 + $0x488] sm:$0xff]
    %v2751 = vld [vmem:[#allocation8 + $0x490] sm:$0xff]
    %v2752 = vld [vmem:[#allocation8 + $0x498] sm:$0xff]
    %v2753 = vld [vmem:[#allocation8 + $0x4a0] sm:$0xff]
    %v2754 = vld [vmem:[#allocation8 + $0x4a8] sm:$0xff]
    %v2755 = vld [vmem:[#allocation8 + $0x4b0] sm:$0xff]
    %v2756 = vld [vmem:[#allocation8 + $0x4b8] sm:$0xff]
    %v2757 = vld [vmem:[#allocation8 + $0x4c0] sm:$0xff]
    %v2758 = vld [vmem:[#allocation8 + $0x4c8] sm:$0xff]
    %v2759 = vld [vmem:[#allocation8 + $0x4d0] sm:$0xff]
    %v2760 = vld [vmem:[#allocation8 + $0x4d8] sm:$0xff]
    %v2761 = vld [vmem:[#allocation8 + $0x4e0] sm:$0xff]
    %v2762 = vld [vmem:[#allocation8 + $0x4e8] sm:$0xff]
    %v2763 = vld [vmem:[#allocation8 + $0x4f0] sm:$0xff]
    %v2764 = vld [vmem:[#allocation8 + $0x4f8] sm:$0xff]
    %v2925 = vunpack.c.l.b16 %v2605
    %v2926 = vunpack.c.h.b16 %v2605
    %v2927 = vunpack.c.l.b16 %v2606
    %v2928 = vunpack.c.h.b16 %v2606
    %v2929 = vunpack.c.l.b16 %v2607
    %v2930 = vunpack.c.h.b16 %v2607
    %v2931 = vunpack.c.l.b16 %v2608
    %v2932 = vunpack.c.h.b16 %v2608
    %v2933 = vunpack.c.l.b16 %v2609
    %v2934 = vunpack.c.h.b16 %v2609
    %v2935 = vunpack.c.l.b16 %v2610
    %v2936 = vunpack.c.h.b16 %v2610
    %v2937 = vunpack.c.l.b16 %v2611
    %v2938 = vunpack.c.h.b16 %v2611
    %v2939 = vunpack.c.l.b16 %v2612
    %v2940 = vunpack.c.h.b16 %v2612
    %v2941 = vunpack.c.l.b16 %v2613
    %v2942 = vunpack.c.h.b16 %v2613
    %v2943 = vunpack.c.l.b16 %v2614
    %v2944 = vunpack.c.h.b16 %v2614
    %v2945 = vunpack.c.l.b16 %v2615
    %v2946 = vunpack.c.h.b16 %v2615
    %v2947 = vunpack.c.l.b16 %v2616
    %v2948 = vunpack.c.h.b16 %v2616
    %v2949 = vunpack.c.l.b16 %v2617
    %v2950 = vunpack.c.h.b16 %v2617
    %v2951 = vunpack.c.l.b16 %v2618
    %v2952 = vunpack.c.h.b16 %v2618
    %v2953 = vunpack.c.l.b16 %v2619
    %v2954 = vunpack.c.h.b16 %v2619
    %v2955 = vunpack.c.l.b16 %v2620
    %v2956 = vunpack.c.h.b16 %v2620
    %v2957 = vunpack.c.l.b16 %v2621
    %v2958 = vunpack.c.h.b16 %v2621
    %v2959 = vunpack.c.l.b16 %v2622
    %v2960 = vunpack.c.h.b16 %v2622
    %v2961 = vunpack.c.l.b16 %v2623
    %v2962 = vunpack.c.h.b16 %v2623
    %v2963 = vunpack.c.l.b16 %v2624
    %v2964 = vunpack.c.h.b16 %v2624
    %v2965 = vunpack.c.l.b16 %v2625
    %v2966 = vunpack.c.h.b16 %v2625
    %v2967 = vunpack.c.l.b16 %v2626
    %v2968 = vunpack.c.h.b16 %v2626
    %v2969 = vunpack.c.l.b16 %v2627
    %v2970 = vunpack.c.h.b16 %v2627
    %v2971 = vunpack.c.l.b16 %v2628
    %v2972 = vunpack.c.h.b16 %v2628
    %v2973 = vunpack.c.l.b16 %v2629
    %v2974 = vunpack.c.h.b16 %v2629
    %v2975 = vunpack.c.l.b16 %v2630
    %v2976 = vunpack.c.h.b16 %v2630
    %v2977 = vunpack.c.l.b16 %v2631
    %v2978 = vunpack.c.h.b16 %v2631
    %v2979 = vunpack.c.l.b16 %v2632
    %v2980 = vunpack.c.h.b16 %v2632
    %v2981 = vunpack.c.l.b16 %v2633
    %v2982 = vunpack.c.h.b16 %v2633
    %v2983 = vunpack.c.l.b16 %v2634
    %v2984 = vunpack.c.h.b16 %v2634
    %v2985 = vunpack.c.l.b16 %v2635
    %v2986 = vunpack.c.h.b16 %v2635
    %v2987 = vunpack.c.l.b16 %v2636
    %v2988 = vunpack.c.h.b16 %v2636
    %v2989 = vunpack.c.l.b16 %v2637
    %v2990 = vunpack.c.h.b16 %v2637
    %v2991 = vunpack.c.l.b16 %v2638
    %v2992 = vunpack.c.h.b16 %v2638
    %v2993 = vunpack.c.l.b16 %v2639
    %v2994 = vunpack.c.h.b16 %v2639
    %v2995 = vunpack.c.l.b16 %v2640
    %v2996 = vunpack.c.h.b16 %v2640
    %v2997 = vunpack.c.l.b16 %v2641
    %v2998 = vunpack.c.h.b16 %v2641
    %v2999 = vunpack.c.l.b16 %v2642
    %v3000 = vunpack.c.h.b16 %v2642
    %v3001 = vunpack.c.l.b16 %v2643
    %v3002 = vunpack.c.h.b16 %v2643
    %v3003 = vunpack.c.l.b16 %v2644
    %v3004 = vunpack.c.h.b16 %v2644
    %v3005 = vunpack.c.l.b16 %v2645
    %v3006 = vunpack.c.h.b16 %v2645
    %v3007 = vunpack.c.l.b16 %v2646
    %v3008 = vunpack.c.h.b16 %v2646
    %v3009 = vunpack.c.l.b16 %v2647
    %v3010 = vunpack.c.h.b16 %v2647
    %v3011 = vunpack.c.l.b16 %v2648
    %v3012 = vunpack.c.h.b16 %v2648
    %v3013 = vunpack.c.l.b16 %v2649
    %v3014 = vunpack.c.h.b16 %v2649
    %v3015 = vunpack.c.l.b16 %v2650
    %v3016 = vunpack.c.h.b16 %v2650
    %v3017 = vunpack.c.l.b16 %v2651
    %v3018 = vunpack.c.h.b16 %v2651
    %v3019 = vunpack.c.l.b16 %v2652
    %v3020 = vunpack.c.h.b16 %v2652
    %v3021 = vunpack.c.l.b16 %v2653
    %v3022 = vunpack.c.h.b16 %v2653
    %v3023 = vunpack.c.l.b16 %v2654
    %v3024 = vunpack.c.h.b16 %v2654
    %v3025 = vunpack.c.l.b16 %v2655
    %v3026 = vunpack.c.h.b16 %v2655
    %v3027 = vunpack.c.l.b16 %v2656
    %v3028 = vunpack.c.h.b16 %v2656
    %v3029 = vunpack.c.l.b16 %v2657
    %v3030 = vunpack.c.h.b16 %v2657
    %v3031 = vunpack.c.l.b16 %v2658
    %v3032 = vunpack.c.h.b16 %v2658
    %v3033 = vunpack.c.l.b16 %v2659
    %v3034 = vunpack.c.h.b16 %v2659
    %v3035 = vunpack.c.l.b16 %v2660
    %v3036 = vunpack.c.h.b16 %v2660
    %v3037 = vunpack.c.l.b16 %v2661
    %v3038 = vunpack.c.h.b16 %v2661
    %v3039 = vunpack.c.l.b16 %v2662
    %v3040 = vunpack.c.h.b16 %v2662
    %v3041 = vunpack.c.l.b16 %v2663
    %v3042 = vunpack.c.h.b16 %v2663
    %v3043 = vunpack.c.l.b16 %v2664
    %v3044 = vunpack.c.h.b16 %v2664
    %v3045 = vunpack.c.l.b16 %v2665
    %v3046 = vunpack.c.h.b16 %v2665
    %v3047 = vunpack.c.l.b16 %v2666
    %v3048 = vunpack.c.h.b16 %v2666
    %v3049 = vunpack.c.l.b16 %v2667
    %v3050 = vunpack.c.h.b16 %v2667
    %v3051 = vunpack.c.l.b16 %v2668
    %v3052 = vunpack.c.h.b16 %v2668
    %v3053 = vunpack.c.l.b16 %v2669
    %v3054 = vunpack.c.h.b16 %v2669
    %v3055 = vunpack.c.l.b16 %v2670
    %v3056 = vunpack.c.h.b16 %v2670
    %v3057 = vunpack.c.l.b16 %v2671
    %v3058 = vunpack.c.h.b16 %v2671
    %v3059 = vunpack.c.l.b16 %v2672
    %v3060 = vunpack.c.h.b16 %v2672
    %v3061 = vunpack.c.l.b16 %v2673
    %v3062 = vunpack.c.h.b16 %v2673
    %v3063 = vunpack.c.l.b16 %v2674
    %v3064 = vunpack.c.h.b16 %v2674
    %v3065 = vunpack.c.l.b16 %v2675
    %v3066 = vunpack.c.h.b16 %v2675
    %v3067 = vunpack.c.l.b16 %v2676
    %v3068 = vunpack.c.h.b16 %v2676
    %v3069 = vunpack.c.l.b16 %v2677
    %v3070 = vunpack.c.h.b16 %v2677
    %v3071 = vunpack.c.l.b16 %v2678
    %v3072 = vunpack.c.h.b16 %v2678
    %v3073 = vunpack.c.l.b16 %v2679
    %v3074 = vunpack.c.h.b16 %v2679
    %v3075 = vunpack.c.l.b16 %v2680
    %v3076 = vunpack.c.h.b16 %v2680
    %v3077 = vunpack.c.l.b16 %v2681
    %v3078 = vunpack.c.h.b16 %v2681
    %v3079 = vunpack.c.l.b16 %v2682
    %v3080 = vunpack.c.h.b16 %v2682
    %v3081 = vunpack.c.l.b16 %v2683
    %v3082 = vunpack.c.h.b16 %v2683
    %v3083 = vunpack.c.l.b16 %v2684
    %v3084 = vunpack.c.h.b16 %v2684
    %v3085 = vunpack.c.l.b16 %v2685
    %v3086 = vunpack.c.h.b16 %v2685
    %v3087 = vunpack.c.l.b16 %v2686
    %v3088 = vunpack.c.h.b16 %v2686
    %v3089 = vunpack.c.l.b16 %v2687
    %v3090 = vunpack.c.h.b16 %v2687
    %v3091 = vunpack.c.l.b16 %v2688
    %v3092 = vunpack.c.h.b16 %v2688
    %v3093 = vunpack.c.l.b16 %v2689
    %v3094 = vunpack.c.h.b16 %v2689
    %v3095 = vunpack.c.l.b16 %v2690
    %v3096 = vunpack.c.h.b16 %v2690
    %v3097 = vunpack.c.l.b16 %v2691
    %v3098 = vunpack.c.h.b16 %v2691
    %v3099 = vunpack.c.l.b16 %v2692
    %v3100 = vunpack.c.h.b16 %v2692
    %v3101 = vunpack.c.l.b16 %v2693
    %v3102 = vunpack.c.h.b16 %v2693
    %v3103 = vunpack.c.l.b16 %v2694
    %v3104 = vunpack.c.h.b16 %v2694
    %v3105 = vunpack.c.l.b16 %v2695
    %v3106 = vunpack.c.h.b16 %v2695
    %v3107 = vunpack.c.l.b16 %v2696
    %v3108 = vunpack.c.h.b16 %v2696
    %v3109 = vunpack.c.l.b16 %v2697
    %v3110 = vunpack.c.h.b16 %v2697
    %v3111 = vunpack.c.l.b16 %v2698
    %v3112 = vunpack.c.h.b16 %v2698
    %v3113 = vunpack.c.l.b16 %v2699
    %v3114 = vunpack.c.h.b16 %v2699
    %v3115 = vunpack.c.l.b16 %v2700
    %v3116 = vunpack.c.h.b16 %v2700
    %v3117 = vunpack.c.l.b16 %v2701
    %v3118 = vunpack.c.h.b16 %v2701
    %v3119 = vunpack.c.l.b16 %v2702
    %v3120 = vunpack.c.h.b16 %v2702
    %v3121 = vunpack.c.l.b16 %v2703
    %v3122 = vunpack.c.h.b16 %v2703
    %v3123 = vunpack.c.l.b16 %v2704
    %v3124 = vunpack.c.h.b16 %v2704
    %v3125 = vunpack.c.l.b16 %v2705
    %v3126 = vunpack.c.h.b16 %v2705
    %v3127 = vunpack.c.l.b16 %v2706
    %v3128 = vunpack.c.h.b16 %v2706
    %v3129 = vunpack.c.l.b16 %v2707
    %v3130 = vunpack.c.h.b16 %v2707
    %v3131 = vunpack.c.l.b16 %v2708
    %v3132 = vunpack.c.h.b16 %v2708
    %v3133 = vunpack.c.l.b16 %v2709
    %v3134 = vunpack.c.h.b16 %v2709
    %v3135 = vunpack.c.l.b16 %v2710
    %v3136 = vunpack.c.h.b16 %v2710
    %v3137 = vunpack.c.l.b16 %v2711
    %v3138 = vunpack.c.h.b16 %v2711
    %v3139 = vunpack.c.l.b16 %v2712
    %v3140 = vunpack.c.h.b16 %v2712
    %v3141 = vunpack.c.l.b16 %v2713
    %v3142 = vunpack.c.h.b16 %v2713
    %v3143 = vunpack.c.l.b16 %v2714
    %v3144 = vunpack.c.h.b16 %v2714
    %v3145 = vunpack.c.l.b16 %v2715
    %v3146 = vunpack.c.h.b16 %v2715
    %v3147 = vunpack.c.l.b16 %v2716
    %v3148 = vunpack.c.h.b16 %v2716
    %v3149 = vunpack.c.l.b16 %v2717
    %v3150 = vunpack.c.h.b16 %v2717
    %v3151 = vunpack.c.l.b16 %v2718
    %v3152 = vunpack.c.h.b16 %v2718
    %v3153 = vunpack.c.l.b16 %v2719
    %v3154 = vunpack.c.h.b16 %v2719
    %v3155 = vunpack.c.l.b16 %v2720
    %v3156 = vunpack.c.h.b16 %v2720
    %v3157 = vunpack.c.l.b16 %v2721
    %v3158 = vunpack.c.h.b16 %v2721
    %v3159 = vunpack.c.l.b16 %v2722
    %v3160 = vunpack.c.h.b16 %v2722
    %v3161 = vunpack.c.l.b16 %v2723
    %v3162 = vunpack.c.h.b16 %v2723
    %v3163 = vunpack.c.l.b16 %v2724
    %v3164 = vunpack.c.h.b16 %v2724
    %v3165 = vunpack.c.l.b16 %v2725
    %v3166 = vunpack.c.h.b16 %v2725
    %v3167 = vunpack.c.l.b16 %v2726
    %v3168 = vunpack.c.h.b16 %v2726
    %v3169 = vunpack.c.l.b16 %v2727
    %v3170 = vunpack.c.h.b16 %v2727
    %v3171 = vunpack.c.l.b16 %v2728
    %v3172 = vunpack.c.h.b16 %v2728
    %v3173 = vunpack.c.l.b16 %v2729
    %v3174 = vunpack.c.h.b16 %v2729
    %v3175 = vunpack.c.l.b16 %v2730
    %v3176 = vunpack.c.h.b16 %v2730
    %v3177 = vunpack.c.l.b16 %v2731
    %v3178 = vunpack.c.h.b16 %v2731
    %v3179 = vunpack.c.l.b16 %v2732
    %v3180 = vunpack.c.h.b16 %v2732
    %v3181 = vunpack.c.l.b16 %v2733
    %v3182 = vunpack.c.h.b16 %v2733
    %v3183 = vunpack.c.l.b16 %v2734
    %v3184 = vunpack.c.h.b16 %v2734
    %v3185 = vunpack.c.l.b16 %v2735
    %v3186 = vunpack.c.h.b16 %v2735
    %v3187 = vunpack.c.l.b16 %v2736
    %v3188 = vunpack.c.h.b16 %v2736
    %v3189 = vunpack.c.l.b16 %v2737
    %v3190 = vunpack.c.h.b16 %v2737
    %v3191 = vunpack.c.l.b16 %v2738
    %v3192 = vunpack.c.h.b16 %v2738
    %v3193 = vunpack.c.l.b16 %v2739
    %v3194 = vunpack.c.h.b16 %v2739
    %v3195 = vunpack.c.l.b16 %v2740
    %v3196 = vunpack.c.h.b16 %v2740
    %v3197 = vunpack.c.l.b16 %v2741
    %v3198 = vunpack.c.h.b16 %v2741
    %v3199 = vunpack.c.l.b16 %v2742
    %v3200 = vunpack.c.h.b16 %v2742
    %v3201 = vunpack.c.l.b16 %v2743
    %v3202 = vunpack.c.h.b16 %v2743
    %v3203 = vunpack.c.l.b16 %v2744
    %v3204 = vunpack.c.h.b16 %v2744
    %v3205 = vunpack.c.l.b16 %v2745
    %v3206 = vunpack.c.h.b16 %v2745
    %v3207 = vunpack.c.l.b16 %v2746
    %v3208 = vunpack.c.h.b16 %v2746
    %v3209 = vunpack.c.l.b16 %v2747
    %v3210 = vunpack.c.h.b16 %v2747
    %v3211 = vunpack.c.l.b16 %v2748
    %v3212 = vunpack.c.h.b16 %v2748
    %v3213 = vunpack.c.l.b16 %v2749
    %v3214 = vunpack.c.h.b16 %v2749
    %v3215 = vunpack.c.l.b16 %v2750
    %v3216 = vunpack.c.h.b16 %v2750
    %v3217 = vunpack.c.l.b16 %v2751
    %v3218 = vunpack.c.h.b16 %v2751
    %v3219 = vunpack.c.l.b16 %v2752
    %v3220 = vunpack.c.h.b16 %v2752
    %v3221 = vunpack.c.l.b16 %v2753
    %v3222 = vunpack.c.h.b16 %v2753
    %v3223 = vunpack.c.l.b16 %v2754
    %v3224 = vunpack.c.h.b16 %v2754
    %v3225 = vunpack.c.l.b16 %v2755
    %v3226 = vunpack.c.h.b16 %v2755
    %v3227 = vunpack.c.l.b16 %v2756
    %v3228 = vunpack.c.h.b16 %v2756
    %v3229 = vunpack.c.l.b16 %v2757
    %v3230 = vunpack.c.h.b16 %v2757
    %v3231 = vunpack.c.l.b16 %v2758
    %v3232 = vunpack.c.h.b16 %v2758
    %v3233 = vunpack.c.l.b16 %v2759
    %v3234 = vunpack.c.h.b16 %v2759
    %v3235 = vunpack.c.l.b16 %v2760
    %v3236 = vunpack.c.h.b16 %v2760
    %v3237 = vunpack.c.l.b16 %v2761
    %v3238 = vunpack.c.h.b16 %v2761
    %v3239 = vunpack.c.l.b16 %v2762
    %v3240 = vunpack.c.h.b16 %v2762
    %v3241 = vunpack.c.l.b16 %v2763
    %v3242 = vunpack.c.h.b16 %v2763
    %v3243 = vunpack.c.l.b16 %v2764
    %v3244 = vunpack.c.h.b16 %v2764
    %v3245 = vpack.c.b16 %v2929, %v2925
    %v3246 = vpack.c.b16 %v2930, %v2926
    %v3247 = vpack.c.b16 %v2931, %v2927
    %v3248 = vpack.c.b16 %v2932, %v2928
    %v3249 = vpack.c.b16 %v2937, %v2933
    %v3250 = vpack.c.b16 %v2938, %v2934
    %v3251 = vpack.c.b16 %v2939, %v2935
    %v3252 = vpack.c.b16 %v2940, %v2936
    %v3253 = vpack.c.b16 %v2945, %v2941
    %v3254 = vpack.c.b16 %v2946, %v2942
    %v3255 = vpack.c.b16 %v2947, %v2943
    %v3256 = vpack.c.b16 %v2948, %v2944
    %v3257 = vpack.c.b16 %v2953, %v2949
    %v3258 = vpack.c.b16 %v2954, %v2950
    %v3259 = vpack.c.b16 %v2955, %v2951
    %v3260 = vpack.c.b16 %v2956, %v2952
    %v3261 = vpack.c.b16 %v2961, %v2957
    %v3262 = vpack.c.b16 %v2962, %v2958
    %v3263 = vpack.c.b16 %v2963, %v2959
    %v3264 = vpack.c.b16 %v2964, %v2960
    %v3265 = vpack.c.b16 %v2969, %v2965
    %v3266 = vpack.c.b16 %v2970, %v2966
    %v3267 = vpack.c.b16 %v2971, %v2967
    %v3268 = vpack.c.b16 %v2972, %v2968
    %v3269 = vpack.c.b16 %v2977, %v2973
    %v3270 = vpack.c.b16 %v2978, %v2974
    %v3271 = vpack.c.b16 %v2979, %v2975
    %v3272 = vpack.c.b16 %v2980, %v2976
    %v3273 = vpack.c.b16 %v2985, %v2981
    %v3274 = vpack.c.b16 %v2986, %v2982
    %v3275 = vpack.c.b16 %v2987, %v2983
    %v3276 = vpack.c.b16 %v2988, %v2984
    %v3277 = vpack.c.b16 %v2993, %v2989
    %v3278 = vpack.c.b16 %v2994, %v2990
    %v3279 = vpack.c.b16 %v2995, %v2991
    %v3280 = vpack.c.b16 %v2996, %v2992
    %v3281 = vpack.c.b16 %v3001, %v2997
    %v3282 = vpack.c.b16 %v3002, %v2998
    %v3283 = vpack.c.b16 %v3003, %v2999
    %v3284 = vpack.c.b16 %v3004, %v3000
    %v3285 = vpack.c.b16 %v3009, %v3005
    %v3286 = vpack.c.b16 %v3010, %v3006
    %v3287 = vpack.c.b16 %v3011, %v3007
    %v3288 = vpack.c.b16 %v3012, %v3008
    %v3289 = vpack.c.b16 %v3017, %v3013
    %v3290 = vpack.c.b16 %v3018, %v3014
    %v3291 = vpack.c.b16 %v3019, %v3015
    %v3292 = vpack.c.b16 %v3020, %v3016
    %v3293 = vpack.c.b16 %v3025, %v3021
    %v3294 = vpack.c.b16 %v3026, %v3022
    %v3295 = vpack.c.b16 %v3027, %v3023
    %v3296 = vpack.c.b16 %v3028, %v3024
    %v3297 = vpack.c.b16 %v3033, %v3029
    %v3298 = vpack.c.b16 %v3034, %v3030
    %v3299 = vpack.c.b16 %v3035, %v3031
    %v3300 = vpack.c.b16 %v3036, %v3032
    %v3301 = vpack.c.b16 %v3041, %v3037
    %v3302 = vpack.c.b16 %v3042, %v3038
    %v3303 = vpack.c.b16 %v3043, %v3039
    %v3304 = vpack.c.b16 %v3044, %v3040
    %v3305 = vpack.c.b16 %v3049, %v3045
    %v3306 = vpack.c.b16 %v3050, %v3046
    %v3307 = vpack.c.b16 %v3051, %v3047
    %v3308 = vpack.c.b16 %v3052, %v3048
    %v3309 = vpack.c.b16 %v3057, %v3053
    %v3310 = vpack.c.b16 %v3058, %v3054
    %v3311 = vpack.c.b16 %v3059, %v3055
    %v3312 = vpack.c.b16 %v3060, %v3056
    %v3313 = vpack.c.b16 %v3065, %v3061
    %v3314 = vpack.c.b16 %v3066, %v3062
    %v3315 = vpack.c.b16 %v3067, %v3063
    %v3316 = vpack.c.b16 %v3068, %v3064
    %v3317 = vpack.c.b16 %v3073, %v3069
    %v3318 = vpack.c.b16 %v3074, %v3070
    %v3319 = vpack.c.b16 %v3075, %v3071
    %v3320 = vpack.c.b16 %v3076, %v3072
    %v3321 = vpack.c.b16 %v3081, %v3077
    %v3322 = vpack.c.b16 %v3082, %v3078
    %v3323 = vpack.c.b16 %v3083, %v3079
    %v3324 = vpack.c.b16 %v3084, %v3080
    %v3325 = vpack.c.b16 %v3089, %v3085
    %v3326 = vpack.c.b16 %v3090, %v3086
    %v3327 = vpack.c.b16 %v3091, %v3087
    %v3328 = vpack.c.b16 %v3092, %v3088
    %v3329 = vpack.c.b16 %v3097, %v3093
    %v3330 = vpack.c.b16 %v3098, %v3094
    %v3331 = vpack.c.b16 %v3099, %v3095
    %v3332 = vpack.c.b16 %v3100, %v3096
    %v3333 = vpack.c.b16 %v3105, %v3101
    %v3334 = vpack.c.b16 %v3106, %v3102
    %v3335 = vpack.c.b16 %v3107, %v3103
    %v3336 = vpack.c.b16 %v3108, %v3104
    %v3337 = vpack.c.b16 %v3113, %v3109
    %v3338 = vpack.c.b16 %v3114, %v3110
    %v3339 = vpack.c.b16 %v3115, %v3111
    %v3340 = vpack.c.b16 %v3116, %v3112
    %v3341 = vpack.c.b16 %v3121, %v3117
    %v3342 = vpack.c.b16 %v3122, %v3118
    %v3343 = vpack.c.b16 %v3123, %v3119
    %v3344 = vpack.c.b16 %v3124, %v3120
    %v3345 = vpack.c.b16 %v3129, %v3125
    %v3346 = vpack.c.b16 %v3130, %v3126
    %v3347 = vpack.c.b16 %v3131, %v3127
    %v3348 = vpack.c.b16 %v3132, %v3128
    %v3349 = vpack.c.b16 %v3137, %v3133
    %v3350 = vpack.c.b16 %v3138, %v3134
    %v3351 = vpack.c.b16 %v3139, %v3135
    %v3352 = vpack.c.b16 %v3140, %v3136
    %v3353 = vpack.c.b16 %v3145, %v3141
    %v3354 = vpack.c.b16 %v3146, %v3142
    %v3355 = vpack.c.b16 %v3147, %v3143
    %v3356 = vpack.c.b16 %v3148, %v3144
    %v3357 = vpack.c.b16 %v3153, %v3149
    %v3358 = vpack.c.b16 %v3154, %v3150
    %v3359 = vpack.c.b16 %v3155, %v3151
    %v3360 = vpack.c.b16 %v3156, %v3152
    %v3361 = vpack.c.b16 %v3161, %v3157
    %v3362 = vpack.c.b16 %v3162, %v3158
    %v3363 = vpack.c.b16 %v3163, %v3159
    %v3364 = vpack.c.b16 %v3164, %v3160
    %v3365 = vpack.c.b16 %v3169, %v3165
    %v3366 = vpack.c.b16 %v3170, %v3166
    %v3367 = vpack.c.b16 %v3171, %v3167
    %v3368 = vpack.c.b16 %v3172, %v3168
    %v3369 = vpack.c.b16 %v3177, %v3173
    %v3370 = vpack.c.b16 %v3178, %v3174
    %v3371 = vpack.c.b16 %v3179, %v3175
    %v3372 = vpack.c.b16 %v3180, %v3176
    %v3373 = vpack.c.b16 %v3185, %v3181
    %v3374 = vpack.c.b16 %v3186, %v3182
    %v3375 = vpack.c.b16 %v3187, %v3183
    %v3376 = vpack.c.b16 %v3188, %v3184
    %v3377 = vpack.c.b16 %v3193, %v3189
    %v3378 = vpack.c.b16 %v3194, %v3190
    %v3379 = vpack.c.b16 %v3195, %v3191
    %v3380 = vpack.c.b16 %v3196, %v3192
    %v3381 = vpack.c.b16 %v3201, %v3197
    %v3382 = vpack.c.b16 %v3202, %v3198
    %v3383 = vpack.c.b16 %v3203, %v3199
    %v3384 = vpack.c.b16 %v3204, %v3200
    %v3385 = vpack.c.b16 %v3209, %v3205
    %v3386 = vpack.c.b16 %v3210, %v3206
    %v3387 = vpack.c.b16 %v3211, %v3207
    %v3388 = vpack.c.b16 %v3212, %v3208
    %v3389 = vpack.c.b16 %v3217, %v3213
    %v3390 = vpack.c.b16 %v3218, %v3214
    %v3391 = vpack.c.b16 %v3219, %v3215
    %v3392 = vpack.c.b16 %v3220, %v3216
    %v3393 = vpack.c.b16 %v3225, %v3221
    %v3394 = vpack.c.b16 %v3226, %v3222
    %v3395 = vpack.c.b16 %v3227, %v3223
    %v3396 = vpack.c.b16 %v3228, %v3224
    %v3397 = vpack.c.b16 %v3233, %v3229
    %v3398 = vpack.c.b16 %v3234, %v3230
    %v3399 = vpack.c.b16 %v3235, %v3231
    %v3400 = vpack.c.b16 %v3236, %v3232
    %v3401 = vpack.c.b16 %v3241, %v3237
    %v3402 = vpack.c.b16 %v3242, %v3238
    %v3403 = vpack.c.b16 %v3243, %v3239
    %v3404 = vpack.c.b16 %v3244, %v3240
    %3565 = vmatprep.subr.bf16.mxu0 %v3274
    %3566 = vmatpush1.bf16.msra.mxu0 %v3273
    %3567 = vmatprep.subr.bf16.mxu0 %v3270
    %3568 = vmatpush1.bf16.msra.mxu0 %v3269
    %3569 = vmatprep.subr.bf16.mxu0 %v3266
    %3570 = vmatpush1.bf16.msra.mxu0 %v3265
    %3571 = vmatprep.subr.bf16.mxu0 %v3262
    %3572 = vmatpush1.bf16.msra.mxu0 %v3261
    %3573 = vmatprep.subr.bf16.mxu0 %v3258
    %3574 = vmatpush1.bf16.msra.mxu0 %v3257
    %3575 = vmatprep.subr.bf16.mxu0 %v3254
    %3576 = vmatpush1.bf16.msra.mxu0 %v3253
    %3577 = vmatprep.subr.bf16.mxu0 %v3250
    %3578 = vmatpush1.bf16.msra.mxu0 %v3249
    %3579 = vmatprep.subr.bf16.mxu0 %v3246
    %3580 = vmatpush1.bf16.msra.mxu0 %v3245
    %3581 = vmatprep.subr.bf16.mxu0 %v3306
    %3582 = vmatpush2.bf16.msra.mxu0 %v3305
    %3583 = vmatprep.subr.bf16.mxu0 %v3302
    %3584 = vmatpush2.bf16.msra.mxu0 %v3301
    %3585 = vmatprep.subr.bf16.mxu0 %v3298
    %3586 = vmatpush2.bf16.msra.mxu0 %v3297
    %3587 = vmatprep.subr.bf16.mxu0 %v3294
    %3588 = vmatpush2.bf16.msra.mxu0 %v3293
    %3589 = vmatprep.subr.bf16.mxu0 %v3290
    %3590 = vmatpush2.bf16.msra.mxu0 %v3289
    %3591 = vmatprep.subr.bf16.mxu0 %v3286
    %3592 = vmatpush2.bf16.msra.mxu0 %v3285
    %3593 = vmatprep.subr.bf16.mxu0 %v3282
    %3594 = vmatpush2.bf16.msra.mxu0 %v3281
    %3595 = vmatprep.subr.bf16.mxu0 %v3278
    %3596 = vmatpush2.bf16.msra.mxu0 %v3277
    %3597 = vmatprep.mubr.bf16.mxu0 %v2601
    %3598 = vmatmul.mubr.bf16.gmra.mxu0 %v2600
    %v3599 = vpop.f32.mrf.mxu0
    %v3600 = vadd.f32 0.0, %v3599
    %v3601 = vpop.f32.mrf.mxu0
    %v3602 = vadd.f32 0.0, %v3601
    %v3603 = vpop.f32.mrf.mxu0
    %v3604 = vadd.f32 0.0, %v3603
    %v3605 = vpop.f32.mrf.mxu0
    %v3606 = vadd.f32 0.0, %v3605
    %3607 = vdwg.mxu0
    %3608 = vmatprep.subr.bf16.mxu0 %v3338
    %3609 = vmatpush1.bf16.msra.mxu0 %v3337
    %3610 = vmatprep.subr.bf16.mxu0 %v3334
    %3611 = vmatpush1.bf16.msra.mxu0 %v3333
    %3612 = vmatprep.subr.bf16.mxu0 %v3330
    %3613 = vmatpush1.bf16.msra.mxu0 %v3329
    %3614 = vmatprep.subr.bf16.mxu0 %v3326
    %3615 = vmatpush1.bf16.msra.mxu0 %v3325
    %3616 = vmatprep.subr.bf16.mxu0 %v3322
    %3617 = vmatpush1.bf16.msra.mxu0 %v3321
    %3618 = vmatprep.subr.bf16.mxu0 %v3318
    %3619 = vmatpush1.bf16.msra.mxu0 %v3317
    %3620 = vmatprep.subr.bf16.mxu0 %v3314
    %3621 = vmatpush1.bf16.msra.mxu0 %v3313
    %3622 = vmatprep.subr.bf16.mxu0 %v3310
    %3623 = vmatpush1.bf16.msra.mxu0 %v3309
    %3624 = vmatprep.subr.bf16.mxu0 %v3370
    %3625 = vmatpush2.bf16.msra.mxu0 %v3369
    %3626 = vmatprep.subr.bf16.mxu0 %v3366
    %3627 = vmatpush2.bf16.msra.mxu0 %v3365
    %3628 = vmatprep.subr.bf16.mxu0 %v3362
    %3629 = vmatpush2.bf16.msra.mxu0 %v3361
    %3630 = vmatprep.subr.bf16.mxu0 %v3358
    %3631 = vmatpush2.bf16.msra.mxu0 %v3357
    %3632 = vmatprep.subr.bf16.mxu0 %v3354
    %3633 = vmatpush2.bf16.msra.mxu0 %v3353
    %3634 = vmatprep.subr.bf16.mxu0 %v3350
    %3635 = vmatpush2.bf16.msra.mxu0 %v3349
    %3636 = vmatprep.subr.bf16.mxu0 %v3346
    %3637 = vmatpush2.bf16.msra.mxu0 %v3345
    %3638 = vmatprep.subr.bf16.mxu0 %v3342
    %3639 = vmatpush2.bf16.msra.mxu0 %v3341
    %3640 = vmatprep.mubr.bf16.mxu0 %v2603
    %3641 = vmatmul.mubr.bf16.gmra.mxu0 %v2602
    %v3642 = vpop.f32.mrf.mxu0
    %v3643 = vadd.f32 %v3600, %v3642
    %v3644 = vpop.f32.mrf.mxu0
    %v3645 = vadd.f32 %v3602, %v3644
    %v3646 = vpop.f32.mrf.mxu0
    %v3647 = vadd.f32 %v3604, %v3646
    %v3648 = vpop.f32.mrf.mxu0
    %v3649 = vadd.f32 %v3606, %v3648
    %3650 = vdwg.mxu0
    %3651 = vmatprep.subr.bf16.mxu0 %v3402
    %3652 = vmatpush1.bf16.msra.mxu0 %v3401
    %3653 = vmatprep.subr.bf16.mxu0 %v3398
    %3654 = vmatpush1.bf16.msra.mxu0 %v3397
    %3655 = vmatprep.subr.bf16.mxu0 %v3394
    %3656 = vmatpush1.bf16.msra.mxu0 %v3393
    %3657 = vmatprep.subr.bf16.mxu0 %v3390
    %3658 = vmatpush1.bf16.msra.mxu0 %v3389
    %3659 = vmatprep.subr.bf16.mxu0 %v3386
    %3660 = vmatpush1.bf16.msra.mxu0 %v3385
    %3661 = vmatprep.subr.bf16.mxu0 %v3382
    %3662 = vmatpush1.bf16.msra.mxu0 %v3381
    %3663 = vmatprep.subr.bf16.mxu0 %v3378
    %3664 = vmatpush1.bf16.msra.mxu0 %v3377
    %3665 = vmatprep.subr.bf16.mxu0 %v3374
    %3666 = vmatpush1.bf16.msra.mxu0 %v3373
    %3667 = vmatprep.subr.bf16.mxu0 0
    %3668 = vmatpush2.bf16.msra.mxu0 0
    %3669 = vmatprep.subr.bf16.mxu0 0
    %3670 = vmatpush2.bf16.msra.mxu0 0
    %3671 = vmatprep.subr.bf16.mxu0 0
    %3672 = vmatpush2.bf16.msra.mxu0 0
    %3673 = vmatprep.subr.bf16.mxu0 0
    %3674 = vmatpush2.bf16.msra.mxu0 0
    %3675 = vmatprep.subr.bf16.mxu0 0
    %3676 = vmatpush2.bf16.msra.mxu0 0
    %3677 = vmatprep.subr.bf16.mxu0 0
    %3678 = vmatpush2.bf16.msra.mxu0 0
    %3679 = vmatprep.subr.bf16.mxu0 0
    %3680 = vmatpush2.bf16.msra.mxu0 0
    %3681 = vmatprep.subr.bf16.mxu0 0
    %3682 = vmatpush2.bf16.msra.mxu0 0
    %3683 = vmatprep.mubr.bf16.mxu0 0
    %3684 = vmatmul.mubr.bf16.gmra.mxu0 %v2604
    %v3685 = vpop.f32.mrf.mxu0
    %v3686 = vadd.f32 %v3643, %v3685
    %v3687 = vpop.f32.mrf.mxu0
    %v3688 = vadd.f32 %v3645, %v3687
    %v3689 = vpop.f32.mrf.mxu0
    %v3690 = vadd.f32 %v3647, %v3689
    %v3691 = vpop.f32.mrf.mxu0
    %v3692 = vadd.f32 %v3649, %v3691
    %3693 = vdwg.mxu0
    %3694 = vmatprep.subr.bf16.mxu0 %v3276
    %3695 = vmatpush1.bf16.msra.mxu0 %v3275
    %3696 = vmatprep.subr.bf16.mxu0 %v3272
    %3697 = vmatpush1.bf16.msra.mxu0 %v3271
    %3698 = vmatprep.subr.bf16.mxu0 %v3268
    %3699 = vmatpush1.bf16.msra.mxu0 %v3267
    %3700 = vmatprep.subr.bf16.mxu0 %v3264
    %3701 = vmatpush1.bf16.msra.mxu0 %v3263
    %3702 = vmatprep.subr.bf16.mxu0 %v3260
    %3703 = vmatpush1.bf16.msra.mxu0 %v3259
    %3704 = vmatprep.subr.bf16.mxu0 %v3256
    %3705 = vmatpush1.bf16.msra.mxu0 %v3255
    %3706 = vmatprep.subr.bf16.mxu0 %v3252
    %3707 = vmatpush1.bf16.msra.mxu0 %v3251
    %3708 = vmatprep.subr.bf16.mxu0 %v3248
    %3709 = vmatpush1.bf16.msra.mxu0 %v3247
    %3710 = vmatprep.subr.bf16.mxu0 %v3308
    %3711 = vmatpush2.bf16.msra.mxu0 %v3307
    %3712 = vmatprep.subr.bf16.mxu0 %v3304
    %3713 = vmatpush2.bf16.msra.mxu0 %v3303
    %3714 = vmatprep.subr.bf16.mxu0 %v3300
    %3715 = vmatpush2.bf16.msra.mxu0 %v3299
    %3716 = vmatprep.subr.bf16.mxu0 %v3296
    %3717 = vmatpush2.bf16.msra.mxu0 %v3295
    %3718 = vmatprep.subr.bf16.mxu0 %v3292
    %3719 = vmatpush2.bf16.msra.mxu0 %v3291
    %3720 = vmatprep.subr.bf16.mxu0 %v3288
    %3721 = vmatpush2.bf16.msra.mxu0 %v3287
    %3722 = vmatprep.subr.bf16.mxu0 %v3284
    %3723 = vmatpush2.bf16.msra.mxu0 %v3283
    %3724 = vmatprep.subr.bf16.mxu0 %v3280
    %3725 = vmatpush2.bf16.msra.mxu0 %v3279
    %3726 = vmatprep.mubr.bf16.mxu0 %v2601
    %3727 = vmatmul.mubr.bf16.gmra.mxu0 %v2600
    %v3728 = vpop.f32.mrf.mxu0
    %v3729 = vadd.f32 0.0, %v3728
    %v3730 = vpop.f32.mrf.mxu0
    %v3731 = vadd.f32 0.0, %v3730
    %v3732 = vpop.f32.mrf.mxu0
    %v3733 = vadd.f32 0.0, %v3732
    %v3734 = vpop.f32.mrf.mxu0
    %v3735 = vadd.f32 0.0, %v3734
    %3736 = vdwg.mxu0
    %3737 = vmatprep.subr.bf16.mxu0 %v3340
    %3738 = vmatpush1.bf16.msra.mxu0 %v3339
    %3739 = vmatprep.subr.bf16.mxu0 %v3336
    %3740 = vmatpush1.bf16.msra.mxu0 %v3335
    %3741 = vmatprep.subr.bf16.mxu0 %v3332
    %3742 = vmatpush1.bf16.msra.mxu0 %v3331
    %3743 = vmatprep.subr.bf16.mxu0 %v3328
    %3744 = vmatpush1.bf16.msra.mxu0 %v3327
    %3745 = vmatprep.subr.bf16.mxu0 %v3324
    %3746 = vmatpush1.bf16.msra.mxu0 %v3323
    %3747 = vmatprep.subr.bf16.mxu0 %v3320
    %3748 = vmatpush1.bf16.msra.mxu0 %v3319
    %3749 = vmatprep.subr.bf16.mxu0 %v3316
    %3750 = vmatpush1.bf16.msra.mxu0 %v3315
    %3751 = vmatprep.subr.bf16.mxu0 %v3312
    %3752 = vmatpush1.bf16.msra.mxu0 %v3311
    %3753 = vmatprep.subr.bf16.mxu0 %v3372
    %3754 = vmatpush2.bf16.msra.mxu0 %v3371
    %3755 = vmatprep.subr.bf16.mxu0 %v3368
    %3756 = vmatpush2.bf16.msra.mxu0 %v3367
    %3757 = vmatprep.subr.bf16.mxu0 %v3364
    %3758 = vmatpush2.bf16.msra.mxu0 %v3363
    %3759 = vmatprep.subr.bf16.mxu0 %v3360
    %3760 = vmatpush2.bf16.msra.mxu0 %v3359
    %3761 = vmatprep.subr.bf16.mxu0 %v3356
    %3762 = vmatpush2.bf16.msra.mxu0 %v3355
    %3763 = vmatprep.subr.bf16.mxu0 %v3352
    %3764 = vmatpush2.bf16.msra.mxu0 %v3351
    %3765 = vmatprep.subr.bf16.mxu0 %v3348
    %3766 = vmatpush2.bf16.msra.mxu0 %v3347
    %3767 = vmatprep.subr.bf16.mxu0 %v3344
    %3768 = vmatpush2.bf16.msra.mxu0 %v3343
    %3769 = vmatprep.mubr.bf16.mxu0 %v2603
    %3770 = vmatmul.mubr.bf16.gmra.mxu0 %v2602
    %v3771 = vpop.f32.mrf.mxu0
    %v3772 = vadd.f32 %v3729, %v3771
    %v3773 = vpop.f32.mrf.mxu0
    %v3774 = vadd.f32 %v3731, %v3773
    %v3775 = vpop.f32.mrf.mxu0
    %v3776 = vadd.f32 %v3733, %v3775
    %v3777 = vpop.f32.mrf.mxu0
    %v3778 = vadd.f32 %v3735, %v3777
    %3779 = vdwg.mxu0
    %3780 = vmatprep.subr.bf16.mxu0 %v3404
    %3781 = vmatpush1.bf16.msra.mxu0 %v3403
    %3782 = vmatprep.subr.bf16.mxu0 %v3400
    %3783 = vmatpush1.bf16.msra.mxu0 %v3399
    %3784 = vmatprep.subr.bf16.mxu0 %v3396
    %3785 = vmatpush1.bf16.msra.mxu0 %v3395
    %3786 = vmatprep.subr.bf16.mxu0 %v3392
    %3787 = vmatpush1.bf16.msra.mxu0 %v3391
    %3788 = vmatprep.subr.bf16.mxu0 %v3388
    %3789 = vmatpush1.bf16.msra.mxu0 %v3387
    %3790 = vmatprep.subr.bf16.mxu0 %v3384
    %3791 = vmatpush1.bf16.msra.mxu0 %v3383
    %3792 = vmatprep.subr.bf16.mxu0 %v3380
    %3793 = vmatpush1.bf16.msra.mxu0 %v3379
    %3794 = vmatprep.subr.bf16.mxu0 %v3376
    %3795 = vmatpush1.bf16.msra.mxu0 %v3375
    %3796 = vmatprep.subr.bf16.mxu0 0
    %3797 = vmatpush2.bf16.msra.mxu0 0
    %3798 = vmatprep.subr.bf16.mxu0 0
    %3799 = vmatpush2.bf16.msra.mxu0 0
    %3800 = vmatprep.subr.bf16.mxu0 0
    %3801 = vmatpush2.bf16.msra.mxu0 0
    %3802 = vmatprep.subr.bf16.mxu0 0
    %3803 = vmatpush2.bf16.msra.mxu0 0
    %3804 = vmatprep.subr.bf16.mxu0 0
    %3805 = vmatpush2.bf16.msra.mxu0 0
    %3806 = vmatprep.subr.bf16.mxu0 0
    %3807 = vmatpush2.bf16.msra.mxu0 0
    %3808 = vmatprep.subr.bf16.mxu0 0
    %3809 = vmatpush2.bf16.msra.mxu0 0
    %3810 = vmatprep.subr.bf16.mxu0 0
    %3811 = vmatpush2.bf16.msra.mxu0 0
    %3812 = vmatprep.mubr.bf16.mxu0 0
    %3813 = vmatmul.mubr.bf16.gmra.mxu0 %v2604
    %v3814 = vpop.f32.mrf.mxu0
    %v3815 = vadd.f32 %v3772, %v3814
    %v3816 = vpop.f32.mrf.mxu0
    %v3817 = vadd.f32 %v3774, %v3816
    %v3818 = vpop.f32.mrf.mxu0
    %v3819 = vadd.f32 %v3776, %v3818
    %v3820 = vpop.f32.mrf.mxu0
    %v3821 = vadd.f32 %v3778, %v3820
    %3822 = vdwg.mxu0
    %v3823 = vpack.c.bf16 %v3690, %v3686
    %v3824 = vpack.c.bf16 %v3692, %v3688
    %v3825 = vpack.c.bf16 %v3819, %v3815
    %v3826 = vpack.c.bf16 %v3821, %v3817
    %v3827 = vld [vmem:[#allocation10] sm:$0xf]
    %v3829 = vlaneseq
    %v3830 = vshrl.u32 %v3829, 7
    %v3831 = vsub.s32 0, %v3830
    %v3832 = vrot.slane %v3827, %v3831
    %v3833 = vlaneseq
    %v3834 = vshrl.u32 %v3833, 7
    %v3835 = vsub.s32 1, %v3834
    %v3836 = vrot.slane %v3827, %v3835
    %v3837 = vlaneseq
    %v3838 = vshrl.u32 %v3837, 7
    %v3839 = vsub.s32 2, %v3838
    %v3840 = vrot.slane %v3827, %v3839
    %v3841 = vlaneseq
    %v3842 = vshrl.u32 %v3841, 7
    %v3843 = vsub.s32 3, %v3842
    %v3844 = vrot.slane %v3827, %v3843
    %v3849 = vpack.c.bf16 %v3832, %v3832
    %v3850 = vpack.c.bf16 %v3836, %v3836
    %v3851 = vpack.c.bf16 %v3840, %v3840
    %v3852 = vpack.c.bf16 %v3844, %v3844
    %v3854 = vpack.i.b16 %v3849, %v3849
    %v3856 = vlaneseq
    %v3857 = vshrl.u32 %v3856, 7
    %v3858 = vsub.s32 0, %v3857
    %v3859 = vrot.slane %v3854, %v3858
    %v3861 = vpack.i.b16 %v3850, %v3850
    %v3863 = vlaneseq
    %v3864 = vshrl.u32 %v3863, 7
    %v3865 = vsub.s32 0, %v3864
    %v3866 = vrot.slane %v3861, %v3865
    %v3868 = vpack.i.b16 %v3851, %v3851
    %v3870 = vlaneseq
    %v3871 = vshrl.u32 %v3870, 7
    %v3872 = vsub.s32 0, %v3871
    %v3873 = vrot.slane %v3868, %v3872
    %v3875 = vpack.i.b16 %v3852, %v3852
    %v3877 = vlaneseq
    %v3878 = vshrl.u32 %v3877, 7
    %v3879 = vsub.s32 0, %v3878
    %v3880 = vrot.slane %v3875, %v3879
    %v3881 = vadd.bf16 %v3823, %v3859
    %v3882 = vadd.bf16 %v3824, %v3866
    %v3883 = vadd.bf16 %v3825, %v3873
    %v3884 = vadd.bf16 %v3826, %v3880
    %v3885 = vmax.bf16 %v3881, 0
    %v3886 = vmax.bf16 %v3882, 0
    %v3887 = vmax.bf16 %v3883, 0
    %v3888 = vmax.bf16 %v3884, 0
    %v3889 = vld [vmem:[#allocation11] sm:$0xff]
    %v3890 = vld [vmem:[#allocation11 + $0x8] sm:$0xff]
    %v3891 = vld [vmem:[#allocation11 + $0x10] sm:$0xff]
    %v3892 = vld [vmem:[#allocation11 + $0x18] sm:$0xff]
    %v3893 = vld [vmem:[#allocation11 + $0x20] sm:$0xff]
    %v3894 = vld [vmem:[#allocation11 + $0x28] sm:$0xff]
    %v3895 = vld [vmem:[#allocation11 + $0x30] sm:$0xff]
    %v3896 = vld [vmem:[#allocation11 + $0x38] sm:$0xff]
    %v3897 = vld [vmem:[#allocation11 + $0x40] sm:$0xff]
    %v3898 = vld [vmem:[#allocation11 + $0x48] sm:$0xff]
    %v3899 = vld [vmem:[#allocation11 + $0x50] sm:$0xff]
    %v3900 = vld [vmem:[#allocation11 + $0x58] sm:$0xff]
    %v3901 = vld [vmem:[#allocation11 + $0x60] sm:$0xff]
    %v3902 = vld [vmem:[#allocation11 + $0x68] sm:$0xff]
    %v3903 = vld [vmem:[#allocation11 + $0x70] sm:$0xff]
    %v3904 = vld [vmem:[#allocation11 + $0x78] sm:$0xff]
    %v3905 = vld [vmem:[#allocation11 + $0x80] sm:$0xff]
    %v3906 = vld [vmem:[#allocation11 + $0x88] sm:$0xff]
    %v3907 = vld [vmem:[#allocation11 + $0x90] sm:$0xff]
    %v3908 = vld [vmem:[#allocation11 + $0x98] sm:$0xff]
    %v3909 = vld [vmem:[#allocation11 + $0xa0] sm:$0xff]
    %v3910 = vld [vmem:[#allocation11 + $0xa8] sm:$0xff]
    %v3911 = vld [vmem:[#allocation11 + $0xb0] sm:$0xff]
    %v3912 = vld [vmem:[#allocation11 + $0xb8] sm:$0xff]
    %v3913 = vld [vmem:[#allocation11 + $0xc0] sm:$0xff]
    %v3914 = vld [vmem:[#allocation11 + $0xc8] sm:$0xff]
    %v3915 = vld [vmem:[#allocation11 + $0xd0] sm:$0xff]
    %v3916 = vld [vmem:[#allocation11 + $0xd8] sm:$0xff]
    %v3917 = vld [vmem:[#allocation11 + $0xe0] sm:$0xff]
    %v3918 = vld [vmem:[#allocation11 + $0xe8] sm:$0xff]
    %v3919 = vld [vmem:[#allocation11 + $0xf0] sm:$0xff]
    %v3920 = vld [vmem:[#allocation11 + $0xf8] sm:$0xff]
    %v3921 = vld [vmem:[#allocation11 + $0x100] sm:$0xff]
    %v3922 = vld [vmem:[#allocation11 + $0x108] sm:$0xff]
    %v3923 = vld [vmem:[#allocation11 + $0x110] sm:$0xff]
    %v3924 = vld [vmem:[#allocation11 + $0x118] sm:$0xff]
    %v3925 = vld [vmem:[#allocation11 + $0x120] sm:$0xff]
    %v3926 = vld [vmem:[#allocation11 + $0x128] sm:$0xff]
    %v3927 = vld [vmem:[#allocation11 + $0x130] sm:$0xff]
    %v3928 = vld [vmem:[#allocation11 + $0x138] sm:$0xff]
    %v3929 = vld [vmem:[#allocation11 + $0x140] sm:$0xff]
    %v3930 = vld [vmem:[#allocation11 + $0x148] sm:$0xff]
    %v3931 = vld [vmem:[#allocation11 + $0x150] sm:$0xff]
    %v3932 = vld [vmem:[#allocation11 + $0x158] sm:$0xff]
    %v3933 = vld [vmem:[#allocation11 + $0x160] sm:$0xff]
    %v3934 = vld [vmem:[#allocation11 + $0x168] sm:$0xff]
    %v3935 = vld [vmem:[#allocation11 + $0x170] sm:$0xff]
    %v3936 = vld [vmem:[#allocation11 + $0x178] sm:$0xff]
    %v3937 = vld [vmem:[#allocation11 + $0x180] sm:$0xff]
    %v3938 = vld [vmem:[#allocation11 + $0x188] sm:$0xff]
    %v3939 = vld [vmem:[#allocation11 + $0x190] sm:$0xff]
    %v3940 = vld [vmem:[#allocation11 + $0x198] sm:$0xff]
    %v3941 = vld [vmem:[#allocation11 + $0x1a0] sm:$0xff]
    %v3942 = vld [vmem:[#allocation11 + $0x1a8] sm:$0xff]
    %v3943 = vld [vmem:[#allocation11 + $0x1b0] sm:$0xff]
    %v3944 = vld [vmem:[#allocation11 + $0x1b8] sm:$0xff]
    %v3945 = vld [vmem:[#allocation11 + $0x1c0] sm:$0xff]
    %v3946 = vld [vmem:[#allocation11 + $0x1c8] sm:$0xff]
    %v3947 = vld [vmem:[#allocation11 + $0x1d0] sm:$0xff]
    %v3948 = vld [vmem:[#allocation11 + $0x1d8] sm:$0xff]
    %v3949 = vld [vmem:[#allocation11 + $0x1e0] sm:$0xff]
    %v3950 = vld [vmem:[#allocation11 + $0x1e8] sm:$0xff]
    %v3951 = vld [vmem:[#allocation11 + $0x1f0] sm:$0xff]
    %v3952 = vld [vmem:[#allocation11 + $0x1f8] sm:$0xff]
    %v4017 = vunpack.c.l.b16 %v3889
    %v4018 = vunpack.c.h.b16 %v3889
    %v4019 = vunpack.c.l.b16 %v3890
    %v4020 = vunpack.c.h.b16 %v3890
    %v4021 = vunpack.c.l.b16 %v3891
    %v4022 = vunpack.c.h.b16 %v3891
    %v4023 = vunpack.c.l.b16 %v3892
    %v4024 = vunpack.c.h.b16 %v3892
    %v4025 = vunpack.c.l.b16 %v3893
    %v4026 = vunpack.c.h.b16 %v3893
    %v4027 = vunpack.c.l.b16 %v3894
    %v4028 = vunpack.c.h.b16 %v3894
    %v4029 = vunpack.c.l.b16 %v3895
    %v4030 = vunpack.c.h.b16 %v3895
    %v4031 = vunpack.c.l.b16 %v3896
    %v4032 = vunpack.c.h.b16 %v3896
    %v4033 = vunpack.c.l.b16 %v3897
    %v4034 = vunpack.c.h.b16 %v3897
    %v4035 = vunpack.c.l.b16 %v3898
    %v4036 = vunpack.c.h.b16 %v3898
    %v4037 = vunpack.c.l.b16 %v3899
    %v4038 = vunpack.c.h.b16 %v3899
    %v4039 = vunpack.c.l.b16 %v3900
    %v4040 = vunpack.c.h.b16 %v3900
    %v4041 = vunpack.c.l.b16 %v3901
    %v4042 = vunpack.c.h.b16 %v3901
    %v4043 = vunpack.c.l.b16 %v3902
    %v4044 = vunpack.c.h.b16 %v3902
    %v4045 = vunpack.c.l.b16 %v3903
    %v4046 = vunpack.c.h.b16 %v3903
    %v4047 = vunpack.c.l.b16 %v3904
    %v4048 = vunpack.c.h.b16 %v3904
    %v4049 = vunpack.c.l.b16 %v3905
    %v4050 = vunpack.c.h.b16 %v3905
    %v4051 = vunpack.c.l.b16 %v3906
    %v4052 = vunpack.c.h.b16 %v3906
    %v4053 = vunpack.c.l.b16 %v3907
    %v4054 = vunpack.c.h.b16 %v3907
    %v4055 = vunpack.c.l.b16 %v3908
    %v4056 = vunpack.c.h.b16 %v3908
    %v4057 = vunpack.c.l.b16 %v3909
    %v4058 = vunpack.c.h.b16 %v3909
    %v4059 = vunpack.c.l.b16 %v3910
    %v4060 = vunpack.c.h.b16 %v3910
    %v4061 = vunpack.c.l.b16 %v3911
    %v4062 = vunpack.c.h.b16 %v3911
    %v4063 = vunpack.c.l.b16 %v3912
    %v4064 = vunpack.c.h.b16 %v3912
    %v4065 = vunpack.c.l.b16 %v3913
    %v4066 = vunpack.c.h.b16 %v3913
    %v4067 = vunpack.c.l.b16 %v3914
    %v4068 = vunpack.c.h.b16 %v3914
    %v4069 = vunpack.c.l.b16 %v3915
    %v4070 = vunpack.c.h.b16 %v3915
    %v4071 = vunpack.c.l.b16 %v3916
    %v4072 = vunpack.c.h.b16 %v3916
    %v4073 = vunpack.c.l.b16 %v3917
    %v4074 = vunpack.c.h.b16 %v3917
    %v4075 = vunpack.c.l.b16 %v3918
    %v4076 = vunpack.c.h.b16 %v3918
    %v4077 = vunpack.c.l.b16 %v3919
    %v4078 = vunpack.c.h.b16 %v3919
    %v4079 = vunpack.c.l.b16 %v3920
    %v4080 = vunpack.c.h.b16 %v3920
    %v4081 = vunpack.c.l.b16 %v3921
    %v4082 = vunpack.c.h.b16 %v3921
    %v4083 = vunpack.c.l.b16 %v3922
    %v4084 = vunpack.c.h.b16 %v3922
    %v4085 = vunpack.c.l.b16 %v3923
    %v4086 = vunpack.c.h.b16 %v3923
    %v4087 = vunpack.c.l.b16 %v3924
    %v4088 = vunpack.c.h.b16 %v3924
    %v4089 = vunpack.c.l.b16 %v3925
    %v4090 = vunpack.c.h.b16 %v3925
    %v4091 = vunpack.c.l.b16 %v3926
    %v4092 = vunpack.c.h.b16 %v3926
    %v4093 = vunpack.c.l.b16 %v3927
    %v4094 = vunpack.c.h.b16 %v3927
    %v4095 = vunpack.c.l.b16 %v3928
    %v4096 = vunpack.c.h.b16 %v3928
    %v4097 = vunpack.c.l.b16 %v3929
    %v4098 = vunpack.c.h.b16 %v3929
    %v4099 = vunpack.c.l.b16 %v3930
    %v4100 = vunpack.c.h.b16 %v3930
    %v4101 = vunpack.c.l.b16 %v3931
    %v4102 = vunpack.c.h.b16 %v3931
    %v4103 = vunpack.c.l.b16 %v3932
    %v4104 = vunpack.c.h.b16 %v3932
    %v4105 = vunpack.c.l.b16 %v3933
    %v4106 = vunpack.c.h.b16 %v3933
    %v4107 = vunpack.c.l.b16 %v3934
    %v4108 = vunpack.c.h.b16 %v3934
    %v4109 = vunpack.c.l.b16 %v3935
    %v4110 = vunpack.c.h.b16 %v3935
    %v4111 = vunpack.c.l.b16 %v3936
    %v4112 = vunpack.c.h.b16 %v3936
    %v4113 = vunpack.c.l.b16 %v3937
    %v4114 = vunpack.c.h.b16 %v3937
    %v4115 = vunpack.c.l.b16 %v3938
    %v4116 = vunpack.c.h.b16 %v3938
    %v4117 = vunpack.c.l.b16 %v3939
    %v4118 = vunpack.c.h.b16 %v3939
    %v4119 = vunpack.c.l.b16 %v3940
    %v4120 = vunpack.c.h.b16 %v3940
    %v4121 = vunpack.c.l.b16 %v3941
    %v4122 = vunpack.c.h.b16 %v3941
    %v4123 = vunpack.c.l.b16 %v3942
    %v4124 = vunpack.c.h.b16 %v3942
    %v4125 = vunpack.c.l.b16 %v3943
    %v4126 = vunpack.c.h.b16 %v3943
    %v4127 = vunpack.c.l.b16 %v3944
    %v4128 = vunpack.c.h.b16 %v3944
    %v4129 = vunpack.c.l.b16 %v3945
    %v4130 = vunpack.c.h.b16 %v3945
    %v4131 = vunpack.c.l.b16 %v3946
    %v4132 = vunpack.c.h.b16 %v3946
    %v4133 = vunpack.c.l.b16 %v3947
    %v4134 = vunpack.c.h.b16 %v3947
    %v4135 = vunpack.c.l.b16 %v3948
    %v4136 = vunpack.c.h.b16 %v3948
    %v4137 = vunpack.c.l.b16 %v3949
    %v4138 = vunpack.c.h.b16 %v3949
    %v4139 = vunpack.c.l.b16 %v3950
    %v4140 = vunpack.c.h.b16 %v3950
    %v4141 = vunpack.c.l.b16 %v3951
    %v4142 = vunpack.c.h.b16 %v3951
    %v4143 = vunpack.c.l.b16 %v3952
    %v4144 = vunpack.c.h.b16 %v3952
    %v4145 = vpack.c.b16 %v4019, %v4017
    %v4146 = vpack.c.b16 %v4020, %v4018
    %v4147 = vpack.c.b16 %v4023, %v4021
    %v4148 = vpack.c.b16 %v4024, %v4022
    %v4149 = vpack.c.b16 %v4027, %v4025
    %v4150 = vpack.c.b16 %v4028, %v4026
    %v4151 = vpack.c.b16 %v4031, %v4029
    %v4152 = vpack.c.b16 %v4032, %v4030
    %v4153 = vpack.c.b16 %v4035, %v4033
    %v4154 = vpack.c.b16 %v4036, %v4034
    %v4155 = vpack.c.b16 %v4039, %v4037
    %v4156 = vpack.c.b16 %v4040, %v4038
    %v4157 = vpack.c.b16 %v4043, %v4041
    %v4158 = vpack.c.b16 %v4044, %v4042
    %v4159 = vpack.c.b16 %v4047, %v4045
    %v4160 = vpack.c.b16 %v4048, %v4046
    %v4161 = vpack.c.b16 %v4051, %v4049
    %v4162 = vpack.c.b16 %v4052, %v4050
    %v4163 = vpack.c.b16 %v4055, %v4053
    %v4164 = vpack.c.b16 %v4056, %v4054
    %v4165 = vpack.c.b16 %v4059, %v4057
    %v4166 = vpack.c.b16 %v4060, %v4058
    %v4167 = vpack.c.b16 %v4063, %v4061
    %v4168 = vpack.c.b16 %v4064, %v4062
    %v4169 = vpack.c.b16 %v4067, %v4065
    %v4170 = vpack.c.b16 %v4068, %v4066
    %v4171 = vpack.c.b16 %v4071, %v4069
    %v4172 = vpack.c.b16 %v4072, %v4070
    %v4173 = vpack.c.b16 %v4075, %v4073
    %v4174 = vpack.c.b16 %v4076, %v4074
    %v4175 = vpack.c.b16 %v4079, %v4077
    %v4176 = vpack.c.b16 %v4080, %v4078
    %v4177 = vpack.c.b16 %v4083, %v4081
    %v4178 = vpack.c.b16 %v4084, %v4082
    %v4179 = vpack.c.b16 %v4087, %v4085
    %v4180 = vpack.c.b16 %v4088, %v4086
    %v4181 = vpack.c.b16 %v4091, %v4089
    %v4182 = vpack.c.b16 %v4092, %v4090
    %v4183 = vpack.c.b16 %v4095, %v4093
    %v4184 = vpack.c.b16 %v4096, %v4094
    %v4185 = vpack.c.b16 %v4099, %v4097
    %v4186 = vpack.c.b16 %v4100, %v4098
    %v4187 = vpack.c.b16 %v4103, %v4101
    %v4188 = vpack.c.b16 %v4104, %v4102
    %v4189 = vpack.c.b16 %v4107, %v4105
    %v4190 = vpack.c.b16 %v4108, %v4106
    %v4191 = vpack.c.b16 %v4111, %v4109
    %v4192 = vpack.c.b16 %v4112, %v4110
    %v4193 = vpack.c.b16 %v4115, %v4113
    %v4194 = vpack.c.b16 %v4116, %v4114
    %v4195 = vpack.c.b16 %v4119, %v4117
    %v4196 = vpack.c.b16 %v4120, %v4118
    %v4197 = vpack.c.b16 %v4123, %v4121
    %v4198 = vpack.c.b16 %v4124, %v4122
    %v4199 = vpack.c.b16 %v4127, %v4125
    %v4200 = vpack.c.b16 %v4128, %v4126
    %v4201 = vpack.c.b16 %v4131, %v4129
    %v4202 = vpack.c.b16 %v4132, %v4130
    %v4203 = vpack.c.b16 %v4135, %v4133
    %v4204 = vpack.c.b16 %v4136, %v4134
    %v4205 = vpack.c.b16 %v4139, %v4137
    %v4206 = vpack.c.b16 %v4140, %v4138
    %v4207 = vpack.c.b16 %v4143, %v4141
    %v4208 = vpack.c.b16 %v4144, %v4142
    %4273 = vmatprep.subr.bf16.mxu0 %v4160
    %4274 = vmatpush1.bf16.msra.mxu0 %v4159
    %4275 = vmatprep.subr.bf16.mxu0 %v4158
    %4276 = vmatpush1.bf16.msra.mxu0 %v4157
    %4277 = vmatprep.subr.bf16.mxu0 %v4156
    %4278 = vmatpush1.bf16.msra.mxu0 %v4155
    %4279 = vmatprep.subr.bf16.mxu0 %v4154
    %4280 = vmatpush1.bf16.msra.mxu0 %v4153
    %4281 = vmatprep.subr.bf16.mxu0 %v4152
    %4282 = vmatpush1.bf16.msra.mxu0 %v4151
    %4283 = vmatprep.subr.bf16.mxu0 %v4150
    %4284 = vmatpush1.bf16.msra.mxu0 %v4149
    %4285 = vmatprep.subr.bf16.mxu0 %v4148
    %4286 = vmatpush1.bf16.msra.mxu0 %v4147
    %4287 = vmatprep.subr.bf16.mxu0 %v4146
    %4288 = vmatpush1.bf16.msra.mxu0 %v4145
    %4289 = vmatprep.subr.bf16.mxu0 %v4176
    %4290 = vmatpush2.bf16.msra.mxu0 %v4175
    %4291 = vmatprep.subr.bf16.mxu0 %v4174
    %4292 = vmatpush2.bf16.msra.mxu0 %v4173
    %4293 = vmatprep.subr.bf16.mxu0 %v4172
    %4294 = vmatpush2.bf16.msra.mxu0 %v4171
    %4295 = vmatprep.subr.bf16.mxu0 %v4170
    %4296 = vmatpush2.bf16.msra.mxu0 %v4169
    %4297 = vmatprep.subr.bf16.mxu0 %v4168
    %4298 = vmatpush2.bf16.msra.mxu0 %v4167
    %4299 = vmatprep.subr.bf16.mxu0 %v4166
    %4300 = vmatpush2.bf16.msra.mxu0 %v4165
    %4301 = vmatprep.subr.bf16.mxu0 %v4164
    %4302 = vmatpush2.bf16.msra.mxu0 %v4163
    %4303 = vmatprep.subr.bf16.mxu0 %v4162
    %4304 = vmatpush2.bf16.msra.mxu0 %v4161
    %4305 = vmatprep.mubr.bf16.mxu0 %v3886
    %4306 = vmatmul.mubr.bf16.gmra.mxu0 %v3885
    %v4307 = vpop.f32.mrf.mxu0
    %v4308 = vadd.f32 0.0, %v4307
    %v4309 = vpop.f32.mrf.mxu0
    %v4310 = vadd.f32 0.0, %v4309
    %v4311 = vpop.f32.mrf.mxu0
    %v4312 = vadd.f32 0.0, %v4311
    %v4313 = vpop.f32.mrf.mxu0
    %v4314 = vadd.f32 0.0, %v4313
    %4315 = vdwg.mxu0
    %4316 = vmatprep.subr.bf16.mxu0 %v4192
    %4317 = vmatpush1.bf16.msra.mxu0 %v4191
    %4318 = vmatprep.subr.bf16.mxu0 %v4190
    %4319 = vmatpush1.bf16.msra.mxu0 %v4189
    %4320 = vmatprep.subr.bf16.mxu0 %v4188
    %4321 = vmatpush1.bf16.msra.mxu0 %v4187
    %4322 = vmatprep.subr.bf16.mxu0 %v4186
    %4323 = vmatpush1.bf16.msra.mxu0 %v4185
    %4324 = vmatprep.subr.bf16.mxu0 %v4184
    %4325 = vmatpush1.bf16.msra.mxu0 %v4183
    %4326 = vmatprep.subr.bf16.mxu0 %v4182
    %4327 = vmatpush1.bf16.msra.mxu0 %v4181
    %4328 = vmatprep.subr.bf16.mxu0 %v4180
    %4329 = vmatpush1.bf16.msra.mxu0 %v4179
    %4330 = vmatprep.subr.bf16.mxu0 %v4178
    %4331 = vmatpush1.bf16.msra.mxu0 %v4177
    %4332 = vmatprep.subr.bf16.mxu0 %v4208
    %4333 = vmatpush2.bf16.msra.mxu0 %v4207
    %4334 = vmatprep.subr.bf16.mxu0 %v4206
    %4335 = vmatpush2.bf16.msra.mxu0 %v4205
    %4336 = vmatprep.subr.bf16.mxu0 %v4204
    %4337 = vmatpush2.bf16.msra.mxu0 %v4203
    %4338 = vmatprep.subr.bf16.mxu0 %v4202
    %4339 = vmatpush2.bf16.msra.mxu0 %v4201
    %4340 = vmatprep.subr.bf16.mxu0 %v4200
    %4341 = vmatpush2.bf16.msra.mxu0 %v4199
    %4342 = vmatprep.subr.bf16.mxu0 %v4198
    %4343 = vmatpush2.bf16.msra.mxu0 %v4197
    %4344 = vmatprep.subr.bf16.mxu0 %v4196
    %4345 = vmatpush2.bf16.msra.mxu0 %v4195
    %4346 = vmatprep.subr.bf16.mxu0 %v4194
    %4347 = vmatpush2.bf16.msra.mxu0 %v4193
    %4348 = vmatprep.mubr.bf16.mxu0 %v3888
    %4349 = vmatmul.mubr.bf16.gmra.mxu0 %v3887
    %v4350 = vpop.f32.mrf.mxu0
    %v4351 = vadd.f32 %v4308, %v4350
    %v4352 = vpop.f32.mrf.mxu0
    %v4353 = vadd.f32 %v4310, %v4352
    %v4354 = vpop.f32.mrf.mxu0
    %v4355 = vadd.f32 %v4312, %v4354
    %v4356 = vpop.f32.mrf.mxu0
    %v4357 = vadd.f32 %v4314, %v4356
    %4358 = vdwg.mxu0
    %v4359 = vpack.c.bf16 %v4355, %v4351
    %v4360 = vpack.c.bf16 %v4357, %v4353
    %v4361 = vld [vmem:[#allocation13] sm:$0x3]
    %v4363 = vlaneseq
    %v4364 = vshrl.u32 %v4363, 7
    %v4365 = vsub.s32 0, %v4364
    %v4366 = vrot.slane %v4361, %v4365
    %v4367 = vlaneseq
    %v4368 = vshrl.u32 %v4367, 7
    %v4369 = vsub.s32 1, %v4368
    %v4370 = vrot.slane %v4361, %v4369
    %v4373 = vpack.c.bf16 %v4366, %v4366
    %v4374 = vpack.c.bf16 %v4370, %v4370
    %v4376 = vpack.i.b16 %v4373, %v4373
    %v4378 = vlaneseq
    %v4379 = vshrl.u32 %v4378, 7
    %v4380 = vsub.s32 0, %v4379
    %v4381 = vrot.slane %v4376, %v4380
    %v4383 = vpack.i.b16 %v4374, %v4374
    %v4385 = vlaneseq
    %v4386 = vshrl.u32 %v4385, 7
    %v4387 = vsub.s32 0, %v4386
    %v4388 = vrot.slane %v4383, %v4387
    %v4389 = vadd.bf16 %v4359, %v4381
    %v4390 = vadd.bf16 %v4360, %v4388
    %v4391 = vmax.bf16 %v4389, 0
    %v4392 = vmax.bf16 %v4390, 0
    %v4393 = vld [vmem:[#allocation14] sm:$0xf]
    %v4394 = vld [vmem:[#allocation14 + $0x4] sm:$0xf]
    %v4395 = vld [vmem:[#allocation14 + $0x8] sm:$0xf]
    %v4396 = vld [vmem:[#allocation14 + $0xc] sm:$0xf]
    %v4397 = vld [vmem:[#allocation14 + $0x10] sm:$0xf]
    %v4398 = vld [vmem:[#allocation14 + $0x14] sm:$0xf]
    %v4399 = vld [vmem:[#allocation14 + $0x18] sm:$0xf]
    %v4400 = vld [vmem:[#allocation14 + $0x1c] sm:$0xf]
    %v4401 = vld [vmem:[#allocation14 + $0x20] sm:$0xf]
    %v4402 = vld [vmem:[#allocation14 + $0x24] sm:$0xf]
    %v4403 = vld [vmem:[#allocation14 + $0x28] sm:$0xf]
    %v4404 = vld [vmem:[#allocation14 + $0x2c] sm:$0xf]
    %v4405 = vld [vmem:[#allocation14 + $0x30] sm:$0xf]
    %v4406 = vld [vmem:[#allocation14 + $0x34] sm:$0xf]
    %v4407 = vld [vmem:[#allocation14 + $0x38] sm:$0xf]
    %v4408 = vld [vmem:[#allocation14 + $0x3c] sm:$0xf]
    %v4409 = vld [vmem:[#allocation14 + $0x40] sm:$0xf]
    %v4410 = vld [vmem:[#allocation14 + $0x44] sm:$0xf]
    %v4411 = vld [vmem:[#allocation14 + $0x48] sm:$0xf]
    %v4412 = vld [vmem:[#allocation14 + $0x4c] sm:$0xf]
    %v4413 = vld [vmem:[#allocation14 + $0x50] sm:$0xf]
    %v4414 = vld [vmem:[#allocation14 + $0x54] sm:$0xf]
    %v4415 = vld [vmem:[#allocation14 + $0x58] sm:$0xf]
    %v4416 = vld [vmem:[#allocation14 + $0x5c] sm:$0xf]
    %v4417 = vld [vmem:[#allocation14 + $0x60] sm:$0xf]
    %v4418 = vld [vmem:[#allocation14 + $0x64] sm:$0xf]
    %v4419 = vld [vmem:[#allocation14 + $0x68] sm:$0xf]
    %v4420 = vld [vmem:[#allocation14 + $0x6c] sm:$0xf]
    %v4421 = vld [vmem:[#allocation14 + $0x70] sm:$0xf]
    %v4422 = vld [vmem:[#allocation14 + $0x74] sm:$0xf]
    %v4423 = vld [vmem:[#allocation14 + $0x78] sm:$0xf]
    %v4424 = vld [vmem:[#allocation14 + $0x7c] sm:$0xf]
    %v4457 = vunpack.c.l.b16 %v4393
    %v4458 = vunpack.c.l.b16 %v4394
    %v4459 = vunpack.c.l.b16 %v4395
    %v4460 = vunpack.c.l.b16 %v4396
    %v4461 = vunpack.c.l.b16 %v4397
    %v4462 = vunpack.c.l.b16 %v4398
    %v4463 = vunpack.c.l.b16 %v4399
    %v4464 = vunpack.c.l.b16 %v4400
    %v4465 = vunpack.c.l.b16 %v4401
    %v4466 = vunpack.c.l.b16 %v4402
    %v4467 = vunpack.c.l.b16 %v4403
    %v4468 = vunpack.c.l.b16 %v4404
    %v4469 = vunpack.c.l.b16 %v4405
    %v4470 = vunpack.c.l.b16 %v4406
    %v4471 = vunpack.c.l.b16 %v4407
    %v4472 = vunpack.c.l.b16 %v4408
    %v4473 = vunpack.c.l.b16 %v4409
    %v4474 = vunpack.c.l.b16 %v4410
    %v4475 = vunpack.c.l.b16 %v4411
    %v4476 = vunpack.c.l.b16 %v4412
    %v4477 = vunpack.c.l.b16 %v4413
    %v4478 = vunpack.c.l.b16 %v4414
    %v4479 = vunpack.c.l.b16 %v4415
    %v4480 = vunpack.c.l.b16 %v4416
    %v4481 = vunpack.c.l.b16 %v4417
    %v4482 = vunpack.c.l.b16 %v4418
    %v4483 = vunpack.c.l.b16 %v4419
    %v4484 = vunpack.c.l.b16 %v4420
    %v4485 = vunpack.c.l.b16 %v4421
    %v4486 = vunpack.c.l.b16 %v4422
    %v4487 = vunpack.c.l.b16 %v4423
    %v4488 = vunpack.c.l.b16 %v4424
    %v4489 = vpack.c.b16 %v4458, %v4457
    %v4490 = vpack.c.b16 %v4460, %v4459
    %v4491 = vpack.c.b16 %v4462, %v4461
    %v4492 = vpack.c.b16 %v4464, %v4463
    %v4493 = vpack.c.b16 %v4466, %v4465
    %v4494 = vpack.c.b16 %v4468, %v4467
    %v4495 = vpack.c.b16 %v4470, %v4469
    %v4496 = vpack.c.b16 %v4472, %v4471
    %v4497 = vpack.c.b16 %v4474, %v4473
    %v4498 = vpack.c.b16 %v4476, %v4475
    %v4499 = vpack.c.b16 %v4478, %v4477
    %v4500 = vpack.c.b16 %v4480, %v4479
    %v4501 = vpack.c.b16 %v4482, %v4481
    %v4502 = vpack.c.b16 %v4484, %v4483
    %v4503 = vpack.c.b16 %v4486, %v4485
    %v4504 = vpack.c.b16 %v4488, %v4487
    %4521 = vmatprep.subr.bf16.mxu0 0
    %4522 = vmatpush1.bf16.msra.mxu0 %v4496
    %4523 = vmatprep.subr.bf16.mxu0 0
    %4524 = vmatpush1.bf16.msra.mxu0 %v4495
    %4525 = vmatprep.subr.bf16.mxu0 0
    %4526 = vmatpush1.bf16.msra.mxu0 %v4494
    %4527 = vmatprep.subr.bf16.mxu0 0
    %4528 = vmatpush1.bf16.msra.mxu0 %v4493
    %4529 = vmatprep.subr.bf16.mxu0 0
    %4530 = vmatpush1.bf16.msra.mxu0 %v4492
    %4531 = vmatprep.subr.bf16.mxu0 0
    %4532 = vmatpush1.bf16.msra.mxu0 %v4491
    %4533 = vmatprep.subr.bf16.mxu0 0
    %4534 = vmatpush1.bf16.msra.mxu0 %v4490
    %4535 = vmatprep.subr.bf16.mxu0 0
    %4536 = vmatpush1.bf16.msra.mxu0 %v4489
    %4537 = vmatprep.subr.bf16.mxu0 0
    %4538 = vmatpush2.bf16.msra.mxu0 %v4504
    %4539 = vmatprep.subr.bf16.mxu0 0
    %4540 = vmatpush2.bf16.msra.mxu0 %v4503
    %4541 = vmatprep.subr.bf16.mxu0 0
    %4542 = vmatpush2.bf16.msra.mxu0 %v4502
    %4543 = vmatprep.subr.bf16.mxu0 0
    %4544 = vmatpush2.bf16.msra.mxu0 %v4501
    %4545 = vmatprep.subr.bf16.mxu0 0
    %4546 = vmatpush2.bf16.msra.mxu0 %v4500
    %4547 = vmatprep.subr.bf16.mxu0 0
    %4548 = vmatpush2.bf16.msra.mxu0 %v4499
    %4549 = vmatprep.subr.bf16.mxu0 0
    %4550 = vmatpush2.bf16.msra.mxu0 %v4498
    %4551 = vmatprep.subr.bf16.mxu0 0
    %4552 = vmatpush2.bf16.msra.mxu0 %v4497
    %4553 = vmatprep.mubr.bf16.mxu0 %v4392
    %4554 = vmatmul.mubr.bf16.gmra.mxu0 %v4391
    %v4555 = vpop.f32.mrf.mxu0
    %v4556 = vadd.f32 0.0, %v4555
    %v4557 = vpop.f32.mrf.mxu0
    %v4558 = vpop.f32.mrf.mxu0
    %v4559 = vadd.f32 0.0, %v4558
    %v4560 = vpop.f32.mrf.mxu0
    %4561 = vdwg.mxu0
    %v4562 = vpack.c.bf16 %v4559, %v4556
    %v4563 = vld [vmem:[#allocation16] sm:$0x1]
    %v4564 = vpack.c.bf16 %v4563, %v4563
    %v4566 = vpack.i.b16 %v4564, %v4564
    %v4568 = vlaneseq
    %v4569 = vshrl.u32 %v4568, 7
    %v4570 = vsub.s32 0, %v4569
    %v4571 = vrot.slane %v4566, %v4570
    %v4572 = vadd.bf16 %v4562, %v4571
    %v4573 = vmax.bf16 %v4572, 0
    %v4574 = vld [vmem:[#allocation17] sm:$0xf]
    %v4575 = vld [vmem:[#allocation17 + $0x4] sm:$0xf]
    %v4576 = vld [vmem:[#allocation17 + $0x8] sm:$0xf]
    %v4577 = vld [vmem:[#allocation17 + $0xc] sm:$0xf]
    %v4578 = vld [vmem:[#allocation17 + $0x10] sm:$0xf]
    %v4579 = vld [vmem:[#allocation17 + $0x14] sm:$0xf]
    %v4580 = vld [vmem:[#allocation17 + $0x18] sm:$0xf]
    %v4581 = vld [vmem:[#allocation17 + $0x1c] sm:$0xf]
    %v4582 = vld [vmem:[#allocation17 + $0x20] sm:$0xf]
    %v4583 = vld [vmem:[#allocation17 + $0x24] sm:$0xf]
    %v4584 = vld [vmem:[#allocation17 + $0x28] sm:$0xf]
    %v4585 = vld [vmem:[#allocation17 + $0x2c] sm:$0xf]
    %v4586 = vld [vmem:[#allocation17 + $0x30] sm:$0xf]
    %v4587 = vld [vmem:[#allocation17 + $0x34] sm:$0xf]
    %v4588 = vld [vmem:[#allocation17 + $0x38] sm:$0xf]
    %v4589 = vld [vmem:[#allocation17 + $0x3c] sm:$0xf]
    %v4590 = vld [vmem:[#allocation19] sm:$0x1]
    %v4592 = vlaneseq
    %v4593 = vshrl.u32 %v4592, 7
    %v4594 = vsub.s32 0, %v4593
    %v4595 = vrot.slane %v4590, %v4594
    %v4613 = vunpack.c.l.b16 %v4574
    %v4614 = vunpack.c.l.b16 %v4575
    %v4615 = vunpack.c.l.b16 %v4576
    %v4616 = vunpack.c.l.b16 %v4577
    %v4617 = vunpack.c.l.b16 %v4578
    %v4618 = vunpack.c.l.b16 %v4579
    %v4619 = vunpack.c.l.b16 %v4580
    %v4620 = vunpack.c.l.b16 %v4581
    %v4621 = vunpack.c.l.b16 %v4582
    %v4622 = vunpack.c.l.b16 %v4583
    %v4623 = vunpack.c.l.b16 %v4584
    %v4624 = vunpack.c.l.b16 %v4585
    %v4625 = vunpack.c.l.b16 %v4586
    %v4626 = vunpack.c.l.b16 %v4587
    %v4627 = vunpack.c.l.b16 %v4588
    %v4628 = vunpack.c.l.b16 %v4589
    %v4629 = vpack.c.b16 %v4614, %v4613
    %v4630 = vpack.c.b16 %v4616, %v4615
    %v4631 = vpack.c.b16 %v4618, %v4617
    %v4632 = vpack.c.b16 %v4620, %v4619
    %v4633 = vpack.c.b16 %v4622, %v4621
    %v4634 = vpack.c.b16 %v4624, %v4623
    %v4635 = vpack.c.b16 %v4626, %v4625
    %v4636 = vpack.c.b16 %v4628, %v4627
    %4645 = vmatprep.subr.bf16.mxu0 0
    %4646 = vmatpush1.bf16.msra.mxu0 %v4636
    %4647 = vmatprep.subr.bf16.mxu0 0
    %4648 = vmatpush1.bf16.msra.mxu0 %v4635
    %4649 = vmatprep.subr.bf16.mxu0 0
    %4650 = vmatpush1.bf16.msra.mxu0 %v4634
    %4651 = vmatprep.subr.bf16.mxu0 0
    %4652 = vmatpush1.bf16.msra.mxu0 %v4633
    %4653 = vmatprep.subr.bf16.mxu0 0
    %4654 = vmatpush1.bf16.msra.mxu0 %v4632
    %4655 = vmatprep.subr.bf16.mxu0 0
    %4656 = vmatpush1.bf16.msra.mxu0 %v4631
    %4657 = vmatprep.subr.bf16.mxu0 0
    %4658 = vmatpush1.bf16.msra.mxu0 %v4630
    %4659 = vmatprep.subr.bf16.mxu0 0
    %4660 = vmatpush1.bf16.msra.mxu0 %v4629
    %4661 = vmatprep.subr.bf16.mxu0 0
    %4662 = vmatpush2.bf16.msra.mxu0 0
    %4663 = vmatprep.subr.bf16.mxu0 0
    %4664 = vmatpush2.bf16.msra.mxu0 0
    %4665 = vmatprep.subr.bf16.mxu0 0
    %4666 = vmatpush2.bf16.msra.mxu0 0
    %4667 = vmatprep.subr.bf16.mxu0 0
    %4668 = vmatpush2.bf16.msra.mxu0 0
    %4669 = vmatprep.subr.bf16.mxu0 0
    %4670 = vmatpush2.bf16.msra.mxu0 0
    %4671 = vmatprep.subr.bf16.mxu0 0
    %4672 = vmatpush2.bf16.msra.mxu0 0
    %4673 = vmatprep.subr.bf16.mxu0 0
    %4674 = vmatpush2.bf16.msra.mxu0 0
    %4675 = vmatprep.subr.bf16.mxu0 0
    %4676 = vmatpush2.bf16.msra.mxu0 0
    %4677 = vmatprep.mubr.bf16.mxu0 0
    %4678 = vmatmul.mubr.bf16.gmra.mxu0 %v4573
    %v4679 = vpop.f32.mrf.mxu0
    %v4680 = vadd.f32 %v4595, %v4679
    %v4681 = vpop.f32.mrf.mxu0
    %v4682 = vpop.f32.mrf.mxu0
    %v4683 = vadd.f32 %v4595, %v4682
    %v4684 = vpop.f32.mrf.mxu0
    %4685 = vdwg.mxu0
    %4686 = vst [vmem:[#allocation20] sm:$0xff] %v4680
    %4687 = vst [vmem:[#allocation20 + $0x8] sm:$0xff] %v4683
    // Predicated region
    $region90: #{tpu_custom_call.1} parent=1 // pred_check
      _
    $region91: #{tpu_custom_call.1} parent=1 // pred_check_branch
      %4689 = sbr.rel (0) target = $region93
    $region92: #{tpu_custom_call.1} parent=1 // pred_region
      %s4691 = ssub.s32 256, 256
      %4692 = vsyncadd [#allocation4], %s4691
      %s4693 = sshll.u32 [#allocation20], 4
      %s4694 = int_to_ptr.vmem [resolvable:$true] %s4693
      %4699 = dma.vmem_to_hbm [thread:$0]  %s4694, 256, %s11, [#allocation4], 128, 128, 8
    $region93: #{tpu_custom_call.1} parent=1 // pred_fallthru
      _
    // Predicated region
    $region94: #{tpu_custom_call.1} parent=1 // pred_check
      _
    $region95: #{tpu_custom_call.1} parent=1 // pred_check_branch
      %4701 = sbr.rel (0) target = $region97
    $region96: #{tpu_custom_call.1} parent=1 // pred_region
      %4702 = dma.done [#allocation4], 256
    $region97: #{tpu_custom_call.1} parent=1 // pred_fallthru
      _
    %4703 = vsyncpa [#allocation3], 1
    %4704 = vsyncpa [#allocation6], 1
    %4705 = vsyncpa [#allocation9], 1
    %4706 = vsyncpa [#allocation12], 1
    %4707 = vsyncpa [#allocation15], 1
    %4708 = vsyncpa [#allocation18], 1
    %4709 = vsyncpa [#allocation4], 1

// kernel: tpu_custom_call.1
$region0: #{tpu_custom_call.1}
  #allocation0 [shape = 'u32[]', space=smem, size = 0x4, offset = 0x4, fixed_abs, tag = 'smem constant byte address 0x4 - core index']
  #allocation1 [shape = 'u32[144,128]{1,0:T(1,128)}', space=vmem, size = 0x12000, scoped, tag = 'internal scratch']
  %s0 = inlined_call_operand.hbm [shape: bf16[16,896], index: 0, kind: input, shape index: {}]
  %s1 = inlined_call_operand.hbm [shape: bf16[896,640], index: 1, kind: input, shape index: {}]
  %s2 = inlined_call_operand.hbm [shape: f32[1,640], index: 2, kind: input, shape index: {}]
  %s3 = inlined_call_operand.hbm [shape: bf16[640,512], index: 3, kind: input, shape index: {}]
  %s4 = inlined_call_operand.hbm [shape: f32[1,512], index: 4, kind: input, shape index: {}]
  %s5 = inlined_call_operand.hbm [shape: bf16[512,256], index: 5, kind: input, shape index: {}]
  %s6 = inlined_call_operand.hbm [shape: f32[1,256], index: 6, kind: input, shape index: {}]
  %s7 = inlined_call_operand.hbm [shape: bf16[256,128], index: 7, kind: input, shape index: {}]
  %s8 = inlined_call_operand.hbm [shape: f32[1,128], index: 8, kind: input, shape index: {}]
  %s9 = inlined_call_operand.hbm [shape: bf16[128,128], index: 9, kind: input, shape index: {}]
  %s10 = inlined_call_operand.hbm [shape: f32[1,128], index: 10, kind: input, shape index: {}]
  %s11 = inlined_call_operand.hbm [shape: f32[16,128], index: 11, kind: output, shape index: {}]
  %s12 = sld [smem:[#allocation0]]
  $region98: #{tpu_custom_call.1} parent=0
    _
  %s14 = ssub.s32 1, %s12
  %s15 = scalar_select 0, %s14, %s12
  $region1: #{tpu_custom_call.1} parent=0
    #allocation2 [shape = 'u8[28672]{0}', space=vmem, size = 0x7000, scoped, tag = 'input window, operand 0, single buffered']
    #allocation3 [shape = 's32[1]{0}', space=sflag, size = 0x4, scoped, tag = 'scoped memory for tpu_custom_call.1']
    #allocation4 [shape = 's32[1]{0}', space=sflag, size = 0x4, scoped, tag = 'scoped memory for tpu_custom_call.1']
    #allocation5 [shape = 'u8[1146880]{0}', space=vmem, size = 0x118000, scoped, tag = 'input window, operand 1, single buffered']
    #allocation6 [shape = 's32[1]{0}', space=sflag, size = 0x4, scoped, tag = 'scoped memory for tpu_custom_call.1']
    #allocation7 [shape = 'u8[2560]{0}', space=vmem, size = 0xc00, scoped, tag = 'input window, operand 2, single buffered']
    #allocation8 [shape = 'u8[655360]{0}', space=vmem, size = 0xa0000, scoped, tag = 'input window, operand 3, single buffered']
    #allocation9 [shape = 's32[1]{0}', space=sflag, size = 0x4, scoped, tag = 'scoped memory for tpu_custom_call.1']
    #allocation10 [shape = 'u8[2048]{0}', space=vmem, size = 0x800, scoped, tag = 'input window, operand 4, single buffered']
    #allocation11 [shape = 'u8[262144]{0}', space=vmem, size = 0x40000, scoped, tag = 'input window, operand 5, single buffered']
    #allocation12 [shape = 's32[1]{0}', space=sflag, size = 0x4, scoped, tag = 'scoped memory for tpu_custom_call.1']
    #allocation13 [shape = 'u8[1024]{0}', space=vmem, size = 0x400, scoped, tag = 'input window, operand 6, single buffered']
    #allocation14 [shape = 'u8[65536]{0}', space=vmem, size = 0x10000, scoped, tag = 'input window, operand 7, single buffered']
    #allocation15 [shape = 's32[1]{0}', space=sflag, size = 0x4, scoped, tag = 'scoped memory for tpu_custom_call.1']
    #allocation16 [shape = 'u8[512]{0}', space=vmem, size = 0x400, scoped, tag = 'input window, operand 8, single buffered']
    #allocation17 [shape = 'u8[32768]{0}', space=vmem, size = 0x8000, scoped, tag = 'input window, operand 9, single buffered']
    #allocation18 [shape = 's32[1]{0}', space=sflag, size = 0x4, scoped, tag = 'scoped memory for tpu_custom_call.1']
    #allocation19 [shape = 'u8[512]{0}', space=vmem, size = 0x400, scoped, tag = 'input window, operand 10, single buffered']
    #allocation20 [shape = 'u8[8192]{0}', space=vmem, size = 0x2000, scoped, tag = 'output window, operand 0, single buffered']
    %16 = vsyncpa [#allocation3], 0
    %17 = vsyncpa [#allocation6], 0
    %18 = vsyncpa [#allocation9], 0
    %19 = vsyncpa [#allocation12], 0
    %20 = vsyncpa [#allocation15], 0
    %21 = vsyncpa [#allocation18], 0
    %22 = vsyncpa [#allocation4], 0
    // Predicated region
    $region2: #{tpu_custom_call.1} parent=1 // pred_check
      _
    $region3: #{tpu_custom_call.1} parent=1 // pred_check_branch
      %24 = sbr.rel (0) target = $region5
    $region4: #{tpu_custom_call.1} parent=1 // pred_region
      %s26 = ssub.s32 896, 896
      %27 = vsyncadd [#allocation3], %s26
      %s28 = sshll.u32 [#allocation2], 4
      %s29 = int_to_ptr.vmem [resolvable:$true] %s28
      %34 = dma.hbm_to_vmem [thread:$0]  %s0, 896, %s29, [#allocation3], 448, 448, 28
    $region5: #{tpu_custom_call.1} parent=1 // pred_fallthru
      _
    // Predicated region
    $region6: #{tpu_custom_call.1} parent=1 // pred_check
      _
    $region7: #{tpu_custom_call.1} parent=1 // pred_check_branch
      %36 = sbr.rel (0) target = $region9
    $region8: #{tpu_custom_call.1} parent=1 // pred_region
      %s38 = ssub.s32 35840, 35840
      %39 = vsyncadd [#allocation6], %s38
      %s40 = sshll.u32 [#allocation5], 4
      %s41 = int_to_ptr.vmem [resolvable:$true] %s40
      %46 = dma.hbm_to_vmem [thread:$0]  %s1, 35840, %s41, [#allocation6], 320, 320, 20
    $region9: #{tpu_custom_call.1} parent=1 // pred_fallthru
      _
    // Predicated region
    $region10: #{tpu_custom_call.1} parent=1 // pred_check
      _
    $region11: #{tpu_custom_call.1} parent=1 // pred_check_branch
      %48 = sbr.rel (0) target = $region13
    $region12: #{tpu_custom_call.1} parent=1 // pred_region
      %s50 = ssub.s32 80, 80
      %51 = vsyncadd [#allocation6], %s50
      %s53 = sshll.u32 [#allocation7], 4
      %s54 = int_to_ptr.vmem [resolvable:$true] %s53
      %56 = dma.hbm_to_vmem [thread:$0]  %s2, 80, %s54, [#allocation6]
    $region13: #{tpu_custom_call.1} parent=1 // pred_fallthru
      _
    // Predicated region
    $region14: #{tpu_custom_call.1} parent=1 // pred_check
      _
    $region15: #{tpu_custom_call.1} parent=1 // pred_check_branch
      %58 = sbr.rel (0) target = $region17
    $region16: #{tpu_custom_call.1} parent=1 // pred_region
      %s60 = ssub.s32 20480, 20480
      %61 = vsyncadd [#allocation9], %s60
      %s62 = sshll.u32 [#allocation8], 4
      %s63 = int_to_ptr.vmem [resolvable:$true] %s62
      %68 = dma.hbm_to_vmem [thread:$0]  %s3, 20480, %s63, [#allocation9], 256, 256, 16
    $region17: #{tpu_custom_call.1} parent=1 // pred_fallthru
      _
    // Predicated region
    $region18: #{tpu_custom_call.1} parent=1 // pred_check
      _
    $region19: #{tpu_custom_call.1} parent=1 // pred_check_branch
      %70 = sbr.rel (0) target = $region21
    $region20: #{tpu_custom_call.1} parent=1 // pred_region
      %s72 = ssub.s32 64, 64
      %73 = vsyncadd [#allocation9], %s72
      %s75 = sshll.u32 [#allocation10], 4
      %s76 = int_to_ptr.vmem [resolvable:$true] %s75
      %78 = dma.hbm_to_vmem [thread:$0]  %s4, 64, %s76, [#allocation9]
    $region21: #{tpu_custom_call.1} parent=1 // pred_fallthru
      _
    // Predicated region
    $region22: #{tpu_custom_call.1} parent=1 // pred_check
      _
    $region23: #{tpu_custom_call.1} parent=1 // pred_check_branch
      %80 = sbr.rel (0) target = $region25
    $region24: #{tpu_custom_call.1} parent=1 // pred_region
      %s82 = ssub.s32 8192, 8192
      %83 = vsyncadd [#allocation12], %s82
      %s84 = sshll.u32 [#allocation11], 4
      %s85 = int_to_ptr.vmem [resolvable:$true] %s84
      %90 = dma.hbm_to_vmem [thread:$0]  %s5, 8192, %s85, [#allocation12], 128, 128, 8
    $region25: #{tpu_custom_call.1} parent=1 // pred_fallthru
      _
    // Predicated region
    $region26: #{tpu_custom_call.1} parent=1 // pred_check
      _
    $region27: #{tpu_custom_call.1} parent=1 // pred_check_branch
      %92 = sbr.rel (0) target = $region29
    $region28: #{tpu_custom_call.1} parent=1 // pred_region
      %s94 = ssub.s32 32, 32
      %95 = vsyncadd [#allocation12], %s94
      %s97 = sshll.u32 [#allocation13], 4
      %s98 = int_to_ptr.vmem [resolvable:$true] %s97
      %100 = dma.hbm_to_vmem [thread:$0]  %s6, 32, %s98, [#allocation12]
    $region29: #{tpu_custom_call.1} parent=1 // pred_fallthru
      _
    // Predicated region
    $region30: #{tpu_custom_call.1} parent=1 // pred_check
      _
    $region31: #{tpu_custom_call.1} parent=1 // pred_check_branch
      %102 = sbr.rel (0) target = $region33
    $region32: #{tpu_custom_call.1} parent=1 // pred_region
      %s104 = ssub.s32 2048, 2048
      %105 = vsyncadd [#allocation15], %s104
      %s106 = sshll.u32 [#allocation14], 4
      %s107 = int_to_ptr.vmem [resolvable:$true] %s106
      %112 = dma.hbm_to_vmem [thread:$0]  %s7, 2048, %s107, [#allocation15], 64, 64, 4
    $region33: #{tpu_custom_call.1} parent=1 // pred_fallthru
      _
    // Predicated region
    $region34: #{tpu_custom_call.1} parent=1 // pred_check
      _
    $region35: #{tpu_custom_call.1} parent=1 // pred_check_branch
      %114 = sbr.rel (0) target = $region37
    $region36: #{tpu_custom_call.1} parent=1 // pred_region
      %s116 = ssub.s32 16, 16
      %117 = vsyncadd [#allocation15], %s116
      %s119 = sshll.u32 [#allocation16], 4
      %s120 = int_to_ptr.vmem [resolvable:$true] %s119
      %122 = dma.hbm_to_vmem [thread:$0]  %s8, 16, %s120, [#allocation15]
    $region37: #{tpu_custom_call.1} parent=1 // pred_fallthru
      _
    // Predicated region
    $region38: #{tpu_custom_call.1} parent=1 // pred_check
      _
    $region39: #{tpu_custom_call.1} parent=1 // pred_check_branch
      %124 = sbr.rel (0) target = $region41
    $region40: #{tpu_custom_call.1} parent=1 // pred_region
      %s126 = ssub.s32 1024, 1024
      %127 = vsyncadd [#allocation18], %s126
      %s128 = sshll.u32 [#allocation17], 4
      %s129 = int_to_ptr.vmem [resolvable:$true] %s128
      %134 = dma.hbm_to_vmem [thread:$0]  %s9, 1024, %s129, [#allocation18], 64, 64, 4
    $region41: #{tpu_custom_call.1} parent=1 // pred_fallthru
      _
    // Predicated region
    $region42: #{tpu_custom_call.1} parent=1 // pred_check
      _
    $region43: #{tpu_custom_call.1} parent=1 // pred_check_branch
      %136 = sbr.rel (0) target = $region45
    $region44: #{tpu_custom_call.1} parent=1 // pred_region
      %s138 = ssub.s32 16, 16
      %139 = vsyncadd [#allocation18], %s138
      %s141 = sshll.u32 [#allocation19], 4
      %s142 = int_to_ptr.vmem [resolvable:$true] %s141
      %144 = dma.hbm_to_vmem [thread:$0]  %s10, 16, %s142, [#allocation18]
    $region45: #{tpu_custom_call.1} parent=1 // pred_fallthru
      _
    // Predicated region
    $region46: #{tpu_custom_call.1} parent=1 // pred_check
      _
    $region47: #{tpu_custom_call.1} parent=1 // pred_check_branch
      %146 = sbr.rel (0) target = $region49
    $region48: #{tpu_custom_call.1} parent=1 // pred_region
      %147 = dma.done [#allocation3], 896
    $region49: #{tpu_custom_call.1} parent=1 // pred_fallthru
      _
    // Predicated region
    $region50: #{tpu_custom_call.1} parent=1 // pred_check
      _
    $region51: #{tpu_custom_call.1} parent=1 // pred_check_branch
      %149 = sbr.rel (0) target = $region53
    $region52: #{tpu_custom_call.1} parent=1 // pred_region
      %150 = dma.done [#allocation6], 35840
    $region53: #{tpu_custom_call.1} parent=1 // pred_fallthru
      _
    // Predicated region
    $region54: #{tpu_custom_call.1} parent=1 // pred_check
      _
    $region55: #{tpu_custom_call.1} parent=1 // pred_check_branch
      %152 = sbr.rel (0) target = $region57
    $region56: #{tpu_custom_call.1} parent=1 // pred_region
      %153 = dma.done [#allocation6], 80
    $region57: #{tpu_custom_call.1} parent=1 // pred_fallthru
      _
    // Predicated region
    $region58: #{tpu_custom_call.1} parent=1 // pred_check
      _
    $region59: #{tpu_custom_call.1} parent=1 // pred_check_branch
      %155 = sbr.rel (0) target = $region61
    $region60: #{tpu_custom_call.1} parent=1 // pred_region
      %156 = dma.done [#allocation9], 20480
    $region61: #{tpu_custom_call.1} parent=1 // pred_fallthru
      _
    // Predicated region
    $region62: #{tpu_custom_call.1} parent=1 // pred_check
      _
    $region63: #{tpu_custom_call.1} parent=1 // pred_check_branch
      %158 = sbr.rel (0) target = $region65
    $region64: #{tpu_custom_call.1} parent=1 // pred_region
      %159 = dma.done [#allocation9], 64
    $region65: #{tpu_custom_call.1} parent=1 // pred_fallthru
      _
    // Predicated region
    $region66: #{tpu_custom_call.1} parent=1 // pred_check
      _
    $region67: #{tpu_custom_call.1} parent=1 // pred_check_branch
      %161 = sbr.rel (0) target = $region69
    $region68: #{tpu_custom_call.1} parent=1 // pred_region
      %162 = dma.done [#allocation12], 8192
    $region69: #{tpu_custom_call.1} parent=1 // pred_fallthru
      _
    // Predicated region
    $region70: #{tpu_custom_call.1} parent=1 // pred_check
      _
    $region71: #{tpu_custom_call.1} parent=1 // pred_check_branch
      %164 = sbr.rel (0) target = $region73
    $region72: #{tpu_custom_call.1} parent=1 // pred_region
      %165 = dma.done [#allocation12], 32
    $region73: #{tpu_custom_call.1} parent=1 // pred_fallthru
      _
    // Predicated region
    $region74: #{tpu_custom_call.1} parent=1 // pred_check
      _
    $region75: #{tpu_custom_call.1} parent=1 // pred_check_branch
      %167 = sbr.rel (0) target = $region77
    $region76: #{tpu_custom_call.1} parent=1 // pred_region
      %168 = dma.done [#allocation15], 2048
    $region77: #{tpu_custom_call.1} parent=1 // pred_fallthru
      _
    // Predicated region
    $region78: #{tpu_custom_call.1} parent=1 // pred_check
      _
    $region79: #{tpu_custom_call.1} parent=1 // pred_check_branch
      %170 = sbr.rel (0) target = $region81
    $region80: #{tpu_custom_call.1} parent=1 // pred_region
      %171 = dma.done [#allocation15], 16
    $region81: #{tpu_custom_call.1} parent=1 // pred_fallthru
      _
    // Predicated region
    $region82: #{tpu_custom_call.1} parent=1 // pred_check
      _
    $region83: #{tpu_custom_call.1} parent=1 // pred_check_branch
      %173 = sbr.rel (0) target = $region85
    $region84: #{tpu_custom_call.1} parent=1 // pred_region
      %174 = dma.done [#allocation18], 1024
    $region85: #{tpu_custom_call.1} parent=1 // pred_fallthru
      _
    // Predicated region
    $region86: #{tpu_custom_call.1} parent=1 // pred_check
      _
    $region87: #{tpu_custom_call.1} parent=1 // pred_check_branch
      %176 = sbr.rel (0) target = $region89
    $region88: #{tpu_custom_call.1} parent=1 // pred_region
      %177 = dma.done [#allocation18], 16
    $region89: #{tpu_custom_call.1} parent=1 // pred_fallthru
      _
    %v179 = vld [vmem:[#allocation2] sm:$0xff]
    %v180 = vld [vmem:[#allocation2 + $0x8] sm:$0xff]
    %v181 = vld [vmem:[#allocation2 + $0x10] sm:$0xff]
    %v182 = vld [vmem:[#allocation2 + $0x18] sm:$0xf]
    %v183 = vld [vmem:[#allocation2 + $0x1c] sm:$0xff]
    %v184 = vld [vmem:[#allocation2 + $0x24] sm:$0xff]
    %v185 = vld [vmem:[#allocation2 + $0x2c] sm:$0xff]
    %v186 = vld [vmem:[#allocation2 + $0x34] sm:$0xf]
    %v187 = vld [vmem:[#allocation5] sm:$0xff]
    %v188 = vld [vmem:[#allocation5 + $0x8] sm:$0xff]
    %v189 = vld [vmem:[#allocation5 + $0x10] sm:$0xf]
    %v190 = vld [vmem:[#allocation5 + $0x14] sm:$0xff]
    %v191 = vld [vmem:[#allocation5 + $0x1c] sm:$0xff]
    %v192 = vld [vmem:[#allocation5 + $0x24] sm:$0xf]
    %v193 = vld [vmem:[#allocation5 + $0x28] sm:$0xff]
    %v194 = vld [vmem:[#allocation5 + $0x30] sm:$0xff]
    %v195 = vld [vmem:[#allocation5 + $0x38] sm:$0xf]
    %v196 = vld [vmem:[#allocation5 + $0x3c] sm:$0xff]
    %v197 = vld [vmem:[#allocation5 + $0x44] sm:$0xff]
    %v198 = vld [vmem:[#allocation5 + $0x4c] sm:$0xf]
    %v199 = vld [vmem:[#allocation5 + $0x50] sm:$0xff]
    %v200 = vld [vmem:[#allocation5 + $0x58] sm:$0xff]
    %v201 = vld [vmem:[#allocation5 + $0x60] sm:$0xf]
    %v202 = vld [vmem:[#allocation5 + $0x64] sm:$0xff]
    %v203 = vld [vmem:[#allocation5 + $0x6c] sm:$0xff]
    %v204 = vld [vmem:[#allocation5 + $0x74] sm:$0xf]
    %v205 = vld [vmem:[#allocation5 + $0x78] sm:$0xff]
    %v206 = vld [vmem:[#allocation5 + $0x80] sm:$0xff]
    %v207 = vld [vmem:[#allocation5 + $0x88] sm:$0xf]
    %v208 = vld [vmem:[#allocation5 + $0x8c] sm:$0xff]
    %v209 = vld [vmem:[#allocation5 + $0x94] sm:$0xff]
    %v210 = vld [vmem:[#allocation5 + $0x9c] sm:$0xf]
    %v211 = vld [vmem:[#allocation5 + $0xa0] sm:$0xff]
    %v212 = vld [vmem:[#allocation5 + $0xa8] sm:$0xff]
    %v213 = vld [vmem:[#allocation5 + $0xb0] sm:$0xf]
    %v214 = vld [vmem:[#allocation5 + $0xb4] sm:$0xff]
    %v215 = vld [vmem:[#allocation5 + $0xbc] sm:$0xff]
    %v216 = vld [vmem:[#allocation5 + $0xc4] sm:$0xf]
    %v217 = vld [vmem:[#allocation5 + $0xc8] sm:$0xff]
    %v218 = vld [vmem:[#allocation5 + $0xd0] sm:$0xff]
    %v219 = vld [vmem:[#allocation5 + $0xd8] sm:$0xf]
    %v220 = vld [vmem:[#allocation5 + $0xdc] sm:$0xff]
    %v221 = vld [vmem:[#allocation5 + $0xe4] sm:$0xff]
    %v222 = vld [vmem:[#allocation5 + $0xec] sm:$0xf]
    %v223 = vld [vmem:[#allocation5 + $0xf0] sm:$0xff]
    %v224 = vld [vmem:[#allocation5 + $0xf8] sm:$0xff]
    %v225 = vld [vmem:[#allocation5 + $0x100] sm:$0xf]
    %v226 = vld [vmem:[#allocation5 + $0x104] sm:$0xff]
    %v227 = vld [vmem:[#allocation5 + $0x10c] sm:$0xff]
    %v228 = vld [vmem:[#allocation5 + $0x114] sm:$0xf]
    %v229 = vld [vmem:[#allocation5 + $0x118] sm:$0xff]
    %v230 = vld [vmem:[#allocation5 + $0x120] sm:$0xff]
    %v231 = vld [vmem:[#allocation5 + $0x128] sm:$0xf]
    %v232 = vld [vmem:[#allocation5 + $0x12c] sm:$0xff]
    %v233 = vld [vmem:[#allocation5 + $0x134] sm:$0xff]
    %v234 = vld [vmem:[#allocation5 + $0x13c] sm:$0xf]
    %v235 = vld [vmem:[#allocation5 + $0x140] sm:$0xff]
    %v236 = vld [vmem:[#allocation5 + $0x148] sm:$0xff]
    %v237 = vld [vmem:[#allocation5 + $0x150] sm:$0xf]
    %v238 = vld [vmem:[#allocation5 + $0x154] sm:$0xff]
    %v239 = vld [vmem:[#allocation5 + $0x15c] sm:$0xff]
    %v240 = vld [vmem:[#allocation5 + $0x164] sm:$0xf]
    %v241 = vld [vmem:[#allocation5 + $0x168] sm:$0xff]
    %v242 = vld [vmem:[#allocation5 + $0x170] sm:$0xff]
    %v243 = vld [vmem:[#allocation5 + $0x178] sm:$0xf]
    %v244 = vld [vmem:[#allocation5 + $0x17c] sm:$0xff]
    %v245 = vld [vmem:[#allocation5 + $0x184] sm:$0xff]
    %v246 = vld [vmem:[#allocation5 + $0x18c] sm:$0xf]
    %v247 = vld [vmem:[#allocation5 + $0x190] sm:$0xff]
    %v248 = vld [vmem:[#allocation5 + $0x198] sm:$0xff]
    %v249 = vld [vmem:[#allocation5 + $0x1a0] sm:$0xf]
    %v250 = vld [vmem:[#allocation5 + $0x1a4] sm:$0xff]
    %v251 = vld [vmem:[#allocation5 + $0x1ac] sm:$0xff]
    %v252 = vld [vmem:[#allocation5 + $0x1b4] sm:$0xf]
    %v253 = vld [vmem:[#allocation5 + $0x1b8] sm:$0xff]
    %v254 = vld [vmem:[#allocation5 + $0x1c0] sm:$0xff]
    %v255 = vld [vmem:[#allocation5 + $0x1c8] sm:$0xf]
    %v256 = vld [vmem:[#allocation5 + $0x1cc] sm:$0xff]
    %v257 = vld [vmem:[#allocation5 + $0x1d4] sm:$0xff]
    %v258 = vld [vmem:[#allocation5 + $0x1dc] sm:$0xf]
    %v259 = vld [vmem:[#allocation5 + $0x1e0] sm:$0xff]
    %v260 = vld [vmem:[#allocation5 + $0x1e8] sm:$0xff]
    %v261 = vld [vmem:[#allocation5 + $0x1f0] sm:$0xf]
    %v262 = vld [vmem:[#allocation5 + $0x1f4] sm:$0xff]
    %v263 = vld [vmem:[#allocation5 + $0x1fc] sm:$0xff]
    %v264 = vld [vmem:[#allocation5 + $0x204] sm:$0xf]
    %v265 = vld [vmem:[#allocation5 + $0x208] sm:$0xff]
    %v266 = vld [vmem:[#allocation5 + $0x210] sm:$0xff]
    %v267 = vld [vmem:[#allocation5 + $0x218] sm:$0xf]
    %v268 = vld [vmem:[#allocation5 + $0x21c] sm:$0xff]
    %v269 = vld [vmem:[#allocation5 + $0x224] sm:$0xff]
    %v270 = vld [vmem:[#allocation5 + $0x22c] sm:$0xf]
    %v271 = vld [vmem:[#allocation5 + $0x230] sm:$0xff]
    %v272 = vld [vmem:[#allocation5 + $0x238] sm:$0xff]
    %v273 = vld [vmem:[#allocation5 + $0x240] sm:$0xf]
    %v274 = vld [vmem:[#allocation5 + $0x244] sm:$0xff]
    %v275 = vld [vmem:[#allocation5 + $0x24c] sm:$0xff]
    %v276 = vld [vmem:[#allocation5 + $0x254] sm:$0xf]
    %v277 = vld [vmem:[#allocation5 + $0x258] sm:$0xff]
    %v278 = vld [vmem:[#allocation5 + $0x260] sm:$0xff]
    %v279 = vld [vmem:[#allocation5 + $0x268] sm:$0xf]
    %v280 = vld [vmem:[#allocation5 + $0x26c] sm:$0xff]
    %v281 = vld [vmem:[#allocation5 + $0x274] sm:$0xff]
    %v282 = vld [vmem:[#allocation5 + $0x27c] sm:$0xf]
    %v283 = vld [vmem:[#allocation5 + $0x280] sm:$0xff]
    %v284 = vld [vmem:[#allocation5 + $0x288] sm:$0xff]
    %v285 = vld [vmem:[#allocation5 + $0x290] sm:$0xf]
    %v286 = vld [vmem:[#allocation5 + $0x294] sm:$0xff]
    %v287 = vld [vmem:[#allocation5 + $0x29c] sm:$0xff]
    %v288 = vld [vmem:[#allocation5 + $0x2a4] sm:$0xf]
    %v289 = vld [vmem:[#allocation5 + $0x2a8] sm:$0xff]
    %v290 = vld [vmem:[#allocation5 + $0x2b0] sm:$0xff]
    %v291 = vld [vmem:[#allocation5 + $0x2b8] sm:$0xf]
    %v292 = vld [vmem:[#allocation5 + $0x2bc] sm:$0xff]
    %v293 = vld [vmem:[#allocation5 + $0x2c4] sm:$0xff]
    %v294 = vld [vmem:[#allocation5 + $0x2cc] sm:$0xf]
    %v295 = vld [vmem:[#allocation5 + $0x2d0] sm:$0xff]
    %v296 = vld [vmem:[#allocation5 + $0x2d8] sm:$0xff]
    %v297 = vld [vmem:[#allocation5 + $0x2e0] sm:$0xf]
    %v298 = vld [vmem:[#allocation5 + $0x2e4] sm:$0xff]
    %v299 = vld [vmem:[#allocation5 + $0x2ec] sm:$0xff]
    %v300 = vld [vmem:[#allocation5 + $0x2f4] sm:$0xf]
    %v301 = vld [vmem:[#allocation5 + $0x2f8] sm:$0xff]
    %v302 = vld [vmem:[#allocation5 + $0x300] sm:$0xff]
    %v303 = vld [vmem:[#allocation5 + $0x308] sm:$0xf]
    %v304 = vld [vmem:[#allocation5 + $0x30c] sm:$0xff]
    %v305 = vld [vmem:[#allocation5 + $0x314] sm:$0xff]
    %v306 = vld [vmem:[#allocation5 + $0x31c] sm:$0xf]
    %v307 = vld [vmem:[#allocation5 + $0x320] sm:$0xff]
    %v308 = vld [vmem:[#allocation5 + $0x328] sm:$0xff]
    %v309 = vld [vmem:[#allocation5 + $0x330] sm:$0xf]
    %v310 = vld [vmem:[#allocation5 + $0x334] sm:$0xff]
    %v311 = vld [vmem:[#allocation5 + $0x33c] sm:$0xff]
    %v312 = vld [vmem:[#allocation5 + $0x344] sm:$0xf]
    %v313 = vld [vmem:[#allocation5 + $0x348] sm:$0xff]
    %v314 = vld [vmem:[#allocation5 + $0x350] sm:$0xff]
    %v315 = vld [vmem:[#allocation5 + $0x358] sm:$0xf]
    %v316 = vld [vmem:[#allocation5 + $0x35c] sm:$0xff]
    %v317 = vld [vmem:[#allocation5 + $0x364] sm:$0xff]
    %v318 = vld [vmem:[#allocation5 + $0x36c] sm:$0xf]
    %v319 = vld [vmem:[#allocation5 + $0x370] sm:$0xff]
    %v320 = vld [vmem:[#allocation5 + $0x378] sm:$0xff]
    %v321 = vld [vmem:[#allocation5 + $0x380] sm:$0xf]
    %v322 = vld [vmem:[#allocation5 + $0x384] sm:$0xff]
    %v323 = vld [vmem:[#allocation5 + $0x38c] sm:$0xff]
    %v324 = vld [vmem:[#allocation5 + $0x394] sm:$0xf]
    %v325 = vld [vmem:[#allocation5 + $0x398] sm:$0xff]
    %v326 = vld [vmem:[#allocation5 + $0x3a0] sm:$0xff]
    %v327 = vld [vmem:[#allocation5 + $0x3a8] sm:$0xf]
    %v328 = vld [vmem:[#allocation5 + $0x3ac] sm:$0xff]
    %v329 = vld [vmem:[#allocation5 + $0x3b4] sm:$0xff]
    %v330 = vld [vmem:[#allocation5 + $0x3bc] sm:$0xf]
    %v331 = vld [vmem:[#allocation5 + $0x3c0] sm:$0xff]
    %v332 = vld [vmem:[#allocation5 + $0x3c8] sm:$0xff]
    %v333 = vld [vmem:[#allocation5 + $0x3d0] sm:$0xf]
    %v334 = vld [vmem:[#allocation5 + $0x3d4] sm:$0xff]
    %v335 = vld [vmem:[#allocation5 + $0x3dc] sm:$0xff]
    %v336 = vld [vmem:[#allocation5 + $0x3e4] sm:$0xf]
    %v337 = vld [vmem:[#allocation5 + $0x3e8] sm:$0xff]
    %v338 = vld [vmem:[#allocation5 + $0x3f0] sm:$0xff]
    %v339 = vld [vmem:[#allocation5 + $0x3f8] sm:$0xf]
    %v340 = vld [vmem:[#allocation5 + $0x3fc] sm:$0xff]
    %v341 = vld [vmem:[#allocation5 + $0x404] sm:$0xff]
    %v342 = vld [vmem:[#allocation5 + $0x40c] sm:$0xf]
    %v343 = vld [vmem:[#allocation5 + $0x410] sm:$0xff]
    %v344 = vld [vmem:[#allocation5 + $0x418] sm:$0xff]
    %v345 = vld [vmem:[#allocation5 + $0x420] sm:$0xf]
    %v346 = vld [vmem:[#allocation5 + $0x424] sm:$0xff]
    %v347 = vld [vmem:[#allocation5 + $0x42c] sm:$0xff]
    %v348 = vld [vmem:[#allocation5 + $0x434] sm:$0xf]
    %v349 = vld [vmem:[#allocation5 + $0x438] sm:$0xff]
    %v350 = vld [vmem:[#allocation5 + $0x440] sm:$0xff]
    %v351 = vld [vmem:[#allocation5 + $0x448] sm:$0xf]
    %v352 = vld [vmem:[#allocation5 + $0x44c] sm:$0xff]
    %v353 = vld [vmem:[#allocation5 + $0x454] sm:$0xff]
    %v354 = vld [vmem:[#allocation5 + $0x45c] sm:$0xf]
    %v355 = vld [vmem:[#allocation5 + $0x460] sm:$0xff]
    %v356 = vld [vmem:[#allocation5 + $0x468] sm:$0xff]
    %v357 = vld [vmem:[#allocation5 + $0x470] sm:$0xf]
    %v358 = vld [vmem:[#allocation5 + $0x474] sm:$0xff]
    %v359 = vld [vmem:[#allocation5 + $0x47c] sm:$0xff]
    %v360 = vld [vmem:[#allocation5 + $0x484] sm:$0xf]
    %v361 = vld [vmem:[#allocation5 + $0x488] sm:$0xff]
    %v362 = vld [vmem:[#allocation5 + $0x490] sm:$0xff]
    %v363 = vld [vmem:[#allocation5 + $0x498] sm:$0xf]
    %v364 = vld [vmem:[#allocation5 + $0x49c] sm:$0xff]
    %v365 = vld [vmem:[#allocation5 + $0x4a4] sm:$0xff]
    %v366 = vld [vmem:[#allocation5 + $0x4ac] sm:$0xf]
    %v367 = vld [vmem:[#allocation5 + $0x4b0] sm:$0xff]
    %v368 = vld [vmem:[#allocation5 + $0x4b8] sm:$0xff]
    %v369 = vld [vmem:[#allocation5 + $0x4c0] sm:$0xf]
    %v370 = vld [vmem:[#allocation5 + $0x4c4] sm:$0xff]
    %v371 = vld [vmem:[#allocation5 + $0x4cc] sm:$0xff]
    %v372 = vld [vmem:[#allocation5 + $0x4d4] sm:$0xf]
    %v373 = vld [vmem:[#allocation5 + $0x4d8] sm:$0xff]
    %v374 = vld [vmem:[#allocation5 + $0x4e0] sm:$0xff]
    %v375 = vld [vmem:[#allocation5 + $0x4e8] sm:$0xf]
    %v376 = vld [vmem:[#allocation5 + $0x4ec] sm:$0xff]
    %v377 = vld [vmem:[#allocation5 + $0x4f4] sm:$0xff]
    %v378 = vld [vmem:[#allocation5 + $0x4fc] sm:$0xf]
    %v379 = vld [vmem:[#allocation5 + $0x500] sm:$0xff]
    %v380 = vld [vmem:[#allocation5 + $0x508] sm:$0xff]
    %v381 = vld [vmem:[#allocation5 + $0x510] sm:$0xf]
    %v382 = vld [vmem:[#allocation5 + $0x514] sm:$0xff]
    %v383 = vld [vmem:[#allocation5 + $0x51c] sm:$0xff]
    %v384 = vld [vmem:[#allocation5 + $0x524] sm:$0xf]
    %v385 = vld [vmem:[#allocation5 + $0x528] sm:$0xff]
    %v386 = vld [vmem:[#allocation5 + $0x530] sm:$0xff]
    %v387 = vld [vmem:[#allocation5 + $0x538] sm:$0xf]
    %v388 = vld [vmem:[#allocation5 + $0x53c] sm:$0xff]
    %v389 = vld [vmem:[#allocation5 + $0x544] sm:$0xff]
    %v390 = vld [vmem:[#allocation5 + $0x54c] sm:$0xf]
    %v391 = vld [vmem:[#allocation5 + $0x550] sm:$0xff]
    %v392 = vld [vmem:[#allocation5 + $0x558] sm:$0xff]
    %v393 = vld [vmem:[#allocation5 + $0x560] sm:$0xf]
    %v394 = vld [vmem:[#allocation5 + $0x564] sm:$0xff]
    %v395 = vld [vmem:[#allocation5 + $0x56c] sm:$0xff]
    %v396 = vld [vmem:[#allocation5 + $0x574] sm:$0xf]
    %v397 = vld [vmem:[#allocation5 + $0x578] sm:$0xff]
    %v398 = vld [vmem:[#allocation5 + $0x580] sm:$0xff]
    %v399 = vld [vmem:[#allocation5 + $0x588] sm:$0xf]
    %v400 = vld [vmem:[#allocation5 + $0x58c] sm:$0xff]
    %v401 = vld [vmem:[#allocation5 + $0x594] sm:$0xff]
    %v402 = vld [vmem:[#allocation5 + $0x59c] sm:$0xf]
    %v403 = vld [vmem:[#allocation5 + $0x5a0] sm:$0xff]
    %v404 = vld [vmem:[#allocation5 + $0x5a8] sm:$0xff]
    %v405 = vld [vmem:[#allocation5 + $0x5b0] sm:$0xf]
    %v406 = vld [vmem:[#allocation5 + $0x5b4] sm:$0xff]
    %v407 = vld [vmem:[#allocation5 + $0x5bc] sm:$0xff]
    %v408 = vld [vmem:[#allocation5 + $0x5c4] sm:$0xf]
    %v409 = vld [vmem:[#allocation5 + $0x5c8] sm:$0xff]
    %v410 = vld [vmem:[#allocation5 + $0x5d0] sm:$0xff]
    %v411 = vld [vmem:[#allocation5 + $0x5d8] sm:$0xf]
    %v412 = vld [vmem:[#allocation5 + $0x5dc] sm:$0xff]
    %v413 = vld [vmem:[#allocation5 + $0x5e4] sm:$0xff]
    %v414 = vld [vmem:[#allocation5 + $0x5ec] sm:$0xf]
    %v415 = vld [vmem:[#allocation5 + $0x5f0] sm:$0xff]
    %v416 = vld [vmem:[#allocation5 + $0x5f8] sm:$0xff]
    %v417 = vld [vmem:[#allocation5 + $0x600] sm:$0xf]
    %v418 = vld [vmem:[#allocation5 + $0x604] sm:$0xff]
    %v419 = vld [vmem:[#allocation5 + $0x60c] sm:$0xff]
    %v420 = vld [vmem:[#allocation5 + $0x614] sm:$0xf]
    %v421 = vld [vmem:[#allocation5 + $0x618] sm:$0xff]
    %v422 = vld [vmem:[#allocation5 + $0x620] sm:$0xff]
    %v423 = vld [vmem:[#allocation5 + $0x628] sm:$0xf]
    %v424 = vld [vmem:[#allocation5 + $0x62c] sm:$0xff]
    %v425 = vld [vmem:[#allocation5 + $0x634] sm:$0xff]
    %v426 = vld [vmem:[#allocation5 + $0x63c] sm:$0xf]
    %v427 = vld [vmem:[#allocation5 + $0x640] sm:$0xff]
    %v428 = vld [vmem:[#allocation5 + $0x648] sm:$0xff]
    %v429 = vld [vmem:[#allocation5 + $0x650] sm:$0xf]
    %v430 = vld [vmem:[#allocation5 + $0x654] sm:$0xff]
    %v431 = vld [vmem:[#allocation5 + $0x65c] sm:$0xff]
    %v432 = vld [vmem:[#allocation5 + $0x664] sm:$0xf]
    %v433 = vld [vmem:[#allocation5 + $0x668] sm:$0xff]
    %v434 = vld [vmem:[#allocation5 + $0x670] sm:$0xff]
    %v435 = vld [vmem:[#allocation5 + $0x678] sm:$0xf]
    %v436 = vld [vmem:[#allocation5 + $0x67c] sm:$0xff]
    %v437 = vld [vmem:[#allocation5 + $0x684] sm:$0xff]
    %v438 = vld [vmem:[#allocation5 + $0x68c] sm:$0xf]
    %v439 = vld [vmem:[#allocation5 + $0x690] sm:$0xff]
    %v440 = vld [vmem:[#allocation5 + $0x698] sm:$0xff]
    %v441 = vld [vmem:[#allocation5 + $0x6a0] sm:$0xf]
    %v442 = vld [vmem:[#allocation5 + $0x6a4] sm:$0xff]
    %v443 = vld [vmem:[#allocation5 + $0x6ac] sm:$0xff]
    %v444 = vld [vmem:[#allocation5 + $0x6b4] sm:$0xf]
    %v445 = vld [vmem:[#allocation5 + $0x6b8] sm:$0xff]
    %v446 = vld [vmem:[#allocation5 + $0x6c0] sm:$0xff]
    %v447 = vld [vmem:[#allocation5 + $0x6c8] sm:$0xf]
    %v448 = vld [vmem:[#allocation5 + $0x6cc] sm:$0xff]
    %v449 = vld [vmem:[#allocation5 + $0x6d4] sm:$0xff]
    %v450 = vld [vmem:[#allocation5 + $0x6dc] sm:$0xf]
    %v451 = vld [vmem:[#allocation5 + $0x6e0] sm:$0xff]
    %v452 = vld [vmem:[#allocation5 + $0x6e8] sm:$0xff]
    %v453 = vld [vmem:[#allocation5 + $0x6f0] sm:$0xf]
    %v454 = vld [vmem:[#allocation5 + $0x6f4] sm:$0xff]
    %v455 = vld [vmem:[#allocation5 + $0x6fc] sm:$0xff]
    %v456 = vld [vmem:[#allocation5 + $0x704] sm:$0xf]
    %v457 = vld [vmem:[#allocation5 + $0x708] sm:$0xff]
    %v458 = vld [vmem:[#allocation5 + $0x710] sm:$0xff]
    %v459 = vld [vmem:[#allocation5 + $0x718] sm:$0xf]
    %v460 = vld [vmem:[#allocation5 + $0x71c] sm:$0xff]
    %v461 = vld [vmem:[#allocation5 + $0x724] sm:$0xff]
    %v462 = vld [vmem:[#allocation5 + $0x72c] sm:$0xf]
    %v463 = vld [vmem:[#allocation5 + $0x730] sm:$0xff]
    %v464 = vld [vmem:[#allocation5 + $0x738] sm:$0xff]
    %v465 = vld [vmem:[#allocation5 + $0x740] sm:$0xf]
    %v466 = vld [vmem:[#allocation5 + $0x744] sm:$0xff]
    %v467 = vld [vmem:[#allocation5 + $0x74c] sm:$0xff]
    %v468 = vld [vmem:[#allocation5 + $0x754] sm:$0xf]
    %v469 = vld [vmem:[#allocation5 + $0x758] sm:$0xff]
    %v470 = vld [vmem:[#allocation5 + $0x760] sm:$0xff]
    %v471 = vld [vmem:[#allocation5 + $0x768] sm:$0xf]
    %v472 = vld [vmem:[#allocation5 + $0x76c] sm:$0xff]
    %v473 = vld [vmem:[#allocation5 + $0x774] sm:$0xff]
    %v474 = vld [vmem:[#allocation5 + $0x77c] sm:$0xf]
    %v475 = vld [vmem:[#allocation5 + $0x780] sm:$0xff]
    %v476 = vld [vmem:[#allocation5 + $0x788] sm:$0xff]
    %v477 = vld [vmem:[#allocation5 + $0x790] sm:$0xf]
    %v478 = vld [vmem:[#allocation5 + $0x794] sm:$0xff]
    %v479 = vld [vmem:[#allocation5 + $0x79c] sm:$0xff]
    %v480 = vld [vmem:[#allocation5 + $0x7a4] sm:$0xf]
    %v481 = vld [vmem:[#allocation5 + $0x7a8] sm:$0xff]
    %v482 = vld [vmem:[#allocation5 + $0x7b0] sm:$0xff]
    %v483 = vld [vmem:[#allocation5 + $0x7b8] sm:$0xf]
    %v484 = vld [vmem:[#allocation5 + $0x7bc] sm:$0xff]
    %v485 = vld [vmem:[#allocation5 + $0x7c4] sm:$0xff]
    %v486 = vld [vmem:[#allocation5 + $0x7cc] sm:$0xf]
    %v487 = vld [vmem:[#allocation5 + $0x7d0] sm:$0xff]
    %v488 = vld [vmem:[#allocation5 + $0x7d8] sm:$0xff]
    %v489 = vld [vmem:[#allocation5 + $0x7e0] sm:$0xf]
    %v490 = vld [vmem:[#allocation5 + $0x7e4] sm:$0xff]
    %v491 = vld [vmem:[#allocation5 + $0x7ec] sm:$0xff]
    %v492 = vld [vmem:[#allocation5 + $0x7f4] sm:$0xf]
    %v493 = vld [vmem:[#allocation5 + $0x7f8] sm:$0xff]
    %v494 = vld [vmem:[#allocation5 + $0x800] sm:$0xff]
    %v495 = vld [vmem:[#allocation5 + $0x808] sm:$0xf]
    %v496 = vld [vmem:[#allocation5 + $0x80c] sm:$0xff]
    %v497 = vld [vmem:[#allocation5 + $0x814] sm:$0xff]
    %v498 = vld [vmem:[#allocation5 + $0x81c] sm:$0xf]
    %v499 = vld [vmem:[#allocation5 + $0x820] sm:$0xff]
    %v500 = vld [vmem:[#allocation5 + $0x828] sm:$0xff]
    %v501 = vld [vmem:[#allocation5 + $0x830] sm:$0xf]
    %v502 = vld [vmem:[#allocation5 + $0x834] sm:$0xff]
    %v503 = vld [vmem:[#allocation5 + $0x83c] sm:$0xff]
    %v504 = vld [vmem:[#allocation5 + $0x844] sm:$0xf]
    %v505 = vld [vmem:[#allocation5 + $0x848] sm:$0xff]
    %v506 = vld [vmem:[#allocation5 + $0x850] sm:$0xff]
    %v507 = vld [vmem:[#allocation5 + $0x858] sm:$0xf]
    %v508 = vld [vmem:[#allocation5 + $0x85c] sm:$0xff]
    %v509 = vld [vmem:[#allocation5 + $0x864] sm:$0xff]
    %v510 = vld [vmem:[#allocation5 + $0x86c] sm:$0xf]
    %v511 = vld [vmem:[#allocation5 + $0x870] sm:$0xff]
    %v512 = vld [vmem:[#allocation5 + $0x878] sm:$0xff]
    %v513 = vld [vmem:[#allocation5 + $0x880] sm:$0xf]
    %v514 = vld [vmem:[#allocation5 + $0x884] sm:$0xff]
    %v515 = vld [vmem:[#allocation5 + $0x88c] sm:$0xff]
    %v516 = vld [vmem:[#allocation5 + $0x894] sm:$0xf]
    %v517 = vld [vmem:[#allocation5 + $0x898] sm:$0xff]
    %v518 = vld [vmem:[#allocation5 + $0x8a0] sm:$0xff]
    %v519 = vld [vmem:[#allocation5 + $0x8a8] sm:$0xf]
    %v520 = vld [vmem:[#allocation5 + $0x8ac] sm:$0xff]
    %v521 = vld [vmem:[#allocation5 + $0x8b4] sm:$0xff]
    %v522 = vld [vmem:[#allocation5 + $0x8bc] sm:$0xf]
    %v531 = vunpack.c.l.b16 %v179
    %v532 = vunpack.c.h.b16 %v179
    %v533 = vunpack.c.l.b16 %v180
    %v534 = vunpack.c.h.b16 %v180
    %v535 = vunpack.c.l.b16 %v181
    %v536 = vunpack.c.h.b16 %v181
    %v537 = vunpack.c.l.b16 %v182
    %v538 = vunpack.c.l.b16 %v183
    %v539 = vunpack.c.h.b16 %v183
    %v540 = vunpack.c.l.b16 %v184
    %v541 = vunpack.c.h.b16 %v184
    %v542 = vunpack.c.l.b16 %v185
    %v543 = vunpack.c.h.b16 %v185
    %v544 = vunpack.c.l.b16 %v186
    %v545 = vpack.c.b16 %v538, %v531
    %v546 = vpack.c.b16 %v539, %v532
    %v547 = vpack.c.b16 %v540, %v533
    %v548 = vpack.c.b16 %v541, %v534
    %v549 = vpack.c.b16 %v542, %v535
    %v550 = vpack.c.b16 %v543, %v536
    %v551 = vpack.c.b16 %v544, %v537
    %v895 = vunpack.c.l.b16 %v187
    %v896 = vunpack.c.h.b16 %v187
    %v897 = vunpack.c.l.b16 %v188
    %v898 = vunpack.c.h.b16 %v188
    %v899 = vunpack.c.l.b16 %v189
    %v900 = vunpack.c.l.b16 %v190
    %v901 = vunpack.c.h.b16 %v190
    %v902 = vunpack.c.l.b16 %v191
    %v903 = vunpack.c.h.b16 %v191
    %v904 = vunpack.c.l.b16 %v192
    %v905 = vunpack.c.l.b16 %v193
    %v906 = vunpack.c.h.b16 %v193
    %v907 = vunpack.c.l.b16 %v194
    %v908 = vunpack.c.h.b16 %v194
    %v909 = vunpack.c.l.b16 %v195
    %v910 = vunpack.c.l.b16 %v196
    %v911 = vunpack.c.h.b16 %v196
    %v912 = vunpack.c.l.b16 %v197
    %v913 = vunpack.c.h.b16 %v197
    %v914 = vunpack.c.l.b16 %v198
    %v915 = vunpack.c.l.b16 %v199
    %v916 = vunpack.c.h.b16 %v199
    %v917 = vunpack.c.l.b16 %v200
    %v918 = vunpack.c.h.b16 %v200
    %v919 = vunpack.c.l.b16 %v201
    %v920 = vunpack.c.l.b16 %v202
    %v921 = vunpack.c.h.b16 %v202
    %v922 = vunpack.c.l.b16 %v203
    %v923 = vunpack.c.h.b16 %v203
    %v924 = vunpack.c.l.b16 %v204
    %v925 = vunpack.c.l.b16 %v205
    %v926 = vunpack.c.h.b16 %v205
    %v927 = vunpack.c.l.b16 %v206
    %v928 = vunpack.c.h.b16 %v206
    %v929 = vunpack.c.l.b16 %v207
    %v930 = vunpack.c.l.b16 %v208
    %v931 = vunpack.c.h.b16 %v208
    %v932 = vunpack.c.l.b16 %v209
    %v933 = vunpack.c.h.b16 %v209
    %v934 = vunpack.c.l.b16 %v210
    %v935 = vunpack.c.l.b16 %v211
    %v936 = vunpack.c.h.b16 %v211
    %v937 = vunpack.c.l.b16 %v212
    %v938 = vunpack.c.h.b16 %v212
    %v939 = vunpack.c.l.b16 %v213
    %v940 = vunpack.c.l.b16 %v214
    %v941 = vunpack.c.h.b16 %v214
    %v942 = vunpack.c.l.b16 %v215
    %v943 = vunpack.c.h.b16 %v215
    %v944 = vunpack.c.l.b16 %v216
    %v945 = vunpack.c.l.b16 %v217
    %v946 = vunpack.c.h.b16 %v217
    %v947 = vunpack.c.l.b16 %v218
    %v948 = vunpack.c.h.b16 %v218
    %v949 = vunpack.c.l.b16 %v219
    %v950 = vunpack.c.l.b16 %v220
    %v951 = vunpack.c.h.b16 %v220
    %v952 = vunpack.c.l.b16 %v221
    %v953 = vunpack.c.h.b16 %v221
    %v954 = vunpack.c.l.b16 %v222
    %v955 = vunpack.c.l.b16 %v223
    %v956 = vunpack.c.h.b16 %v223
    %v957 = vunpack.c.l.b16 %v224
    %v958 = vunpack.c.h.b16 %v224
    %v959 = vunpack.c.l.b16 %v225
    %v960 = vunpack.c.l.b16 %v226
    %v961 = vunpack.c.h.b16 %v226
    %v962 = vunpack.c.l.b16 %v227
    %v963 = vunpack.c.h.b16 %v227
    %v964 = vunpack.c.l.b16 %v228
    %v965 = vunpack.c.l.b16 %v229
    %v966 = vunpack.c.h.b16 %v229
    %v967 = vunpack.c.l.b16 %v230
    %v968 = vunpack.c.h.b16 %v230
    %v969 = vunpack.c.l.b16 %v231
    %v970 = vunpack.c.l.b16 %v232
    %v971 = vunpack.c.h.b16 %v232
    %v972 = vunpack.c.l.b16 %v233
    %v973 = vunpack.c.h.b16 %v233
    %v974 = vunpack.c.l.b16 %v234
    %v975 = vunpack.c.l.b16 %v235
    %v976 = vunpack.c.h.b16 %v235
    %v977 = vunpack.c.l.b16 %v236
    %v978 = vunpack.c.h.b16 %v236
    %v979 = vunpack.c.l.b16 %v237
    %v980 = vunpack.c.l.b16 %v238
    %v981 = vunpack.c.h.b16 %v238
    %v982 = vunpack.c.l.b16 %v239
    %v983 = vunpack.c.h.b16 %v239
    %v984 = vunpack.c.l.b16 %v240
    %v985 = vunpack.c.l.b16 %v241
    %v986 = vunpack.c.h.b16 %v241
    %v987 = vunpack.c.l.b16 %v242
    %v988 = vunpack.c.h.b16 %v242
    %v989 = vunpack.c.l.b16 %v243
    %v990 = vunpack.c.l.b16 %v244
    %v991 = vunpack.c.h.b16 %v244
    %v992 = vunpack.c.l.b16 %v245
    %v993 = vunpack.c.h.b16 %v245
    %v994 = vunpack.c.l.b16 %v246
    %v995 = vunpack.c.l.b16 %v247
    %v996 = vunpack.c.h.b16 %v247
    %v997 = vunpack.c.l.b16 %v248
    %v998 = vunpack.c.h.b16 %v248
    %v999 = vunpack.c.l.b16 %v249
    %v1000 = vunpack.c.l.b16 %v250
    %v1001 = vunpack.c.h.b16 %v250
    %v1002 = vunpack.c.l.b16 %v251
    %v1003 = vunpack.c.h.b16 %v251
    %v1004 = vunpack.c.l.b16 %v252
    %v1005 = vunpack.c.l.b16 %v253
    %v1006 = vunpack.c.h.b16 %v253
    %v1007 = vunpack.c.l.b16 %v254
    %v1008 = vunpack.c.h.b16 %v254
    %v1009 = vunpack.c.l.b16 %v255
    %v1010 = vunpack.c.l.b16 %v256
    %v1011 = vunpack.c.h.b16 %v256
    %v1012 = vunpack.c.l.b16 %v257
    %v1013 = vunpack.c.h.b16 %v257
    %v1014 = vunpack.c.l.b16 %v258
    %v1015 = vunpack.c.l.b16 %v259
    %v1016 = vunpack.c.h.b16 %v259
    %v1017 = vunpack.c.l.b16 %v260
    %v1018 = vunpack.c.h.b16 %v260
    %v1019 = vunpack.c.l.b16 %v261
    %v1020 = vunpack.c.l.b16 %v262
    %v1021 = vunpack.c.h.b16 %v262
    %v1022 = vunpack.c.l.b16 %v263
    %v1023 = vunpack.c.h.b16 %v263
    %v1024 = vunpack.c.l.b16 %v264
    %v1025 = vunpack.c.l.b16 %v265
    %v1026 = vunpack.c.h.b16 %v265
    %v1027 = vunpack.c.l.b16 %v266
    %v1028 = vunpack.c.h.b16 %v266
    %v1029 = vunpack.c.l.b16 %v267
    %v1030 = vunpack.c.l.b16 %v268
    %v1031 = vunpack.c.h.b16 %v268
    %v1032 = vunpack.c.l.b16 %v269
    %v1033 = vunpack.c.h.b16 %v269
    %v1034 = vunpack.c.l.b16 %v270
    %v1035 = vunpack.c.l.b16 %v271
    %v1036 = vunpack.c.h.b16 %v271
    %v1037 = vunpack.c.l.b16 %v272
    %v1038 = vunpack.c.h.b16 %v272
    %v1039 = vunpack.c.l.b16 %v273
    %v1040 = vunpack.c.l.b16 %v274
    %v1041 = vunpack.c.h.b16 %v274
    %v1042 = vunpack.c.l.b16 %v275
    %v1043 = vunpack.c.h.b16 %v275
    %v1044 = vunpack.c.l.b16 %v276
    %v1045 = vunpack.c.l.b16 %v277
    %v1046 = vunpack.c.h.b16 %v277
    %v1047 = vunpack.c.l.b16 %v278
    %v1048 = vunpack.c.h.b16 %v278
    %v1049 = vunpack.c.l.b16 %v279
    %v1050 = vunpack.c.l.b16 %v280
    %v1051 = vunpack.c.h.b16 %v280
    %v1052 = vunpack.c.l.b16 %v281
    %v1053 = vunpack.c.h.b16 %v281
    %v1054 = vunpack.c.l.b16 %v282
    %v1055 = vunpack.c.l.b16 %v283
    %v1056 = vunpack.c.h.b16 %v283
    %v1057 = vunpack.c.l.b16 %v284
    %v1058 = vunpack.c.h.b16 %v284
    %v1059 = vunpack.c.l.b16 %v285
    %v1060 = vunpack.c.l.b16 %v286
    %v1061 = vunpack.c.h.b16 %v286
    %v1062 = vunpack.c.l.b16 %v287
    %v1063 = vunpack.c.h.b16 %v287
    %v1064 = vunpack.c.l.b16 %v288
    %v1065 = vunpack.c.l.b16 %v289
    %v1066 = vunpack.c.h.b16 %v289
    %v1067 = vunpack.c.l.b16 %v290
    %v1068 = vunpack.c.h.b16 %v290
    %v1069 = vunpack.c.l.b16 %v291
    %v1070 = vunpack.c.l.b16 %v292
    %v1071 = vunpack.c.h.b16 %v292
    %v1072 = vunpack.c.l.b16 %v293
    %v1073 = vunpack.c.h.b16 %v293
    %v1074 = vunpack.c.l.b16 %v294
    %v1075 = vunpack.c.l.b16 %v295
    %v1076 = vunpack.c.h.b16 %v295
    %v1077 = vunpack.c.l.b16 %v296
    %v1078 = vunpack.c.h.b16 %v296
    %v1079 = vunpack.c.l.b16 %v297
    %v1080 = vunpack.c.l.b16 %v298
    %v1081 = vunpack.c.h.b16 %v298
    %v1082 = vunpack.c.l.b16 %v299
    %v1083 = vunpack.c.h.b16 %v299
    %v1084 = vunpack.c.l.b16 %v300
    %v1085 = vunpack.c.l.b16 %v301
    %v1086 = vunpack.c.h.b16 %v301
    %v1087 = vunpack.c.l.b16 %v302
    %v1088 = vunpack.c.h.b16 %v302
    %v1089 = vunpack.c.l.b16 %v303
    %v1090 = vunpack.c.l.b16 %v304
    %v1091 = vunpack.c.h.b16 %v304
    %v1092 = vunpack.c.l.b16 %v305
    %v1093 = vunpack.c.h.b16 %v305
    %v1094 = vunpack.c.l.b16 %v306
    %v1095 = vunpack.c.l.b16 %v307
    %v1096 = vunpack.c.h.b16 %v307
    %v1097 = vunpack.c.l.b16 %v308
    %v1098 = vunpack.c.h.b16 %v308
    %v1099 = vunpack.c.l.b16 %v309
    %v1100 = vunpack.c.l.b16 %v310
    %v1101 = vunpack.c.h.b16 %v310
    %v1102 = vunpack.c.l.b16 %v311
    %v1103 = vunpack.c.h.b16 %v311
    %v1104 = vunpack.c.l.b16 %v312
    %v1105 = vunpack.c.l.b16 %v313
    %v1106 = vunpack.c.h.b16 %v313
    %v1107 = vunpack.c.l.b16 %v314
    %v1108 = vunpack.c.h.b16 %v314
    %v1109 = vunpack.c.l.b16 %v315
    %v1110 = vunpack.c.l.b16 %v316
    %v1111 = vunpack.c.h.b16 %v316
    %v1112 = vunpack.c.l.b16 %v317
    %v1113 = vunpack.c.h.b16 %v317
    %v1114 = vunpack.c.l.b16 %v318
    %v1115 = vunpack.c.l.b16 %v319
    %v1116 = vunpack.c.h.b16 %v319
    %v1117 = vunpack.c.l.b16 %v320
    %v1118 = vunpack.c.h.b16 %v320
    %v1119 = vunpack.c.l.b16 %v321
    %v1120 = vunpack.c.l.b16 %v322
    %v1121 = vunpack.c.h.b16 %v322
    %v1122 = vunpack.c.l.b16 %v323
    %v1123 = vunpack.c.h.b16 %v323
    %v1124 = vunpack.c.l.b16 %v324
    %v1125 = vunpack.c.l.b16 %v325
    %v1126 = vunpack.c.h.b16 %v325
    %v1127 = vunpack.c.l.b16 %v326
    %v1128 = vunpack.c.h.b16 %v326
    %v1129 = vunpack.c.l.b16 %v327
    %v1130 = vunpack.c.l.b16 %v328
    %v1131 = vunpack.c.h.b16 %v328
    %v1132 = vunpack.c.l.b16 %v329
    %v1133 = vunpack.c.h.b16 %v329
    %v1134 = vunpack.c.l.b16 %v330
    %v1135 = vunpack.c.l.b16 %v331
    %v1136 = vunpack.c.h.b16 %v331
    %v1137 = vunpack.c.l.b16 %v332
    %v1138 = vunpack.c.h.b16 %v332
    %v1139 = vunpack.c.l.b16 %v333
    %v1140 = vunpack.c.l.b16 %v334
    %v1141 = vunpack.c.h.b16 %v334
    %v1142 = vunpack.c.l.b16 %v335
    %v1143 = vunpack.c.h.b16 %v335
    %v1144 = vunpack.c.l.b16 %v336
    %v1145 = vunpack.c.l.b16 %v337
    %v1146 = vunpack.c.h.b16 %v337
    %v1147 = vunpack.c.l.b16 %v338
    %v1148 = vunpack.c.h.b16 %v338
    %v1149 = vunpack.c.l.b16 %v339
    %v1150 = vunpack.c.l.b16 %v340
    %v1151 = vunpack.c.h.b16 %v340
    %v1152 = vunpack.c.l.b16 %v341
    %v1153 = vunpack.c.h.b16 %v341
    %v1154 = vunpack.c.l.b16 %v342
    %v1155 = vunpack.c.l.b16 %v343
    %v1156 = vunpack.c.h.b16 %v343
    %v1157 = vunpack.c.l.b16 %v344
    %v1158 = vunpack.c.h.b16 %v344
    %v1159 = vunpack.c.l.b16 %v345
    %v1160 = vunpack.c.l.b16 %v346
    %v1161 = vunpack.c.h.b16 %v346
    %v1162 = vunpack.c.l.b16 %v347
    %v1163 = vunpack.c.h.b16 %v347
    %v1164 = vunpack.c.l.b16 %v348
    %v1165 = vunpack.c.l.b16 %v349
    %v1166 = vunpack.c.h.b16 %v349
    %v1167 = vunpack.c.l.b16 %v350
    %v1168 = vunpack.c.h.b16 %v350
    %v1169 = vunpack.c.l.b16 %v351
    %v1170 = vunpack.c.l.b16 %v352
    %v1171 = vunpack.c.h.b16 %v352
    %v1172 = vunpack.c.l.b16 %v353
    %v1173 = vunpack.c.h.b16 %v353
    %v1174 = vunpack.c.l.b16 %v354
    %v1175 = vunpack.c.l.b16 %v355
    %v1176 = vunpack.c.h.b16 %v355
    %v1177 = vunpack.c.l.b16 %v356
    %v1178 = vunpack.c.h.b16 %v356
    %v1179 = vunpack.c.l.b16 %v357
    %v1180 = vunpack.c.l.b16 %v358
    %v1181 = vunpack.c.h.b16 %v358
    %v1182 = vunpack.c.l.b16 %v359
    %v1183 = vunpack.c.h.b16 %v359
    %v1184 = vunpack.c.l.b16 %v360
    %v1185 = vunpack.c.l.b16 %v361
    %v1186 = vunpack.c.h.b16 %v361
    %v1187 = vunpack.c.l.b16 %v362
    %v1188 = vunpack.c.h.b16 %v362
    %v1189 = vunpack.c.l.b16 %v363
    %v1190 = vunpack.c.l.b16 %v364
    %v1191 = vunpack.c.h.b16 %v364
    %v1192 = vunpack.c.l.b16 %v365
    %v1193 = vunpack.c.h.b16 %v365
    %v1194 = vunpack.c.l.b16 %v366
    %v1195 = vunpack.c.l.b16 %v367
    %v1196 = vunpack.c.h.b16 %v367
    %v1197 = vunpack.c.l.b16 %v368
    %v1198 = vunpack.c.h.b16 %v368
    %v1199 = vunpack.c.l.b16 %v369
    %v1200 = vunpack.c.l.b16 %v370
    %v1201 = vunpack.c.h.b16 %v370
    %v1202 = vunpack.c.l.b16 %v371
    %v1203 = vunpack.c.h.b16 %v371
    %v1204 = vunpack.c.l.b16 %v372
    %v1205 = vunpack.c.l.b16 %v373
    %v1206 = vunpack.c.h.b16 %v373
    %v1207 = vunpack.c.l.b16 %v374
    %v1208 = vunpack.c.h.b16 %v374
    %v1209 = vunpack.c.l.b16 %v375
    %v1210 = vunpack.c.l.b16 %v376
    %v1211 = vunpack.c.h.b16 %v376
    %v1212 = vunpack.c.l.b16 %v377
    %v1213 = vunpack.c.h.b16 %v377
    %v1214 = vunpack.c.l.b16 %v378
    %v1215 = vunpack.c.l.b16 %v379
    %v1216 = vunpack.c.h.b16 %v379
    %v1217 = vunpack.c.l.b16 %v380
    %v1218 = vunpack.c.h.b16 %v380
    %v1219 = vunpack.c.l.b16 %v381
    %v1220 = vunpack.c.l.b16 %v382
    %v1221 = vunpack.c.h.b16 %v382
    %v1222 = vunpack.c.l.b16 %v383
    %v1223 = vunpack.c.h.b16 %v383
    %v1224 = vunpack.c.l.b16 %v384
    %v1225 = vunpack.c.l.b16 %v385
    %v1226 = vunpack.c.h.b16 %v385
    %v1227 = vunpack.c.l.b16 %v386
    %v1228 = vunpack.c.h.b16 %v386
    %v1229 = vunpack.c.l.b16 %v387
    %v1230 = vunpack.c.l.b16 %v388
    %v1231 = vunpack.c.h.b16 %v388
    %v1232 = vunpack.c.l.b16 %v389
    %v1233 = vunpack.c.h.b16 %v389
    %v1234 = vunpack.c.l.b16 %v390
    %v1235 = vunpack.c.l.b16 %v391
    %v1236 = vunpack.c.h.b16 %v391
    %v1237 = vunpack.c.l.b16 %v392
    %v1238 = vunpack.c.h.b16 %v392
    %v1239 = vunpack.c.l.b16 %v393
    %v1240 = vunpack.c.l.b16 %v394
    %v1241 = vunpack.c.h.b16 %v394
    %v1242 = vunpack.c.l.b16 %v395
    %v1243 = vunpack.c.h.b16 %v395
    %v1244 = vunpack.c.l.b16 %v396
    %v1245 = vunpack.c.l.b16 %v397
    %v1246 = vunpack.c.h.b16 %v397
    %v1247 = vunpack.c.l.b16 %v398
    %v1248 = vunpack.c.h.b16 %v398
    %v1249 = vunpack.c.l.b16 %v399
    %v1250 = vunpack.c.l.b16 %v400
    %v1251 = vunpack.c.h.b16 %v400
    %v1252 = vunpack.c.l.b16 %v401
    %v1253 = vunpack.c.h.b16 %v401
    %v1254 = vunpack.c.l.b16 %v402
    %v1255 = vunpack.c.l.b16 %v403
    %v1256 = vunpack.c.h.b16 %v403
    %v1257 = vunpack.c.l.b16 %v404
    %v1258 = vunpack.c.h.b16 %v404
    %v1259 = vunpack.c.l.b16 %v405
    %v1260 = vunpack.c.l.b16 %v406
    %v1261 = vunpack.c.h.b16 %v406
    %v1262 = vunpack.c.l.b16 %v407
    %v1263 = vunpack.c.h.b16 %v407
    %v1264 = vunpack.c.l.b16 %v408
    %v1265 = vunpack.c.l.b16 %v409
    %v1266 = vunpack.c.h.b16 %v409
    %v1267 = vunpack.c.l.b16 %v410
    %v1268 = vunpack.c.h.b16 %v410
    %v1269 = vunpack.c.l.b16 %v411
    %v1270 = vunpack.c.l.b16 %v412
    %v1271 = vunpack.c.h.b16 %v412
    %v1272 = vunpack.c.l.b16 %v413
    %v1273 = vunpack.c.h.b16 %v413
    %v1274 = vunpack.c.l.b16 %v414
    %v1275 = vunpack.c.l.b16 %v415
    %v1276 = vunpack.c.h.b16 %v415
    %v1277 = vunpack.c.l.b16 %v416
    %v1278 = vunpack.c.h.b16 %v416
    %v1279 = vunpack.c.l.b16 %v417
    %v1280 = vunpack.c.l.b16 %v418
    %v1281 = vunpack.c.h.b16 %v418
    %v1282 = vunpack.c.l.b16 %v419
    %v1283 = vunpack.c.h.b16 %v419
    %v1284 = vunpack.c.l.b16 %v420
    %v1285 = vunpack.c.l.b16 %v421
    %v1286 = vunpack.c.h.b16 %v421
    %v1287 = vunpack.c.l.b16 %v422
    %v1288 = vunpack.c.h.b16 %v422
    %v1289 = vunpack.c.l.b16 %v423
    %v1290 = vunpack.c.l.b16 %v424
    %v1291 = vunpack.c.h.b16 %v424
    %v1292 = vunpack.c.l.b16 %v425
    %v1293 = vunpack.c.h.b16 %v425
    %v1294 = vunpack.c.l.b16 %v426
    %v1295 = vunpack.c.l.b16 %v427
    %v1296 = vunpack.c.h.b16 %v427
    %v1297 = vunpack.c.l.b16 %v428
    %v1298 = vunpack.c.h.b16 %v428
    %v1299 = vunpack.c.l.b16 %v429
    %v1300 = vunpack.c.l.b16 %v430
    %v1301 = vunpack.c.h.b16 %v430
    %v1302 = vunpack.c.l.b16 %v431
    %v1303 = vunpack.c.h.b16 %v431
    %v1304 = vunpack.c.l.b16 %v432
    %v1305 = vunpack.c.l.b16 %v433
    %v1306 = vunpack.c.h.b16 %v433
    %v1307 = vunpack.c.l.b16 %v434
    %v1308 = vunpack.c.h.b16 %v434
    %v1309 = vunpack.c.l.b16 %v435
    %v1310 = vunpack.c.l.b16 %v436
    %v1311 = vunpack.c.h.b16 %v436
    %v1312 = vunpack.c.l.b16 %v437
    %v1313 = vunpack.c.h.b16 %v437
    %v1314 = vunpack.c.l.b16 %v438
    %v1315 = vunpack.c.l.b16 %v439
    %v1316 = vunpack.c.h.b16 %v439
    %v1317 = vunpack.c.l.b16 %v440
    %v1318 = vunpack.c.h.b16 %v440
    %v1319 = vunpack.c.l.b16 %v441
    %v1320 = vunpack.c.l.b16 %v442
    %v1321 = vunpack.c.h.b16 %v442
    %v1322 = vunpack.c.l.b16 %v443
    %v1323 = vunpack.c.h.b16 %v443
    %v1324 = vunpack.c.l.b16 %v444
    %v1325 = vunpack.c.l.b16 %v445
    %v1326 = vunpack.c.h.b16 %v445
    %v1327 = vunpack.c.l.b16 %v446
    %v1328 = vunpack.c.h.b16 %v446
    %v1329 = vunpack.c.l.b16 %v447
    %v1330 = vunpack.c.l.b16 %v448
    %v1331 = vunpack.c.h.b16 %v448
    %v1332 = vunpack.c.l.b16 %v449
    %v1333 = vunpack.c.h.b16 %v449
    %v1334 = vunpack.c.l.b16 %v450
    %v1335 = vunpack.c.l.b16 %v451
    %v1336 = vunpack.c.h.b16 %v451
    %v1337 = vunpack.c.l.b16 %v452
    %v1338 = vunpack.c.h.b16 %v452
    %v1339 = vunpack.c.l.b16 %v453
    %v1340 = vunpack.c.l.b16 %v454
    %v1341 = vunpack.c.h.b16 %v454
    %v1342 = vunpack.c.l.b16 %v455
    %v1343 = vunpack.c.h.b16 %v455
    %v1344 = vunpack.c.l.b16 %v456
    %v1345 = vunpack.c.l.b16 %v457
    %v1346 = vunpack.c.h.b16 %v457
    %v1347 = vunpack.c.l.b16 %v458
    %v1348 = vunpack.c.h.b16 %v458
    %v1349 = vunpack.c.l.b16 %v459
    %v1350 = vunpack.c.l.b16 %v460
    %v1351 = vunpack.c.h.b16 %v460
    %v1352 = vunpack.c.l.b16 %v461
    %v1353 = vunpack.c.h.b16 %v461
    %v1354 = vunpack.c.l.b16 %v462
    %v1355 = vunpack.c.l.b16 %v463
    %v1356 = vunpack.c.h.b16 %v463
    %v1357 = vunpack.c.l.b16 %v464
    %v1358 = vunpack.c.h.b16 %v464
    %v1359 = vunpack.c.l.b16 %v465
    %v1360 = vunpack.c.l.b16 %v466
    %v1361 = vunpack.c.h.b16 %v466
    %v1362 = vunpack.c.l.b16 %v467
    %v1363 = vunpack.c.h.b16 %v467
    %v1364 = vunpack.c.l.b16 %v468
    %v1365 = vunpack.c.l.b16 %v469
    %v1366 = vunpack.c.h.b16 %v469
    %v1367 = vunpack.c.l.b16 %v470
    %v1368 = vunpack.c.h.b16 %v470
    %v1369 = vunpack.c.l.b16 %v471
    %v1370 = vunpack.c.l.b16 %v472
    %v1371 = vunpack.c.h.b16 %v472
    %v1372 = vunpack.c.l.b16 %v473
    %v1373 = vunpack.c.h.b16 %v473
    %v1374 = vunpack.c.l.b16 %v474
    %v1375 = vunpack.c.l.b16 %v475
    %v1376 = vunpack.c.h.b16 %v475
    %v1377 = vunpack.c.l.b16 %v476
    %v1378 = vunpack.c.h.b16 %v476
    %v1379 = vunpack.c.l.b16 %v477
    %v1380 = vunpack.c.l.b16 %v478
    %v1381 = vunpack.c.h.b16 %v478
    %v1382 = vunpack.c.l.b16 %v479
    %v1383 = vunpack.c.h.b16 %v479
    %v1384 = vunpack.c.l.b16 %v480
    %v1385 = vunpack.c.l.b16 %v481
    %v1386 = vunpack.c.h.b16 %v481
    %v1387 = vunpack.c.l.b16 %v482
    %v1388 = vunpack.c.h.b16 %v482
    %v1389 = vunpack.c.l.b16 %v483
    %v1390 = vunpack.c.l.b16 %v484
    %v1391 = vunpack.c.h.b16 %v484
    %v1392 = vunpack.c.l.b16 %v485
    %v1393 = vunpack.c.h.b16 %v485
    %v1394 = vunpack.c.l.b16 %v486
    %v1395 = vunpack.c.l.b16 %v487
    %v1396 = vunpack.c.h.b16 %v487
    %v1397 = vunpack.c.l.b16 %v488
    %v1398 = vunpack.c.h.b16 %v488
    %v1399 = vunpack.c.l.b16 %v489
    %v1400 = vunpack.c.l.b16 %v490
    %v1401 = vunpack.c.h.b16 %v490
    %v1402 = vunpack.c.l.b16 %v491
    %v1403 = vunpack.c.h.b16 %v491
    %v1404 = vunpack.c.l.b16 %v492
    %v1405 = vunpack.c.l.b16 %v493
    %v1406 = vunpack.c.h.b16 %v493
    %v1407 = vunpack.c.l.b16 %v494
    %v1408 = vunpack.c.h.b16 %v494
    %v1409 = vunpack.c.l.b16 %v495
    %v1410 = vunpack.c.l.b16 %v496
    %v1411 = vunpack.c.h.b16 %v496
    %v1412 = vunpack.c.l.b16 %v497
    %v1413 = vunpack.c.h.b16 %v497
    %v1414 = vunpack.c.l.b16 %v498
    %v1415 = vunpack.c.l.b16 %v499
    %v1416 = vunpack.c.h.b16 %v499
    %v1417 = vunpack.c.l.b16 %v500
    %v1418 = vunpack.c.h.b16 %v500
    %v1419 = vunpack.c.l.b16 %v501
    %v1420 = vunpack.c.l.b16 %v502
    %v1421 = vunpack.c.h.b16 %v502
    %v1422 = vunpack.c.l.b16 %v503
    %v1423 = vunpack.c.h.b16 %v503
    %v1424 = vunpack.c.l.b16 %v504
    %v1425 = vunpack.c.l.b16 %v505
    %v1426 = vunpack.c.h.b16 %v505
    %v1427 = vunpack.c.l.b16 %v506
    %v1428 = vunpack.c.h.b16 %v506
    %v1429 = vunpack.c.l.b16 %v507
    %v1430 = vunpack.c.l.b16 %v508
    %v1431 = vunpack.c.h.b16 %v508
    %v1432 = vunpack.c.l.b16 %v509
    %v1433 = vunpack.c.h.b16 %v509
    %v1434 = vunpack.c.l.b16 %v510
    %v1435 = vunpack.c.l.b16 %v511
    %v1436 = vunpack.c.h.b16 %v511
    %v1437 = vunpack.c.l.b16 %v512
    %v1438 = vunpack.c.h.b16 %v512
    %v1439 = vunpack.c.l.b16 %v513
    %v1440 = vunpack.c.l.b16 %v514
    %v1441 = vunpack.c.h.b16 %v514
    %v1442 = vunpack.c.l.b16 %v515
    %v1443 = vunpack.c.h.b16 %v515
    %v1444 = vunpack.c.l.b16 %v516
    %v1445 = vunpack.c.l.b16 %v517
    %v1446 = vunpack.c.h.b16 %v517
    %v1447 = vunpack.c.l.b16 %v518
    %v1448 = vunpack.c.h.b16 %v518
    %v1449 = vunpack.c.l.b16 %v519
    %v1450 = vunpack.c.l.b16 %v520
    %v1451 = vunpack.c.h.b16 %v520
    %v1452 = vunpack.c.l.b16 %v521
    %v1453 = vunpack.c.h.b16 %v521
    %v1454 = vunpack.c.l.b16 %v522
    %v1455 = vpack.c.b16 %v900, %v895
    %v1456 = vpack.c.b16 %v901, %v896
    %v1457 = vpack.c.b16 %v902, %v897
    %v1458 = vpack.c.b16 %v903, %v898
    %v1459 = vpack.c.b16 %v904, %v899
    %v1460 = vpack.c.b16 %v910, %v905
    %v1461 = vpack.c.b16 %v911, %v906
    %v1462 = vpack.c.b16 %v912, %v907
    %v1463 = vpack.c.b16 %v913, %v908
    %v1464 = vpack.c.b16 %v914, %v909
    %v1465 = vpack.c.b16 %v920, %v915
    %v1466 = vpack.c.b16 %v921, %v916
    %v1467 = vpack.c.b16 %v922, %v917
    %v1468 = vpack.c.b16 %v923, %v918
    %v1469 = vpack.c.b16 %v924, %v919
    %v1470 = vpack.c.b16 %v930, %v925
    %v1471 = vpack.c.b16 %v931, %v926
    %v1472 = vpack.c.b16 %v932, %v927
    %v1473 = vpack.c.b16 %v933, %v928
    %v1474 = vpack.c.b16 %v934, %v929
    %v1475 = vpack.c.b16 %v940, %v935
    %v1476 = vpack.c.b16 %v941, %v936
    %v1477 = vpack.c.b16 %v942, %v937
    %v1478 = vpack.c.b16 %v943, %v938
    %v1479 = vpack.c.b16 %v944, %v939
    %v1480 = vpack.c.b16 %v950, %v945
    %v1481 = vpack.c.b16 %v951, %v946
    %v1482 = vpack.c.b16 %v952, %v947
    %v1483 = vpack.c.b16 %v953, %v948
    %v1484 = vpack.c.b16 %v954, %v949
    %v1485 = vpack.c.b16 %v960, %v955
    %v1486 = vpack.c.b16 %v961, %v956
    %v1487 = vpack.c.b16 %v962, %v957
    %v1488 = vpack.c.b16 %v963, %v958
    %v1489 = vpack.c.b16 %v964, %v959
    %v1490 = vpack.c.b16 %v970, %v965
    %v1491 = vpack.c.b16 %v971, %v966
    %v1492 = vpack.c.b16 %v972, %v967
    %v1493 = vpack.c.b16 %v973, %v968
    %v1494 = vpack.c.b16 %v974, %v969
    %v1495 = vpack.c.b16 %v980, %v975
    %v1496 = vpack.c.b16 %v981, %v976
    %v1497 = vpack.c.b16 %v982, %v977
    %v1498 = vpack.c.b16 %v983, %v978
    %v1499 = vpack.c.b16 %v984, %v979
    %v1500 = vpack.c.b16 %v990, %v985
    %v1501 = vpack.c.b16 %v991, %v986
    %v1502 = vpack.c.b16 %v992, %v987
    %v1503 = vpack.c.b16 %v993, %v988
    %v1504 = vpack.c.b16 %v994, %v989
    %v1505 = vpack.c.b16 %v1000, %v995
    %v1506 = vpack.c.b16 %v1001, %v996
    %v1507 = vpack.c.b16 %v1002, %v997
    %v1508 = vpack.c.b16 %v1003, %v998
    %v1509 = vpack.c.b16 %v1004, %v999
    %v1510 = vpack.c.b16 %v1010, %v1005
    %v1511 = vpack.c.b16 %v1011, %v1006
    %v1512 = vpack.c.b16 %v1012, %v1007
    %v1513 = vpack.c.b16 %v1013, %v1008
    %v1514 = vpack.c.b16 %v1014, %v1009
    %v1515 = vpack.c.b16 %v1020, %v1015
    %v1516 = vpack.c.b16 %v1021, %v1016
    %v1517 = vpack.c.b16 %v1022, %v1017
    %v1518 = vpack.c.b16 %v1023, %v1018
    %v1519 = vpack.c.b16 %v1024, %v1019
    %v1520 = vpack.c.b16 %v1030, %v1025
    %v1521 = vpack.c.b16 %v1031, %v1026
    %v1522 = vpack.c.b16 %v1032, %v1027
    %v1523 = vpack.c.b16 %v1033, %v1028
    %v1524 = vpack.c.b16 %v1034, %v1029
    %v1525 = vpack.c.b16 %v1040, %v1035
    %v1526 = vpack.c.b16 %v1041, %v1036
    %v1527 = vpack.c.b16 %v1042, %v1037
    %v1528 = vpack.c.b16 %v1043, %v1038
    %v1529 = vpack.c.b16 %v1044, %v1039
    %v1530 = vpack.c.b16 %v1050, %v1045
    %v1531 = vpack.c.b16 %v1051, %v1046
    %v1532 = vpack.c.b16 %v1052, %v1047
    %v1533 = vpack.c.b16 %v1053, %v1048
    %v1534 = vpack.c.b16 %v1054, %v1049
    %v1535 = vpack.c.b16 %v1060, %v1055
    %v1536 = vpack.c.b16 %v1061, %v1056
    %v1537 = vpack.c.b16 %v1062, %v1057
    %v1538 = vpack.c.b16 %v1063, %v1058
    %v1539 = vpack.c.b16 %v1064, %v1059
    %v1540 = vpack.c.b16 %v1070, %v1065
    %v1541 = vpack.c.b16 %v1071, %v1066
    %v1542 = vpack.c.b16 %v1072, %v1067
    %v1543 = vpack.c.b16 %v1073, %v1068
    %v1544 = vpack.c.b16 %v1074, %v1069
    %v1545 = vpack.c.b16 %v1080, %v1075
    %v1546 = vpack.c.b16 %v1081, %v1076
    %v1547 = vpack.c.b16 %v1082, %v1077
    %v1548 = vpack.c.b16 %v1083, %v1078
    %v1549 = vpack.c.b16 %v1084, %v1079
    %v1550 = vpack.c.b16 %v1090, %v1085
    %v1551 = vpack.c.b16 %v1091, %v1086
    %v1552 = vpack.c.b16 %v1092, %v1087
    %v1553 = vpack.c.b16 %v1093, %v1088
    %v1554 = vpack.c.b16 %v1094, %v1089
    %v1555 = vpack.c.b16 %v1100, %v1095
    %v1556 = vpack.c.b16 %v1101, %v1096
    %v1557 = vpack.c.b16 %v1102, %v1097
    %v1558 = vpack.c.b16 %v1103, %v1098
    %v1559 = vpack.c.b16 %v1104, %v1099
    %v1560 = vpack.c.b16 %v1110, %v1105
    %v1561 = vpack.c.b16 %v1111, %v1106
    %v1562 = vpack.c.b16 %v1112, %v1107
    %v1563 = vpack.c.b16 %v1113, %v1108
    %v1564 = vpack.c.b16 %v1114, %v1109
    %v1565 = vpack.c.b16 %v1120, %v1115
    %v1566 = vpack.c.b16 %v1121, %v1116
    %v1567 = vpack.c.b16 %v1122, %v1117
    %v1568 = vpack.c.b16 %v1123, %v1118
    %v1569 = vpack.c.b16 %v1124, %v1119
    %v1570 = vpack.c.b16 %v1130, %v1125
    %v1571 = vpack.c.b16 %v1131, %v1126
    %v1572 = vpack.c.b16 %v1132, %v1127
    %v1573 = vpack.c.b16 %v1133, %v1128
    %v1574 = vpack.c.b16 %v1134, %v1129
    %v1575 = vpack.c.b16 %v1140, %v1135
    %v1576 = vpack.c.b16 %v1141, %v1136
    %v1577 = vpack.c.b16 %v1142, %v1137
    %v1578 = vpack.c.b16 %v1143, %v1138
    %v1579 = vpack.c.b16 %v1144, %v1139
    %v1580 = vpack.c.b16 %v1150, %v1145
    %v1581 = vpack.c.b16 %v1151, %v1146
    %v1582 = vpack.c.b16 %v1152, %v1147
    %v1583 = vpack.c.b16 %v1153, %v1148
    %v1584 = vpack.c.b16 %v1154, %v1149
    %v1585 = vpack.c.b16 %v1160, %v1155
    %v1586 = vpack.c.b16 %v1161, %v1156
    %v1587 = vpack.c.b16 %v1162, %v1157
    %v1588 = vpack.c.b16 %v1163, %v1158
    %v1589 = vpack.c.b16 %v1164, %v1159
    %v1590 = vpack.c.b16 %v1170, %v1165
    %v1591 = vpack.c.b16 %v1171, %v1166
    %v1592 = vpack.c.b16 %v1172, %v1167
    %v1593 = vpack.c.b16 %v1173, %v1168
    %v1594 = vpack.c.b16 %v1174, %v1169
    %v1595 = vpack.c.b16 %v1180, %v1175
    %v1596 = vpack.c.b16 %v1181, %v1176
    %v1597 = vpack.c.b16 %v1182, %v1177
    %v1598 = vpack.c.b16 %v1183, %v1178
    %v1599 = vpack.c.b16 %v1184, %v1179
    %v1600 = vpack.c.b16 %v1190, %v1185
    %v1601 = vpack.c.b16 %v1191, %v1186
    %v1602 = vpack.c.b16 %v1192, %v1187
    %v1603 = vpack.c.b16 %v1193, %v1188
    %v1604 = vpack.c.b16 %v1194, %v1189
    %v1605 = vpack.c.b16 %v1200, %v1195
    %v1606 = vpack.c.b16 %v1201, %v1196
    %v1607 = vpack.c.b16 %v1202, %v1197
    %v1608 = vpack.c.b16 %v1203, %v1198
    %v1609 = vpack.c.b16 %v1204, %v1199
    %v1610 = vpack.c.b16 %v1210, %v1205
    %v1611 = vpack.c.b16 %v1211, %v1206
    %v1612 = vpack.c.b16 %v1212, %v1207
    %v1613 = vpack.c.b16 %v1213, %v1208
    %v1614 = vpack.c.b16 %v1214, %v1209
    %v1615 = vpack.c.b16 %v1220, %v1215
    %v1616 = vpack.c.b16 %v1221, %v1216
    %v1617 = vpack.c.b16 %v1222, %v1217
    %v1618 = vpack.c.b16 %v1223, %v1218
    %v1619 = vpack.c.b16 %v1224, %v1219
    %v1620 = vpack.c.b16 %v1230, %v1225
    %v1621 = vpack.c.b16 %v1231, %v1226
    %v1622 = vpack.c.b16 %v1232, %v1227
    %v1623 = vpack.c.b16 %v1233, %v1228
    %v1624 = vpack.c.b16 %v1234, %v1229
    %v1625 = vpack.c.b16 %v1240, %v1235
    %v1626 = vpack.c.b16 %v1241, %v1236
    %v1627 = vpack.c.b16 %v1242, %v1237
    %v1628 = vpack.c.b16 %v1243, %v1238
    %v1629 = vpack.c.b16 %v1244, %v1239
    %v1630 = vpack.c.b16 %v1250, %v1245
    %v1631 = vpack.c.b16 %v1251, %v1246
    %v1632 = vpack.c.b16 %v1252, %v1247
    %v1633 = vpack.c.b16 %v1253, %v1248
    %v1634 = vpack.c.b16 %v1254, %v1249
    %v1635 = vpack.c.b16 %v1260, %v1255
    %v1636 = vpack.c.b16 %v1261, %v1256
    %v1637 = vpack.c.b16 %v1262, %v1257
    %v1638 = vpack.c.b16 %v1263, %v1258
    %v1639 = vpack.c.b16 %v1264, %v1259
    %v1640 = vpack.c.b16 %v1270, %v1265
    %v1641 = vpack.c.b16 %v1271, %v1266
    %v1642 = vpack.c.b16 %v1272, %v1267
    %v1643 = vpack.c.b16 %v1273, %v1268
    %v1644 = vpack.c.b16 %v1274, %v1269
    %v1645 = vpack.c.b16 %v1280, %v1275
    %v1646 = vpack.c.b16 %v1281, %v1276
    %v1647 = vpack.c.b16 %v1282, %v1277
    %v1648 = vpack.c.b16 %v1283, %v1278
    %v1649 = vpack.c.b16 %v1284, %v1279
    %v1650 = vpack.c.b16 %v1290, %v1285
    %v1651 = vpack.c.b16 %v1291, %v1286
    %v1652 = vpack.c.b16 %v1292, %v1287
    %v1653 = vpack.c.b16 %v1293, %v1288
    %v1654 = vpack.c.b16 %v1294, %v1289
    %v1655 = vpack.c.b16 %v1300, %v1295
    %v1656 = vpack.c.b16 %v1301, %v1296
    %v1657 = vpack.c.b16 %v1302, %v1297
    %v1658 = vpack.c.b16 %v1303, %v1298
    %v1659 = vpack.c.b16 %v1304, %v1299
    %v1660 = vpack.c.b16 %v1310, %v1305
    %v1661 = vpack.c.b16 %v1311, %v1306
    %v1662 = vpack.c.b16 %v1312, %v1307
    %v1663 = vpack.c.b16 %v1313, %v1308
    %v1664 = vpack.c.b16 %v1314, %v1309
    %v1665 = vpack.c.b16 %v1320, %v1315
    %v1666 = vpack.c.b16 %v1321, %v1316
    %v1667 = vpack.c.b16 %v1322, %v1317
    %v1668 = vpack.c.b16 %v1323, %v1318
    %v1669 = vpack.c.b16 %v1324, %v1319
    %v1670 = vpack.c.b16 %v1330, %v1325
    %v1671 = vpack.c.b16 %v1331, %v1326
    %v1672 = vpack.c.b16 %v1332, %v1327
    %v1673 = vpack.c.b16 %v1333, %v1328
    %v1674 = vpack.c.b16 %v1334, %v1329
    %v1675 = vpack.c.b16 %v1340, %v1335
    %v1676 = vpack.c.b16 %v1341, %v1336
    %v1677 = vpack.c.b16 %v1342, %v1337
    %v1678 = vpack.c.b16 %v1343, %v1338
    %v1679 = vpack.c.b16 %v1344, %v1339
    %v1680 = vpack.c.b16 %v1350, %v1345
    %v1681 = vpack.c.b16 %v1351, %v1346
    %v1682 = vpack.c.b16 %v1352, %v1347
    %v1683 = vpack.c.b16 %v1353, %v1348
    %v1684 = vpack.c.b16 %v1354, %v1349
    %v1685 = vpack.c.b16 %v1360, %v1355
    %v1686 = vpack.c.b16 %v1361, %v1356
    %v1687 = vpack.c.b16 %v1362, %v1357
    %v1688 = vpack.c.b16 %v1363, %v1358
    %v1689 = vpack.c.b16 %v1364, %v1359
    %v1690 = vpack.c.b16 %v1370, %v1365
    %v1691 = vpack.c.b16 %v1371, %v1366
    %v1692 = vpack.c.b16 %v1372, %v1367
    %v1693 = vpack.c.b16 %v1373, %v1368
    %v1694 = vpack.c.b16 %v1374, %v1369
    %v1695 = vpack.c.b16 %v1380, %v1375
    %v1696 = vpack.c.b16 %v1381, %v1376
    %v1697 = vpack.c.b16 %v1382, %v1377
    %v1698 = vpack.c.b16 %v1383, %v1378
    %v1699 = vpack.c.b16 %v1384, %v1379
    %v1700 = vpack.c.b16 %v1390, %v1385
    %v1701 = vpack.c.b16 %v1391, %v1386
    %v1702 = vpack.c.b16 %v1392, %v1387
    %v1703 = vpack.c.b16 %v1393, %v1388
    %v1704 = vpack.c.b16 %v1394, %v1389
    %v1705 = vpack.c.b16 %v1400, %v1395
    %v1706 = vpack.c.b16 %v1401, %v1396
    %v1707 = vpack.c.b16 %v1402, %v1397
    %v1708 = vpack.c.b16 %v1403, %v1398
    %v1709 = vpack.c.b16 %v1404, %v1399
    %v1710 = vpack.c.b16 %v1410, %v1405
    %v1711 = vpack.c.b16 %v1411, %v1406
    %v1712 = vpack.c.b16 %v1412, %v1407
    %v1713 = vpack.c.b16 %v1413, %v1408
    %v1714 = vpack.c.b16 %v1414, %v1409
    %v1715 = vpack.c.b16 %v1420, %v1415
    %v1716 = vpack.c.b16 %v1421, %v1416
    %v1717 = vpack.c.b16 %v1422, %v1417
    %v1718 = vpack.c.b16 %v1423, %v1418
    %v1719 = vpack.c.b16 %v1424, %v1419
    %v1720 = vpack.c.b16 %v1430, %v1425
    %v1721 = vpack.c.b16 %v1431, %v1426
    %v1722 = vpack.c.b16 %v1432, %v1427
    %v1723 = vpack.c.b16 %v1433, %v1428
    %v1724 = vpack.c.b16 %v1434, %v1429
    %v1725 = vpack.c.b16 %v1440, %v1435
    %v1726 = vpack.c.b16 %v1441, %v1436
    %v1727 = vpack.c.b16 %v1442, %v1437
    %v1728 = vpack.c.b16 %v1443, %v1438
    %v1729 = vpack.c.b16 %v1444, %v1439
    %v1730 = vpack.c.b16 %v1450, %v1445
    %v1731 = vpack.c.b16 %v1451, %v1446
    %v1732 = vpack.c.b16 %v1452, %v1447
    %v1733 = vpack.c.b16 %v1453, %v1448
    %v1734 = vpack.c.b16 %v1454, %v1449
    %2015 = vmatprep.subr.bf16.mxu0 %v1491
    %2016 = vmatpush1.bf16.msra.mxu0 %v1490
    %2017 = vmatprep.subr.bf16.mxu0 %v1486
    %2018 = vmatpush1.bf16.msra.mxu0 %v1485
    %2019 = vmatprep.subr.bf16.mxu0 %v1481
    %2020 = vmatpush1.bf16.msra.mxu0 %v1480
    %2021 = vmatprep.subr.bf16.mxu0 %v1476
    %2022 = vmatpush1.bf16.msra.mxu0 %v1475
    %2023 = vmatprep.subr.bf16.mxu0 %v1471
    %2024 = vmatpush1.bf16.msra.mxu0 %v1470
    %2025 = vmatprep.subr.bf16.mxu0 %v1466
    %2026 = vmatpush1.bf16.msra.mxu0 %v1465
    %2027 = vmatprep.subr.bf16.mxu0 %v1461
    %2028 = vmatpush1.bf16.msra.mxu0 %v1460
    %2029 = vmatprep.subr.bf16.mxu0 %v1456
    %2030 = vmatpush1.bf16.msra.mxu0 %v1455
    %2031 = vmatprep.subr.bf16.mxu0 %v1531
    %2032 = vmatpush2.bf16.msra.mxu0 %v1530
    %2033 = vmatprep.subr.bf16.mxu0 %v1526
    %2034 = vmatpush2.bf16.msra.mxu0 %v1525
    %2035 = vmatprep.subr.bf16.mxu0 %v1521
    %2036 = vmatpush2.bf16.msra.mxu0 %v1520
    %2037 = vmatprep.subr.bf16.mxu0 %v1516
    %2038 = vmatpush2.bf16.msra.mxu0 %v1515
    %2039 = vmatprep.subr.bf16.mxu0 %v1511
    %2040 = vmatpush2.bf16.msra.mxu0 %v1510
    %2041 = vmatprep.subr.bf16.mxu0 %v1506
    %2042 = vmatpush2.bf16.msra.mxu0 %v1505
    %2043 = vmatprep.subr.bf16.mxu0 %v1501
    %2044 = vmatpush2.bf16.msra.mxu0 %v1500
    %2045 = vmatprep.subr.bf16.mxu0 %v1496
    %2046 = vmatpush2.bf16.msra.mxu0 %v1495
    %2047 = vmatprep.mubr.bf16.mxu0 %v546
    %2048 = vmatmul.mubr.bf16.gmra.mxu0 %v545
    %v2049 = vpop.f32.mrf.mxu0
    %v2050 = vadd.f32 0.0, %v2049
    %v2051 = vpop.f32.mrf.mxu0
    %v2052 = vadd.f32 0.0, %v2051
    %v2053 = vpop.f32.mrf.mxu0
    %v2054 = vadd.f32 0.0, %v2053
    %v2055 = vpop.f32.mrf.mxu0
    %v2056 = vadd.f32 0.0, %v2055
    %2057 = vdwg.mxu0
    %2058 = vmatprep.subr.bf16.mxu0 %v1571
    %2059 = vmatpush1.bf16.msra.mxu0 %v1570
    %2060 = vmatprep.subr.bf16.mxu0 %v1566
    %2061 = vmatpush1.bf16.msra.mxu0 %v1565
    %2062 = vmatprep.subr.bf16.mxu0 %v1561
    %2063 = vmatpush1.bf16.msra.mxu0 %v1560
    %2064 = vmatprep.subr.bf16.mxu0 %v1556
    %2065 = vmatpush1.bf16.msra.mxu0 %v1555
    %2066 = vmatprep.subr.bf16.mxu0 %v1551
    %2067 = vmatpush1.bf16.msra.mxu0 %v1550
    %2068 = vmatprep.subr.bf16.mxu0 %v1546
    %2069 = vmatpush1.bf16.msra.mxu0 %v1545
    %2070 = vmatprep.subr.bf16.mxu0 %v1541
    %2071 = vmatpush1.bf16.msra.mxu0 %v1540
    %2072 = vmatprep.subr.bf16.mxu0 %v1536
    %2073 = vmatpush1.bf16.msra.mxu0 %v1535
    %2074 = vmatprep.subr.bf16.mxu0 %v1611
    %2075 = vmatpush2.bf16.msra.mxu0 %v1610
    %2076 = vmatprep.subr.bf16.mxu0 %v1606
    %2077 = vmatpush2.bf16.msra.mxu0 %v1605
    %2078 = vmatprep.subr.bf16.mxu0 %v1601
    %2079 = vmatpush2.bf16.msra.mxu0 %v1600
    %2080 = vmatprep.subr.bf16.mxu0 %v1596
    %2081 = vmatpush2.bf16.msra.mxu0 %v1595
    %2082 = vmatprep.subr.bf16.mxu0 %v1591
    %2083 = vmatpush2.bf16.msra.mxu0 %v1590
    %2084 = vmatprep.subr.bf16.mxu0 %v1586
    %2085 = vmatpush2.bf16.msra.mxu0 %v1585
    %2086 = vmatprep.subr.bf16.mxu0 %v1581
    %2087 = vmatpush2.bf16.msra.mxu0 %v1580
    %2088 = vmatprep.subr.bf16.mxu0 %v1576
    %2089 = vmatpush2.bf16.msra.mxu0 %v1575
    %2090 = vmatprep.mubr.bf16.mxu0 %v548
    %2091 = vmatmul.mubr.bf16.gmra.mxu0 %v547
    %v2092 = vpop.f32.mrf.mxu0
    %v2093 = vadd.f32 %v2050, %v2092
    %v2094 = vpop.f32.mrf.mxu0
    %v2095 = vadd.f32 %v2052, %v2094
    %v2096 = vpop.f32.mrf.mxu0
    %v2097 = vadd.f32 %v2054, %v2096
    %v2098 = vpop.f32.mrf.mxu0
    %v2099 = vadd.f32 %v2056, %v2098
    %2100 = vdwg.mxu0
    %2101 = vmatprep.subr.bf16.mxu0 %v1651
    %2102 = vmatpush1.bf16.msra.mxu0 %v1650
    %2103 = vmatprep.subr.bf16.mxu0 %v1646
    %2104 = vmatpush1.bf16.msra.mxu0 %v1645
    %2105 = vmatprep.subr.bf16.mxu0 %v1641
    %2106 = vmatpush1.bf16.msra.mxu0 %v1640
    %2107 = vmatprep.subr.bf16.mxu0 %v1636
    %2108 = vmatpush1.bf16.msra.mxu0 %v1635
    %2109 = vmatprep.subr.bf16.mxu0 %v1631
    %2110 = vmatpush1.bf16.msra.mxu0 %v1630
    %2111 = vmatprep.subr.bf16.mxu0 %v1626
    %2112 = vmatpush1.bf16.msra.mxu0 %v1625
    %2113 = vmatprep.subr.bf16.mxu0 %v1621
    %2114 = vmatpush1.bf16.msra.mxu0 %v1620
    %2115 = vmatprep.subr.bf16.mxu0 %v1616
    %2116 = vmatpush1.bf16.msra.mxu0 %v1615
    %2117 = vmatprep.subr.bf16.mxu0 %v1691
    %2118 = vmatpush2.bf16.msra.mxu0 %v1690
    %2119 = vmatprep.subr.bf16.mxu0 %v1686
    %2120 = vmatpush2.bf16.msra.mxu0 %v1685
    %2121 = vmatprep.subr.bf16.mxu0 %v1681
    %2122 = vmatpush2.bf16.msra.mxu0 %v1680
    %2123 = vmatprep.subr.bf16.mxu0 %v1676
    %2124 = vmatpush2.bf16.msra.mxu0 %v1675
    %2125 = vmatprep.subr.bf16.mxu0 %v1671
    %2126 = vmatpush2.bf16.msra.mxu0 %v1670
    %2127 = vmatprep.subr.bf16.mxu0 %v1666
    %2128 = vmatpush2.bf16.msra.mxu0 %v1665
    %2129 = vmatprep.subr.bf16.mxu0 %v1661
    %2130 = vmatpush2.bf16.msra.mxu0 %v1660
    %2131 = vmatprep.subr.bf16.mxu0 %v1656
    %2132 = vmatpush2.bf16.msra.mxu0 %v1655
    %2133 = vmatprep.mubr.bf16.mxu0 %v550
    %2134 = vmatmul.mubr.bf16.gmra.mxu0 %v549
    %v2135 = vpop.f32.mrf.mxu0
    %v2136 = vadd.f32 %v2093, %v2135
    %v2137 = vpop.f32.mrf.mxu0
    %v2138 = vadd.f32 %v2095, %v2137
    %v2139 = vpop.f32.mrf.mxu0
    %v2140 = vadd.f32 %v2097, %v2139
    %v2141 = vpop.f32.mrf.mxu0
    %v2142 = vadd.f32 %v2099, %v2141
    %2143 = vdwg.mxu0
    %2144 = vmatprep.subr.bf16.mxu0 %v1731
    %2145 = vmatpush1.bf16.msra.mxu0 %v1730
    %2146 = vmatprep.subr.bf16.mxu0 %v1726
    %2147 = vmatpush1.bf16.msra.mxu0 %v1725
    %2148 = vmatprep.subr.bf16.mxu0 %v1721
    %2149 = vmatpush1.bf16.msra.mxu0 %v1720
    %2150 = vmatprep.subr.bf16.mxu0 %v1716
    %2151 = vmatpush1.bf16.msra.mxu0 %v1715
    %2152 = vmatprep.subr.bf16.mxu0 %v1711
    %2153 = vmatpush1.bf16.msra.mxu0 %v1710
    %2154 = vmatprep.subr.bf16.mxu0 %v1706
    %2155 = vmatpush1.bf16.msra.mxu0 %v1705
    %2156 = vmatprep.subr.bf16.mxu0 %v1701
    %2157 = vmatpush1.bf16.msra.mxu0 %v1700
    %2158 = vmatprep.subr.bf16.mxu0 %v1696
    %2159 = vmatpush1.bf16.msra.mxu0 %v1695
    %2160 = vmatprep.subr.bf16.mxu0 0
    %2161 = vmatpush2.bf16.msra.mxu0 0
    %2162 = vmatprep.subr.bf16.mxu0 0
    %2163 = vmatpush2.bf16.msra.mxu0 0
    %2164 = vmatprep.subr.bf16.mxu0 0
    %2165 = vmatpush2.bf16.msra.mxu0 0
    %2166 = vmatprep.subr.bf16.mxu0 0
    %2167 = vmatpush2.bf16.msra.mxu0 0
    %2168 = vmatprep.subr.bf16.mxu0 0
    %2169 = vmatpush2.bf16.msra.mxu0 0
    %2170 = vmatprep.subr.bf16.mxu0 0
    %2171 = vmatpush2.bf16.msra.mxu0 0
    %2172 = vmatprep.subr.bf16.mxu0 0
    %2173 = vmatpush2.bf16.msra.mxu0 0
    %2174 = vmatprep.subr.bf16.mxu0 0
    %2175 = vmatpush2.bf16.msra.mxu0 0
    %2176 = vmatprep.mubr.bf16.mxu0 0
    %2177 = vmatmul.mubr.bf16.gmra.mxu0 %v551
    %v2178 = vpop.f32.mrf.mxu0
    %v2179 = vadd.f32 %v2136, %v2178
    %v2180 = vpop.f32.mrf.mxu0
    %v2181 = vadd.f32 %v2138, %v2180
    %v2182 = vpop.f32.mrf.mxu0
    %v2183 = vadd.f32 %v2140, %v2182
    %v2184 = vpop.f32.mrf.mxu0
    %v2185 = vadd.f32 %v2142, %v2184
    %2186 = vdwg.mxu0
    %2187 = vmatprep.subr.bf16.mxu0 %v1493
    %2188 = vmatpush1.bf16.msra.mxu0 %v1492
    %2189 = vmatprep.subr.bf16.mxu0 %v1488
    %2190 = vmatpush1.bf16.msra.mxu0 %v1487
    %2191 = vmatprep.subr.bf16.mxu0 %v1483
    %2192 = vmatpush1.bf16.msra.mxu0 %v1482
    %2193 = vmatprep.subr.bf16.mxu0 %v1478
    %2194 = vmatpush1.bf16.msra.mxu0 %v1477
    %2195 = vmatprep.subr.bf16.mxu0 %v1473
    %2196 = vmatpush1.bf16.msra.mxu0 %v1472
    %2197 = vmatprep.subr.bf16.mxu0 %v1468
    %2198 = vmatpush1.bf16.msra.mxu0 %v1467
    %2199 = vmatprep.subr.bf16.mxu0 %v1463
    %2200 = vmatpush1.bf16.msra.mxu0 %v1462
    %2201 = vmatprep.subr.bf16.mxu0 %v1458
    %2202 = vmatpush1.bf16.msra.mxu0 %v1457
    %2203 = vmatprep.subr.bf16.mxu0 %v1533
    %2204 = vmatpush2.bf16.msra.mxu0 %v1532
    %2205 = vmatprep.subr.bf16.mxu0 %v1528
    %2206 = vmatpush2.bf16.msra.mxu0 %v1527
    %2207 = vmatprep.subr.bf16.mxu0 %v1523
    %2208 = vmatpush2.bf16.msra.mxu0 %v1522
    %2209 = vmatprep.subr.bf16.mxu0 %v1518
    %2210 = vmatpush2.bf16.msra.mxu0 %v1517
    %2211 = vmatprep.subr.bf16.mxu0 %v1513
    %2212 = vmatpush2.bf16.msra.mxu0 %v1512
    %2213 = vmatprep.subr.bf16.mxu0 %v1508
    %2214 = vmatpush2.bf16.msra.mxu0 %v1507
    %2215 = vmatprep.subr.bf16.mxu0 %v1503
    %2216 = vmatpush2.bf16.msra.mxu0 %v1502
    %2217 = vmatprep.subr.bf16.mxu0 %v1498
    %2218 = vmatpush2.bf16.msra.mxu0 %v1497
    %2219 = vmatprep.mubr.bf16.mxu0 %v546
    %2220 = vmatmul.mubr.bf16.gmra.mxu0 %v545
    %v2221 = vpop.f32.mrf.mxu0
    %v2222 = vadd.f32 0.0, %v2221
    %v2223 = vpop.f32.mrf.mxu0
    %v2224 = vadd.f32 0.0, %v2223
    %v2225 = vpop.f32.mrf.mxu0
    %v2226 = vadd.f32 0.0, %v2225
    %v2227 = vpop.f32.mrf.mxu0
    %v2228 = vadd.f32 0.0, %v2227
    %2229 = vdwg.mxu0
    %2230 = vmatprep.subr.bf16.mxu0 %v1573
    %2231 = vmatpush1.bf16.msra.mxu0 %v1572
    %2232 = vmatprep.subr.bf16.mxu0 %v1568
    %2233 = vmatpush1.bf16.msra.mxu0 %v1567
    %2234 = vmatprep.subr.bf16.mxu0 %v1563
    %2235 = vmatpush1.bf16.msra.mxu0 %v1562
    %2236 = vmatprep.subr.bf16.mxu0 %v1558
    %2237 = vmatpush1.bf16.msra.mxu0 %v1557
    %2238 = vmatprep.subr.bf16.mxu0 %v1553
    %2239 = vmatpush1.bf16.msra.mxu0 %v1552
    %2240 = vmatprep.subr.bf16.mxu0 %v1548
    %2241 = vmatpush1.bf16.msra.mxu0 %v1547
    %2242 = vmatprep.subr.bf16.mxu0 %v1543
    %2243 = vmatpush1.bf16.msra.mxu0 %v1542
    %2244 = vmatprep.subr.bf16.mxu0 %v1538
    %2245 = vmatpush1.bf16.msra.mxu0 %v1537
    %2246 = vmatprep.subr.bf16.mxu0 %v1613
    %2247 = vmatpush2.bf16.msra.mxu0 %v1612
    %2248 = vmatprep.subr.bf16.mxu0 %v1608
    %2249 = vmatpush2.bf16.msra.mxu0 %v1607
    %2250 = vmatprep.subr.bf16.mxu0 %v1603
    %2251 = vmatpush2.bf16.msra.mxu0 %v1602
    %2252 = vmatprep.subr.bf16.mxu0 %v1598
    %2253 = vmatpush2.bf16.msra.mxu0 %v1597
    %2254 = vmatprep.subr.bf16.mxu0 %v1593
    %2255 = vmatpush2.bf16.msra.mxu0 %v1592
    %2256 = vmatprep.subr.bf16.mxu0 %v1588
    %2257 = vmatpush2.bf16.msra.mxu0 %v1587
    %2258 = vmatprep.subr.bf16.mxu0 %v1583
    %2259 = vmatpush2.bf16.msra.mxu0 %v1582
    %2260 = vmatprep.subr.bf16.mxu0 %v1578
    %2261 = vmatpush2.bf16.msra.mxu0 %v1577
    %2262 = vmatprep.mubr.bf16.mxu0 %v548
    %2263 = vmatmul.mubr.bf16.gmra.mxu0 %v547
    %v2264 = vpop.f32.mrf.mxu0
    %v2265 = vadd.f32 %v2222, %v2264
    %v2266 = vpop.f32.mrf.mxu0
    %v2267 = vadd.f32 %v2224, %v2266
    %v2268 = vpop.f32.mrf.mxu0
    %v2269 = vadd.f32 %v2226, %v2268
    %v2270 = vpop.f32.mrf.mxu0
    %v2271 = vadd.f32 %v2228, %v2270
    %2272 = vdwg.mxu0
    %2273 = vmatprep.subr.bf16.mxu0 %v1653
    %2274 = vmatpush1.bf16.msra.mxu0 %v1652
    %2275 = vmatprep.subr.bf16.mxu0 %v1648
    %2276 = vmatpush1.bf16.msra.mxu0 %v1647
    %2277 = vmatprep.subr.bf16.mxu0 %v1643
    %2278 = vmatpush1.bf16.msra.mxu0 %v1642
    %2279 = vmatprep.subr.bf16.mxu0 %v1638
    %2280 = vmatpush1.bf16.msra.mxu0 %v1637
    %2281 = vmatprep.subr.bf16.mxu0 %v1633
    %2282 = vmatpush1.bf16.msra.mxu0 %v1632
    %2283 = vmatprep.subr.bf16.mxu0 %v1628
    %2284 = vmatpush1.bf16.msra.mxu0 %v1627
    %2285 = vmatprep.subr.bf16.mxu0 %v1623
    %2286 = vmatpush1.bf16.msra.mxu0 %v1622
    %2287 = vmatprep.subr.bf16.mxu0 %v1618
    %2288 = vmatpush1.bf16.msra.mxu0 %v1617
    %2289 = vmatprep.subr.bf16.mxu0 %v1693
    %2290 = vmatpush2.bf16.msra.mxu0 %v1692
    %2291 = vmatprep.subr.bf16.mxu0 %v1688
    %2292 = vmatpush2.bf16.msra.mxu0 %v1687
    %2293 = vmatprep.subr.bf16.mxu0 %v1683
    %2294 = vmatpush2.bf16.msra.mxu0 %v1682
    %2295 = vmatprep.subr.bf16.mxu0 %v1678
    %2296 = vmatpush2.bf16.msra.mxu0 %v1677
    %2297 = vmatprep.subr.bf16.mxu0 %v1673
    %2298 = vmatpush2.bf16.msra.mxu0 %v1672
    %2299 = vmatprep.subr.bf16.mxu0 %v1668
    %2300 = vmatpush2.bf16.msra.mxu0 %v1667
    %2301 = vmatprep.subr.bf16.mxu0 %v1663
    %2302 = vmatpush2.bf16.msra.mxu0 %v1662
    %2303 = vmatprep.subr.bf16.mxu0 %v1658
    %2304 = vmatpush2.bf16.msra.mxu0 %v1657
    %2305 = vmatprep.mubr.bf16.mxu0 %v550
    %2306 = vmatmul.mubr.bf16.gmra.mxu0 %v549
    %v2307 = vpop.f32.mrf.mxu0
    %v2308 = vadd.f32 %v2265, %v2307
    %v2309 = vpop.f32.mrf.mxu0
    %v2310 = vadd.f32 %v2267, %v2309
    %v2311 = vpop.f32.mrf.mxu0
    %v2312 = vadd.f32 %v2269, %v2311
    %v2313 = vpop.f32.mrf.mxu0
    %v2314 = vadd.f32 %v2271, %v2313
    %2315 = vdwg.mxu0
    %2316 = vmatprep.subr.bf16.mxu0 %v1733
    %2317 = vmatpush1.bf16.msra.mxu0 %v1732
    %2318 = vmatprep.subr.bf16.mxu0 %v1728
    %2319 = vmatpush1.bf16.msra.mxu0 %v1727
    %2320 = vmatprep.subr.bf16.mxu0 %v1723
    %2321 = vmatpush1.bf16.msra.mxu0 %v1722
    %2322 = vmatprep.subr.bf16.mxu0 %v1718
    %2323 = vmatpush1.bf16.msra.mxu0 %v1717
    %2324 = vmatprep.subr.bf16.mxu0 %v1713
    %2325 = vmatpush1.bf16.msra.mxu0 %v1712
    %2326 = vmatprep.subr.bf16.mxu0 %v1708
    %2327 = vmatpush1.bf16.msra.mxu0 %v1707
    %2328 = vmatprep.subr.bf16.mxu0 %v1703
    %2329 = vmatpush1.bf16.msra.mxu0 %v1702
    %2330 = vmatprep.subr.bf16.mxu0 %v1698
    %2331 = vmatpush1.bf16.msra.mxu0 %v1697
    %2332 = vmatprep.subr.bf16.mxu0 0
    %2333 = vmatpush2.bf16.msra.mxu0 0
    %2334 = vmatprep.subr.bf16.mxu0 0
    %2335 = vmatpush2.bf16.msra.mxu0 0
    %2336 = vmatprep.subr.bf16.mxu0 0
    %2337 = vmatpush2.bf16.msra.mxu0 0
    %2338 = vmatprep.subr.bf16.mxu0 0
    %2339 = vmatpush2.bf16.msra.mxu0 0
    %2340 = vmatprep.subr.bf16.mxu0 0
    %2341 = vmatpush2.bf16.msra.mxu0 0
    %2342 = vmatprep.subr.bf16.mxu0 0
    %2343 = vmatpush2.bf16.msra.mxu0 0
    %2344 = vmatprep.subr.bf16.mxu0 0
    %2345 = vmatpush2.bf16.msra.mxu0 0
    %2346 = vmatprep.subr.bf16.mxu0 0
    %2347 = vmatpush2.bf16.msra.mxu0 0
    %2348 = vmatprep.mubr.bf16.mxu0 0
    %2349 = vmatmul.mubr.bf16.gmra.mxu0 %v551
    %v2350 = vpop.f32.mrf.mxu0
    %v2351 = vadd.f32 %v2308, %v2350
    %v2352 = vpop.f32.mrf.mxu0
    %v2353 = vadd.f32 %v2310, %v2352
    %v2354 = vpop.f32.mrf.mxu0
    %v2355 = vadd.f32 %v2312, %v2354
    %v2356 = vpop.f32.mrf.mxu0
    %v2357 = vadd.f32 %v2314, %v2356
    %2358 = vdwg.mxu0
    %2359 = vmatprep.subr.bf16.mxu0 0
    %2360 = vmatpush1.bf16.msra.mxu0 %v1494
    %2361 = vmatprep.subr.bf16.mxu0 0
    %2362 = vmatpush1.bf16.msra.mxu0 %v1489
    %2363 = vmatprep.subr.bf16.mxu0 0
    %2364 = vmatpush1.bf16.msra.mxu0 %v1484
    %2365 = vmatprep.subr.bf16.mxu0 0
    %2366 = vmatpush1.bf16.msra.mxu0 %v1479
    %2367 = vmatprep.subr.bf16.mxu0 0
    %2368 = vmatpush1.bf16.msra.mxu0 %v1474
    %2369 = vmatprep.subr.bf16.mxu0 0
    %2370 = vmatpush1.bf16.msra.mxu0 %v1469
    %2371 = vmatprep.subr.bf16.mxu0 0
    %2372 = vmatpush1.bf16.msra.mxu0 %v1464
    %2373 = vmatprep.subr.bf16.mxu0 0
    %2374 = vmatpush1.bf16.msra.mxu0 %v1459
    %2375 = vmatprep.subr.bf16.mxu0 0
    %2376 = vmatpush2.bf16.msra.mxu0 %v1534
    %2377 = vmatprep.subr.bf16.mxu0 0
    %2378 = vmatpush2.bf16.msra.mxu0 %v1529
    %2379 = vmatprep.subr.bf16.mxu0 0
    %2380 = vmatpush2.bf16.msra.mxu0 %v1524
    %2381 = vmatprep.subr.bf16.mxu0 0
    %2382 = vmatpush2.bf16.msra.mxu0 %v1519
    %2383 = vmatprep.subr.bf16.mxu0 0
    %2384 = vmatpush2.bf16.msra.mxu0 %v1514
    %2385 = vmatprep.subr.bf16.mxu0 0
    %2386 = vmatpush2.bf16.msra.mxu0 %v1509
    %2387 = vmatprep.subr.bf16.mxu0 0
    %2388 = vmatpush2.bf16.msra.mxu0 %v1504
    %2389 = vmatprep.subr.bf16.mxu0 0
    %2390 = vmatpush2.bf16.msra.mxu0 %v1499
    %2391 = vmatprep.mubr.bf16.mxu0 %v546
    %2392 = vmatmul.mubr.bf16.gmra.mxu0 %v545
    %v2393 = vpop.f32.mrf.mxu0
    %v2394 = vadd.f32 0.0, %v2393
    %v2395 = vpop.f32.mrf.mxu0
    %v2396 = vpop.f32.mrf.mxu0
    %v2397 = vadd.f32 0.0, %v2396
    %v2398 = vpop.f32.mrf.mxu0
    %2399 = vdwg.mxu0
    %2400 = vmatprep.subr.bf16.mxu0 0
    %2401 = vmatpush1.bf16.msra.mxu0 %v1574
    %2402 = vmatprep.subr.bf16.mxu0 0
    %2403 = vmatpush1.bf16.msra.mxu0 %v1569
    %2404 = vmatprep.subr.bf16.mxu0 0
    %2405 = vmatpush1.bf16.msra.mxu0 %v1564
    %2406 = vmatprep.subr.bf16.mxu0 0
    %2407 = vmatpush1.bf16.msra.mxu0 %v1559
    %2408 = vmatprep.subr.bf16.mxu0 0
    %2409 = vmatpush1.bf16.msra.mxu0 %v1554
    %2410 = vmatprep.subr.bf16.mxu0 0
    %2411 = vmatpush1.bf16.msra.mxu0 %v1549
    %2412 = vmatprep.subr.bf16.mxu0 0
    %2413 = vmatpush1.bf16.msra.mxu0 %v1544
    %2414 = vmatprep.subr.bf16.mxu0 0
    %2415 = vmatpush1.bf16.msra.mxu0 %v1539
    %2416 = vmatprep.subr.bf16.mxu0 0
    %2417 = vmatpush2.bf16.msra.mxu0 %v1614
    %2418 = vmatprep.subr.bf16.mxu0 0
    %2419 = vmatpush2.bf16.msra.mxu0 %v1609
    %2420 = vmatprep.subr.bf16.mxu0 0
    %2421 = vmatpush2.bf16.msra.mxu0 %v1604
    %2422 = vmatprep.subr.bf16.mxu0 0
    %2423 = vmatpush2.bf16.msra.mxu0 %v1599
    %2424 = vmatprep.subr.bf16.mxu0 0
    %2425 = vmatpush2.bf16.msra.mxu0 %v1594
    %2426 = vmatprep.subr.bf16.mxu0 0
    %2427 = vmatpush2.bf16.msra.mxu0 %v1589
    %2428 = vmatprep.subr.bf16.mxu0 0
    %2429 = vmatpush2.bf16.msra.mxu0 %v1584
    %2430 = vmatprep.subr.bf16.mxu0 0
    %2431 = vmatpush2.bf16.msra.mxu0 %v1579
    %2432 = vmatprep.mubr.bf16.mxu0 %v548
    %2433 = vmatmul.mubr.bf16.gmra.mxu0 %v547
    %v2434 = vpop.f32.mrf.mxu0
    %v2435 = vadd.f32 %v2394, %v2434
    %v2436 = vpop.f32.mrf.mxu0
    %v2437 = vpop.f32.mrf.mxu0
    %v2438 = vadd.f32 %v2397, %v2437
    %v2439 = vpop.f32.mrf.mxu0
    %2440 = vdwg.mxu0
    %2441 = vmatprep.subr.bf16.mxu0 0
    %2442 = vmatpush1.bf16.msra.mxu0 %v1654
    %2443 = vmatprep.subr.bf16.mxu0 0
    %2444 = vmatpush1.bf16.msra.mxu0 %v1649
    %2445 = vmatprep.subr.bf16.mxu0 0
    %2446 = vmatpush1.bf16.msra.mxu0 %v1644
    %2447 = vmatprep.subr.bf16.mxu0 0
    %2448 = vmatpush1.bf16.msra.mxu0 %v1639
    %2449 = vmatprep.subr.bf16.mxu0 0
    %2450 = vmatpush1.bf16.msra.mxu0 %v1634
    %2451 = vmatprep.subr.bf16.mxu0 0
    %2452 = vmatpush1.bf16.msra.mxu0 %v1629
    %2453 = vmatprep.subr.bf16.mxu0 0
    %2454 = vmatpush1.bf16.msra.mxu0 %v1624
    %2455 = vmatprep.subr.bf16.mxu0 0
    %2456 = vmatpush1.bf16.msra.mxu0 %v1619
    %2457 = vmatprep.subr.bf16.mxu0 0
    %2458 = vmatpush2.bf16.msra.mxu0 %v1694
    %2459 = vmatprep.subr.bf16.mxu0 0
    %2460 = vmatpush2.bf16.msra.mxu0 %v1689
    %2461 = vmatprep.subr.bf16.mxu0 0
    %2462 = vmatpush2.bf16.msra.mxu0 %v1684
    %2463 = vmatprep.subr.bf16.mxu0 0
    %2464 = vmatpush2.bf16.msra.mxu0 %v1679
    %2465 = vmatprep.subr.bf16.mxu0 0
    %2466 = vmatpush2.bf16.msra.mxu0 %v1674
    %2467 = vmatprep.subr.bf16.mxu0 0
    %2468 = vmatpush2.bf16.msra.mxu0 %v1669
    %2469 = vmatprep.subr.bf16.mxu0 0
    %2470 = vmatpush2.bf16.msra.mxu0 %v1664
    %2471 = vmatprep.subr.bf16.mxu0 0
    %2472 = vmatpush2.bf16.msra.mxu0 %v1659
    %2473 = vmatprep.mubr.bf16.mxu0 %v550
    %2474 = vmatmul.mubr.bf16.gmra.mxu0 %v549
    %v2475 = vpop.f32.mrf.mxu0
    %v2476 = vadd.f32 %v2435, %v2475
    %v2477 = vpop.f32.mrf.mxu0
    %v2478 = vpop.f32.mrf.mxu0
    %v2479 = vadd.f32 %v2438, %v2478
    %v2480 = vpop.f32.mrf.mxu0
    %2481 = vdwg.mxu0
    %2482 = vmatprep.subr.bf16.mxu0 0
    %2483 = vmatpush1.bf16.msra.mxu0 %v1734
    %2484 = vmatprep.subr.bf16.mxu0 0
    %2485 = vmatpush1.bf16.msra.mxu0 %v1729
    %2486 = vmatprep.subr.bf16.mxu0 0
    %2487 = vmatpush1.bf16.msra.mxu0 %v1724
    %2488 = vmatprep.subr.bf16.mxu0 0
    %2489 = vmatpush1.bf16.msra.mxu0 %v1719
    %2490 = vmatprep.subr.bf16.mxu0 0
    %2491 = vmatpush1.bf16.msra.mxu0 %v1714
    %2492 = vmatprep.subr.bf16.mxu0 0
    %2493 = vmatpush1.bf16.msra.mxu0 %v1709
    %2494 = vmatprep.subr.bf16.mxu0 0
    %2495 = vmatpush1.bf16.msra.mxu0 %v1704
    %2496 = vmatprep.subr.bf16.mxu0 0
    %2497 = vmatpush1.bf16.msra.mxu0 %v1699
    %2498 = vmatprep.subr.bf16.mxu0 0
    %2499 = vmatpush2.bf16.msra.mxu0 0
    %2500 = vmatprep.subr.bf16.mxu0 0
    %2501 = vmatpush2.bf16.msra.mxu0 0
    %2502 = vmatprep.subr.bf16.mxu0 0
    %2503 = vmatpush2.bf16.msra.mxu0 0
    %2504 = vmatprep.subr.bf16.mxu0 0
    %2505 = vmatpush2.bf16.msra.mxu0 0
    %2506 = vmatprep.subr.bf16.mxu0 0
    %2507 = vmatpush2.bf16.msra.mxu0 0
    %2508 = vmatprep.subr.bf16.mxu0 0
    %2509 = vmatpush2.bf16.msra.mxu0 0
    %2510 = vmatprep.subr.bf16.mxu0 0
    %2511 = vmatpush2.bf16.msra.mxu0 0
    %2512 = vmatprep.subr.bf16.mxu0 0
    %2513 = vmatpush2.bf16.msra.mxu0 0
    %2514 = vmatprep.mubr.bf16.mxu0 0
    %2515 = vmatmul.mubr.bf16.gmra.mxu0 %v551
    %v2516 = vpop.f32.mrf.mxu0
    %v2517 = vadd.f32 %v2476, %v2516
    %v2518 = vpop.f32.mrf.mxu0
    %v2519 = vpop.f32.mrf.mxu0
    %v2520 = vadd.f32 %v2479, %v2519
    %v2521 = vpop.f32.mrf.mxu0
    %2522 = vdwg.mxu0
    %v2523 = vpack.c.bf16 %v2183, %v2179
    %v2524 = vpack.c.bf16 %v2185, %v2181
    %v2525 = vpack.c.bf16 %v2355, %v2351
    %v2526 = vpack.c.bf16 %v2357, %v2353
    %v2527 = vpack.c.bf16 %v2520, %v2517
    %v2528 = vld [vmem:[#allocation7] sm:$0x1f]
    %v2530 = vlaneseq
    %v2531 = vshrl.u32 %v2530, 7
    %v2532 = vsub.s32 0, %v2531
    %v2533 = vrot.slane %v2528, %v2532
    %v2534 = vlaneseq
    %v2535 = vshrl.u32 %v2534, 7
    %v2536 = vsub.s32 1, %v2535
    %v2537 = vrot.slane %v2528, %v2536
    %v2538 = vlaneseq
    %v2539 = vshrl.u32 %v2538, 7
    %v2540 = vsub.s32 2, %v2539
    %v2541 = vrot.slane %v2528, %v2540
    %v2542 = vlaneseq
    %v2543 = vshrl.u32 %v2542, 7
    %v2544 = vsub.s32 3, %v2543
    %v2545 = vrot.slane %v2528, %v2544
    %v2546 = vlaneseq
    %v2547 = vshrl.u32 %v2546, 7
    %v2548 = vsub.s32 4, %v2547
    %v2549 = vrot.slane %v2528, %v2548
    %v2555 = vpack.c.bf16 %v2533, %v2533
    %v2556 = vpack.c.bf16 %v2537, %v2537
    %v2557 = vpack.c.bf16 %v2541, %v2541
    %v2558 = vpack.c.bf16 %v2545, %v2545
    %v2559 = vpack.c.bf16 %v2549, %v2549
    %v2561 = vpack.i.b16 %v2555, %v2555
    %v2563 = vlaneseq
    %v2564 = vshrl.u32 %v2563, 7
    %v2565 = vsub.s32 0, %v2564
    %v2566 = vrot.slane %v2561, %v2565
    %v2568 = vpack.i.b16 %v2556, %v2556
    %v2570 = vlaneseq
    %v2571 = vshrl.u32 %v2570, 7
    %v2572 = vsub.s32 0, %v2571
    %v2573 = vrot.slane %v2568, %v2572
    %v2575 = vpack.i.b16 %v2557, %v2557
    %v2577 = vlaneseq
    %v2578 = vshrl.u32 %v2577, 7
    %v2579 = vsub.s32 0, %v2578
    %v2580 = vrot.slane %v2575, %v2579
    %v2582 = vpack.i.b16 %v2558, %v2558
    %v2584 = vlaneseq
    %v2585 = vshrl.u32 %v2584, 7
    %v2586 = vsub.s32 0, %v2585
    %v2587 = vrot.slane %v2582, %v2586
    %v2589 = vpack.i.b16 %v2559, %v2559
    %v2591 = vlaneseq
    %v2592 = vshrl.u32 %v2591, 7
    %v2593 = vsub.s32 0, %v2592
    %v2594 = vrot.slane %v2589, %v2593
    %v2595 = vadd.bf16 %v2523, %v2566
    %v2596 = vadd.bf16 %v2524, %v2573
    %v2597 = vadd.bf16 %v2525, %v2580
    %v2598 = vadd.bf16 %v2526, %v2587
    %v2599 = vadd.bf16 %v2527, %v2594
    %v2600 = vmax.bf16 %v2595, 0
    %v2601 = vmax.bf16 %v2596, 0
    %v2602 = vmax.bf16 %v2597, 0
    %v2603 = vmax.bf16 %v2598, 0
    %v2604 = vmax.bf16 %v2599, 0
    %v2605 = vld [vmem:[#allocation8] sm:$0xff]
    %v2606 = vld [vmem:[#allocation8 + $0x8] sm:$0xff]
    %v2607 = vld [vmem:[#allocation8 + $0x10] sm:$0xff]
    %v2608 = vld [vmem:[#allocation8 + $0x18] sm:$0xff]
    %v2609 = vld [vmem:[#allocation8 + $0x20] sm:$0xff]
    %v2610 = vld [vmem:[#allocation8 + $0x28] sm:$0xff]
    %v2611 = vld [vmem:[#allocation8 + $0x30] sm:$0xff]
    %v2612 = vld [vmem:[#allocation8 + $0x38] sm:$0xff]
    %v2613 = vld [vmem:[#allocation8 + $0x40] sm:$0xff]
    %v2614 = vld [vmem:[#allocation8 + $0x48] sm:$0xff]
    %v2615 = vld [vmem:[#allocation8 + $0x50] sm:$0xff]
    %v2616 = vld [vmem:[#allocation8 + $0x58] sm:$0xff]
    %v2617 = vld [vmem:[#allocation8 + $0x60] sm:$0xff]
    %v2618 = vld [vmem:[#allocation8 + $0x68] sm:$0xff]
    %v2619 = vld [vmem:[#allocation8 + $0x70] sm:$0xff]
    %v2620 = vld [vmem:[#allocation8 + $0x78] sm:$0xff]
    %v2621 = vld [vmem:[#allocation8 + $0x80] sm:$0xff]
    %v2622 = vld [vmem:[#allocation8 + $0x88] sm:$0xff]
    %v2623 = vld [vmem:[#allocation8 + $0x90] sm:$0xff]
    %v2624 = vld [vmem:[#allocation8 + $0x98] sm:$0xff]
    %v2625 = vld [vmem:[#allocation8 + $0xa0] sm:$0xff]
    %v2626 = vld [vmem:[#allocation8 + $0xa8] sm:$0xff]
    %v2627 = vld [vmem:[#allocation8 + $0xb0] sm:$0xff]
    %v2628 = vld [vmem:[#allocation8 + $0xb8] sm:$0xff]
    %v2629 = vld [vmem:[#allocation8 + $0xc0] sm:$0xff]
    %v2630 = vld [vmem:[#allocation8 + $0xc8] sm:$0xff]
    %v2631 = vld [vmem:[#allocation8 + $0xd0] sm:$0xff]
    %v2632 = vld [vmem:[#allocation8 + $0xd8] sm:$0xff]
    %v2633 = vld [vmem:[#allocation8 + $0xe0] sm:$0xff]
    %v2634 = vld [vmem:[#allocation8 + $0xe8] sm:$0xff]
    %v2635 = vld [vmem:[#allocation8 + $0xf0] sm:$0xff]
    %v2636 = vld [vmem:[#allocation8 + $0xf8] sm:$0xff]
    %v2637 = vld [vmem:[#allocation8 + $0x100] sm:$0xff]
    %v2638 = vld [vmem:[#allocation8 + $0x108] sm:$0xff]
    %v2639 = vld [vmem:[#allocation8 + $0x110] sm:$0xff]
    %v2640 = vld [vmem:[#allocation8 + $0x118] sm:$0xff]
    %v2641 = vld [vmem:[#allocation8 + $0x120] sm:$0xff]
    %v2642 = vld [vmem:[#allocation8 + $0x128] sm:$0xff]
    %v2643 = vld [vmem:[#allocation8 + $0x130] sm:$0xff]
    %v2644 = vld [vmem:[#allocation8 + $0x138] sm:$0xff]
    %v2645 = vld [vmem:[#allocation8 + $0x140] sm:$0xff]
    %v2646 = vld [vmem:[#allocation8 + $0x148] sm:$0xff]
    %v2647 = vld [vmem:[#allocation8 + $0x150] sm:$0xff]
    %v2648 = vld [vmem:[#allocation8 + $0x158] sm:$0xff]
    %v2649 = vld [vmem:[#allocation8 + $0x160] sm:$0xff]
    %v2650 = vld [vmem:[#allocation8 + $0x168] sm:$0xff]
    %v2651 = vld [vmem:[#allocation8 + $0x170] sm:$0xff]
    %v2652 = vld [vmem:[#allocation8 + $0x178] sm:$0xff]
    %v2653 = vld [vmem:[#allocation8 + $0x180] sm:$0xff]
    %v2654 = vld [vmem:[#allocation8 + $0x188] sm:$0xff]
    %v2655 = vld [vmem:[#allocation8 + $0x190] sm:$0xff]
    %v2656 = vld [vmem:[#allocation8 + $0x198] sm:$0xff]
    %v2657 = vld [vmem:[#allocation8 + $0x1a0] sm:$0xff]
    %v2658 = vld [vmem:[#allocation8 + $0x1a8] sm:$0xff]
    %v2659 = vld [vmem:[#allocation8 + $0x1b0] sm:$0xff]
    %v2660 = vld [vmem:[#allocation8 + $0x1b8] sm:$0xff]
    %v2661 = vld [vmem:[#allocation8 + $0x1c0] sm:$0xff]
    %v2662 = vld [vmem:[#allocation8 + $0x1c8] sm:$0xff]
    %v2663 = vld [vmem:[#allocation8 + $0x1d0] sm:$0xff]
    %v2664 = vld [vmem:[#allocation8 + $0x1d8] sm:$0xff]
    %v2665 = vld [vmem:[#allocation8 + $0x1e0] sm:$0xff]
    %v2666 = vld [vmem:[#allocation8 + $0x1e8] sm:$0xff]
    %v2667 = vld [vmem:[#allocation8 + $0x1f0] sm:$0xff]
    %v2668 = vld [vmem:[#allocation8 + $0x1f8] sm:$0xff]
    %v2669 = vld [vmem:[#allocation8 + $0x200] sm:$0xff]
    %v2670 = vld [vmem:[#allocation8 + $0x208] sm:$0xff]
    %v2671 = vld [vmem:[#allocation8 + $0x210] sm:$0xff]
    %v2672 = vld [vmem:[#allocation8 + $0x218] sm:$0xff]
    %v2673 = vld [vmem:[#allocation8 + $0x220] sm:$0xff]
    %v2674 = vld [vmem:[#allocation8 + $0x228] sm:$0xff]
    %v2675 = vld [vmem:[#allocation8 + $0x230] sm:$0xff]
    %v2676 = vld [vmem:[#allocation8 + $0x238] sm:$0xff]
    %v2677 = vld [vmem:[#allocation8 + $0x240] sm:$0xff]
    %v2678 = vld [vmem:[#allocation8 + $0x248] sm:$0xff]
    %v2679 = vld [vmem:[#allocation8 + $0x250] sm:$0xff]
    %v2680 = vld [vmem:[#allocation8 + $0x258] sm:$0xff]
    %v2681 = vld [vmem:[#allocation8 + $0x260] sm:$0xff]
    %v2682 = vld [vmem:[#allocation8 + $0x268] sm:$0xff]
    %v2683 = vld [vmem:[#allocation8 + $0x270] sm:$0xff]
    %v2684 = vld [vmem:[#allocation8 + $0x278] sm:$0xff]
    %v2685 = vld [vmem:[#allocation8 + $0x280] sm:$0xff]
    %v2686 = vld [vmem:[#allocation8 + $0x288] sm:$0xff]
    %v2687 = vld [vmem:[#allocation8 + $0x290] sm:$0xff]
    %v2688 = vld [vmem:[#allocation8 + $0x298] sm:$0xff]
    %v2689 = vld [vmem:[#allocation8 + $0x2a0] sm:$0xff]
    %v2690 = vld [vmem:[#allocation8 + $0x2a8] sm:$0xff]
    %v2691 = vld [vmem:[#allocation8 + $0x2b0] sm:$0xff]
    %v2692 = vld [vmem:[#allocation8 + $0x2b8] sm:$0xff]
    %v2693 = vld [vmem:[#allocation8 + $0x2c0] sm:$0xff]
    %v2694 = vld [vmem:[#allocation8 + $0x2c8] sm:$0xff]
    %v2695 = vld [vmem:[#allocation8 + $0x2d0] sm:$0xff]
    %v2696 = vld [vmem:[#allocation8 + $0x2d8] sm:$0xff]
    %v2697 = vld [vmem:[#allocation8 + $0x2e0] sm:$0xff]
    %v2698 = vld [vmem:[#allocation8 + $0x2e8] sm:$0xff]
    %v2699 = vld [vmem:[#allocation8 + $0x2f0] sm:$0xff]
    %v2700 = vld [vmem:[#allocation8 + $0x2f8] sm:$0xff]
    %v2701 = vld [vmem:[#allocation8 + $0x300] sm:$0xff]
    %v2702 = vld [vmem:[#allocation8 + $0x308] sm:$0xff]
    %v2703 = vld [vmem:[#allocation8 + $0x310] sm:$0xff]
    %v2704 = vld [vmem:[#allocation8 + $0x318] sm:$0xff]
    %v2705 = vld [vmem:[#allocation8 + $0x320] sm:$0xff]
    %v2706 = vld [vmem:[#allocation8 + $0x328] sm:$0xff]
    %v2707 = vld [vmem:[#allocation8 + $0x330] sm:$0xff]
    %v2708 = vld [vmem:[#allocation8 + $0x338] sm:$0xff]
    %v2709 = vld [vmem:[#allocation8 + $0x340] sm:$0xff]
    %v2710 = vld [vmem:[#allocation8 + $0x348] sm:$0xff]
    %v2711 = vld [vmem:[#allocation8 + $0x350] sm:$0xff]
    %v2712 = vld [vmem:[#allocation8 + $0x358] sm:$0xff]
    %v2713 = vld [vmem:[#allocation8 + $0x360] sm:$0xff]
    %v2714 = vld [vmem:[#allocation8 + $0x368] sm:$0xff]
    %v2715 = vld [vmem:[#allocation8 + $0x370] sm:$0xff]
    %v2716 = vld [vmem:[#allocation8 + $0x378] sm:$0xff]
    %v2717 = vld [vmem:[#allocation8 + $0x380] sm:$0xff]
    %v2718 = vld [vmem:[#allocation8 + $0x388] sm:$0xff]
    %v2719 = vld [vmem:[#allocation8 + $0x390] sm:$0xff]
    %v2720 = vld [vmem:[#allocation8 + $0x398] sm:$0xff]
    %v2721 = vld [vmem:[#allocation8 + $0x3a0] sm:$0xff]
    %v2722 = vld [vmem:[#allocation8 + $0x3a8] sm:$0xff]
    %v2723 = vld [vmem:[#allocation8 + $0x3b0] sm:$0xff]
    %v2724 = vld [vmem:[#allocation8 + $0x3b8] sm:$0xff]
    %v2725 = vld [vmem:[#allocation8 + $0x3c0] sm:$0xff]
    %v2726 = vld [vmem:[#allocation8 + $0x3c8] sm:$0xff]
    %v2727 = vld [vmem:[#allocation8 + $0x3d0] sm:$0xff]
    %v2728 = vld [vmem:[#allocation8 + $0x3d8] sm:$0xff]
    %v2729 = vld [vmem:[#allocation8 + $0x3e0] sm:$0xff]
    %v2730 = vld [vmem:[#allocation8 + $0x3e8] sm:$0xff]
    %v2731 = vld [vmem:[#allocation8 + $0x3f0] sm:$0xff]
    %v2732 = vld [vmem:[#allocation8 + $0x3f8] sm:$0xff]
    %v2733 = vld [vmem:[#allocation8 + $0x400] sm:$0xff]
    %v2734 = vld [vmem:[#allocation8 + $0x408] sm:$0xff]
    %v2735 = vld [vmem:[#allocation8 + $0x410] sm:$0xff]
    %v2736 = vld [vmem:[#allocation8 + $0x418] sm:$0xff]
    %v2737 = vld [vmem:[#allocation8 + $0x420] sm:$0xff]
    %v2738 = vld [vmem:[#allocation8 + $0x428] sm:$0xff]
    %v2739 = vld [vmem:[#allocation8 + $0x430] sm:$0xff]
    %v2740 = vld [vmem:[#allocation8 + $0x438] sm:$0xff]
    %v2741 = vld [vmem:[#allocation8 + $0x440] sm:$0xff]
    %v2742 = vld [vmem:[#allocation8 + $0x448] sm:$0xff]
    %v2743 = vld [vmem:[#allocation8 + $0x450] sm:$0xff]
    %v2744 = vld [vmem:[#allocation8 + $0x458] sm:$0xff]
    %v2745 = vld [vmem:[#allocation8 + $0x460] sm:$0xff]
    %v2746 = vld [vmem:[#allocation8 + $0x468] sm:$0xff]
    %v2747 = vld [vmem:[#allocation8 + $0x470] sm:$0xff]
    %v2748 = vld [vmem:[#allocation8 + $0x478] sm:$0xff]
    %v2749 = vld [vmem:[#allocation8 + $0x480] sm:$0xff]
    %v2750 = vld [vmem:[#allocation8 + $0x488] sm:$0xff]
    %v2751 = vld [vmem:[#allocation8 + $0x490] sm:$0xff]
    %v2752 = vld [vmem:[#allocation8 + $0x498] sm:$0xff]
    %v2753 = vld [vmem:[#allocation8 + $0x4a0] sm:$0xff]
    %v2754 = vld [vmem:[#allocation8 + $0x4a8] sm:$0xff]
    %v2755 = vld [vmem:[#allocation8 + $0x4b0] sm:$0xff]
    %v2756 = vld [vmem:[#allocation8 + $0x4b8] sm:$0xff]
    %v2757 = vld [vmem:[#allocation8 + $0x4c0] sm:$0xff]
    %v2758 = vld [vmem:[#allocation8 + $0x4c8] sm:$0xff]
    %v2759 = vld [vmem:[#allocation8 + $0x4d0] sm:$0xff]
    %v2760 = vld [vmem:[#allocation8 + $0x4d8] sm:$0xff]
    %v2761 = vld [vmem:[#allocation8 + $0x4e0] sm:$0xff]
    %v2762 = vld [vmem:[#allocation8 + $0x4e8] sm:$0xff]
    %v2763 = vld [vmem:[#allocation8 + $0x4f0] sm:$0xff]
    %v2764 = vld [vmem:[#allocation8 + $0x4f8] sm:$0xff]
    %v2925 = vunpack.c.l.b16 %v2605
    %v2926 = vunpack.c.h.b16 %v2605
    %v2927 = vunpack.c.l.b16 %v2606
    %v2928 = vunpack.c.h.b16 %v2606
    %v2929 = vunpack.c.l.b16 %v2607
    %v2930 = vunpack.c.h.b16 %v2607
    %v2931 = vunpack.c.l.b16 %v2608
    %v2932 = vunpack.c.h.b16 %v2608
    %v2933 = vunpack.c.l.b16 %v2609
    %v2934 = vunpack.c.h.b16 %v2609
    %v2935 = vunpack.c.l.b16 %v2610
    %v2936 = vunpack.c.h.b16 %v2610
    %v2937 = vunpack.c.l.b16 %v2611
    %v2938 = vunpack.c.h.b16 %v2611
    %v2939 = vunpack.c.l.b16 %v2612
    %v2940 = vunpack.c.h.b16 %v2612
    %v2941 = vunpack.c.l.b16 %v2613
    %v2942 = vunpack.c.h.b16 %v2613
    %v2943 = vunpack.c.l.b16 %v2614
    %v2944 = vunpack.c.h.b16 %v2614
    %v2945 = vunpack.c.l.b16 %v2615
    %v2946 = vunpack.c.h.b16 %v2615
    %v2947 = vunpack.c.l.b16 %v2616
    %v2948 = vunpack.c.h.b16 %v2616
    %v2949 = vunpack.c.l.b16 %v2617
    %v2950 = vunpack.c.h.b16 %v2617
    %v2951 = vunpack.c.l.b16 %v2618
    %v2952 = vunpack.c.h.b16 %v2618
    %v2953 = vunpack.c.l.b16 %v2619
    %v2954 = vunpack.c.h.b16 %v2619
    %v2955 = vunpack.c.l.b16 %v2620
    %v2956 = vunpack.c.h.b16 %v2620
    %v2957 = vunpack.c.l.b16 %v2621
    %v2958 = vunpack.c.h.b16 %v2621
    %v2959 = vunpack.c.l.b16 %v2622
    %v2960 = vunpack.c.h.b16 %v2622
    %v2961 = vunpack.c.l.b16 %v2623
    %v2962 = vunpack.c.h.b16 %v2623
    %v2963 = vunpack.c.l.b16 %v2624
    %v2964 = vunpack.c.h.b16 %v2624
    %v2965 = vunpack.c.l.b16 %v2625
    %v2966 = vunpack.c.h.b16 %v2625
    %v2967 = vunpack.c.l.b16 %v2626
    %v2968 = vunpack.c.h.b16 %v2626
    %v2969 = vunpack.c.l.b16 %v2627
    %v2970 = vunpack.c.h.b16 %v2627
    %v2971 = vunpack.c.l.b16 %v2628
    %v2972 = vunpack.c.h.b16 %v2628
    %v2973 = vunpack.c.l.b16 %v2629
    %v2974 = vunpack.c.h.b16 %v2629
    %v2975 = vunpack.c.l.b16 %v2630
    %v2976 = vunpack.c.h.b16 %v2630
    %v2977 = vunpack.c.l.b16 %v2631
    %v2978 = vunpack.c.h.b16 %v2631
    %v2979 = vunpack.c.l.b16 %v2632
    %v2980 = vunpack.c.h.b16 %v2632
    %v2981 = vunpack.c.l.b16 %v2633
    %v2982 = vunpack.c.h.b16 %v2633
    %v2983 = vunpack.c.l.b16 %v2634
    %v2984 = vunpack.c.h.b16 %v2634
    %v2985 = vunpack.c.l.b16 %v2635
    %v2986 = vunpack.c.h.b16 %v2635
    %v2987 = vunpack.c.l.b16 %v2636
    %v2988 = vunpack.c.h.b16 %v2636
    %v2989 = vunpack.c.l.b16 %v2637
    %v2990 = vunpack.c.h.b16 %v2637
    %v2991 = vunpack.c.l.b16 %v2638
    %v2992 = vunpack.c.h.b16 %v2638
    %v2993 = vunpack.c.l.b16 %v2639
    %v2994 = vunpack.c.h.b16 %v2639
    %v2995 = vunpack.c.l.b16 %v2640
    %v2996 = vunpack.c.h.b16 %v2640
    %v2997 = vunpack.c.l.b16 %v2641
    %v2998 = vunpack.c.h.b16 %v2641
    %v2999 = vunpack.c.l.b16 %v2642
    %v3000 = vunpack.c.h.b16 %v2642
    %v3001 = vunpack.c.l.b16 %v2643
    %v3002 = vunpack.c.h.b16 %v2643
    %v3003 = vunpack.c.l.b16 %v2644
    %v3004 = vunpack.c.h.b16 %v2644
    %v3005 = vunpack.c.l.b16 %v2645
    %v3006 = vunpack.c.h.b16 %v2645
    %v3007 = vunpack.c.l.b16 %v2646
    %v3008 = vunpack.c.h.b16 %v2646
    %v3009 = vunpack.c.l.b16 %v2647
    %v3010 = vunpack.c.h.b16 %v2647
    %v3011 = vunpack.c.l.b16 %v2648
    %v3012 = vunpack.c.h.b16 %v2648
    %v3013 = vunpack.c.l.b16 %v2649
    %v3014 = vunpack.c.h.b16 %v2649
    %v3015 = vunpack.c.l.b16 %v2650
    %v3016 = vunpack.c.h.b16 %v2650
    %v3017 = vunpack.c.l.b16 %v2651
    %v3018 = vunpack.c.h.b16 %v2651
    %v3019 = vunpack.c.l.b16 %v2652
    %v3020 = vunpack.c.h.b16 %v2652
    %v3021 = vunpack.c.l.b16 %v2653
    %v3022 = vunpack.c.h.b16 %v2653
    %v3023 = vunpack.c.l.b16 %v2654
    %v3024 = vunpack.c.h.b16 %v2654
    %v3025 = vunpack.c.l.b16 %v2655
    %v3026 = vunpack.c.h.b16 %v2655
    %v3027 = vunpack.c.l.b16 %v2656
    %v3028 = vunpack.c.h.b16 %v2656
    %v3029 = vunpack.c.l.b16 %v2657
    %v3030 = vunpack.c.h.b16 %v2657
    %v3031 = vunpack.c.l.b16 %v2658
    %v3032 = vunpack.c.h.b16 %v2658
    %v3033 = vunpack.c.l.b16 %v2659
    %v3034 = vunpack.c.h.b16 %v2659
    %v3035 = vunpack.c.l.b16 %v2660
    %v3036 = vunpack.c.h.b16 %v2660
    %v3037 = vunpack.c.l.b16 %v2661
    %v3038 = vunpack.c.h.b16 %v2661
    %v3039 = vunpack.c.l.b16 %v2662
    %v3040 = vunpack.c.h.b16 %v2662
    %v3041 = vunpack.c.l.b16 %v2663
    %v3042 = vunpack.c.h.b16 %v2663
    %v3043 = vunpack.c.l.b16 %v2664
    %v3044 = vunpack.c.h.b16 %v2664
    %v3045 = vunpack.c.l.b16 %v2665
    %v3046 = vunpack.c.h.b16 %v2665
    %v3047 = vunpack.c.l.b16 %v2666
    %v3048 = vunpack.c.h.b16 %v2666
    %v3049 = vunpack.c.l.b16 %v2667
    %v3050 = vunpack.c.h.b16 %v2667
    %v3051 = vunpack.c.l.b16 %v2668
    %v3052 = vunpack.c.h.b16 %v2668
    %v3053 = vunpack.c.l.b16 %v2669
    %v3054 = vunpack.c.h.b16 %v2669
    %v3055 = vunpack.c.l.b16 %v2670
    %v3056 = vunpack.c.h.b16 %v2670
    %v3057 = vunpack.c.l.b16 %v2671
    %v3058 = vunpack.c.h.b16 %v2671
    %v3059 = vunpack.c.l.b16 %v2672
    %v3060 = vunpack.c.h.b16 %v2672
    %v3061 = vunpack.c.l.b16 %v2673
    %v3062 = vunpack.c.h.b16 %v2673
    %v3063 = vunpack.c.l.b16 %v2674
    %v3064 = vunpack.c.h.b16 %v2674
    %v3065 = vunpack.c.l.b16 %v2675
    %v3066 = vunpack.c.h.b16 %v2675
    %v3067 = vunpack.c.l.b16 %v2676
    %v3068 = vunpack.c.h.b16 %v2676
    %v3069 = vunpack.c.l.b16 %v2677
    %v3070 = vunpack.c.h.b16 %v2677
    %v3071 = vunpack.c.l.b16 %v2678
    %v3072 = vunpack.c.h.b16 %v2678
    %v3073 = vunpack.c.l.b16 %v2679
    %v3074 = vunpack.c.h.b16 %v2679
    %v3075 = vunpack.c.l.b16 %v2680
    %v3076 = vunpack.c.h.b16 %v2680
    %v3077 = vunpack.c.l.b16 %v2681
    %v3078 = vunpack.c.h.b16 %v2681
    %v3079 = vunpack.c.l.b16 %v2682
    %v3080 = vunpack.c.h.b16 %v2682
    %v3081 = vunpack.c.l.b16 %v2683
    %v3082 = vunpack.c.h.b16 %v2683
    %v3083 = vunpack.c.l.b16 %v2684
    %v3084 = vunpack.c.h.b16 %v2684
    %v3085 = vunpack.c.l.b16 %v2685
    %v3086 = vunpack.c.h.b16 %v2685
    %v3087 = vunpack.c.l.b16 %v2686
    %v3088 = vunpack.c.h.b16 %v2686
    %v3089 = vunpack.c.l.b16 %v2687
    %v3090 = vunpack.c.h.b16 %v2687
    %v3091 = vunpack.c.l.b16 %v2688
    %v3092 = vunpack.c.h.b16 %v2688
    %v3093 = vunpack.c.l.b16 %v2689
    %v3094 = vunpack.c.h.b16 %v2689
    %v3095 = vunpack.c.l.b16 %v2690
    %v3096 = vunpack.c.h.b16 %v2690
    %v3097 = vunpack.c.l.b16 %v2691
    %v3098 = vunpack.c.h.b16 %v2691
    %v3099 = vunpack.c.l.b16 %v2692
    %v3100 = vunpack.c.h.b16 %v2692
    %v3101 = vunpack.c.l.b16 %v2693
    %v3102 = vunpack.c.h.b16 %v2693
    %v3103 = vunpack.c.l.b16 %v2694
    %v3104 = vunpack.c.h.b16 %v2694
    %v3105 = vunpack.c.l.b16 %v2695
    %v3106 = vunpack.c.h.b16 %v2695
    %v3107 = vunpack.c.l.b16 %v2696
    %v3108 = vunpack.c.h.b16 %v2696
    %v3109 = vunpack.c.l.b16 %v2697
    %v3110 = vunpack.c.h.b16 %v2697
    %v3111 = vunpack.c.l.b16 %v2698
    %v3112 = vunpack.c.h.b16 %v2698
    %v3113 = vunpack.c.l.b16 %v2699
    %v3114 = vunpack.c.h.b16 %v2699
    %v3115 = vunpack.c.l.b16 %v2700
    %v3116 = vunpack.c.h.b16 %v2700
    %v3117 = vunpack.c.l.b16 %v2701
    %v3118 = vunpack.c.h.b16 %v2701
    %v3119 = vunpack.c.l.b16 %v2702
    %v3120 = vunpack.c.h.b16 %v2702
    %v3121 = vunpack.c.l.b16 %v2703
    %v3122 = vunpack.c.h.b16 %v2703
    %v3123 = vunpack.c.l.b16 %v2704
    %v3124 = vunpack.c.h.b16 %v2704
    %v3125 = vunpack.c.l.b16 %v2705
    %v3126 = vunpack.c.h.b16 %v2705
    %v3127 = vunpack.c.l.b16 %v2706
    %v3128 = vunpack.c.h.b16 %v2706
    %v3129 = vunpack.c.l.b16 %v2707
    %v3130 = vunpack.c.h.b16 %v2707
    %v3131 = vunpack.c.l.b16 %v2708
    %v3132 = vunpack.c.h.b16 %v2708
    %v3133 = vunpack.c.l.b16 %v2709
    %v3134 = vunpack.c.h.b16 %v2709
    %v3135 = vunpack.c.l.b16 %v2710
    %v3136 = vunpack.c.h.b16 %v2710
    %v3137 = vunpack.c.l.b16 %v2711
    %v3138 = vunpack.c.h.b16 %v2711
    %v3139 = vunpack.c.l.b16 %v2712
    %v3140 = vunpack.c.h.b16 %v2712
    %v3141 = vunpack.c.l.b16 %v2713
    %v3142 = vunpack.c.h.b16 %v2713
    %v3143 = vunpack.c.l.b16 %v2714
    %v3144 = vunpack.c.h.b16 %v2714
    %v3145 = vunpack.c.l.b16 %v2715
    %v3146 = vunpack.c.h.b16 %v2715
    %v3147 = vunpack.c.l.b16 %v2716
    %v3148 = vunpack.c.h.b16 %v2716
    %v3149 = vunpack.c.l.b16 %v2717
    %v3150 = vunpack.c.h.b16 %v2717
    %v3151 = vunpack.c.l.b16 %v2718
    %v3152 = vunpack.c.h.b16 %v2718
    %v3153 = vunpack.c.l.b16 %v2719
    %v3154 = vunpack.c.h.b16 %v2719
    %v3155 = vunpack.c.l.b16 %v2720
    %v3156 = vunpack.c.h.b16 %v2720
    %v3157 = vunpack.c.l.b16 %v2721
    %v3158 = vunpack.c.h.b16 %v2721
    %v3159 = vunpack.c.l.b16 %v2722
    %v3160 = vunpack.c.h.b16 %v2722
    %v3161 = vunpack.c.l.b16 %v2723
    %v3162 = vunpack.c.h.b16 %v2723
    %v3163 = vunpack.c.l.b16 %v2724
    %v3164 = vunpack.c.h.b16 %v2724
    %v3165 = vunpack.c.l.b16 %v2725
    %v3166 = vunpack.c.h.b16 %v2725
    %v3167 = vunpack.c.l.b16 %v2726
    %v3168 = vunpack.c.h.b16 %v2726
    %v3169 = vunpack.c.l.b16 %v2727
    %v3170 = vunpack.c.h.b16 %v2727
    %v3171 = vunpack.c.l.b16 %v2728
    %v3172 = vunpack.c.h.b16 %v2728
    %v3173 = vunpack.c.l.b16 %v2729
    %v3174 = vunpack.c.h.b16 %v2729
    %v3175 = vunpack.c.l.b16 %v2730
    %v3176 = vunpack.c.h.b16 %v2730
    %v3177 = vunpack.c.l.b16 %v2731
    %v3178 = vunpack.c.h.b16 %v2731
    %v3179 = vunpack.c.l.b16 %v2732
    %v3180 = vunpack.c.h.b16 %v2732
    %v3181 = vunpack.c.l.b16 %v2733
    %v3182 = vunpack.c.h.b16 %v2733
    %v3183 = vunpack.c.l.b16 %v2734
    %v3184 = vunpack.c.h.b16 %v2734
    %v3185 = vunpack.c.l.b16 %v2735
    %v3186 = vunpack.c.h.b16 %v2735
    %v3187 = vunpack.c.l.b16 %v2736
    %v3188 = vunpack.c.h.b16 %v2736
    %v3189 = vunpack.c.l.b16 %v2737
    %v3190 = vunpack.c.h.b16 %v2737
    %v3191 = vunpack.c.l.b16 %v2738
    %v3192 = vunpack.c.h.b16 %v2738
    %v3193 = vunpack.c.l.b16 %v2739
    %v3194 = vunpack.c.h.b16 %v2739
    %v3195 = vunpack.c.l.b16 %v2740
    %v3196 = vunpack.c.h.b16 %v2740
    %v3197 = vunpack.c.l.b16 %v2741
    %v3198 = vunpack.c.h.b16 %v2741
    %v3199 = vunpack.c.l.b16 %v2742
    %v3200 = vunpack.c.h.b16 %v2742
    %v3201 = vunpack.c.l.b16 %v2743
    %v3202 = vunpack.c.h.b16 %v2743
    %v3203 = vunpack.c.l.b16 %v2744
    %v3204 = vunpack.c.h.b16 %v2744
    %v3205 = vunpack.c.l.b16 %v2745
    %v3206 = vunpack.c.h.b16 %v2745
    %v3207 = vunpack.c.l.b16 %v2746
    %v3208 = vunpack.c.h.b16 %v2746
    %v3209 = vunpack.c.l.b16 %v2747
    %v3210 = vunpack.c.h.b16 %v2747
    %v3211 = vunpack.c.l.b16 %v2748
    %v3212 = vunpack.c.h.b16 %v2748
    %v3213 = vunpack.c.l.b16 %v2749
    %v3214 = vunpack.c.h.b16 %v2749
    %v3215 = vunpack.c.l.b16 %v2750
    %v3216 = vunpack.c.h.b16 %v2750
    %v3217 = vunpack.c.l.b16 %v2751
    %v3218 = vunpack.c.h.b16 %v2751
    %v3219 = vunpack.c.l.b16 %v2752
    %v3220 = vunpack.c.h.b16 %v2752
    %v3221 = vunpack.c.l.b16 %v2753
    %v3222 = vunpack.c.h.b16 %v2753
    %v3223 = vunpack.c.l.b16 %v2754
    %v3224 = vunpack.c.h.b16 %v2754
    %v3225 = vunpack.c.l.b16 %v2755
    %v3226 = vunpack.c.h.b16 %v2755
    %v3227 = vunpack.c.l.b16 %v2756
    %v3228 = vunpack.c.h.b16 %v2756
    %v3229 = vunpack.c.l.b16 %v2757
    %v3230 = vunpack.c.h.b16 %v2757
    %v3231 = vunpack.c.l.b16 %v2758
    %v3232 = vunpack.c.h.b16 %v2758
    %v3233 = vunpack.c.l.b16 %v2759
    %v3234 = vunpack.c.h.b16 %v2759
    %v3235 = vunpack.c.l.b16 %v2760
    %v3236 = vunpack.c.h.b16 %v2760
    %v3237 = vunpack.c.l.b16 %v2761
    %v3238 = vunpack.c.h.b16 %v2761
    %v3239 = vunpack.c.l.b16 %v2762
    %v3240 = vunpack.c.h.b16 %v2762
    %v3241 = vunpack.c.l.b16 %v2763
    %v3242 = vunpack.c.h.b16 %v2763
    %v3243 = vunpack.c.l.b16 %v2764
    %v3244 = vunpack.c.h.b16 %v2764
    %v3245 = vpack.c.b16 %v2929, %v2925
    %v3246 = vpack.c.b16 %v2930, %v2926
    %v3247 = vpack.c.b16 %v2931, %v2927
    %v3248 = vpack.c.b16 %v2932, %v2928
    %v3249 = vpack.c.b16 %v2937, %v2933
    %v3250 = vpack.c.b16 %v2938, %v2934
    %v3251 = vpack.c.b16 %v2939, %v2935
    %v3252 = vpack.c.b16 %v2940, %v2936
    %v3253 = vpack.c.b16 %v2945, %v2941
    %v3254 = vpack.c.b16 %v2946, %v2942
    %v3255 = vpack.c.b16 %v2947, %v2943
    %v3256 = vpack.c.b16 %v2948, %v2944
    %v3257 = vpack.c.b16 %v2953, %v2949
    %v3258 = vpack.c.b16 %v2954, %v2950
    %v3259 = vpack.c.b16 %v2955, %v2951
    %v3260 = vpack.c.b16 %v2956, %v2952
    %v3261 = vpack.c.b16 %v2961, %v2957
    %v3262 = vpack.c.b16 %v2962, %v2958
    %v3263 = vpack.c.b16 %v2963, %v2959
    %v3264 = vpack.c.b16 %v2964, %v2960
    %v3265 = vpack.c.b16 %v2969, %v2965
    %v3266 = vpack.c.b16 %v2970, %v2966
    %v3267 = vpack.c.b16 %v2971, %v2967
    %v3268 = vpack.c.b16 %v2972, %v2968
    %v3269 = vpack.c.b16 %v2977, %v2973
    %v3270 = vpack.c.b16 %v2978, %v2974
    %v3271 = vpack.c.b16 %v2979, %v2975
    %v3272 = vpack.c.b16 %v2980, %v2976
    %v3273 = vpack.c.b16 %v2985, %v2981
    %v3274 = vpack.c.b16 %v2986, %v2982
    %v3275 = vpack.c.b16 %v2987, %v2983
    %v3276 = vpack.c.b16 %v2988, %v2984
    %v3277 = vpack.c.b16 %v2993, %v2989
    %v3278 = vpack.c.b16 %v2994, %v2990
    %v3279 = vpack.c.b16 %v2995, %v2991
    %v3280 = vpack.c.b16 %v2996, %v2992
    %v3281 = vpack.c.b16 %v3001, %v2997
    %v3282 = vpack.c.b16 %v3002, %v2998
    %v3283 = vpack.c.b16 %v3003, %v2999
    %v3284 = vpack.c.b16 %v3004, %v3000
    %v3285 = vpack.c.b16 %v3009, %v3005
    %v3286 = vpack.c.b16 %v3010, %v3006
    %v3287 = vpack.c.b16 %v3011, %v3007
    %v3288 = vpack.c.b16 %v3012, %v3008
    %v3289 = vpack.c.b16 %v3017, %v3013
    %v3290 = vpack.c.b16 %v3018, %v3014
    %v3291 = vpack.c.b16 %v3019, %v3015
    %v3292 = vpack.c.b16 %v3020, %v3016
    %v3293 = vpack.c.b16 %v3025, %v3021
    %v3294 = vpack.c.b16 %v3026, %v3022
    %v3295 = vpack.c.b16 %v3027, %v3023
    %v3296 = vpack.c.b16 %v3028, %v3024
    %v3297 = vpack.c.b16 %v3033, %v3029
    %v3298 = vpack.c.b16 %v3034, %v3030
    %v3299 = vpack.c.b16 %v3035, %v3031
    %v3300 = vpack.c.b16 %v3036, %v3032
    %v3301 = vpack.c.b16 %v3041, %v3037
    %v3302 = vpack.c.b16 %v3042, %v3038
    %v3303 = vpack.c.b16 %v3043, %v3039
    %v3304 = vpack.c.b16 %v3044, %v3040
    %v3305 = vpack.c.b16 %v3049, %v3045
    %v3306 = vpack.c.b16 %v3050, %v3046
    %v3307 = vpack.c.b16 %v3051, %v3047
    %v3308 = vpack.c.b16 %v3052, %v3048
    %v3309 = vpack.c.b16 %v3057, %v3053
    %v3310 = vpack.c.b16 %v3058, %v3054
    %v3311 = vpack.c.b16 %v3059, %v3055
    %v3312 = vpack.c.b16 %v3060, %v3056
    %v3313 = vpack.c.b16 %v3065, %v3061
    %v3314 = vpack.c.b16 %v3066, %v3062
    %v3315 = vpack.c.b16 %v3067, %v3063
    %v3316 = vpack.c.b16 %v3068, %v3064
    %v3317 = vpack.c.b16 %v3073, %v3069
    %v3318 = vpack.c.b16 %v3074, %v3070
    %v3319 = vpack.c.b16 %v3075, %v3071
    %v3320 = vpack.c.b16 %v3076, %v3072
    %v3321 = vpack.c.b16 %v3081, %v3077
    %v3322 = vpack.c.b16 %v3082, %v3078
    %v3323 = vpack.c.b16 %v3083, %v3079
    %v3324 = vpack.c.b16 %v3084, %v3080
    %v3325 = vpack.c.b16 %v3089, %v3085
    %v3326 = vpack.c.b16 %v3090, %v3086
    %v3327 = vpack.c.b16 %v3091, %v3087
    %v3328 = vpack.c.b16 %v3092, %v3088
    %v3329 = vpack.c.b16 %v3097, %v3093
    %v3330 = vpack.c.b16 %v3098, %v3094
    %v3331 = vpack.c.b16 %v3099, %v3095
    %v3332 = vpack.c.b16 %v3100, %v3096
    %v3333 = vpack.c.b16 %v3105, %v3101
    %v3334 = vpack.c.b16 %v3106, %v3102
    %v3335 = vpack.c.b16 %v3107, %v3103
    %v3336 = vpack.c.b16 %v3108, %v3104
    %v3337 = vpack.c.b16 %v3113, %v3109
    %v3338 = vpack.c.b16 %v3114, %v3110
    %v3339 = vpack.c.b16 %v3115, %v3111
    %v3340 = vpack.c.b16 %v3116, %v3112
    %v3341 = vpack.c.b16 %v3121, %v3117
    %v3342 = vpack.c.b16 %v3122, %v3118
    %v3343 = vpack.c.b16 %v3123, %v3119
    %v3344 = vpack.c.b16 %v3124, %v3120
    %v3345 = vpack.c.b16 %v3129, %v3125
    %v3346 = vpack.c.b16 %v3130, %v3126
    %v3347 = vpack.c.b16 %v3131, %v3127
    %v3348 = vpack.c.b16 %v3132, %v3128
    %v3349 = vpack.c.b16 %v3137, %v3133
    %v3350 = vpack.c.b16 %v3138, %v3134
    %v3351 = vpack.c.b16 %v3139, %v3135
    %v3352 = vpack.c.b16 %v3140, %v3136
    %v3353 = vpack.c.b16 %v3145, %v3141
    %v3354 = vpack.c.b16 %v3146, %v3142
    %v3355 = vpack.c.b16 %v3147, %v3143
    %v3356 = vpack.c.b16 %v3148, %v3144
    %v3357 = vpack.c.b16 %v3153, %v3149
    %v3358 = vpack.c.b16 %v3154, %v3150
    %v3359 = vpack.c.b16 %v3155, %v3151
    %v3360 = vpack.c.b16 %v3156, %v3152
    %v3361 = vpack.c.b16 %v3161, %v3157
    %v3362 = vpack.c.b16 %v3162, %v3158
    %v3363 = vpack.c.b16 %v3163, %v3159
    %v3364 = vpack.c.b16 %v3164, %v3160
    %v3365 = vpack.c.b16 %v3169, %v3165
    %v3366 = vpack.c.b16 %v3170, %v3166
    %v3367 = vpack.c.b16 %v3171, %v3167
    %v3368 = vpack.c.b16 %v3172, %v3168
    %v3369 = vpack.c.b16 %v3177, %v3173
    %v3370 = vpack.c.b16 %v3178, %v3174
    %v3371 = vpack.c.b16 %v3179, %v3175
    %v3372 = vpack.c.b16 %v3180, %v3176
    %v3373 = vpack.c.b16 %v3185, %v3181
    %v3374 = vpack.c.b16 %v3186, %v3182
    %v3375 = vpack.c.b16 %v3187, %v3183
    %v3376 = vpack.c.b16 %v3188, %v3184
    %v3377 = vpack.c.b16 %v3193, %v3189
    %v3378 = vpack.c.b16 %v3194, %v3190
    %v3379 = vpack.c.b16 %v3195, %v3191
    %v3380 = vpack.c.b16 %v3196, %v3192
    %v3381 = vpack.c.b16 %v3201, %v3197
    %v3382 = vpack.c.b16 %v3202, %v3198
    %v3383 = vpack.c.b16 %v3203, %v3199
    %v3384 = vpack.c.b16 %v3204, %v3200
    %v3385 = vpack.c.b16 %v3209, %v3205
    %v3386 = vpack.c.b16 %v3210, %v3206
    %v3387 = vpack.c.b16 %v3211, %v3207
    %v3388 = vpack.c.b16 %v3212, %v3208
    %v3389 = vpack.c.b16 %v3217, %v3213
    %v3390 = vpack.c.b16 %v3218, %v3214
    %v3391 = vpack.c.b16 %v3219, %v3215
    %v3392 = vpack.c.b16 %v3220, %v3216
    %v3393 = vpack.c.b16 %v3225, %v3221
    %v3394 = vpack.c.b16 %v3226, %v3222
    %v3395 = vpack.c.b16 %v3227, %v3223
    %v3396 = vpack.c.b16 %v3228, %v3224
    %v3397 = vpack.c.b16 %v3233, %v3229
    %v3398 = vpack.c.b16 %v3234, %v3230
    %v3399 = vpack.c.b16 %v3235, %v3231
    %v3400 = vpack.c.b16 %v3236, %v3232
    %v3401 = vpack.c.b16 %v3241, %v3237
    %v3402 = vpack.c.b16 %v3242, %v3238
    %v3403 = vpack.c.b16 %v3243, %v3239
    %v3404 = vpack.c.b16 %v3244, %v3240
    %3565 = vmatprep.subr.bf16.mxu0 %v3274
    %3566 = vmatpush1.bf16.msra.mxu0 %v3273
    %3567 = vmatprep.subr.bf16.mxu0 %v3270
    %3568 = vmatpush1.bf16.msra.mxu0 %v3269
    %3569 = vmatprep.subr.bf16.mxu0 %v3266
    %3570 = vmatpush1.bf16.msra.mxu0 %v3265
    %3571 = vmatprep.subr.bf16.mxu0 %v3262
    %3572 = vmatpush1.bf16.msra.mxu0 %v3261
    %3573 = vmatprep.subr.bf16.mxu0 %v3258
    %3574 = vmatpush1.bf16.msra.mxu0 %v3257
    %3575 = vmatprep.subr.bf16.mxu0 %v3254
    %3576 = vmatpush1.bf16.msra.mxu0 %v3253
    %3577 = vmatprep.subr.bf16.mxu0 %v3250
    %3578 = vmatpush1.bf16.msra.mxu0 %v3249
    %3579 = vmatprep.subr.bf16.mxu0 %v3246
    %3580 = vmatpush1.bf16.msra.mxu0 %v3245
    %3581 = vmatprep.subr.bf16.mxu0 %v3306
    %3582 = vmatpush2.bf16.msra.mxu0 %v3305
    %3583 = vmatprep.subr.bf16.mxu0 %v3302
    %3584 = vmatpush2.bf16.msra.mxu0 %v3301
    %3585 = vmatprep.subr.bf16.mxu0 %v3298
    %3586 = vmatpush2.bf16.msra.mxu0 %v3297
    %3587 = vmatprep.subr.bf16.mxu0 %v3294
    %3588 = vmatpush2.bf16.msra.mxu0 %v3293
    %3589 = vmatprep.subr.bf16.mxu0 %v3290
    %3590 = vmatpush2.bf16.msra.mxu0 %v3289
    %3591 = vmatprep.subr.bf16.mxu0 %v3286
    %3592 = vmatpush2.bf16.msra.mxu0 %v3285
    %3593 = vmatprep.subr.bf16.mxu0 %v3282
    %3594 = vmatpush2.bf16.msra.mxu0 %v3281
    %3595 = vmatprep.subr.bf16.mxu0 %v3278
    %3596 = vmatpush2.bf16.msra.mxu0 %v3277
    %3597 = vmatprep.mubr.bf16.mxu0 %v2601
    %3598 = vmatmul.mubr.bf16.gmra.mxu0 %v2600
    %v3599 = vpop.f32.mrf.mxu0
    %v3600 = vadd.f32 0.0, %v3599
    %v3601 = vpop.f32.mrf.mxu0
    %v3602 = vadd.f32 0.0, %v3601
    %v3603 = vpop.f32.mrf.mxu0
    %v3604 = vadd.f32 0.0, %v3603
    %v3605 = vpop.f32.mrf.mxu0
    %v3606 = vadd.f32 0.0, %v3605
    %3607 = vdwg.mxu0
    %3608 = vmatprep.subr.bf16.mxu0 %v3338
    %3609 = vmatpush1.bf16.msra.mxu0 %v3337
    %3610 = vmatprep.subr.bf16.mxu0 %v3334
    %3611 = vmatpush1.bf16.msra.mxu0 %v3333
    %3612 = vmatprep.subr.bf16.mxu0 %v3330
    %3613 = vmatpush1.bf16.msra.mxu0 %v3329
    %3614 = vmatprep.subr.bf16.mxu0 %v3326
    %3615 = vmatpush1.bf16.msra.mxu0 %v3325
    %3616 = vmatprep.subr.bf16.mxu0 %v3322
    %3617 = vmatpush1.bf16.msra.mxu0 %v3321
    %3618 = vmatprep.subr.bf16.mxu0 %v3318
    %3619 = vmatpush1.bf16.msra.mxu0 %v3317
    %3620 = vmatprep.subr.bf16.mxu0 %v3314
    %3621 = vmatpush1.bf16.msra.mxu0 %v3313
    %3622 = vmatprep.subr.bf16.mxu0 %v3310
    %3623 = vmatpush1.bf16.msra.mxu0 %v3309
    %3624 = vmatprep.subr.bf16.mxu0 %v3370
    %3625 = vmatpush2.bf16.msra.mxu0 %v3369
    %3626 = vmatprep.subr.bf16.mxu0 %v3366
    %3627 = vmatpush2.bf16.msra.mxu0 %v3365
    %3628 = vmatprep.subr.bf16.mxu0 %v3362
    %3629 = vmatpush2.bf16.msra.mxu0 %v3361
    %3630 = vmatprep.subr.bf16.mxu0 %v3358
    %3631 = vmatpush2.bf16.msra.mxu0 %v3357
    %3632 = vmatprep.subr.bf16.mxu0 %v3354
    %3633 = vmatpush2.bf16.msra.mxu0 %v3353
    %3634 = vmatprep.subr.bf16.mxu0 %v3350
    %3635 = vmatpush2.bf16.msra.mxu0 %v3349
    %3636 = vmatprep.subr.bf16.mxu0 %v3346
    %3637 = vmatpush2.bf16.msra.mxu0 %v3345
    %3638 = vmatprep.subr.bf16.mxu0 %v3342
    %3639 = vmatpush2.bf16.msra.mxu0 %v3341
    %3640 = vmatprep.mubr.bf16.mxu0 %v2603
    %3641 = vmatmul.mubr.bf16.gmra.mxu0 %v2602
    %v3642 = vpop.f32.mrf.mxu0
    %v3643 = vadd.f32 %v3600, %v3642
    %v3644 = vpop.f32.mrf.mxu0
    %v3645 = vadd.f32 %v3602, %v3644
    %v3646 = vpop.f32.mrf.mxu0
    %v3647 = vadd.f32 %v3604, %v3646
    %v3648 = vpop.f32.mrf.mxu0
    %v3649 = vadd.f32 %v3606, %v3648
    %3650 = vdwg.mxu0
    %3651 = vmatprep.subr.bf16.mxu0 %v3402
    %3652 = vmatpush1.bf16.msra.mxu0 %v3401
    %3653 = vmatprep.subr.bf16.mxu0 %v3398
    %3654 = vmatpush1.bf16.msra.mxu0 %v3397
    %3655 = vmatprep.subr.bf16.mxu0 %v3394
    %3656 = vmatpush1.bf16.msra.mxu0 %v3393
    %3657 = vmatprep.subr.bf16.mxu0 %v3390
    %3658 = vmatpush1.bf16.msra.mxu0 %v3389
    %3659 = vmatprep.subr.bf16.mxu0 %v3386
    %3660 = vmatpush1.bf16.msra.mxu0 %v3385
    %3661 = vmatprep.subr.bf16.mxu0 %v3382
    %3662 = vmatpush1.bf16.msra.mxu0 %v3381
    %3663 = vmatprep.subr.bf16.mxu0 %v3378
    %3664 = vmatpush1.bf16.msra.mxu0 %v3377
    %3665 = vmatprep.subr.bf16.mxu0 %v3374
    %3666 = vmatpush1.bf16.msra.mxu0 %v3373
    %3667 = vmatprep.subr.bf16.mxu0 0
    %3668 = vmatpush2.bf16.msra.mxu0 0
    %3669 = vmatprep.subr.bf16.mxu0 0
    %3670 = vmatpush2.bf16.msra.mxu0 0
    %3671 = vmatprep.subr.bf16.mxu0 0
    %3672 = vmatpush2.bf16.msra.mxu0 0
    %3673 = vmatprep.subr.bf16.mxu0 0
    %3674 = vmatpush2.bf16.msra.mxu0 0
    %3675 = vmatprep.subr.bf16.mxu0 0
    %3676 = vmatpush2.bf16.msra.mxu0 0
    %3677 = vmatprep.subr.bf16.mxu0 0
    %3678 = vmatpush2.bf16.msra.mxu0 0
    %3679 = vmatprep.subr.bf16.mxu0 0
    %3680 = vmatpush2.bf16.msra.mxu0 0
    %3681 = vmatprep.subr.bf16.mxu0 0
    %3682 = vmatpush2.bf16.msra.mxu0 0
    %3683 = vmatprep.mubr.bf16.mxu0 0
    %3684 = vmatmul.mubr.bf16.gmra.mxu0 %v2604
    %v3685 = vpop.f32.mrf.mxu0
    %v3686 = vadd.f32 %v3643, %v3685
    %v3687 = vpop.f32.mrf.mxu0
    %v3688 = vadd.f32 %v3645, %v3687
    %v3689 = vpop.f32.mrf.mxu0
    %v3690 = vadd.f32 %v3647, %v3689
    %v3691 = vpop.f32.mrf.mxu0
    %v3692 = vadd.f32 %v3649, %v3691
    %3693 = vdwg.mxu0
    %3694 = vmatprep.subr.bf16.mxu0 %v3276
    %3695 = vmatpush1.bf16.msra.mxu0 %v3275
    %3696 = vmatprep.subr.bf16.mxu0 %v3272
    %3697 = vmatpush1.bf16.msra.mxu0 %v3271
    %3698 = vmatprep.subr.bf16.mxu0 %v3268
    %3699 = vmatpush1.bf16.msra.mxu0 %v3267
    %3700 = vmatprep.subr.bf16.mxu0 %v3264
    %3701 = vmatpush1.bf16.msra.mxu0 %v3263
    %3702 = vmatprep.subr.bf16.mxu0 %v3260
    %3703 = vmatpush1.bf16.msra.mxu0 %v3259
    %3704 = vmatprep.subr.bf16.mxu0 %v3256
    %3705 = vmatpush1.bf16.msra.mxu0 %v3255
    %3706 = vmatprep.subr.bf16.mxu0 %v3252
    %3707 = vmatpush1.bf16.msra.mxu0 %v3251
    %3708 = vmatprep.subr.bf16.mxu0 %v3248
    %3709 = vmatpush1.bf16.msra.mxu0 %v3247
    %3710 = vmatprep.subr.bf16.mxu0 %v3308
    %3711 = vmatpush2.bf16.msra.mxu0 %v3307
    %3712 = vmatprep.subr.bf16.mxu0 %v3304
    %3713 = vmatpush2.bf16.msra.mxu0 %v3303
    %3714 = vmatprep.subr.bf16.mxu0 %v3300
    %3715 = vmatpush2.bf16.msra.mxu0 %v3299
    %3716 = vmatprep.subr.bf16.mxu0 %v3296
    %3717 = vmatpush2.bf16.msra.mxu0 %v3295
    %3718 = vmatprep.subr.bf16.mxu0 %v3292
    %3719 = vmatpush2.bf16.msra.mxu0 %v3291
    %3720 = vmatprep.subr.bf16.mxu0 %v3288
    %3721 = vmatpush2.bf16.msra.mxu0 %v3287
    %3722 = vmatprep.subr.bf16.mxu0 %v3284
    %3723 = vmatpush2.bf16.msra.mxu0 %v3283
    %3724 = vmatprep.subr.bf16.mxu0 %v3280
    %3725 = vmatpush2.bf16.msra.mxu0 %v3279
    %3726 = vmatprep.mubr.bf16.mxu0 %v2601
    %3727 = vmatmul.mubr.bf16.gmra.mxu0 %v2600
    %v3728 = vpop.f32.mrf.mxu0
    %v3729 = vadd.f32 0.0, %v3728
    %v3730 = vpop.f32.mrf.mxu0
    %v3731 = vadd.f32 0.0, %v3730
    %v3732 = vpop.f32.mrf.mxu0
    %v3733 = vadd.f32 0.0, %v3732
    %v3734 = vpop.f32.mrf.mxu0
    %v3735 = vadd.f32 0.0, %v3734
    %3736 = vdwg.mxu0
    %3737 = vmatprep.subr.bf16.mxu0 %v3340
    %3738 = vmatpush1.bf16.msra.mxu0 %v3339
    %3739 = vmatprep.subr.bf16.mxu0 %v3336
    %3740 = vmatpush1.bf16.msra.mxu0 %v3335
    %3741 = vmatprep.subr.bf16.mxu0 %v3332
    %3742 = vmatpush1.bf16.msra.mxu0 %v3331
    %3743 = vmatprep.subr.bf16.mxu0 %v3328
    %3744 = vmatpush1.bf16.msra.mxu0 %v3327
    %3745 = vmatprep.subr.bf16.mxu0 %v3324
    %3746 = vmatpush1.bf16.msra.mxu0 %v3323
    %3747 = vmatprep.subr.bf16.mxu0 %v3320
    %3748 = vmatpush1.bf16.msra.mxu0 %v3319
    %3749 = vmatprep.subr.bf16.mxu0 %v3316
    %3750 = vmatpush1.bf16.msra.mxu0 %v3315
    %3751 = vmatprep.subr.bf16.mxu0 %v3312
    %3752 = vmatpush1.bf16.msra.mxu0 %v3311
    %3753 = vmatprep.subr.bf16.mxu0 %v3372
    %3754 = vmatpush2.bf16.msra.mxu0 %v3371
    %3755 = vmatprep.subr.bf16.mxu0 %v3368
    %3756 = vmatpush2.bf16.msra.mxu0 %v3367
    %3757 = vmatprep.subr.bf16.mxu0 %v3364
    %3758 = vmatpush2.bf16.msra.mxu0 %v3363
    %3759 = vmatprep.subr.bf16.mxu0 %v3360
    %3760 = vmatpush2.bf16.msra.mxu0 %v3359
    %3761 = vmatprep.subr.bf16.mxu0 %v3356
    %3762 = vmatpush2.bf16.msra.mxu0 %v3355
    %3763 = vmatprep.subr.bf16.mxu0 %v3352
    %3764 = vmatpush2.bf16.msra.mxu0 %v3351
    %3765 = vmatprep.subr.bf16.mxu0 %v3348
    %3766 = vmatpush2.bf16.msra.mxu0 %v3347
    %3767 = vmatprep.subr.bf16.mxu0 %v3344
    %3768 = vmatpush2.bf16.msra.mxu0 %v3343
    %3769 = vmatprep.mubr.bf16.mxu0 %v2603
    %3770 = vmatmul.mubr.bf16.gmra.mxu0 %v2602
    %v3771 = vpop.f32.mrf.mxu0
    %v3772 = vadd.f32 %v3729, %v3771
    %v3773 = vpop.f32.mrf.mxu0
    %v3774 = vadd.f32 %v3731, %v3773
    %v3775 = vpop.f32.mrf.mxu0
    %v3776 = vadd.f32 %v3733, %v3775
    %v3777 = vpop.f32.mrf.mxu0
    %v3778 = vadd.f32 %v3735, %v3777
    %3779 = vdwg.mxu0
    %3780 = vmatprep.subr.bf16.mxu0 %v3404
    %3781 = vmatpush1.bf16.msra.mxu0 %v3403
    %3782 = vmatprep.subr.bf16.mxu0 %v3400
    %3783 = vmatpush1.bf16.msra.mxu0 %v3399
    %3784 = vmatprep.subr.bf16.mxu0 %v3396
    %3785 = vmatpush1.bf16.msra.mxu0 %v3395
    %3786 = vmatprep.subr.bf16.mxu0 %v3392
    %3787 = vmatpush1.bf16.msra.mxu0 %v3391
    %3788 = vmatprep.subr.bf16.mxu0 %v3388
    %3789 = vmatpush1.bf16.msra.mxu0 %v3387
    %3790 = vmatprep.subr.bf16.mxu0 %v3384
    %3791 = vmatpush1.bf16.msra.mxu0 %v3383
    %3792 = vmatprep.subr.bf16.mxu0 %v3380
    %3793 = vmatpush1.bf16.msra.mxu0 %v3379
    %3794 = vmatprep.subr.bf16.mxu0 %v3376
    %3795 = vmatpush1.bf16.msra.mxu0 %v3375
    %3796 = vmatprep.subr.bf16.mxu0 0
    %3797 = vmatpush2.bf16.msra.mxu0 0
    %3798 = vmatprep.subr.bf16.mxu0 0
    %3799 = vmatpush2.bf16.msra.mxu0 0
    %3800 = vmatprep.subr.bf16.mxu0 0
    %3801 = vmatpush2.bf16.msra.mxu0 0
    %3802 = vmatprep.subr.bf16.mxu0 0
    %3803 = vmatpush2.bf16.msra.mxu0 0
    %3804 = vmatprep.subr.bf16.mxu0 0
    %3805 = vmatpush2.bf16.msra.mxu0 0
    %3806 = vmatprep.subr.bf16.mxu0 0
    %3807 = vmatpush2.bf16.msra.mxu0 0
    %3808 = vmatprep.subr.bf16.mxu0 0
    %3809 = vmatpush2.bf16.msra.mxu0 0
    %3810 = vmatprep.subr.bf16.mxu0 0
    %3811 = vmatpush2.bf16.msra.mxu0 0
    %3812 = vmatprep.mubr.bf16.mxu0 0
    %3813 = vmatmul.mubr.bf16.gmra.mxu0 %v2604
    %v3814 = vpop.f32.mrf.mxu0
    %v3815 = vadd.f32 %v3772, %v3814
    %v3816 = vpop.f32.mrf.mxu0
    %v3817 = vadd.f32 %v3774, %v3816
    %v3818 = vpop.f32.mrf.mxu0
    %v3819 = vadd.f32 %v3776, %v3818
    %v3820 = vpop.f32.mrf.mxu0
    %v3821 = vadd.f32 %v3778, %v3820
    %3822 = vdwg.mxu0
    %v3823 = vpack.c.bf16 %v3690, %v3686
    %v3824 = vpack.c.bf16 %v3692, %v3688
    %v3825 = vpack.c.bf16 %v3819, %v3815
    %v3826 = vpack.c.bf16 %v3821, %v3817
    %v3827 = vld [vmem:[#allocation10] sm:$0xf]
    %v3829 = vlaneseq
    %v3830 = vshrl.u32 %v3829, 7
    %v3831 = vsub.s32 0, %v3830
    %v3832 = vrot.slane %v3827, %v3831
    %v3833 = vlaneseq
    %v3834 = vshrl.u32 %v3833, 7
    %v3835 = vsub.s32 1, %v3834
    %v3836 = vrot.slane %v3827, %v3835
    %v3837 = vlaneseq
    %v3838 = vshrl.u32 %v3837, 7
    %v3839 = vsub.s32 2, %v3838
    %v3840 = vrot.slane %v3827, %v3839
    %v3841 = vlaneseq
    %v3842 = vshrl.u32 %v3841, 7
    %v3843 = vsub.s32 3, %v3842
    %v3844 = vrot.slane %v3827, %v3843
    %v3849 = vpack.c.bf16 %v3832, %v3832
    %v3850 = vpack.c.bf16 %v3836, %v3836
    %v3851 = vpack.c.bf16 %v3840, %v3840
    %v3852 = vpack.c.bf16 %v3844, %v3844
    %v3854 = vpack.i.b16 %v3849, %v3849
    %v3856 = vlaneseq
    %v3857 = vshrl.u32 %v3856, 7
    %v3858 = vsub.s32 0, %v3857
    %v3859 = vrot.slane %v3854, %v3858
    %v3861 = vpack.i.b16 %v3850, %v3850
    %v3863 = vlaneseq
    %v3864 = vshrl.u32 %v3863, 7
    %v3865 = vsub.s32 0, %v3864
    %v3866 = vrot.slane %v3861, %v3865
    %v3868 = vpack.i.b16 %v3851, %v3851
    %v3870 = vlaneseq
    %v3871 = vshrl.u32 %v3870, 7
    %v3872 = vsub.s32 0, %v3871
    %v3873 = vrot.slane %v3868, %v3872
    %v3875 = vpack.i.b16 %v3852, %v3852
    %v3877 = vlaneseq
    %v3878 = vshrl.u32 %v3877, 7
    %v3879 = vsub.s32 0, %v3878
    %v3880 = vrot.slane %v3875, %v3879
    %v3881 = vadd.bf16 %v3823, %v3859
    %v3882 = vadd.bf16 %v3824, %v3866
    %v3883 = vadd.bf16 %v3825, %v3873
    %v3884 = vadd.bf16 %v3826, %v3880
    %v3885 = vmax.bf16 %v3881, 0
    %v3886 = vmax.bf16 %v3882, 0
    %v3887 = vmax.bf16 %v3883, 0
    %v3888 = vmax.bf16 %v3884, 0
    %v3889 = vld [vmem:[#allocation11] sm:$0xff]
    %v3890 = vld [vmem:[#allocation11 + $0x8] sm:$0xff]
    %v3891 = vld [vmem:[#allocation11 + $0x10] sm:$0xff]
    %v3892 = vld [vmem:[#allocation11 + $0x18] sm:$0xff]
    %v3893 = vld [vmem:[#allocation11 + $0x20] sm:$0xff]
    %v3894 = vld [vmem:[#allocation11 + $0x28] sm:$0xff]
    %v3895 = vld [vmem:[#allocation11 + $0x30] sm:$0xff]
    %v3896 = vld [vmem:[#allocation11 + $0x38] sm:$0xff]
    %v3897 = vld [vmem:[#allocation11 + $0x40] sm:$0xff]
    %v3898 = vld [vmem:[#allocation11 + $0x48] sm:$0xff]
    %v3899 = vld [vmem:[#allocation11 + $0x50] sm:$0xff]
    %v3900 = vld [vmem:[#allocation11 + $0x58] sm:$0xff]
    %v3901 = vld [vmem:[#allocation11 + $0x60] sm:$0xff]
    %v3902 = vld [vmem:[#allocation11 + $0x68] sm:$0xff]
    %v3903 = vld [vmem:[#allocation11 + $0x70] sm:$0xff]
    %v3904 = vld [vmem:[#allocation11 + $0x78] sm:$0xff]
    %v3905 = vld [vmem:[#allocation11 + $0x80] sm:$0xff]
    %v3906 = vld [vmem:[#allocation11 + $0x88] sm:$0xff]
    %v3907 = vld [vmem:[#allocation11 + $0x90] sm:$0xff]
    %v3908 = vld [vmem:[#allocation11 + $0x98] sm:$0xff]
    %v3909 = vld [vmem:[#allocation11 + $0xa0] sm:$0xff]
    %v3910 = vld [vmem:[#allocation11 + $0xa8] sm:$0xff]
    %v3911 = vld [vmem:[#allocation11 + $0xb0] sm:$0xff]
    %v3912 = vld [vmem:[#allocation11 + $0xb8] sm:$0xff]
    %v3913 = vld [vmem:[#allocation11 + $0xc0] sm:$0xff]
    %v3914 = vld [vmem:[#allocation11 + $0xc8] sm:$0xff]
    %v3915 = vld [vmem:[#allocation11 + $0xd0] sm:$0xff]
    %v3916 = vld [vmem:[#allocation11 + $0xd8] sm:$0xff]
    %v3917 = vld [vmem:[#allocation11 + $0xe0] sm:$0xff]
    %v3918 = vld [vmem:[#allocation11 + $0xe8] sm:$0xff]
    %v3919 = vld [vmem:[#allocation11 + $0xf0] sm:$0xff]
    %v3920 = vld [vmem:[#allocation11 + $0xf8] sm:$0xff]
    %v3921 = vld [vmem:[#allocation11 + $0x100] sm:$0xff]
    %v3922 = vld [vmem:[#allocation11 + $0x108] sm:$0xff]
    %v3923 = vld [vmem:[#allocation11 + $0x110] sm:$0xff]
    %v3924 = vld [vmem:[#allocation11 + $0x118] sm:$0xff]
    %v3925 = vld [vmem:[#allocation11 + $0x120] sm:$0xff]
    %v3926 = vld [vmem:[#allocation11 + $0x128] sm:$0xff]
    %v3927 = vld [vmem:[#allocation11 + $0x130] sm:$0xff]
    %v3928 = vld [vmem:[#allocation11 + $0x138] sm:$0xff]
    %v3929 = vld [vmem:[#allocation11 + $0x140] sm:$0xff]
    %v3930 = vld [vmem:[#allocation11 + $0x148] sm:$0xff]
    %v3931 = vld [vmem:[#allocation11 + $0x150] sm:$0xff]
    %v3932 = vld [vmem:[#allocation11 + $0x158] sm:$0xff]
    %v3933 = vld [vmem:[#allocation11 + $0x160] sm:$0xff]
    %v3934 = vld [vmem:[#allocation11 + $0x168] sm:$0xff]
    %v3935 = vld [vmem:[#allocation11 + $0x170] sm:$0xff]
    %v3936 = vld [vmem:[#allocation11 + $0x178] sm:$0xff]
    %v3937 = vld [vmem:[#allocation11 + $0x180] sm:$0xff]
    %v3938 = vld [vmem:[#allocation11 + $0x188] sm:$0xff]
    %v3939 = vld [vmem:[#allocation11 + $0x190] sm:$0xff]
    %v3940 = vld [vmem:[#allocation11 + $0x198] sm:$0xff]
    %v3941 = vld [vmem:[#allocation11 + $0x1a0] sm:$0xff]
    %v3942 = vld [vmem:[#allocation11 + $0x1a8] sm:$0xff]
    %v3943 = vld [vmem:[#allocation11 + $0x1b0] sm:$0xff]
    %v3944 = vld [vmem:[#allocation11 + $0x1b8] sm:$0xff]
    %v3945 = vld [vmem:[#allocation11 + $0x1c0] sm:$0xff]
    %v3946 = vld [vmem:[#allocation11 + $0x1c8] sm:$0xff]
    %v3947 = vld [vmem:[#allocation11 + $0x1d0] sm:$0xff]
    %v3948 = vld [vmem:[#allocation11 + $0x1d8] sm:$0xff]
    %v3949 = vld [vmem:[#allocation11 + $0x1e0] sm:$0xff]
    %v3950 = vld [vmem:[#allocation11 + $0x1e8] sm:$0xff]
    %v3951 = vld [vmem:[#allocation11 + $0x1f0] sm:$0xff]
    %v3952 = vld [vmem:[#allocation11 + $0x1f8] sm:$0xff]
    %v4017 = vunpack.c.l.b16 %v3889
    %v4018 = vunpack.c.h.b16 %v3889
    %v4019 = vunpack.c.l.b16 %v3890
    %v4020 = vunpack.c.h.b16 %v3890
    %v4021 = vunpack.c.l.b16 %v3891
    %v4022 = vunpack.c.h.b16 %v3891
    %v4023 = vunpack.c.l.b16 %v3892
    %v4024 = vunpack.c.h.b16 %v3892
    %v4025 = vunpack.c.l.b16 %v3893
    %v4026 = vunpack.c.h.b16 %v3893
    %v4027 = vunpack.c.l.b16 %v3894
    %v4028 = vunpack.c.h.b16 %v3894
    %v4029 = vunpack.c.l.b16 %v3895
    %v4030 = vunpack.c.h.b16 %v3895
    %v4031 = vunpack.c.l.b16 %v3896
    %v4032 = vunpack.c.h.b16 %v3896
    %v4033 = vunpack.c.l.b16 %v3897
    %v4034 = vunpack.c.h.b16 %v3897
    %v4035 = vunpack.c.l.b16 %v3898
    %v4036 = vunpack.c.h.b16 %v3898
    %v4037 = vunpack.c.l.b16 %v3899
    %v4038 = vunpack.c.h.b16 %v3899
    %v4039 = vunpack.c.l.b16 %v3900
    %v4040 = vunpack.c.h.b16 %v3900
    %v4041 = vunpack.c.l.b16 %v3901
    %v4042 = vunpack.c.h.b16 %v3901
    %v4043 = vunpack.c.l.b16 %v3902
    %v4044 = vunpack.c.h.b16 %v3902
    %v4045 = vunpack.c.l.b16 %v3903
    %v4046 = vunpack.c.h.b16 %v3903
    %v4047 = vunpack.c.l.b16 %v3904
    %v4048 = vunpack.c.h.b16 %v3904
    %v4049 = vunpack.c.l.b16 %v3905
    %v4050 = vunpack.c.h.b16 %v3905
    %v4051 = vunpack.c.l.b16 %v3906
    %v4052 = vunpack.c.h.b16 %v3906
    %v4053 = vunpack.c.l.b16 %v3907
    %v4054 = vunpack.c.h.b16 %v3907
    %v4055 = vunpack.c.l.b16 %v3908
    %v4056 = vunpack.c.h.b16 %v3908
    %v4057 = vunpack.c.l.b16 %v3909
    %v4058 = vunpack.c.h.b16 %v3909
    %v4059 = vunpack.c.l.b16 %v3910
    %v4060 = vunpack.c.h.b16 %v3910
    %v4061 = vunpack.c.l.b16 %v3911
    %v4062 = vunpack.c.h.b16 %v3911
    %v4063 = vunpack.c.l.b16 %v3912
    %v4064 = vunpack.c.h.b16 %v3912
    %v4065 = vunpack.c.l.b16 %v3913
    %v4066 = vunpack.c.h.b16 %v3913
    %v4067 = vunpack.c.l.b16 %v3914
    %v4068 = vunpack.c.h.b16 %v3914
    %v4069 = vunpack.c.l.b16 %v3915
    %v4070 = vunpack.c.h.b16 %v3915
    %v4071 = vunpack.c.l.b16 %v3916
    %v4072 = vunpack.c.h.b16 %v3916
    %v4073 = vunpack.c.l.b16 %v3917
    %v4074 = vunpack.c.h.b16 %v3917
    %v4075 = vunpack.c.l.b16 %v3918
    %v4076 = vunpack.c.h.b16 %v3918
    %v4077 = vunpack.c.l.b16 %v3919
    %v4078 = vunpack.c.h.b16 %v3919
    %v4079 = vunpack.c.l.b16 %v3920
    %v4080 = vunpack.c.h.b16 %v3920
    %v4081 = vunpack.c.l.b16 %v3921
    %v4082 = vunpack.c.h.b16 %v3921
    %v4083 = vunpack.c.l.b16 %v3922
    %v4084 = vunpack.c.h.b16 %v3922
    %v4085 = vunpack.c.l.b16 %v3923
    %v4086 = vunpack.c.h.b16 %v3923
    %v4087 = vunpack.c.l.b16 %v3924
    %v4088 = vunpack.c.h.b16 %v3924
    %v4089 = vunpack.c.l.b16 %v3925
    %v4090 = vunpack.c.h.b16 %v3925
    %v4091 = vunpack.c.l.b16 %v3926
    %v4092 = vunpack.c.h.b16 %v3926
    %v4093 = vunpack.c.l.b16 %v3927
    %v4094 = vunpack.c.h.b16 %v3927
    %v4095 = vunpack.c.l.b16 %v3928
    %v4096 = vunpack.c.h.b16 %v3928
    %v4097 = vunpack.c.l.b16 %v3929
    %v4098 = vunpack.c.h.b16 %v3929
    %v4099 = vunpack.c.l.b16 %v3930
    %v4100 = vunpack.c.h.b16 %v3930
    %v4101 = vunpack.c.l.b16 %v3931
    %v4102 = vunpack.c.h.b16 %v3931
    %v4103 = vunpack.c.l.b16 %v3932
    %v4104 = vunpack.c.h.b16 %v3932
    %v4105 = vunpack.c.l.b16 %v3933
    %v4106 = vunpack.c.h.b16 %v3933
    %v4107 = vunpack.c.l.b16 %v3934
    %v4108 = vunpack.c.h.b16 %v3934
    %v4109 = vunpack.c.l.b16 %v3935
    %v4110 = vunpack.c.h.b16 %v3935
    %v4111 = vunpack.c.l.b16 %v3936
    %v4112 = vunpack.c.h.b16 %v3936
    %v4113 = vunpack.c.l.b16 %v3937
    %v4114 = vunpack.c.h.b16 %v3937
    %v4115 = vunpack.c.l.b16 %v3938
    %v4116 = vunpack.c.h.b16 %v3938
    %v4117 = vunpack.c.l.b16 %v3939
    %v4118 = vunpack.c.h.b16 %v3939
    %v4119 = vunpack.c.l.b16 %v3940
    %v4120 = vunpack.c.h.b16 %v3940
    %v4121 = vunpack.c.l.b16 %v3941
    %v4122 = vunpack.c.h.b16 %v3941
    %v4123 = vunpack.c.l.b16 %v3942
    %v4124 = vunpack.c.h.b16 %v3942
    %v4125 = vunpack.c.l.b16 %v3943
    %v4126 = vunpack.c.h.b16 %v3943
    %v4127 = vunpack.c.l.b16 %v3944
    %v4128 = vunpack.c.h.b16 %v3944
    %v4129 = vunpack.c.l.b16 %v3945
    %v4130 = vunpack.c.h.b16 %v3945
    %v4131 = vunpack.c.l.b16 %v3946
    %v4132 = vunpack.c.h.b16 %v3946
    %v4133 = vunpack.c.l.b16 %v3947
    %v4134 = vunpack.c.h.b16 %v3947
    %v4135 = vunpack.c.l.b16 %v3948
    %v4136 = vunpack.c.h.b16 %v3948
    %v4137 = vunpack.c.l.b16 %v3949
    %v4138 = vunpack.c.h.b16 %v3949
    %v4139 = vunpack.c.l.b16 %v3950
    %v4140 = vunpack.c.h.b16 %v3950
    %v4141 = vunpack.c.l.b16 %v3951
    %v4142 = vunpack.c.h.b16 %v3951
    %v4143 = vunpack.c.l.b16 %v3952
    %v4144 = vunpack.c.h.b16 %v3952
    %v4145 = vpack.c.b16 %v4019, %v4017
    %v4146 = vpack.c.b16 %v4020, %v4018
    %v4147 = vpack.c.b16 %v4023, %v4021
    %v4148 = vpack.c.b16 %v4024, %v4022
    %v4149 = vpack.c.b16 %v4027, %v4025
    %v4150 = vpack.c.b16 %v4028, %v4026
    %v4151 = vpack.c.b16 %v4031, %v4029
    %v4152 = vpack.c.b16 %v4032, %v4030
    %v4153 = vpack.c.b16 %v4035, %v4033
    %v4154 = vpack.c.b16 %v4036, %v4034
    %v4155 = vpack.c.b16 %v4039, %v4037
    %v4156 = vpack.c.b16 %v4040, %v4038
    %v4157 = vpack.c.b16 %v4043, %v4041
    %v4158 = vpack.c.b16 %v4044, %v4042
    %v4159 = vpack.c.b16 %v4047, %v4045
    %v4160 = vpack.c.b16 %v4048, %v4046
    %v4161 = vpack.c.b16 %v4051, %v4049
    %v4162 = vpack.c.b16 %v4052, %v4050
    %v4163 = vpack.c.b16 %v4055, %v4053
    %v4164 = vpack.c.b16 %v4056, %v4054
    %v4165 = vpack.c.b16 %v4059, %v4057
    %v4166 = vpack.c.b16 %v4060, %v4058
    %v4167 = vpack.c.b16 %v4063, %v4061
    %v4168 = vpack.c.b16 %v4064, %v4062
    %v4169 = vpack.c.b16 %v4067, %v4065
    %v4170 = vpack.c.b16 %v4068, %v4066
    %v4171 = vpack.c.b16 %v4071, %v4069
    %v4172 = vpack.c.b16 %v4072, %v4070
    %v4173 = vpack.c.b16 %v4075, %v4073
    %v4174 = vpack.c.b16 %v4076, %v4074
    %v4175 = vpack.c.b16 %v4079, %v4077
    %v4176 = vpack.c.b16 %v4080, %v4078
    %v4177 = vpack.c.b16 %v4083, %v4081
    %v4178 = vpack.c.b16 %v4084, %v4082
    %v4179 = vpack.c.b16 %v4087, %v4085
    %v4180 = vpack.c.b16 %v4088, %v4086
    %v4181 = vpack.c.b16 %v4091, %v4089
    %v4182 = vpack.c.b16 %v4092, %v4090
    %v4183 = vpack.c.b16 %v4095, %v4093
    %v4184 = vpack.c.b16 %v4096, %v4094
    %v4185 = vpack.c.b16 %v4099, %v4097
    %v4186 = vpack.c.b16 %v4100, %v4098
    %v4187 = vpack.c.b16 %v4103, %v4101
    %v4188 = vpack.c.b16 %v4104, %v4102
    %v4189 = vpack.c.b16 %v4107, %v4105
    %v4190 = vpack.c.b16 %v4108, %v4106
    %v4191 = vpack.c.b16 %v4111, %v4109
    %v4192 = vpack.c.b16 %v4112, %v4110
    %v4193 = vpack.c.b16 %v4115, %v4113
    %v4194 = vpack.c.b16 %v4116, %v4114
    %v4195 = vpack.c.b16 %v4119, %v4117
    %v4196 = vpack.c.b16 %v4120, %v4118
    %v4197 = vpack.c.b16 %v4123, %v4121
    %v4198 = vpack.c.b16 %v4124, %v4122
    %v4199 = vpack.c.b16 %v4127, %v4125
    %v4200 = vpack.c.b16 %v4128, %v4126
    %v4201 = vpack.c.b16 %v4131, %v4129
    %v4202 = vpack.c.b16 %v4132, %v4130
    %v4203 = vpack.c.b16 %v4135, %v4133
    %v4204 = vpack.c.b16 %v4136, %v4134
    %v4205 = vpack.c.b16 %v4139, %v4137
    %v4206 = vpack.c.b16 %v4140, %v4138
    %v4207 = vpack.c.b16 %v4143, %v4141
    %v4208 = vpack.c.b16 %v4144, %v4142
    %4273 = vmatprep.subr.bf16.mxu0 %v4160
    %4274 = vmatpush1.bf16.msra.mxu0 %v4159
    %4275 = vmatprep.subr.bf16.mxu0 %v4158
    %4276 = vmatpush1.bf16.msra.mxu0 %v4157
    %4277 = vmatprep.subr.bf16.mxu0 %v4156
    %4278 = vmatpush1.bf16.msra.mxu0 %v4155
    %4279 = vmatprep.subr.bf16.mxu0 %v4154
    %4280 = vmatpush1.bf16.msra.mxu0 %v4153
    %4281 = vmatprep.subr.bf16.mxu0 %v4152
    %4282 = vmatpush1.bf16.msra.mxu0 %v4151
    %4283 = vmatprep.subr.bf16.mxu0 %v4150
    %4284 = vmatpush1.bf16.msra.mxu0 %v4149
    %4285 = vmatprep.subr.bf16.mxu0 %v4148
    %4286 = vmatpush1.bf16.msra.mxu0 %v4147
    %4287 = vmatprep.subr.bf16.mxu0 %v4146
    %4288 = vmatpush1.bf16.msra.mxu0 %v4145
    %4289 = vmatprep.subr.bf16.mxu0 %v4176
    %4290 = vmatpush2.bf16.msra.mxu0 %v4175
    %4291 = vmatprep.subr.bf16.mxu0 %v4174
    %4292 = vmatpush2.bf16.msra.mxu0 %v4173
    %4293 = vmatprep.subr.bf16.mxu0 %v4172
    %4294 = vmatpush2.bf16.msra.mxu0 %v4171
    %4295 = vmatprep.subr.bf16.mxu0 %v4170
    %4296 = vmatpush2.bf16.msra.mxu0 %v4169
    %4297 = vmatprep.subr.bf16.mxu0 %v4168
    %4298 = vmatpush2.bf16.msra.mxu0 %v4167
    %4299 = vmatprep.subr.bf16.mxu0 %v4166
    %4300 = vmatpush2.bf16.msra.mxu0 %v4165
    %4301 = vmatprep.subr.bf16.mxu0 %v4164
    %4302 = vmatpush2.bf16.msra.mxu0 %v4163
    %4303 = vmatprep.subr.bf16.mxu0 %v4162
    %4304 = vmatpush2.bf16.msra.mxu0 %v4161
    %4305 = vmatprep.mubr.bf16.mxu0 %v3886
    %4306 = vmatmul.mubr.bf16.gmra.mxu0 %v3885
    %v4307 = vpop.f32.mrf.mxu0
    %v4308 = vadd.f32 0.0, %v4307
    %v4309 = vpop.f32.mrf.mxu0
    %v4310 = vadd.f32 0.0, %v4309
    %v4311 = vpop.f32.mrf.mxu0
    %v4312 = vadd.f32 0.0, %v4311
    %v4313 = vpop.f32.mrf.mxu0
    %v4314 = vadd.f32 0.0, %v4313
    %4315 = vdwg.mxu0
    %4316 = vmatprep.subr.bf16.mxu0 %v4192
    %4317 = vmatpush1.bf16.msra.mxu0 %v4191
    %4318 = vmatprep.subr.bf16.mxu0 %v4190
    %4319 = vmatpush1.bf16.msra.mxu0 %v4189
    %4320 = vmatprep.subr.bf16.mxu0 %v4188
    %4321 = vmatpush1.bf16.msra.mxu0 %v4187
    %4322 = vmatprep.subr.bf16.mxu0 %v4186
    %4323 = vmatpush1.bf16.msra.mxu0 %v4185
    %4324 = vmatprep.subr.bf16.mxu0 %v4184
    %4325 = vmatpush1.bf16.msra.mxu0 %v4183
    %4326 = vmatprep.subr.bf16.mxu0 %v4182
    %4327 = vmatpush1.bf16.msra.mxu0 %v4181
    %4328 = vmatprep.subr.bf16.mxu0 %v4180
    %4329 = vmatpush1.bf16.msra.mxu0 %v4179
    %4330 = vmatprep.subr.bf16.mxu0 %v4178
    %4331 = vmatpush1.bf16.msra.mxu0 %v4177
    %4332 = vmatprep.subr.bf16.mxu0 %v4208
    %4333 = vmatpush2.bf16.msra.mxu0 %v4207
    %4334 = vmatprep.subr.bf16.mxu0 %v4206
    %4335 = vmatpush2.bf16.msra.mxu0 %v4205
    %4336 = vmatprep.subr.bf16.mxu0 %v4204
    %4337 = vmatpush2.bf16.msra.mxu0 %v4203
    %4338 = vmatprep.subr.bf16.mxu0 %v4202
    %4339 = vmatpush2.bf16.msra.mxu0 %v4201
    %4340 = vmatprep.subr.bf16.mxu0 %v4200
    %4341 = vmatpush2.bf16.msra.mxu0 %v4199
    %4342 = vmatprep.subr.bf16.mxu0 %v4198
    %4343 = vmatpush2.bf16.msra.mxu0 %v4197
    %4344 = vmatprep.subr.bf16.mxu0 %v4196
    %4345 = vmatpush2.bf16.msra.mxu0 %v4195
    %4346 = vmatprep.subr.bf16.mxu0 %v4194
    %4347 = vmatpush2.bf16.msra.mxu0 %v4193
    %4348 = vmatprep.mubr.bf16.mxu0 %v3888
    %4349 = vmatmul.mubr.bf16.gmra.mxu0 %v3887
    %v4350 = vpop.f32.mrf.mxu0
    %v4351 = vadd.f32 %v4308, %v4350
    %v4352 = vpop.f32.mrf.mxu0
    %v4353 = vadd.f32 %v4310, %v4352
    %v4354 = vpop.f32.mrf.mxu0
    %v4355 = vadd.f32 %v4312, %v4354
    %v4356 = vpop.f32.mrf.mxu0
    %v4357 = vadd.f32 %v4314, %v4356
    %4358 = vdwg.mxu0
    %v4359 = vpack.c.bf16 %v4355, %v4351
    %v4360 = vpack.c.bf16 %v4357, %v4353
    %v4361 = vld [vmem:[#allocation13] sm:$0x3]
    %v4363 = vlaneseq
    %v4364 = vshrl.u32 %v4363, 7
    %v4365 = vsub.s32 0, %v4364
    %v4366 = vrot.slane %v4361, %v4365
    %v4367 = vlaneseq
    %v4368 = vshrl.u32 %v4367, 7
    %v4369 = vsub.s32 1, %v4368
    %v4370 = vrot.slane %v4361, %v4369
    %v4373 = vpack.c.bf16 %v4366, %v4366
    %v4374 = vpack.c.bf16 %v4370, %v4370
    %v4376 = vpack.i.b16 %v4373, %v4373
    %v4378 = vlaneseq
    %v4379 = vshrl.u32 %v4378, 7
    %v4380 = vsub.s32 0, %v4379
    %v4381 = vrot.slane %v4376, %v4380
    %v4383 = vpack.i.b16 %v4374, %v4374
    %v4385 = vlaneseq
    %v4386 = vshrl.u32 %v4385, 7
    %v4387 = vsub.s32 0, %v4386
    %v4388 = vrot.slane %v4383, %v4387
    %v4389 = vadd.bf16 %v4359, %v4381
    %v4390 = vadd.bf16 %v4360, %v4388
    %v4391 = vmax.bf16 %v4389, 0
    %v4392 = vmax.bf16 %v4390, 0
    %v4393 = vld [vmem:[#allocation14] sm:$0xf]
    %v4394 = vld [vmem:[#allocation14 + $0x4] sm:$0xf]
    %v4395 = vld [vmem:[#allocation14 + $0x8] sm:$0xf]
    %v4396 = vld [vmem:[#allocation14 + $0xc] sm:$0xf]
    %v4397 = vld [vmem:[#allocation14 + $0x10] sm:$0xf]
    %v4398 = vld [vmem:[#allocation14 + $0x14] sm:$0xf]
    %v4399 = vld [vmem:[#allocation14 + $0x18] sm:$0xf]
    %v4400 = vld [vmem:[#allocation14 + $0x1c] sm:$0xf]
    %v4401 = vld [vmem:[#allocation14 + $0x20] sm:$0xf]
    %v4402 = vld [vmem:[#allocation14 + $0x24] sm:$0xf]
    %v4403 = vld [vmem:[#allocation14 + $0x28] sm:$0xf]
    %v4404 = vld [vmem:[#allocation14 + $0x2c] sm:$0xf]
    %v4405 = vld [vmem:[#allocation14 + $0x30] sm:$0xf]
    %v4406 = vld [vmem:[#allocation14 + $0x34] sm:$0xf]
    %v4407 = vld [vmem:[#allocation14 + $0x38] sm:$0xf]
    %v4408 = vld [vmem:[#allocation14 + $0x3c] sm:$0xf]
    %v4409 = vld [vmem:[#allocation14 + $0x40] sm:$0xf]
    %v4410 = vld [vmem:[#allocation14 + $0x44] sm:$0xf]
    %v4411 = vld [vmem:[#allocation14 + $0x48] sm:$0xf]
    %v4412 = vld [vmem:[#allocation14 + $0x4c] sm:$0xf]
    %v4413 = vld [vmem:[#allocation14 + $0x50] sm:$0xf]
    %v4414 = vld [vmem:[#allocation14 + $0x54] sm:$0xf]
    %v4415 = vld [vmem:[#allocation14 + $0x58] sm:$0xf]
    %v4416 = vld [vmem:[#allocation14 + $0x5c] sm:$0xf]
    %v4417 = vld [vmem:[#allocation14 + $0x60] sm:$0xf]
    %v4418 = vld [vmem:[#allocation14 + $0x64] sm:$0xf]
    %v4419 = vld [vmem:[#allocation14 + $0x68] sm:$0xf]
    %v4420 = vld [vmem:[#allocation14 + $0x6c] sm:$0xf]
    %v4421 = vld [vmem:[#allocation14 + $0x70] sm:$0xf]
    %v4422 = vld [vmem:[#allocation14 + $0x74] sm:$0xf]
    %v4423 = vld [vmem:[#allocation14 + $0x78] sm:$0xf]
    %v4424 = vld [vmem:[#allocation14 + $0x7c] sm:$0xf]
    %v4457 = vunpack.c.l.b16 %v4393
    %v4458 = vunpack.c.l.b16 %v4394
    %v4459 = vunpack.c.l.b16 %v4395
    %v4460 = vunpack.c.l.b16 %v4396
    %v4461 = vunpack.c.l.b16 %v4397
    %v4462 = vunpack.c.l.b16 %v4398
    %v4463 = vunpack.c.l.b16 %v4399
    %v4464 = vunpack.c.l.b16 %v4400
    %v4465 = vunpack.c.l.b16 %v4401
    %v4466 = vunpack.c.l.b16 %v4402
    %v4467 = vunpack.c.l.b16 %v4403
    %v4468 = vunpack.c.l.b16 %v4404
    %v4469 = vunpack.c.l.b16 %v4405
    %v4470 = vunpack.c.l.b16 %v4406
    %v4471 = vunpack.c.l.b16 %v4407
    %v4472 = vunpack.c.l.b16 %v4408
    %v4473 = vunpack.c.l.b16 %v4409
    %v4474 = vunpack.c.l.b16 %v4410
    %v4475 = vunpack.c.l.b16 %v4411
    %v4476 = vunpack.c.l.b16 %v4412
    %v4477 = vunpack.c.l.b16 %v4413
    %v4478 = vunpack.c.l.b16 %v4414
    %v4479 = vunpack.c.l.b16 %v4415
    %v4480 = vunpack.c.l.b16 %v4416
    %v4481 = vunpack.c.l.b16 %v4417
    %v4482 = vunpack.c.l.b16 %v4418
    %v4483 = vunpack.c.l.b16 %v4419
    %v4484 = vunpack.c.l.b16 %v4420
    %v4485 = vunpack.c.l.b16 %v4421
    %v4486 = vunpack.c.l.b16 %v4422
    %v4487 = vunpack.c.l.b16 %v4423
    %v4488 = vunpack.c.l.b16 %v4424
    %v4489 = vpack.c.b16 %v4458, %v4457
    %v4490 = vpack.c.b16 %v4460, %v4459
    %v4491 = vpack.c.b16 %v4462, %v4461
    %v4492 = vpack.c.b16 %v4464, %v4463
    %v4493 = vpack.c.b16 %v4466, %v4465
    %v4494 = vpack.c.b16 %v4468, %v4467
    %v4495 = vpack.c.b16 %v4470, %v4469
    %v4496 = vpack.c.b16 %v4472, %v4471
    %v4497 = vpack.c.b16 %v4474, %v4473
    %v4498 = vpack.c.b16 %v4476, %v4475
    %v4499 = vpack.c.b16 %v4478, %v4477
    %v4500 = vpack.c.b16 %v4480, %v4479
    %v4501 = vpack.c.b16 %v4482, %v4481
    %v4502 = vpack.c.b16 %v4484, %v4483
    %v4503 = vpack.c.b16 %v4486, %v4485
    %v4504 = vpack.c.b16 %v4488, %v4487
    %4521 = vmatprep.subr.bf16.mxu0 0
    %4522 = vmatpush1.bf16.msra.mxu0 %v4496
    %4523 = vmatprep.subr.bf16.mxu0 0
    %4524 = vmatpush1.bf16.msra.mxu0 %v4495
    %4525 = vmatprep.subr.bf16.mxu0 0
    %4526 = vmatpush1.bf16.msra.mxu0 %v4494
    %4527 = vmatprep.subr.bf16.mxu0 0
    %4528 = vmatpush1.bf16.msra.mxu0 %v4493
    %4529 = vmatprep.subr.bf16.mxu0 0
    %4530 = vmatpush1.bf16.msra.mxu0 %v4492
    %4531 = vmatprep.subr.bf16.mxu0 0
    %4532 = vmatpush1.bf16.msra.mxu0 %v4491
    %4533 = vmatprep.subr.bf16.mxu0 0
    %4534 = vmatpush1.bf16.msra.mxu0 %v4490
    %4535 = vmatprep.subr.bf16.mxu0 0
    %4536 = vmatpush1.bf16.msra.mxu0 %v4489
    %4537 = vmatprep.subr.bf16.mxu0 0
    %4538 = vmatpush2.bf16.msra.mxu0 %v4504
    %4539 = vmatprep.subr.bf16.mxu0 0
    %4540 = vmatpush2.bf16.msra.mxu0 %v4503
    %4541 = vmatprep.subr.bf16.mxu0 0
    %4542 = vmatpush2.bf16.msra.mxu0 %v4502
    %4543 = vmatprep.subr.bf16.mxu0 0
    %4544 = vmatpush2.bf16.msra.mxu0 %v4501
    %4545 = vmatprep.subr.bf16.mxu0 0
    %4546 = vmatpush2.bf16.msra.mxu0 %v4500
    %4547 = vmatprep.subr.bf16.mxu0 0
    %4548 = vmatpush2.bf16.msra.mxu0 %v4499
    %4549 = vmatprep.subr.bf16.mxu0 0
    %4550 = vmatpush2.bf16.msra.mxu0 %v4498
    %4551 = vmatprep.subr.bf16.mxu0 0
    %4552 = vmatpush2.bf16.msra.mxu0 %v4497
    %4553 = vmatprep.mubr.bf16.mxu0 %v4392
    %4554 = vmatmul.mubr.bf16.gmra.mxu0 %v4391
    %v4555 = vpop.f32.mrf.mxu0
    %v4556 = vadd.f32 0.0, %v4555
    %v4557 = vpop.f32.mrf.mxu0
    %v4558 = vpop.f32.mrf.mxu0
    %v4559 = vadd.f32 0.0, %v4558
    %v4560 = vpop.f32.mrf.mxu0
    %4561 = vdwg.mxu0
    %v4562 = vpack.c.bf16 %v4559, %v4556
    %v4563 = vld [vmem:[#allocation16] sm:$0x1]
    %v4564 = vpack.c.bf16 %v4563, %v4563
    %v4566 = vpack.i.b16 %v4564, %v4564
    %v4568 = vlaneseq
    %v4569 = vshrl.u32 %v4568, 7
    %v4570 = vsub.s32 0, %v4569
    %v4571 = vrot.slane %v4566, %v4570
    %v4572 = vadd.bf16 %v4562, %v4571
    %v4573 = vmax.bf16 %v4572, 0
    %v4574 = vld [vmem:[#allocation17] sm:$0xf]
    %v4575 = vld [vmem:[#allocation17 + $0x4] sm:$0xf]
    %v4576 = vld [vmem:[#allocation17 + $0x8] sm:$0xf]
    %v4577 = vld [vmem:[#allocation17 + $0xc] sm:$0xf]
    %v4578 = vld [vmem:[#allocation17 + $0x10] sm:$0xf]
    %v4579 = vld [vmem:[#allocation17 + $0x14] sm:$0xf]
    %v4580 = vld [vmem:[#allocation17 + $0x18] sm:$0xf]
    %v4581 = vld [vmem:[#allocation17 + $0x1c] sm:$0xf]
    %v4582 = vld [vmem:[#allocation17 + $0x20] sm:$0xf]
    %v4583 = vld [vmem:[#allocation17 + $0x24] sm:$0xf]
    %v4584 = vld [vmem:[#allocation17 + $0x28] sm:$0xf]
    %v4585 = vld [vmem:[#allocation17 + $0x2c] sm:$0xf]
    %v4586 = vld [vmem:[#allocation17 + $0x30] sm:$0xf]
    %v4587 = vld [vmem:[#allocation17 + $0x34] sm:$0xf]
    %v4588 = vld [vmem:[#allocation17 + $0x38] sm:$0xf]
    %v4589 = vld [vmem:[#allocation17 + $0x3c] sm:$0xf]
    %v4590 = vld [vmem:[#allocation19] sm:$0x1]
    %v4592 = vlaneseq
    %v4593 = vshrl.u32 %v4592, 7
    %v4594 = vsub.s32 0, %v4593
    %v4595 = vrot.slane %v4590, %v4594
    %v4613 = vunpack.c.l.b16 %v4574
    %v4614 = vunpack.c.l.b16 %v4575
    %v4615 = vunpack.c.l.b16 %v4576
    %v4616 = vunpack.c.l.b16 %v4577
    %v4617 = vunpack.c.l.b16 %v4578
    %v4618 = vunpack.c.l.b16 %v4579
    %v4619 = vunpack.c.l.b16 %v4580
    %v4620 = vunpack.c.l.b16 %v4581
    %v4621 = vunpack.c.l.b16 %v4582
    %v4622 = vunpack.c.l.b16 %v4583
    %v4623 = vunpack.c.l.b16 %v4584
    %v4624 = vunpack.c.l.b16 %v4585
    %v4625 = vunpack.c.l.b16 %v4586
    %v4626 = vunpack.c.l.b16 %v4587
    %v4627 = vunpack.c.l.b16 %v4588
    %v4628 = vunpack.c.l.b16 %v4589
    %v4629 = vpack.c.b16 %v4614, %v4613
    %v4630 = vpack.c.b16 %v4616, %v4615
    %v4631 = vpack.c.b16 %v4618, %v4617
    %v4632 = vpack.c.b16 %v4620, %v4619
    %v4633 = vpack.c.b16 %v4622, %v4621
    %v4634 = vpack.c.b16 %v4624, %v4623
    %v4635 = vpack.c.b16 %v4626, %v4625
    %v4636 = vpack.c.b16 %v4628, %v4627
    %4645 = vmatprep.subr.bf16.mxu0 0
    %4646 = vmatpush1.bf16.msra.mxu0 %v4636
    %4647 = vmatprep.subr.bf16.mxu0 0
    %4648 = vmatpush1.bf16.msra.mxu0 %v4635
    %4649 = vmatprep.subr.bf16.mxu0 0
    %4650 = vmatpush1.bf16.msra.mxu0 %v4634
    %4651 = vmatprep.subr.bf16.mxu0 0
    %4652 = vmatpush1.bf16.msra.mxu0 %v4633
    %4653 = vmatprep.subr.bf16.mxu0 0
    %4654 = vmatpush1.bf16.msra.mxu0 %v4632
    %4655 = vmatprep.subr.bf16.mxu0 0
    %4656 = vmatpush1.bf16.msra.mxu0 %v4631
    %4657 = vmatprep.subr.bf16.mxu0 0
    %4658 = vmatpush1.bf16.msra.mxu0 %v4630
    %4659 = vmatprep.subr.bf16.mxu0 0
    %4660 = vmatpush1.bf16.msra.mxu0 %v4629
    %4661 = vmatprep.subr.bf16.mxu0 0
    %4662 = vmatpush2.bf16.msra.mxu0 0
    %4663 = vmatprep.subr.bf16.mxu0 0
    %4664 = vmatpush2.bf16.msra.mxu0 0
    %4665 = vmatprep.subr.bf16.mxu0 0
    %4666 = vmatpush2.bf16.msra.mxu0 0
    %4667 = vmatprep.subr.bf16.mxu0 0
    %4668 = vmatpush2.bf16.msra.mxu0 0
    %4669 = vmatprep.subr.bf16.mxu0 0
    %4670 = vmatpush2.bf16.msra.mxu0 0
    %4671 = vmatprep.subr.bf16.mxu0 0
    %4672 = vmatpush2.bf16.msra.mxu0 0
    %4673 = vmatprep.subr.bf16.mxu0 0
    %4674 = vmatpush2.bf16.msra.mxu0 0
    %4675 = vmatprep.subr.bf16.mxu0 0
    %4676 = vmatpush2.bf16.msra.mxu0 0
    %4677 = vmatprep.mubr.bf16.mxu0 0
    %4678 = vmatmul.mubr.bf16.gmra.mxu0 %v4573
    %v4679 = vpop.f32.mrf.mxu0
    %v4680 = vadd.f32 %v4595, %v4679
    %v4681 = vpop.f32.mrf.mxu0
    %v4682 = vpop.f32.mrf.mxu0
    %v4683 = vadd.f32 %v4595, %v4682
    %v4684 = vpop.f32.mrf.mxu0
    %4685 = vdwg.mxu0
    %4686 = vst [vmem:[#allocation20] sm:$0xff] %v4680
    %4687 = vst [vmem:[#allocation20 + $0x8] sm:$0xff] %v4683
    // Predicated region
    $region90: #{tpu_custom_call.1} parent=1 // pred_check
      _
    $region91: #{tpu_custom_call.1} parent=1 // pred_check_branch
      %4689 = sbr.rel (0) target = $region93
    $region92: #{tpu_custom_call.1} parent=1 // pred_region
      %s4691 = ssub.s32 256, 256
      %4692 = vsyncadd [#allocation4], %s4691
      %s4693 = sshll.u32 [#allocation20], 4
      %s4694 = int_to_ptr.vmem [resolvable:$true] %s4693
      %4699 = dma.vmem_to_hbm [thread:$0]  %s4694, 256, %s11, [#allocation4], 128, 128, 8
    $region93: #{tpu_custom_call.1} parent=1 // pred_fallthru
      _
    // Predicated region
    $region94: #{tpu_custom_call.1} parent=1 // pred_check
      _
    $region95: #{tpu_custom_call.1} parent=1 // pred_check_branch
      %4701 = sbr.rel (0) target = $region97
    $region96: #{tpu_custom_call.1} parent=1 // pred_region
      %4702 = dma.done [#allocation4], 256
    $region97: #{tpu_custom_call.1} parent=1 // pred_fallthru
      _
    %4703 = vsyncpa [#allocation3], 1
    %4704 = vsyncpa [#allocation6], 1
    %4705 = vsyncpa [#allocation9], 1
    %4706 = vsyncpa [#allocation12], 1
    %4707 = vsyncpa [#allocation15], 1
    %4708 = vsyncpa [#allocation18], 1
    %4709 = vsyncpa [#allocation4], 1

</llo_original>
